<compile_context>
chip_gen: v6e
topology: v6e:2x2x1
jax: 0.10.0
libtpu: 0.0.40
codegen_flags: <defaults>
</compile_context>

<pallas_src>
import jax
import jax.numpy as jnp
from jax.experimental import pallas as pl
from jax.experimental.pallas import tpu as pltpu
from jax.scipy.linalg import solve_triangular


# ---------------------------------------------------------------------------
# Small-N path: batch-in-lanes VPU congruence kernel (lane-dense for N <= 32).
# ---------------------------------------------------------------------------
def _congruence_lanes_kernel(a4_ref, at_ref, xt_ref, m_ref):
    """M[b] = Linv[b] @ X[b] @ Linv[b]^T with the batch packed into lanes.

    a4_ref : (N, N, 1, LT)  a4[i, k, 0, b] = Linv[b, i, k]
    at_ref : (N, N, LT)     at[j, l, b]    = Linv[b, j, l]
    xt_ref : (N, N, LT)     xt[k, l, b]    = X[b, k, l]
    m_ref  : (N, N, 1, LT)  m[i, j, 0, b]  = M[b, i, j]
    """
    n = at_ref.shape[0]

    # Stage 1: t[i, l, b] = sum_k Linv[b, i, k] * X[b, k, l]
    # The contraction index k lives on *leading* dims of both operands, so the
    # unrolled loop is only leading-dim slices + a size-1 sublane broadcast +
    # fully lane-dense VPU FMAs.
    t = a4_ref[:, 0] * xt_ref[0]                 # (N,1,LT)*(N,LT) -> (N,N,LT)
    for k in range(1, n):
        t = t + a4_ref[:, k] * xt_ref[k]

    # Stage 2: m[i, j, b] = sum_l t[i, l, b] * Linv[b, j, l]
    at = at_ref[...]                             # (N, N, LT)
    for i in range(n):
        # (N,N,LT) elementwise product, sublane (l) reduction, keepdims so the
        # result matches the (N, 1, LT) output slice without any relayout.
        m_ref[i] = jnp.sum(at * t[i], axis=1, keepdims=True)


def _pick_lane_tile(batch):
    """Lane tile (multiple of 128) and padded batch size."""
    bp = ((max(batch, 1) + 127) // 128) * 128
    # Bigger tiles amortize the ~0.35us per-grid-step overhead; keep >= 2 grid
    # steps once there is enough work so v7x can shard across its 2 TCs.
    lt = 256 if bp >= 512 else 128
    bp = ((bp + lt - 1) // lt) * lt
    return lt, bp


def _congruence_lanes(x, linv):
    B, N, _ = x.shape
    lt, bp = _pick_lane_tile(B)
    if bp != B:
        pad = ((0, bp - B), (0, 0), (0, 0))
        x = jnp.pad(x, pad)
        linv = jnp.pad(linv, pad)
    xt = jnp.transpose(x, (1, 2, 0))             # (N, N, Bp)   xt[k, l, b]
    at = jnp.transpose(linv, (1, 2, 0))          # (N, N, Bp)   at[i, k, b]
    a4 = at[:, :, None, :]                       # (N, N, 1, Bp)

    m4 = pl.pallas_call(
        _congruence_lanes_kernel,
        out_shape=jax.ShapeDtypeStruct((N, N, 1, bp), jnp.float32),
        grid=(bp // lt,),
        in_specs=[
            pl.BlockSpec((N, N, 1, lt), lambda b: (0, 0, 0, b)),
            pl.BlockSpec((N, N, lt), lambda b: (0, 0, b)),
            pl.BlockSpec((N, N, lt), lambda b: (0, 0, b)),
        ],
        out_specs=pl.BlockSpec((N, N, 1, lt), lambda b: (0, 0, 0, b)),
        compiler_params=pltpu.CompilerParams(
            dimension_semantics=("parallel",),
            # well under the 64 MiB physical VMEM on v7x, fine on v5e/v6e too
            vmem_limit_bytes=32 << 20),
    )(a4, at, xt)

    m_t = m4[:, :, 0, :]                         # (N, N, Bp)
    return jnp.transpose(m_t, (2, 0, 1))[:B]     # (B, N, N)


# ---------------------------------------------------------------------------
# Large-N path: per-batch-tile MXU congruence kernel (lane-dense for N >= 128).
# ---------------------------------------------------------------------------
def _congruence_mxu_kernel(linv_ref, x_ref, m_ref):
    linv = linv_ref[...]                         # (bt, N, N)
    x = x_ref[...]                               # (bt, N, N)
    t = jnp.einsum('bik,bkj->bij', linv, x,
                   preferred_element_type=jnp.float32)          # Linv @ X
    m_ref[...] = jnp.einsum('bij,bkj->bik', t, linv,
                            preferred_element_type=jnp.float32)  # (.) @ Linv^T


def _pick_batch_tile(batch, n, budget_bytes=6 << 20):
    per_elem = 3 * n * n * 4
    bt = max(1, min(batch, budget_bytes // per_elem))
    if bt >= batch and batch >= 2:               # keep >= 2 grid steps (v7x)
        bt = (batch + 1) // 2
    return bt


def _congruence_mxu(x, linv):
    B, N, _ = x.shape
    bt = _pick_batch_tile(B, N)
    bp = ((B + bt - 1) // bt) * bt               # pad instead of forcing bt | B
    if bp != B:
        pad = ((0, bp - B), (0, 0), (0, 0))
        x = jnp.pad(x, pad)
        linv = jnp.pad(linv, pad)
    m = pl.pallas_call(
        _congruence_mxu_kernel,
        out_shape=jax.ShapeDtypeStruct((bp, N, N), jnp.float32),
        grid=(bp // bt,),
        in_specs=[pl.BlockSpec((bt, N, N), lambda b: (b, 0, 0)),
                  pl.BlockSpec((bt, N, N), lambda b: (b, 0, 0))],
        out_specs=pl.BlockSpec((bt, N, N), lambda b: (b, 0, 0)),
        compiler_params=pltpu.CompilerParams(
            dimension_semantics=("parallel",),
            vmem_limit_bytes=32 << 20),
    )(linv, x)
    return m[:B]


def _congruence(x, linv):
    """Batched M = Linv @ X @ Linv^T, dispatched on N for lane density."""
    if x.shape[-1] <= 32:
        return _congruence_lanes(x, linv)
    return _congruence_mxu(x, linv)


# ---------------------------------------------------------------------------
# Loss wrapper.
# ---------------------------------------------------------------------------
@jax.jit
def riemannian_distance_loss(x, y):
    """Pallas implementation of RiemannianDistanceLoss.forward(x, y)."""
    x = x.astype(jnp.float32)
    y = y.astype(jnp.float32)
    B, N, _ = x.shape
    # Cholesky whitening: y = L L^T, and M = L^{-1} x L^{-T} has the same
    # spectrum as y^{-1/2} x y^{-1/2}, so no eigendecomposition of y is needed.
    # TODO(synk): cholesky / triangular_solve / eigvalsh (symmetric eigensolve)
    # have no Pallas TPU equivalent; they remain XLA glue around the kernel.
    chol = jnp.linalg.cholesky(y)
    eye = jnp.broadcast_to(jnp.eye(N, dtype=jnp.float32), (B, N, N))
    linv = solve_triangular(chol, eye, lower=True)          # L^{-1}

    m = _congruence(x, linv)                                 # (B, N, N)
    m = 0.5 * (m + jnp.swapaxes(m, -1, -2))                  # re-symmetrize
    wm = jnp.linalg.eigvalsh(m)                              # (B, N), > 0 for SPD
    wm = jnp.maximum(wm, 1e-12)                              # guard log()
    dist = jnp.sqrt(jnp.sum(jnp.log(wm) ** 2, axis=-1))      # ||logm(M)||_F
    return jnp.mean(dist)


# ---------------------------------------------------------------------------
# Reference + self-test.
# ---------------------------------------------------------------------------
def _reference_loss(x, y):
    """Plain-JAX reference mirroring the original PyTorch semantics."""
    wy, vy = jnp.linalg.eigh(y)
    p = jnp.einsum('bij,bj,bkj->bik', vy, 1.0 / jnp.sqrt(wy), vy)   # y^{-1/2}
    m = p @ x @ p
    m = 0.5 * (m + jnp.swapaxes(m, -1, -2))
    wm, vm = jnp.linalg.eigh(m)
    log_m = jnp.einsum('bij,bj,bkj->bik', vm, jnp.log(wm), vm)
    d = jnp.sqrt(jnp.sum(log_m ** 2, axis=(-2, -1)))
    return d.mean()


def _make_spd(key, B, N):
    a = jax.random.normal(key, (B, N, N), dtype=jnp.float32)
    return jnp.einsum('bij,bkj->bik', a, a) + N * jnp.eye(N, dtype=jnp.float32)


if __name__ == "__main__":
    key = jax.random.PRNGKey(0)
    k1, k2, k3, k4 = jax.random.split(key, 4)

    # Primary case (small N -> batch-in-lanes VPU kernel).
    B, N = 8, 16
    x = _make_spd(k1, B, N)
    y = _make_spd(k2, B, N)
    loss = jax.block_until_ready(riemannian_distance_loss(x, y))
    ref = _reference_loss(x, y)
    assert jnp.isfinite(loss), float(loss)
    assert abs(float(loss) - float(ref)) <= 2e-2 * max(1.0, abs(float(ref))), (
        float(loss), float(ref))

    # Secondary case (N > 32 -> per-batch-tile MXU kernel).
    B2, N2 = 4, 40
    x2 = _make_spd(k3, B2, N2)
    y2 = _make_spd(k4, B2, N2)
    loss2 = jax.block_until_ready(riemannian_distance_loss(x2, y2))
    ref2 = _reference_loss(x2, y2)
    assert jnp.isfinite(loss2), float(loss2)
    assert abs(float(loss2) - float(ref2)) <= 2e-2 * max(1.0, abs(float(ref2))), (
        float(loss2), float(ref2))

    print("KERNEL_OK")
</pallas_src>

<mosaic_0001>
module attributes {stable_mosaic.version = 11 : i64} {
  func.func @_congruence_lanes_kernel(%arg0: i32, %arg1: memref<16x16x1x128xf32, #tpu.memory_space<vmem>>, %arg2: memref<16x16x128xf32, #tpu.memory_space<vmem>>, %arg3: memref<16x16x128xf32, #tpu.memory_space<vmem>>, %arg4: memref<16x16x1x128xf32, #tpu.memory_space<vmem>>) attributes {dimension_semantics = [#tpu.dimension_semantics<parallel>], iteration_bounds = array<i64: 1>, scalar_prefetch = 0 : i64, scratch_operands = 0 : i64, tpu.core_type = #tpu.core_type<tc>, window_params = [{transform_indices = @transform_0, window_bounds = array<i64: 16, 16, 1, 128>}, {transform_indices = @transform_1, window_bounds = array<i64: 16, 16, 128>}, {transform_indices = @transform_2, window_bounds = array<i64: 16, 16, 128>}, {transform_indices = @transform_3, window_bounds = array<i64: 16, 16, 1, 128>}]} {
    %c0 = arith.constant 0 : index
    %c0_0 = arith.constant 0 : index
    %c0_1 = arith.constant 0 : index
    %c0_2 = arith.constant 0 : index
    %0 = vector.load %arg1[%c0, %c0_0, %c0_1, %c0_2] : memref<16x16x1x128xf32, #tpu.memory_space<vmem>>, vector<16x1x1x128xf32>
    %1 = vector.shape_cast %0 : vector<16x1x1x128xf32> to vector<16x1x128xf32>
    %c0_3 = arith.constant 0 : index
    %c0_4 = arith.constant 0 : index
    %c0_5 = arith.constant 0 : index
    %2 = vector.load %arg3[%c0_3, %c0_4, %c0_5] : memref<16x16x128xf32, #tpu.memory_space<vmem>>, vector<1x16x128xf32>
    %3 = vector.shape_cast %2 : vector<1x16x128xf32> to vector<16x128xf32>
    %4 = vector.shape_cast %3 : vector<16x128xf32> to vector<1x16x128xf32>
    %5 = vector.broadcast %1 : vector<16x1x128xf32> to vector<16x16x128xf32>
    %6 = vector.broadcast %4 : vector<1x16x128xf32> to vector<16x16x128xf32>
    %7 = arith.mulf %5, %6 : vector<16x16x128xf32>
    %c0_6 = arith.constant 0 : index
    %c1 = arith.constant 1 : index
    %c0_7 = arith.constant 0 : index
    %c0_8 = arith.constant 0 : index
    %8 = vector.load %arg1[%c0_6, %c1, %c0_7, %c0_8] : memref<16x16x1x128xf32, #tpu.memory_space<vmem>>, vector<16x1x1x128xf32>
    %9 = vector.shape_cast %8 : vector<16x1x1x128xf32> to vector<16x1x128xf32>
    %c1_9 = arith.constant 1 : index
    %c0_10 = arith.constant 0 : index
    %c0_11 = arith.constant 0 : index
    %10 = vector.load %arg3[%c1_9, %c0_10, %c0_11] : memref<16x16x128xf32, #tpu.memory_space<vmem>>, vector<1x16x128xf32>
    %11 = vector.shape_cast %10 : vector<1x16x128xf32> to vector<16x128xf32>
    %12 = vector.shape_cast %11 : vector<16x128xf32> to vector<1x16x128xf32>
    %13 = vector.broadcast %9 : vector<16x1x128xf32> to vector<16x16x128xf32>
    %14 = vector.broadcast %12 : vector<1x16x128xf32> to vector<16x16x128xf32>
    %15 = arith.mulf %13, %14 : vector<16x16x128xf32>
    %16 = arith.addf %7, %15 : vector<16x16x128xf32>
    %c0_12 = arith.constant 0 : index
    %c2 = arith.constant 2 : index
    %c0_13 = arith.constant 0 : index
    %c0_14 = arith.constant 0 : index
    %17 = vector.load %arg1[%c0_12, %c2, %c0_13, %c0_14] : memref<16x16x1x128xf32, #tpu.memory_space<vmem>>, vector<16x1x1x128xf32>
    %18 = vector.shape_cast %17 : vector<16x1x1x128xf32> to vector<16x1x128xf32>
    %c2_15 = arith.constant 2 : index
    %c0_16 = arith.constant 0 : index
    %c0_17 = arith.constant 0 : index
    %19 = vector.load %arg3[%c2_15, %c0_16, %c0_17] : memref<16x16x128xf32, #tpu.memory_space<vmem>>, vector<1x16x128xf32>
    %20 = vector.shape_cast %19 : vector<1x16x128xf32> to vector<16x128xf32>
    %21 = vector.shape_cast %20 : vector<16x128xf32> to vector<1x16x128xf32>
    %22 = vector.broadcast %18 : vector<16x1x128xf32> to vector<16x16x128xf32>
    %23 = vector.broadcast %21 : vector<1x16x128xf32> to vector<16x16x128xf32>
    %24 = arith.mulf %22, %23 : vector<16x16x128xf32>
    %25 = arith.addf %16, %24 : vector<16x16x128xf32>
    %c0_18 = arith.constant 0 : index
    %c3 = arith.constant 3 : index
    %c0_19 = arith.constant 0 : index
    %c0_20 = arith.constant 0 : index
    %26 = vector.load %arg1[%c0_18, %c3, %c0_19, %c0_20] : memref<16x16x1x128xf32, #tpu.memory_space<vmem>>, vector<16x1x1x128xf32>
    %27 = vector.shape_cast %26 : vector<16x1x1x128xf32> to vector<16x1x128xf32>
    %c3_21 = arith.constant 3 : index
    %c0_22 = arith.constant 0 : index
    %c0_23 = arith.constant 0 : index
    %28 = vector.load %arg3[%c3_21, %c0_22, %c0_23] : memref<16x16x128xf32, #tpu.memory_space<vmem>>, vector<1x16x128xf32>
    %29 = vector.shape_cast %28 : vector<1x16x128xf32> to vector<16x128xf32>
    %30 = vector.shape_cast %29 : vector<16x128xf32> to vector<1x16x128xf32>
    %31 = vector.broadcast %27 : vector<16x1x128xf32> to vector<16x16x128xf32>
    %32 = vector.broadcast %30 : vector<1x16x128xf32> to vector<16x16x128xf32>
    %33 = arith.mulf %31, %32 : vector<16x16x128xf32>
    %34 = arith.addf %25, %33 : vector<16x16x128xf32>
    %c0_24 = arith.constant 0 : index
    %c4 = arith.constant 4 : index
    %c0_25 = arith.constant 0 : index
    %c0_26 = arith.constant 0 : index
    %35 = vector.load %arg1[%c0_24, %c4, %c0_25, %c0_26] : memref<16x16x1x128xf32, #tpu.memory_space<vmem>>, vector<16x1x1x128xf32>
    %36 = vector.shape_cast %35 : vector<16x1x1x128xf32> to vector<16x1x128xf32>
    %c4_27 = arith.constant 4 : index
    %c0_28 = arith.constant 0 : index
    %c0_29 = arith.constant 0 : index
    %37 = vector.load %arg3[%c4_27, %c0_28, %c0_29] : memref<16x16x128xf32, #tpu.memory_space<vmem>>, vector<1x16x128xf32>
    %38 = vector.shape_cast %37 : vector<1x16x128xf32> to vector<16x128xf32>
    %39 = vector.shape_cast %38 : vector<16x128xf32> to vector<1x16x128xf32>
    %40 = vector.broadcast %36 : vector<16x1x128xf32> to vector<16x16x128xf32>
    %41 = vector.broadcast %39 : vector<1x16x128xf32> to vector<16x16x128xf32>
    %42 = arith.mulf %40, %41 : vector<16x16x128xf32>
    %43 = arith.addf %34, %42 : vector<16x16x128xf32>
    %c0_30 = arith.constant 0 : index
    %c5 = arith.constant 5 : index
    %c0_31 = arith.constant 0 : index
    %c0_32 = arith.constant 0 : index
    %44 = vector.load %arg1[%c0_30, %c5, %c0_31, %c0_32] : memref<16x16x1x128xf32, #tpu.memory_space<vmem>>, vector<16x1x1x128xf32>
    %45 = vector.shape_cast %44 : vector<16x1x1x128xf32> to vector<16x1x128xf32>
    %c5_33 = arith.constant 5 : index
    %c0_34 = arith.constant 0 : index
    %c0_35 = arith.constant 0 : index
    %46 = vector.load %arg3[%c5_33, %c0_34, %c0_35] : memref<16x16x128xf32, #tpu.memory_space<vmem>>, vector<1x16x128xf32>
    %47 = vector.shape_cast %46 : vector<1x16x128xf32> to vector<16x128xf32>
    %48 = vector.shape_cast %47 : vector<16x128xf32> to vector<1x16x128xf32>
    %49 = vector.broadcast %45 : vector<16x1x128xf32> to vector<16x16x128xf32>
    %50 = vector.broadcast %48 : vector<1x16x128xf32> to vector<16x16x128xf32>
    %51 = arith.mulf %49, %50 : vector<16x16x128xf32>
    %52 = arith.addf %43, %51 : vector<16x16x128xf32>
    %c0_36 = arith.constant 0 : index
    %c6 = arith.constant 6 : index
    %c0_37 = arith.constant 0 : index
    %c0_38 = arith.constant 0 : index
    %53 = vector.load %arg1[%c0_36, %c6, %c0_37, %c0_38] : memref<16x16x1x128xf32, #tpu.memory_space<vmem>>, vector<16x1x1x128xf32>
    %54 = vector.shape_cast %53 : vector<16x1x1x128xf32> to vector<16x1x128xf32>
    %c6_39 = arith.constant 6 : index
    %c0_40 = arith.constant 0 : index
    %c0_41 = arith.constant 0 : index
    %55 = vector.load %arg3[%c6_39, %c0_40, %c0_41] : memref<16x16x128xf32, #tpu.memory_space<vmem>>, vector<1x16x128xf32>
    %56 = vector.shape_cast %55 : vector<1x16x128xf32> to vector<16x128xf32>
    %57 = vector.shape_cast %56 : vector<16x128xf32> to vector<1x16x128xf32>
    %58 = vector.broadcast %54 : vector<16x1x128xf32> to vector<16x16x128xf32>
    %59 = vector.broadcast %57 : vector<1x16x128xf32> to vector<16x16x128xf32>
    %60 = arith.mulf %58, %59 : vector<16x16x128xf32>
    %61 = arith.addf %52, %60 : vector<16x16x128xf32>
    %c0_42 = arith.constant 0 : index
    %c7 = arith.constant 7 : index
    %c0_43 = arith.constant 0 : index
    %c0_44 = arith.constant 0 : index
    %62 = vector.load %arg1[%c0_42, %c7, %c0_43, %c0_44] : memref<16x16x1x128xf32, #tpu.memory_space<vmem>>, vector<16x1x1x128xf32>
    %63 = vector.shape_cast %62 : vector<16x1x1x128xf32> to vector<16x1x128xf32>
    %c7_45 = arith.constant 7 : index
    %c0_46 = arith.constant 0 : index
    %c0_47 = arith.constant 0 : index
    %64 = vector.load %arg3[%c7_45, %c0_46, %c0_47] : memref<16x16x128xf32, #tpu.memory_space<vmem>>, vector<1x16x128xf32>
    %65 = vector.shape_cast %64 : vector<1x16x128xf32> to vector<16x128xf32>
    %66 = vector.shape_cast %65 : vector<16x128xf32> to vector<1x16x128xf32>
    %67 = vector.broadcast %63 : vector<16x1x128xf32> to vector<16x16x128xf32>
    %68 = vector.broadcast %66 : vector<1x16x128xf32> to vector<16x16x128xf32>
    %69 = arith.mulf %67, %68 : vector<16x16x128xf32>
    %70 = arith.addf %61, %69 : vector<16x16x128xf32>
    %c0_48 = arith.constant 0 : index
    %c8 = arith.constant 8 : index
    %c0_49 = arith.constant 0 : index
    %c0_50 = arith.constant 0 : index
    %71 = vector.load %arg1[%c0_48, %c8, %c0_49, %c0_50] : memref<16x16x1x128xf32, #tpu.memory_space<vmem>>, vector<16x1x1x128xf32>
    %72 = vector.shape_cast %71 : vector<16x1x1x128xf32> to vector<16x1x128xf32>
    %c8_51 = arith.constant 8 : index
    %c0_52 = arith.constant 0 : index
    %c0_53 = arith.constant 0 : index
    %73 = vector.load %arg3[%c8_51, %c0_52, %c0_53] : memref<16x16x128xf32, #tpu.memory_space<vmem>>, vector<1x16x128xf32>
    %74 = vector.shape_cast %73 : vector<1x16x128xf32> to vector<16x128xf32>
    %75 = vector.shape_cast %74 : vector<16x128xf32> to vector<1x16x128xf32>
    %76 = vector.broadcast %72 : vector<16x1x128xf32> to vector<16x16x128xf32>
    %77 = vector.broadcast %75 : vector<1x16x128xf32> to vector<16x16x128xf32>
    %78 = arith.mulf %76, %77 : vector<16x16x128xf32>
    %79 = arith.addf %70, %78 : vector<16x16x128xf32>
    %c0_54 = arith.constant 0 : index
    %c9 = arith.constant 9 : index
    %c0_55 = arith.constant 0 : index
    %c0_56 = arith.constant 0 : index
    %80 = vector.load %arg1[%c0_54, %c9, %c0_55, %c0_56] : memref<16x16x1x128xf32, #tpu.memory_space<vmem>>, vector<16x1x1x128xf32>
    %81 = vector.shape_cast %80 : vector<16x1x1x128xf32> to vector<16x1x128xf32>
    %c9_57 = arith.constant 9 : index
    %c0_58 = arith.constant 0 : index
    %c0_59 = arith.constant 0 : index
    %82 = vector.load %arg3[%c9_57, %c0_58, %c0_59] : memref<16x16x128xf32, #tpu.memory_space<vmem>>, vector<1x16x128xf32>
    %83 = vector.shape_cast %82 : vector<1x16x128xf32> to vector<16x128xf32>
    %84 = vector.shape_cast %83 : vector<16x128xf32> to vector<1x16x128xf32>
    %85 = vector.broadcast %81 : vector<16x1x128xf32> to vector<16x16x128xf32>
    %86 = vector.broadcast %84 : vector<1x16x128xf32> to vector<16x16x128xf32>
    %87 = arith.mulf %85, %86 : vector<16x16x128xf32>
    %88 = arith.addf %79, %87 : vector<16x16x128xf32>
    %c0_60 = arith.constant 0 : index
    %c10 = arith.constant 10 : index
    %c0_61 = arith.constant 0 : index
    %c0_62 = arith.constant 0 : index
    %89 = vector.load %arg1[%c0_60, %c10, %c0_61, %c0_62] : memref<16x16x1x128xf32, #tpu.memory_space<vmem>>, vector<16x1x1x128xf32>
    %90 = vector.shape_cast %89 : vector<16x1x1x128xf32> to vector<16x1x128xf32>
    %c10_63 = arith.constant 10 : index
    %c0_64 = arith.constant 0 : index
    %c0_65 = arith.constant 0 : index
    %91 = vector.load %arg3[%c10_63, %c0_64, %c0_65] : memref<16x16x128xf32, #tpu.memory_space<vmem>>, vector<1x16x128xf32>
    %92 = vector.shape_cast %91 : vector<1x16x128xf32> to vector<16x128xf32>
    %93 = vector.shape_cast %92 : vector<16x128xf32> to vector<1x16x128xf32>
    %94 = vector.broadcast %90 : vector<16x1x128xf32> to vector<16x16x128xf32>
    %95 = vector.broadcast %93 : vector<1x16x128xf32> to vector<16x16x128xf32>
    %96 = arith.mulf %94, %95 : vector<16x16x128xf32>
    %97 = arith.addf %88, %96 : vector<16x16x128xf32>
    %c0_66 = arith.constant 0 : index
    %c11 = arith.constant 11 : index
    %c0_67 = arith.constant 0 : index
    %c0_68 = arith.constant 0 : index
    %98 = vector.load %arg1[%c0_66, %c11, %c0_67, %c0_68] : memref<16x16x1x128xf32, #tpu.memory_space<vmem>>, vector<16x1x1x128xf32>
    %99 = vector.shape_cast %98 : vector<16x1x1x128xf32> to vector<16x1x128xf32>
    %c11_69 = arith.constant 11 : index
    %c0_70 = arith.constant 0 : index
    %c0_71 = arith.constant 0 : index
    %100 = vector.load %arg3[%c11_69, %c0_70, %c0_71] : memref<16x16x128xf32, #tpu.memory_space<vmem>>, vector<1x16x128xf32>
    %101 = vector.shape_cast %100 : vector<1x16x128xf32> to vector<16x128xf32>
    %102 = vector.shape_cast %101 : vector<16x128xf32> to vector<1x16x128xf32>
    %103 = vector.broadcast %99 : vector<16x1x128xf32> to vector<16x16x128xf32>
    %104 = vector.broadcast %102 : vector<1x16x128xf32> to vector<16x16x128xf32>
    %105 = arith.mulf %103, %104 : vector<16x16x128xf32>
    %106 = arith.addf %97, %105 : vector<16x16x128xf32>
    %c0_72 = arith.constant 0 : index
    %c12 = arith.constant 12 : index
    %c0_73 = arith.constant 0 : index
    %c0_74 = arith.constant 0 : index
    %107 = vector.load %arg1[%c0_72, %c12, %c0_73, %c0_74] : memref<16x16x1x128xf32, #tpu.memory_space<vmem>>, vector<16x1x1x128xf32>
    %108 = vector.shape_cast %107 : vector<16x1x1x128xf32> to vector<16x1x128xf32>
    %c12_75 = arith.constant 12 : index
    %c0_76 = arith.constant 0 : index
    %c0_77 = arith.constant 0 : index
    %109 = vector.load %arg3[%c12_75, %c0_76, %c0_77] : memref<16x16x128xf32, #tpu.memory_space<vmem>>, vector<1x16x128xf32>
    %110 = vector.shape_cast %109 : vector<1x16x128xf32> to vector<16x128xf32>
    %111 = vector.shape_cast %110 : vector<16x128xf32> to vector<1x16x128xf32>
    %112 = vector.broadcast %108 : vector<16x1x128xf32> to vector<16x16x128xf32>
    %113 = vector.broadcast %111 : vector<1x16x128xf32> to vector<16x16x128xf32>
    %114 = arith.mulf %112, %113 : vector<16x16x128xf32>
    %115 = arith.addf %106, %114 : vector<16x16x128xf32>
    %c0_78 = arith.constant 0 : index
    %c13 = arith.constant 13 : index
    %c0_79 = arith.constant 0 : index
    %c0_80 = arith.constant 0 : index
    %116 = vector.load %arg1[%c0_78, %c13, %c0_79, %c0_80] : memref<16x16x1x128xf32, #tpu.memory_space<vmem>>, vector<16x1x1x128xf32>
    %117 = vector.shape_cast %116 : vector<16x1x1x128xf32> to vector<16x1x128xf32>
    %c13_81 = arith.constant 13 : index
    %c0_82 = arith.constant 0 : index
    %c0_83 = arith.constant 0 : index
    %118 = vector.load %arg3[%c13_81, %c0_82, %c0_83] : memref<16x16x128xf32, #tpu.memory_space<vmem>>, vector<1x16x128xf32>
    %119 = vector.shape_cast %118 : vector<1x16x128xf32> to vector<16x128xf32>
    %120 = vector.shape_cast %119 : vector<16x128xf32> to vector<1x16x128xf32>
    %121 = vector.broadcast %117 : vector<16x1x128xf32> to vector<16x16x128xf32>
    %122 = vector.broadcast %120 : vector<1x16x128xf32> to vector<16x16x128xf32>
    %123 = arith.mulf %121, %122 : vector<16x16x128xf32>
    %124 = arith.addf %115, %123 : vector<16x16x128xf32>
    %c0_84 = arith.constant 0 : index
    %c14 = arith.constant 14 : index
    %c0_85 = arith.constant 0 : index
    %c0_86 = arith.constant 0 : index
    %125 = vector.load %arg1[%c0_84, %c14, %c0_85, %c0_86] : memref<16x16x1x128xf32, #tpu.memory_space<vmem>>, vector<16x1x1x128xf32>
    %126 = vector.shape_cast %125 : vector<16x1x1x128xf32> to vector<16x1x128xf32>
    %c14_87 = arith.constant 14 : index
    %c0_88 = arith.constant 0 : index
    %c0_89 = arith.constant 0 : index
    %127 = vector.load %arg3[%c14_87, %c0_88, %c0_89] : memref<16x16x128xf32, #tpu.memory_space<vmem>>, vector<1x16x128xf32>
    %128 = vector.shape_cast %127 : vector<1x16x128xf32> to vector<16x128xf32>
    %129 = vector.shape_cast %128 : vector<16x128xf32> to vector<1x16x128xf32>
    %130 = vector.broadcast %126 : vector<16x1x128xf32> to vector<16x16x128xf32>
    %131 = vector.broadcast %129 : vector<1x16x128xf32> to vector<16x16x128xf32>
    %132 = arith.mulf %130, %131 : vector<16x16x128xf32>
    %133 = arith.addf %124, %132 : vector<16x16x128xf32>
    %c0_90 = arith.constant 0 : index
    %c15 = arith.constant 15 : index
    %c0_91 = arith.constant 0 : index
    %c0_92 = arith.constant 0 : index
    %134 = vector.load %arg1[%c0_90, %c15, %c0_91, %c0_92] : memref<16x16x1x128xf32, #tpu.memory_space<vmem>>, vector<16x1x1x128xf32>
    %135 = vector.shape_cast %134 : vector<16x1x1x128xf32> to vector<16x1x128xf32>
    %c15_93 = arith.constant 15 : index
    %c0_94 = arith.constant 0 : index
    %c0_95 = arith.constant 0 : index
    %136 = vector.load %arg3[%c15_93, %c0_94, %c0_95] : memref<16x16x128xf32, #tpu.memory_space<vmem>>, vector<1x16x128xf32>
    %137 = vector.shape_cast %136 : vector<1x16x128xf32> to vector<16x128xf32>
    %138 = vector.shape_cast %137 : vector<16x128xf32> to vector<1x16x128xf32>
    %139 = vector.broadcast %135 : vector<16x1x128xf32> to vector<16x16x128xf32>
    %140 = vector.broadcast %138 : vector<1x16x128xf32> to vector<16x16x128xf32>
    %141 = arith.mulf %139, %140 : vector<16x16x128xf32>
    %142 = arith.addf %133, %141 : vector<16x16x128xf32>
    %c0_96 = arith.constant 0 : index
    %c0_97 = arith.constant 0 : index
    %c0_98 = arith.constant 0 : index
    %143 = vector.load %arg2[%c0_96, %c0_97, %c0_98] : memref<16x16x128xf32, #tpu.memory_space<vmem>>, vector<16x16x128xf32>
    %144 = vector.extract_strided_slice %142 {offsets = [0, 0, 0], sizes = [1, 16, 128], strides = [1, 1, 1]} : vector<16x16x128xf32> to vector<1x16x128xf32>
    %145 = vector.shape_cast %144 : vector<1x16x128xf32> to vector<16x128xf32>
    %146 = vector.shape_cast %145 : vector<16x128xf32> to vector<1x16x128xf32>
    %147 = vector.broadcast %146 : vector<1x16x128xf32> to vector<16x16x128xf32>
    %148 = arith.mulf %143, %147 : vector<16x16x128xf32>
    %cst = arith.constant dense<0.000000e+00> : vector<16x128xf32>
    %149 = vector.multi_reduction <add>, %148, %cst [1] : vector<16x16x128xf32> to vector<16x128xf32>
    %150 = vector.shape_cast %149 : vector<16x128xf32> to vector<16x1x128xf32>
    %c0_99 = arith.constant 0 : index
    %c0_100 = arith.constant 0 : index
    %c0_101 = arith.constant 0 : index
    %c0_102 = arith.constant 0 : index
    %151 = vector.load %arg4[%c0_99, %c0_100, %c0_101, %c0_102] : memref<16x16x1x128xf32, #tpu.memory_space<vmem>>, vector<1x16x1x128xf32>
    %152 = vector.shape_cast %151 : vector<1x16x1x128xf32> to vector<16x1x128xf32>
    %153 = vector.shape_cast %150 : vector<16x1x128xf32> to vector<1x16x1x128xf32>
    tpu.vector_store %arg4[%c0_99, %c0_100, %c0_101, %c0_102], %153 {strides = array<i32>} : memref<16x16x1x128xf32, #tpu.memory_space<vmem>>, vector<1x16x1x128xf32>,
    %154 = vector.extract_strided_slice %142 {offsets = [1, 0, 0], sizes = [1, 16, 128], strides = [1, 1, 1]} : vector<16x16x128xf32> to vector<1x16x128xf32>
    %155 = vector.shape_cast %154 : vector<1x16x128xf32> to vector<16x128xf32>
    %156 = vector.shape_cast %155 : vector<16x128xf32> to vector<1x16x128xf32>
    %157 = vector.broadcast %156 : vector<1x16x128xf32> to vector<16x16x128xf32>
    %158 = arith.mulf %143, %157 : vector<16x16x128xf32>
    %cst_103 = arith.constant dense<0.000000e+00> : vector<16x128xf32>
    %159 = vector.multi_reduction <add>, %158, %cst_103 [1] : vector<16x16x128xf32> to vector<16x128xf32>
    %160 = vector.shape_cast %159 : vector<16x128xf32> to vector<16x1x128xf32>
    %c1_104 = arith.constant 1 : index
    %c0_105 = arith.constant 0 : index
    %c0_106 = arith.constant 0 : index
    %c0_107 = arith.constant 0 : index
    %161 = vector.load %arg4[%c1_104, %c0_105, %c0_106, %c0_107] : memref<16x16x1x128xf32, #tpu.memory_space<vmem>>, vector<1x16x1x128xf32>
    %162 = vector.shape_cast %161 : vector<1x16x1x128xf32> to vector<16x1x128xf32>
    %163 = vector.shape_cast %160 : vector<16x1x128xf32> to vector<1x16x1x128xf32>
    tpu.vector_store %arg4[%c1_104, %c0_105, %c0_106, %c0_107], %163 {strides = array<i32>} : memref<16x16x1x128xf32, #tpu.memory_space<vmem>>, vector<1x16x1x128xf32>,
    %164 = vector.extract_strided_slice %142 {offsets = [2, 0, 0], sizes = [1, 16, 128], strides = [1, 1, 1]} : vector<16x16x128xf32> to vector<1x16x128xf32>
    %165 = vector.shape_cast %164 : vector<1x16x128xf32> to vector<16x128xf32>
    %166 = vector.shape_cast %165 : vector<16x128xf32> to vector<1x16x128xf32>
    %167 = vector.broadcast %166 : vector<1x16x128xf32> to vector<16x16x128xf32>
    %168 = arith.mulf %143, %167 : vector<16x16x128xf32>
    %cst_108 = arith.constant dense<0.000000e+00> : vector<16x128xf32>
    %169 = vector.multi_reduction <add>, %168, %cst_108 [1] : vector<16x16x128xf32> to vector<16x128xf32>
    %170 = vector.shape_cast %169 : vector<16x128xf32> to vector<16x1x128xf32>
    %c2_109 = arith.constant 2 : index
    %c0_110 = arith.constant 0 : index
    %c0_111 = arith.constant 0 : index
    %c0_112 = arith.constant 0 : index
    %171 = vector.load %arg4[%c2_109, %c0_110, %c0_111, %c0_112] : memref<16x16x1x128xf32, #tpu.memory_space<vmem>>, vector<1x16x1x128xf32>
    %172 = vector.shape_cast %171 : vector<1x16x1x128xf32> to vector<16x1x128xf32>
    %173 = vector.shape_cast %170 : vector<16x1x128xf32> to vector<1x16x1x128xf32>
    tpu.vector_store %arg4[%c2_109, %c0_110, %c0_111, %c0_112], %173 {strides = array<i32>} : memref<16x16x1x128xf32, #tpu.memory_space<vmem>>, vector<1x16x1x128xf32>,
    %174 = vector.extract_strided_slice %142 {offsets = [3, 0, 0], sizes = [1, 16, 128], strides = [1, 1, 1]} : vector<16x16x128xf32> to vector<1x16x128xf32>
    %175 = vector.shape_cast %174 : vector<1x16x128xf32> to vector<16x128xf32>
    %176 = vector.shape_cast %175 : vector<16x128xf32> to vector<1x16x128xf32>
    %177 = vector.broadcast %176 : vector<1x16x128xf32> to vector<16x16x128xf32>
    %178 = arith.mulf %143, %177 : vector<16x16x128xf32>
    %cst_113 = arith.constant dense<0.000000e+00> : vector<16x128xf32>
    %179 = vector.multi_reduction <add>, %178, %cst_113 [1] : vector<16x16x128xf32> to vector<16x128xf32>
    %180 = vector.shape_cast %179 : vector<16x128xf32> to vector<16x1x128xf32>
    %c3_114 = arith.constant 3 : index
    %c0_115 = arith.constant 0 : index
    %c0_116 = arith.constant 0 : index
    %c0_117 = arith.constant 0 : index
    %181 = vector.load %arg4[%c3_114, %c0_115, %c0_116, %c0_117] : memref<16x16x1x128xf32, #tpu.memory_space<vmem>>, vector<1x16x1x128xf32>
    %182 = vector.shape_cast %181 : vector<1x16x1x128xf32> to vector<16x1x128xf32>
    %183 = vector.shape_cast %180 : vector<16x1x128xf32> to vector<1x16x1x128xf32>
    tpu.vector_store %arg4[%c3_114, %c0_115, %c0_116, %c0_117], %183 {strides = array<i32>} : memref<16x16x1x128xf32, #tpu.memory_space<vmem>>, vector<1x16x1x128xf32>,
    %184 = vector.extract_strided_slice %142 {offsets = [4, 0, 0], sizes = [1, 16, 128], strides = [1, 1, 1]} : vector<16x16x128xf32> to vector<1x16x128xf32>
    %185 = vector.shape_cast %184 : vector<1x16x128xf32> to vector<16x128xf32>
    %186 = vector.shape_cast %185 : vector<16x128xf32> to vector<1x16x128xf32>
    %187 = vector.broadcast %186 : vector<1x16x128xf32> to vector<16x16x128xf32>
    %188 = arith.mulf %143, %187 : vector<16x16x128xf32>
    %cst_118 = arith.constant dense<0.000000e+00> : vector<16x128xf32>
    %189 = vector.multi_reduction <add>, %188, %cst_118 [1] : vector<16x16x128xf32> to vector<16x128xf32>
    %190 = vector.shape_cast %189 : vector<16x128xf32> to vector<16x1x128xf32>
    %c4_119 = arith.constant 4 : index
    %c0_120 = arith.constant 0 : index
    %c0_121 = arith.constant 0 : index
    %c0_122 = arith.constant 0 : index
    %191 = vector.load %arg4[%c4_119, %c0_120, %c0_121, %c0_122] : memref<16x16x1x128xf32, #tpu.memory_space<vmem>>, vector<1x16x1x128xf32>
    %192 = vector.shape_cast %191 : vector<1x16x1x128xf32> to vector<16x1x128xf32>
    %193 = vector.shape_cast %190 : vector<16x1x128xf32> to vector<1x16x1x128xf32>
    tpu.vector_store %arg4[%c4_119, %c0_120, %c0_121, %c0_122], %193 {strides = array<i32>} : memref<16x16x1x128xf32, #tpu.memory_space<vmem>>, vector<1x16x1x128xf32>,
    %194 = vector.extract_strided_slice %142 {offsets = [5, 0, 0], sizes = [1, 16, 128], strides = [1, 1, 1]} : vector<16x16x128xf32> to vector<1x16x128xf32>
    %195 = vector.shape_cast %194 : vector<1x16x128xf32> to vector<16x128xf32>
    %196 = vector.shape_cast %195 : vector<16x128xf32> to vector<1x16x128xf32>
    %197 = vector.broadcast %196 : vector<1x16x128xf32> to vector<16x16x128xf32>
    %198 = arith.mulf %143, %197 : vector<16x16x128xf32>
    %cst_123 = arith.constant dense<0.000000e+00> : vector<16x128xf32>
    %199 = vector.multi_reduction <add>, %198, %cst_123 [1] : vector<16x16x128xf32> to vector<16x128xf32>
    %200 = vector.shape_cast %199 : vector<16x128xf32> to vector<16x1x128xf32>
    %c5_124 = arith.constant 5 : index
    %c0_125 = arith.constant 0 : index
    %c0_126 = arith.constant 0 : index
    %c0_127 = arith.constant 0 : index
    %201 = vector.load %arg4[%c5_124, %c0_125, %c0_126, %c0_127] : memref<16x16x1x128xf32, #tpu.memory_space<vmem>>, vector<1x16x1x128xf32>
    %202 = vector.shape_cast %201 : vector<1x16x1x128xf32> to vector<16x1x128xf32>
    %203 = vector.shape_cast %200 : vector<16x1x128xf32> to vector<1x16x1x128xf32>
    tpu.vector_store %arg4[%c5_124, %c0_125, %c0_126, %c0_127], %203 {strides = array<i32>} : memref<16x16x1x128xf32, #tpu.memory_space<vmem>>, vector<1x16x1x128xf32>,
    %204 = vector.extract_strided_slice %142 {offsets = [6, 0, 0], sizes = [1, 16, 128], strides = [1, 1, 1]} : vector<16x16x128xf32> to vector<1x16x128xf32>
    %205 = vector.shape_cast %204 : vector<1x16x128xf32> to vector<16x128xf32>
    %206 = vector.shape_cast %205 : vector<16x128xf32> to vector<1x16x128xf32>
    %207 = vector.broadcast %206 : vector<1x16x128xf32> to vector<16x16x128xf32>
    %208 = arith.mulf %143, %207 : vector<16x16x128xf32>
    %cst_128 = arith.constant dense<0.000000e+00> : vector<16x128xf32>
    %209 = vector.multi_reduction <add>, %208, %cst_128 [1] : vector<16x16x128xf32> to vector<16x128xf32>
    %210 = vector.shape_cast %209 : vector<16x128xf32> to vector<16x1x128xf32>
    %c6_129 = arith.constant 6 : index
    %c0_130 = arith.constant 0 : index
    %c0_131 = arith.constant 0 : index
    %c0_132 = arith.constant 0 : index
    %211 = vector.load %arg4[%c6_129, %c0_130, %c0_131, %c0_132] : memref<16x16x1x128xf32, #tpu.memory_space<vmem>>, vector<1x16x1x128xf32>
    %212 = vector.shape_cast %211 : vector<1x16x1x128xf32> to vector<16x1x128xf32>
    %213 = vector.shape_cast %210 : vector<16x1x128xf32> to vector<1x16x1x128xf32>
    tpu.vector_store %arg4[%c6_129, %c0_130, %c0_131, %c0_132], %213 {strides = array<i32>} : memref<16x16x1x128xf32, #tpu.memory_space<vmem>>, vector<1x16x1x128xf32>,
    %214 = vector.extract_strided_slice %142 {offsets = [7, 0, 0], sizes = [1, 16, 128], strides = [1, 1, 1]} : vector<16x16x128xf32> to vector<1x16x128xf32>
    %215 = vector.shape_cast %214 : vector<1x16x128xf32> to vector<16x128xf32>
    %216 = vector.shape_cast %215 : vector<16x128xf32> to vector<1x16x128xf32>
    %217 = vector.broadcast %216 : vector<1x16x128xf32> to vector<16x16x128xf32>
    %218 = arith.mulf %143, %217 : vector<16x16x128xf32>
    %cst_133 = arith.constant dense<0.000000e+00> : vector<16x128xf32>
    %219 = vector.multi_reduction <add>, %218, %cst_133 [1] : vector<16x16x128xf32> to vector<16x128xf32>
    %220 = vector.shape_cast %219 : vector<16x128xf32> to vector<16x1x128xf32>
    %c7_134 = arith.constant 7 : index
    %c0_135 = arith.constant 0 : index
    %c0_136 = arith.constant 0 : index
    %c0_137 = arith.constant 0 : index
    %221 = vector.load %arg4[%c7_134, %c0_135, %c0_136, %c0_137] : memref<16x16x1x128xf32, #tpu.memory_space<vmem>>, vector<1x16x1x128xf32>
    %222 = vector.shape_cast %221 : vector<1x16x1x128xf32> to vector<16x1x128xf32>
    %223 = vector.shape_cast %220 : vector<16x1x128xf32> to vector<1x16x1x128xf32>
    tpu.vector_store %arg4[%c7_134, %c0_135, %c0_136, %c0_137], %223 {strides = array<i32>} : memref<16x16x1x128xf32, #tpu.memory_space<vmem>>, vector<1x16x1x128xf32>,
    %224 = vector.extract_strided_slice %142 {offsets = [8, 0, 0], sizes = [1, 16, 128], strides = [1, 1, 1]} : vector<16x16x128xf32> to vector<1x16x128xf32>
    %225 = vector.shape_cast %224 : vector<1x16x128xf32> to vector<16x128xf32>
    %226 = vector.shape_cast %225 : vector<16x128xf32> to vector<1x16x128xf32>
    %227 = vector.broadcast %226 : vector<1x16x128xf32> to vector<16x16x128xf32>
    %228 = arith.mulf %143, %227 : vector<16x16x128xf32>
    %cst_138 = arith.constant dense<0.000000e+00> : vector<16x128xf32>
    %229 = vector.multi_reduction <add>, %228, %cst_138 [1] : vector<16x16x128xf32> to vector<16x128xf32>
    %230 = vector.shape_cast %229 : vector<16x128xf32> to vector<16x1x128xf32>
    %c8_139 = arith.constant 8 : index
    %c0_140 = arith.constant 0 : index
    %c0_141 = arith.constant 0 : index
    %c0_142 = arith.constant 0 : index
    %231 = vector.load %arg4[%c8_139, %c0_140, %c0_141, %c0_142] : memref<16x16x1x128xf32, #tpu.memory_space<vmem>>, vector<1x16x1x128xf32>
    %232 = vector.shape_cast %231 : vector<1x16x1x128xf32> to vector<16x1x128xf32>
    %233 = vector.shape_cast %230 : vector<16x1x128xf32> to vector<1x16x1x128xf32>
    tpu.vector_store %arg4[%c8_139, %c0_140, %c0_141, %c0_142], %233 {strides = array<i32>} : memref<16x16x1x128xf32, #tpu.memory_space<vmem>>, vector<1x16x1x128xf32>,
    %234 = vector.extract_strided_slice %142 {offsets = [9, 0, 0], sizes = [1, 16, 128], strides = [1, 1, 1]} : vector<16x16x128xf32> to vector<1x16x128xf32>
    %235 = vector.shape_cast %234 : vector<1x16x128xf32> to vector<16x128xf32>
    %236 = vector.shape_cast %235 : vector<16x128xf32> to vector<1x16x128xf32>
    %237 = vector.broadcast %236 : vector<1x16x128xf32> to vector<16x16x128xf32>
    %238 = arith.mulf %143, %237 : vector<16x16x128xf32>
    %cst_143 = arith.constant dense<0.000000e+00> : vector<16x128xf32>
    %239 = vector.multi_reduction <add>, %238, %cst_143 [1] : vector<16x16x128xf32> to vector<16x128xf32>
    %240 = vector.shape_cast %239 : vector<16x128xf32> to vector<16x1x128xf32>
    %c9_144 = arith.constant 9 : index
    %c0_145 = arith.constant 0 : index
    %c0_146 = arith.constant 0 : index
    %c0_147 = arith.constant 0 : index
    %241 = vector.load %arg4[%c9_144, %c0_145, %c0_146, %c0_147] : memref<16x16x1x128xf32, #tpu.memory_space<vmem>>, vector<1x16x1x128xf32>
    %242 = vector.shape_cast %241 : vector<1x16x1x128xf32> to vector<16x1x128xf32>
    %243 = vector.shape_cast %240 : vector<16x1x128xf32> to vector<1x16x1x128xf32>
    tpu.vector_store %arg4[%c9_144, %c0_145, %c0_146, %c0_147], %243 {strides = array<i32>} : memref<16x16x1x128xf32, #tpu.memory_space<vmem>>, vector<1x16x1x128xf32>,
    %244 = vector.extract_strided_slice %142 {offsets = [10, 0, 0], sizes = [1, 16, 128], strides = [1, 1, 1]} : vector<16x16x128xf32> to vector<1x16x128xf32>
    %245 = vector.shape_cast %244 : vector<1x16x128xf32> to vector<16x128xf32>
    %246 = vector.shape_cast %245 : vector<16x128xf32> to vector<1x16x128xf32>
    %247 = vector.broadcast %246 : vector<1x16x128xf32> to vector<16x16x128xf32>
    %248 = arith.mulf %143, %247 : vector<16x16x128xf32>
    %cst_148 = arith.constant dense<0.000000e+00> : vector<16x128xf32>
    %249 = vector.multi_reduction <add>, %248, %cst_148 [1] : vector<16x16x128xf32> to vector<16x128xf32>
    %250 = vector.shape_cast %249 : vector<16x128xf32> to vector<16x1x128xf32>
    %c10_149 = arith.constant 10 : index
    %c0_150 = arith.constant 0 : index
    %c0_151 = arith.constant 0 : index
    %c0_152 = arith.constant 0 : index
    %251 = vector.load %arg4[%c10_149, %c0_150, %c0_151, %c0_152] : memref<16x16x1x128xf32, #tpu.memory_space<vmem>>, vector<1x16x1x128xf32>
    %252 = vector.shape_cast %251 : vector<1x16x1x128xf32> to vector<16x1x128xf32>
    %253 = vector.shape_cast %250 : vector<16x1x128xf32> to vector<1x16x1x128xf32>
    tpu.vector_store %arg4[%c10_149, %c0_150, %c0_151, %c0_152], %253 {strides = array<i32>} : memref<16x16x1x128xf32, #tpu.memory_space<vmem>>, vector<1x16x1x128xf32>,
    %254 = vector.extract_strided_slice %142 {offsets = [11, 0, 0], sizes = [1, 16, 128], strides = [1, 1, 1]} : vector<16x16x128xf32> to vector<1x16x128xf32>
    %255 = vector.shape_cast %254 : vector<1x16x128xf32> to vector<16x128xf32>
    %256 = vector.shape_cast %255 : vector<16x128xf32> to vector<1x16x128xf32>
    %257 = vector.broadcast %256 : vector<1x16x128xf32> to vector<16x16x128xf32>
    %258 = arith.mulf %143, %257 : vector<16x16x128xf32>
    %cst_153 = arith.constant dense<0.000000e+00> : vector<16x128xf32>
    %259 = vector.multi_reduction <add>, %258, %cst_153 [1] : vector<16x16x128xf32> to vector<16x128xf32>
    %260 = vector.shape_cast %259 : vector<16x128xf32> to vector<16x1x128xf32>
    %c11_154 = arith.constant 11 : index
    %c0_155 = arith.constant 0 : index
    %c0_156 = arith.constant 0 : index
    %c0_157 = arith.constant 0 : index
    %261 = vector.load %arg4[%c11_154, %c0_155, %c0_156, %c0_157] : memref<16x16x1x128xf32, #tpu.memory_space<vmem>>, vector<1x16x1x128xf32>
    %262 = vector.shape_cast %261 : vector<1x16x1x128xf32> to vector<16x1x128xf32>
    %263 = vector.shape_cast %260 : vector<16x1x128xf32> to vector<1x16x1x128xf32>
    tpu.vector_store %arg4[%c11_154, %c0_155, %c0_156, %c0_157], %263 {strides = array<i32>} : memref<16x16x1x128xf32, #tpu.memory_space<vmem>>, vector<1x16x1x128xf32>,
    %264 = vector.extract_strided_slice %142 {offsets = [12, 0, 0], sizes = [1, 16, 128], strides = [1, 1, 1]} : vector<16x16x128xf32> to vector<1x16x128xf32>
    %265 = vector.shape_cast %264 : vector<1x16x128xf32> to vector<16x128xf32>
    %266 = vector.shape_cast %265 : vector<16x128xf32> to vector<1x16x128xf32>
    %267 = vector.broadcast %266 : vector<1x16x128xf32> to vector<16x16x128xf32>
    %268 = arith.mulf %143, %267 : vector<16x16x128xf32>
    %cst_158 = arith.constant dense<0.000000e+00> : vector<16x128xf32>
    %269 = vector.multi_reduction <add>, %268, %cst_158 [1] : vector<16x16x128xf32> to vector<16x128xf32>
    %270 = vector.shape_cast %269 : vector<16x128xf32> to vector<16x1x128xf32>
    %c12_159 = arith.constant 12 : index
    %c0_160 = arith.constant 0 : index
    %c0_161 = arith.constant 0 : index
    %c0_162 = arith.constant 0 : index
    %271 = vector.load %arg4[%c12_159, %c0_160, %c0_161, %c0_162] : memref<16x16x1x128xf32, #tpu.memory_space<vmem>>, vector<1x16x1x128xf32>
    %272 = vector.shape_cast %271 : vector<1x16x1x128xf32> to vector<16x1x128xf32>
    %273 = vector.shape_cast %270 : vector<16x1x128xf32> to vector<1x16x1x128xf32>
    tpu.vector_store %arg4[%c12_159, %c0_160, %c0_161, %c0_162], %273 {strides = array<i32>} : memref<16x16x1x128xf32, #tpu.memory_space<vmem>>, vector<1x16x1x128xf32>,
    %274 = vector.extract_strided_slice %142 {offsets = [13, 0, 0], sizes = [1, 16, 128], strides = [1, 1, 1]} : vector<16x16x128xf32> to vector<1x16x128xf32>
    %275 = vector.shape_cast %274 : vector<1x16x128xf32> to vector<16x128xf32>
    %276 = vector.shape_cast %275 : vector<16x128xf32> to vector<1x16x128xf32>
    %277 = vector.broadcast %276 : vector<1x16x128xf32> to vector<16x16x128xf32>
    %278 = arith.mulf %143, %277 : vector<16x16x128xf32>
    %cst_163 = arith.constant dense<0.000000e+00> : vector<16x128xf32>
    %279 = vector.multi_reduction <add>, %278, %cst_163 [1] : vector<16x16x128xf32> to vector<16x128xf32>
    %280 = vector.shape_cast %279 : vector<16x128xf32> to vector<16x1x128xf32>
    %c13_164 = arith.constant 13 : index
    %c0_165 = arith.constant 0 : index
    %c0_166 = arith.constant 0 : index
    %c0_167 = arith.constant 0 : index
    %281 = vector.load %arg4[%c13_164, %c0_165, %c0_166, %c0_167] : memref<16x16x1x128xf32, #tpu.memory_space<vmem>>, vector<1x16x1x128xf32>
    %282 = vector.shape_cast %281 : vector<1x16x1x128xf32> to vector<16x1x128xf32>
    %283 = vector.shape_cast %280 : vector<16x1x128xf32> to vector<1x16x1x128xf32>
    tpu.vector_store %arg4[%c13_164, %c0_165, %c0_166, %c0_167], %283 {strides = array<i32>} : memref<16x16x1x128xf32, #tpu.memory_space<vmem>>, vector<1x16x1x128xf32>,
    %284 = vector.extract_strided_slice %142 {offsets = [14, 0, 0], sizes = [1, 16, 128], strides = [1, 1, 1]} : vector<16x16x128xf32> to vector<1x16x128xf32>
    %285 = vector.shape_cast %284 : vector<1x16x128xf32> to vector<16x128xf32>
    %286 = vector.shape_cast %285 : vector<16x128xf32> to vector<1x16x128xf32>
    %287 = vector.broadcast %286 : vector<1x16x128xf32> to vector<16x16x128xf32>
    %288 = arith.mulf %143, %287 : vector<16x16x128xf32>
    %cst_168 = arith.constant dense<0.000000e+00> : vector<16x128xf32>
    %289 = vector.multi_reduction <add>, %288, %cst_168 [1] : vector<16x16x128xf32> to vector<16x128xf32>
    %290 = vector.shape_cast %289 : vector<16x128xf32> to vector<16x1x128xf32>
    %c14_169 = arith.constant 14 : index
    %c0_170 = arith.constant 0 : index
    %c0_171 = arith.constant 0 : index
    %c0_172 = arith.constant 0 : index
    %291 = vector.load %arg4[%c14_169, %c0_170, %c0_171, %c0_172] : memref<16x16x1x128xf32, #tpu.memory_space<vmem>>, vector<1x16x1x128xf32>
    %292 = vector.shape_cast %291 : vector<1x16x1x128xf32> to vector<16x1x128xf32>
    %293 = vector.shape_cast %290 : vector<16x1x128xf32> to vector<1x16x1x128xf32>
    tpu.vector_store %arg4[%c14_169, %c0_170, %c0_171, %c0_172], %293 {strides = array<i32>} : memref<16x16x1x128xf32, #tpu.memory_space<vmem>>, vector<1x16x1x128xf32>,
    %294 = vector.extract_strided_slice %142 {offsets = [15, 0, 0], sizes = [1, 16, 128], strides = [1, 1, 1]} : vector<16x16x128xf32> to vector<1x16x128xf32>
    %295 = vector.shape_cast %294 : vector<1x16x128xf32> to vector<16x128xf32>
    %296 = vector.shape_cast %295 : vector<16x128xf32> to vector<1x16x128xf32>
    %297 = vector.broadcast %296 : vector<1x16x128xf32> to vector<16x16x128xf32>
    %298 = arith.mulf %143, %297 : vector<16x16x128xf32>
    %cst_173 = arith.constant dense<0.000000e+00> : vector<16x128xf32>
    %299 = vector.multi_reduction <add>, %298, %cst_173 [1] : vector<16x16x128xf32> to vector<16x128xf32>
    %300 = vector.shape_cast %299 : vector<16x128xf32> to vector<16x1x128xf32>
    %c15_174 = arith.constant 15 : index
    %c0_175 = arith.constant 0 : index
    %c0_176 = arith.constant 0 : index
    %c0_177 = arith.constant 0 : index
    %301 = vector.load %arg4[%c15_174, %c0_175, %c0_176, %c0_177] : memref<16x16x1x128xf32, #tpu.memory_space<vmem>>, vector<1x16x1x128xf32>
    %302 = vector.shape_cast %301 : vector<1x16x1x128xf32> to vector<16x1x128xf32>
    %303 = vector.shape_cast %300 : vector<16x1x128xf32> to vector<1x16x1x128xf32>
    tpu.vector_store %arg4[%c15_174, %c0_175, %c0_176, %c0_177], %303 {strides = array<i32>} : memref<16x16x1x128xf32, #tpu.memory_space<vmem>>, vector<1x16x1x128xf32>,
    return
  }
  func.func @transform_0(%arg0: i32) -> (i32, i32, i32, i32) {
    %c0_i32 = arith.constant 0 : i32
    %c0_i32_0 = arith.constant 0 : i32
    %c0_i32_1 = arith.constant 0 : i32
    %c0_i32_2 = arith.constant 0 : i32
    return %c0_i32, %c0_i32_0, %c0_i32_1, %arg0 : i32, i32, i32, i32
  }
  func.func @transform_1(%arg0: i32) -> (i32, i32, i32) {
    %c0_i32 = arith.constant 0 : i32
    %c0_i32_0 = arith.constant 0 : i32
    %c0_i32_1 = arith.constant 0 : i32
    return %c0_i32, %c0_i32_0, %arg0 : i32, i32, i32
  }
  func.func @transform_2(%arg0: i32) -> (i32, i32, i32) {
    %c0_i32 = arith.constant 0 : i32
    %c0_i32_0 = arith.constant 0 : i32
    %c0_i32_1 = arith.constant 0 : i32
    return %c0_i32, %c0_i32_0, %arg0 : i32, i32, i32
  }
  func.func @transform_3(%arg0: i32) -> (i32, i32, i32, i32) {
    %c0_i32 = arith.constant 0 : i32
    %c0_i32_0 = arith.constant 0 : i32
    %c0_i32_1 = arith.constant 0 : i32
    %c0_i32_2 = arith.constant 0 : i32
    return %c0_i32, %c0_i32_0, %c0_i32_1, %arg0 : i32, i32, i32, i32
  }
}

</mosaic_0001>

<llo_original>
// kernel: custom-call.7
$region0: #{custom-call.7}
  %s0 = inlined_call_operand.vmem [shape: f32[8,16,16], index: 0, kind: input, shape index: {}]
  %s1 = inlined_call_operand.vmem [shape: f32[8,16,16], index: 1, kind: output, shape index: {}]
  $region1: #{custom-call.7} parent=0
    #allocation0 [shape = 'u8[16384]{0}', space=vmem, size = 0x4000, scoped, tag = 'operand span for operand 0']
    #allocation1 [shape = 'u8[16384]{0}', space=vmem, size = 0x4000, scoped, tag = 'operand span for operand 1']
    loop: start=0, step=1, limit=10
    $region2: #{custom-call.7} parent=1 // loop_pre_header
      _
    $region3: #{custom-call.7} parent=1 // loop_header
      %s3 = sphi 0, %s7
      %p4 = scmp.ge.s32.totalorder %s3, 10
      %s10 = sphi 0, %s29
      %s11 = sphi 0, %s25
      %s12 = sphi 0, %s21
      %s13 = sphi 0, %s10
      %s14 = sphi 0, %s11
      %s15 = sphi 0, %s12
      %s16 = sphi 0, %s13
      %s17 = sphi 0, %s14
      %s18 = sphi 0, %s15
    $region4: #{custom-call.7} parent=1 // loop_header_branch
      %6 = sbr.rel (%p4) target = $region8
    $region5: #{custom-call.7} parent=1 // loop_body
      %s8 = ssub.s32 %s3, 1
      %s9 = ssub.s32 %s3, 2
      %s19 = sadd.s32 1, %s12
      %p20 = scmp.ge.s32.totalorder %s19, 1
      %s21 = scalar_select %p20, 0, %s19
      %s22 = sadd.s32 1, %s11
      %s23 = scalar_select %p20, %s22, %s11
      %p24 = scmp.ge.s32.totalorder %s23, 1
      %s25 = scalar_select %p24, 0, %s23
      %s26 = sadd.s32 1, %s10
      %s27 = scalar_select %p24, %s26, %s10
      %p28 = scmp.ge.s32.totalorder %s27, 8
      %s29 = scalar_select %p28, 0, %s27
      %p30 = scmp.le.s32.totalorder 1, %s3
      %p31 = scmp.lt.s32.totalorder %s3, 9
      %p32 = pnand %p30, %p31
      %p33 = pneg %p32
      // Predicated region
      $region9: #{custom-call.7} parent=5 // pred_check
        _
      $region10: #{custom-call.7} parent=5 // pred_check_branch
        %35 = sbr.rel (%p32) target = $region12
      $region11: #{custom-call.7} parent=5 // pred_region
        %s36 = ssub.s32 %s3, 1
      $region12: #{custom-call.7} parent=5 // pred_fallthru
        _
      %p37 = scmp.lt.s32.totalorder %s3, 8
      // Predicated region
      $region13: #{custom-call.7} parent=5 // pred_check
        %p38 = pneg %p37
      $region14: #{custom-call.7} parent=5 // pred_check_branch
        %40 = sbr.rel (%p38) target = $region16
      $region15: #{custom-call.7} parent=5 // pred_region
        %s41 = sand.u32 %s3, 1
        %s42 = sand.u32 %s3, 1
        %s43 = smul.addr %s42, 16
        %s44 = scalar_lea.vmem [#allocation0], %s43
        %s45 = sadd.s32 %s12, %s11
        %s46 = smul.addr %s10, 2
        %s47 = sadd.s32 %s45, %s46
        %s48 = smul.addr %s47, 8
        %s49 = scalar_lea.vmem %s0, %s48
        // Predicated region
        $region17: #{custom-call.7} parent=15 // pred_check
          _
        $region18: #{custom-call.7} parent=15 // pred_check_branch
          %51 = sbr.rel (0) target = $region20
        $region19: #{custom-call.7} parent=15 // pred_region
          // Predicated region
          $region21: #{custom-call.7} parent=19 // pred_check
            _
          $region22: #{custom-call.7} parent=19 // pred_check_branch
            %53 = sbr.rel (0) target = $region24
          $region23: #{custom-call.7} parent=19 // pred_region
            // Predicated region
            $region36: #{custom-call.7} parent=23 // pred_check
              _
            $region37: #{custom-call.7} parent=23 // pred_check_branch
              %71 = sbr.rel (0) target = $region39
            $region38: #{custom-call.7} parent=23 // pred_region
              loop: start=0, step=1, limit=1
              $region40: #{custom-call.7} parent=38 // loop_pre_header
                _
              $region41: #{custom-call.7} parent=38 // loop_header
                %s73 = sphi 0, %s77
                %p74 = scmp.ge.s32.totalorder %s73, 1
                %s78 = sphi %s49, %s49
                %s79 = sphi %s44, %s44
              $region42: #{custom-call.7} parent=38 // loop_header_branch
                %76 = sbr.rel (%p74) target = $region46
              $region43: #{custom-call.7} parent=38 // loop_body
                %v80 = vld [vmem:[%s78] sm:$0xff]
                %81 = vst [vmem:[%s79] sm:$0xff] %v80
                %v82 = vld [vmem:[%s78 + $0x8] sm:$0xff]
                %83 = vst [vmem:[%s79 + $0x8] sm:$0xff] %v82
              $region44: #{custom-call.7} parent=38 // loop_footer
                %s77 = sadd.s32 1, %s73
              $region45: #{custom-call.7} parent=38 // loop_footer_branch
                %72 = sbr.rel target = $region41
              $region46: #{custom-call.7} parent=38 // loop_exit
                _
            $region39: #{custom-call.7} parent=23 // pred_fallthru
              _
            // Predicated region
            $region47: #{custom-call.7} parent=23 // pred_check
              _
            $region48: #{custom-call.7} parent=23 // pred_check_branch
              %85 = sbr.rel target = $region50
            $region49: #{custom-call.7} parent=23 // pred_region
              _
            $region50: #{custom-call.7} parent=23 // pred_fallthru
              _
          $region24: #{custom-call.7} parent=19 // pred_fallthru
            _
          // Predicated region
          $region25: #{custom-call.7} parent=19 // pred_check
            _
          $region26: #{custom-call.7} parent=19 // pred_check_branch
            %55 = sbr.rel target = $region28
          $region27: #{custom-call.7} parent=19 // pred_region
            %s57 = ssub.s32 256, 1
            loop: start=0, step=1, limit=1
            $region29: #{custom-call.7} parent=27 // loop_pre_header
              _
            $region30: #{custom-call.7} parent=27 // loop_header
              %s59 = sphi 0, %s63
              %p60 = scmp.ge.s32.totalorder %s59, 1
              %s64 = sphi %s49, %s49
              %s65 = sphi %s44, %s44
            $region31: #{custom-call.7} parent=27 // loop_header_branch
              %62 = sbr.rel (%p60) target = $region35
            $region32: #{custom-call.7} parent=27 // loop_body
              %v66 = vld [vmem:[%s64] sm:%s57]
              %67 = vst [vmem:[%s65] sm:%s57] %v66
              %v68 = vld [vmem:[%s64 + $0x8] sm:%s57]
              %69 = vst [vmem:[%s65 + $0x8] sm:%s57] %v68
            $region33: #{custom-call.7} parent=27 // loop_footer
              %s63 = sadd.s32 1, %s59
            $region34: #{custom-call.7} parent=27 // loop_footer_branch
              %58 = sbr.rel target = $region30
            $region35: #{custom-call.7} parent=27 // loop_exit
              _
          $region28: #{custom-call.7} parent=19 // pred_fallthru
            _
        $region20: #{custom-call.7} parent=15 // pred_fallthru
          _
        %86 = vnop
      $region16: #{custom-call.7} parent=5 // pred_fallthru
        _
      %p87 = scmp.le.s32.totalorder 1, %s3
      %p88 = scmp.lt.s32.totalorder %s3, 9
      %p89 = pnand %p87, %p88
      %p90 = pneg %p89
      // Predicated region
      $region51: #{custom-call.7} parent=5 // pred_check
        _
      $region52: #{custom-call.7} parent=5 // pred_check_branch
        %92 = sbr.rel (%p89) target = $region54
      $region53: #{custom-call.7} parent=5 // pred_region
        %s93 = ssub.s32 %s3, 1
        %s94 = sand.u32 %s8, 1
        %s95 = sand.u32 %s8, 1
        %s96 = smul.addr %s95, 16
        %s97 = scalar_lea.vmem [#allocation0], %s96
        %s98 = sand.u32 %s8, 1
        %s99 = sand.u32 %s8, 1
        %s100 = smul.addr %s99, 16
        %s101 = scalar_lea.vmem [#allocation0], %s100
        %s102 = sand.u32 %s8, 1
        %s103 = sand.u32 %s8, 1
        %s104 = smul.addr %s103, 16
        %s105 = scalar_lea.vmem [#allocation1], %s104
        %106 = vst [vmem:[%s105] sm:$0xff] 0.0
        %s107 = scalar_lea.vmem %s105, 8 [#allocation1]
        %108 = vst [vmem:[%s107] sm:$0xff] 0.0
        %vm109 = vcmask 7168
        %v110 = vld [vmem:[%s105] ss:$0 sm:$0xff]
        %v111 = vld [vmem:[%s97] ss:$0 sm:$0xff]
        %v112 = vmul.f32 %v110, %v110
        %113 = vadd.xlane.f32.xlu0 %v112
        %v114 = vpop.xlane.xlu0 %113
        %v115 = vsub.f32 %v111, %v114
        %v116 = vrsqrt.pop %v115
        %v117 = vld [vmem:[%s97] sm:$0xff]
        %v118 = vld [vmem:[%s105] sm:$0xff]
        %v119 = vmul.f32 %v118, %v110
        %120 = vadd.xlane.f32.xlu0 %v119
        %v121 = vpop.xlane.xlu0 %120
        %v122 = vsub.f32 %v117, %v121
        %v123 = vmul.f32 %v122, %v116
        %v124 = vsel %vm109, %v123, 0.0
        %v125 = vadd.f32 %v118, %v124
        %126 = vst [vmem:[%s105] sm:$0xff] %v125
        %s127 = scalar_lea.vmem %s97, 8 [#allocation0]
        %v128 = vld [vmem:[%s127] sm:$0xff]
        %s129 = scalar_lea.vmem %s105, 8 [#allocation1]
        %v130 = vld [vmem:[%s129] sm:$0xff]
        %v131 = vmul.f32 %v130, %v110
        %132 = vadd.xlane.f32.xlu0 %v131
        %v133 = vpop.xlane.xlu0 %132
        %v134 = vsub.f32 %v128, %v133
        %v135 = vmul.f32 %v134, %v116
        %v136 = vsel %vm109, %v135, 0.0
        %v137 = vadd.f32 %v130, %v136
        %s138 = scalar_lea.vmem %s105, 8 [#allocation1]
        %139 = vst [vmem:[%s138] sm:$0xff] %v137
        %vm140 = vcmask 15368
        %s141 = scalar_lea.vmem %s105, 1 [#allocation1]
        %v142 = vld [vmem:[%s141] ss:$0 sm:$0xff]
        %s143 = scalar_lea.vmem %s97, 1 [#allocation0]
        %v144 = vld [vmem:[%s143] ss:$0 sm:$0xff]
        %v145 = vmul.f32 %v142, %v142
        %146 = vadd.xlane.f32.xlu0 %v145
        %v147 = vpop.xlane.xlu0 %146
        %v148 = vsub.f32 %v144, %v147
        %v149 = vrsqrt.pop %v148
        %v150 = vld [vmem:[%s97] sm:$0xff]
        %v151 = vld [vmem:[%s105] sm:$0xff]
        %v152 = vmul.f32 %v151, %v142
        %153 = vadd.xlane.f32.xlu0 %v152
        %v154 = vpop.xlane.xlu0 %153
        %v155 = vsub.f32 %v150, %v154
        %v156 = vmul.f32 %v155, %v149
        %vm157 = vcmask 1047553
        %vm158 = vmand %vm140, %vm157
        %v159 = vsel %vm158, %v156, 0.0
        %v160 = vadd.f32 %v151, %v159
        %161 = vst [vmem:[%s105] sm:$0xff] %v160
        %s162 = scalar_lea.vmem %s97, 8 [#allocation0]
        %v163 = vld [vmem:[%s162] sm:$0xff]
        %s164 = scalar_lea.vmem %s105, 8 [#allocation1]
        %v165 = vld [vmem:[%s164] sm:$0xff]
        %v166 = vmul.f32 %v165, %v142
        %167 = vadd.xlane.f32.xlu0 %v166
        %v168 = vpop.xlane.xlu0 %167
        %v169 = vsub.f32 %v163, %v168
        %v170 = vmul.f32 %v169, %v149
        %v171 = vsel %vm140, %v170, 0.0
        %v172 = vadd.f32 %v165, %v171
        %s173 = scalar_lea.vmem %s105, 8 [#allocation1]
        %174 = vst [vmem:[%s173] sm:$0xff] %v172
        %vm175 = vcmask 23568
        %s176 = scalar_lea.vmem %s105, 2 [#allocation1]
        %v177 = vld [vmem:[%s176] ss:$0 sm:$0xff]
        %s178 = scalar_lea.vmem %s97, 2 [#allocation0]
        %v179 = vld [vmem:[%s178] ss:$0 sm:$0xff]
        %v180 = vmul.f32 %v177, %v177
        %181 = vadd.xlane.f32.xlu0 %v180
        %v182 = vpop.xlane.xlu0 %181
        %v183 = vsub.f32 %v179, %v182
        %v184 = vrsqrt.pop %v183
        %v185 = vld [vmem:[%s97] sm:$0xff]
        %v186 = vld [vmem:[%s105] sm:$0xff]
        %v187 = vmul.f32 %v186, %v177
        %188 = vadd.xlane.f32.xlu0 %v187
        %v189 = vpop.xlane.xlu0 %188
        %v190 = vsub.f32 %v185, %v189
        %v191 = vmul.f32 %v190, %v184
        %vm192 = vcmask 1047554
        %vm193 = vmand %vm175, %vm192
        %v194 = vsel %vm193, %v191, 0.0
        %v195 = vadd.f32 %v186, %v194
        %196 = vst [vmem:[%s105] sm:$0xff] %v195
        %s197 = scalar_lea.vmem %s97, 8 [#allocation0]
        %v198 = vld [vmem:[%s197] sm:$0xff]
        %s199 = scalar_lea.vmem %s105, 8 [#allocation1]
        %v200 = vld [vmem:[%s199] sm:$0xff]
        %v201 = vmul.f32 %v200, %v177
        %202 = vadd.xlane.f32.xlu0 %v201
        %v203 = vpop.xlane.xlu0 %202
        %v204 = vsub.f32 %v198, %v203
        %v205 = vmul.f32 %v204, %v184
        %v206 = vsel %vm175, %v205, 0.0
        %v207 = vadd.f32 %v200, %v206
        %s208 = scalar_lea.vmem %s105, 8 [#allocation1]
        %209 = vst [vmem:[%s208] sm:$0xff] %v207
        %vm210 = vcmask 31768
        %s211 = scalar_lea.vmem %s105, 3 [#allocation1]
        %v212 = vld [vmem:[%s211] ss:$0 sm:$0xff]
        %s213 = scalar_lea.vmem %s97, 3 [#allocation0]
        %v214 = vld [vmem:[%s213] ss:$0 sm:$0xff]
        %v215 = vmul.f32 %v212, %v212
        %216 = vadd.xlane.f32.xlu0 %v215
        %v217 = vpop.xlane.xlu0 %216
        %v218 = vsub.f32 %v214, %v217
        %v219 = vrsqrt.pop %v218
        %v220 = vld [vmem:[%s97] sm:$0xff]
        %v221 = vld [vmem:[%s105] sm:$0xff]
        %v222 = vmul.f32 %v221, %v212
        %223 = vadd.xlane.f32.xlu0 %v222
        %v224 = vpop.xlane.xlu0 %223
        %v225 = vsub.f32 %v220, %v224
        %v226 = vmul.f32 %v225, %v219
        %vm227 = vcmask 1047555
        %vm228 = vmand %vm210, %vm227
        %v229 = vsel %vm228, %v226, 0.0
        %v230 = vadd.f32 %v221, %v229
        %231 = vst [vmem:[%s105] sm:$0xff] %v230
        %s232 = scalar_lea.vmem %s97, 8 [#allocation0]
        %v233 = vld [vmem:[%s232] sm:$0xff]
        %s234 = scalar_lea.vmem %s105, 8 [#allocation1]
        %v235 = vld [vmem:[%s234] sm:$0xff]
        %v236 = vmul.f32 %v235, %v212
        %237 = vadd.xlane.f32.xlu0 %v236
        %v238 = vpop.xlane.xlu0 %237
        %v239 = vsub.f32 %v233, %v238
        %v240 = vmul.f32 %v239, %v219
        %v241 = vsel %vm210, %v240, 0.0
        %v242 = vadd.f32 %v235, %v241
        %s243 = scalar_lea.vmem %s105, 8 [#allocation1]
        %244 = vst [vmem:[%s243] sm:$0xff] %v242
        %vm245 = vcmask 39968
        %s246 = scalar_lea.vmem %s105, 4 [#allocation1]
        %v247 = vld [vmem:[%s246] ss:$0 sm:$0xff]
        %s248 = scalar_lea.vmem %s97, 4 [#allocation0]
        %v249 = vld [vmem:[%s248] ss:$0 sm:$0xff]
        %v250 = vmul.f32 %v247, %v247
        %251 = vadd.xlane.f32.xlu0 %v250
        %v252 = vpop.xlane.xlu0 %251
        %v253 = vsub.f32 %v249, %v252
        %v254 = vrsqrt.pop %v253
        %v255 = vld [vmem:[%s97] sm:$0xff]
        %v256 = vld [vmem:[%s105] sm:$0xff]
        %v257 = vmul.f32 %v256, %v247
        %258 = vadd.xlane.f32.xlu0 %v257
        %v259 = vpop.xlane.xlu0 %258
        %v260 = vsub.f32 %v255, %v259
        %v261 = vmul.f32 %v260, %v254
        %vm262 = vcmask 1047556
        %vm263 = vmand %vm245, %vm262
        %v264 = vsel %vm263, %v261, 0.0
        %v265 = vadd.f32 %v256, %v264
        %266 = vst [vmem:[%s105] sm:$0xff] %v265
        %s267 = scalar_lea.vmem %s97, 8 [#allocation0]
        %v268 = vld [vmem:[%s267] sm:$0xff]
        %s269 = scalar_lea.vmem %s105, 8 [#allocation1]
        %v270 = vld [vmem:[%s269] sm:$0xff]
        %v271 = vmul.f32 %v270, %v247
        %272 = vadd.xlane.f32.xlu0 %v271
        %v273 = vpop.xlane.xlu0 %272
        %v274 = vsub.f32 %v268, %v273
        %v275 = vmul.f32 %v274, %v254
        %v276 = vsel %vm245, %v275, 0.0
        %v277 = vadd.f32 %v270, %v276
        %s278 = scalar_lea.vmem %s105, 8 [#allocation1]
        %279 = vst [vmem:[%s278] sm:$0xff] %v277
        %vm280 = vcmask 48168
        %s281 = scalar_lea.vmem %s105, 5 [#allocation1]
        %v282 = vld [vmem:[%s281] ss:$0 sm:$0xff]
        %s283 = scalar_lea.vmem %s97, 5 [#allocation0]
        %v284 = vld [vmem:[%s283] ss:$0 sm:$0xff]
        %v285 = vmul.f32 %v282, %v282
        %286 = vadd.xlane.f32.xlu0 %v285
        %v287 = vpop.xlane.xlu0 %286
        %v288 = vsub.f32 %v284, %v287
        %v289 = vrsqrt.pop %v288
        %v290 = vld [vmem:[%s97] sm:$0xff]
        %v291 = vld [vmem:[%s105] sm:$0xff]
        %v292 = vmul.f32 %v291, %v282
        %293 = vadd.xlane.f32.xlu0 %v292
        %v294 = vpop.xlane.xlu0 %293
        %v295 = vsub.f32 %v290, %v294
        %v296 = vmul.f32 %v295, %v289
        %vm297 = vcmask 1047557
        %vm298 = vmand %vm280, %vm297
        %v299 = vsel %vm298, %v296, 0.0
        %v300 = vadd.f32 %v291, %v299
        %301 = vst [vmem:[%s105] sm:$0xff] %v300
        %s302 = scalar_lea.vmem %s97, 8 [#allocation0]
        %v303 = vld [vmem:[%s302] sm:$0xff]
        %s304 = scalar_lea.vmem %s105, 8 [#allocation1]
        %v305 = vld [vmem:[%s304] sm:$0xff]
        %v306 = vmul.f32 %v305, %v282
        %307 = vadd.xlane.f32.xlu0 %v306
        %v308 = vpop.xlane.xlu0 %307
        %v309 = vsub.f32 %v303, %v308
        %v310 = vmul.f32 %v309, %v289
        %v311 = vsel %vm280, %v310, 0.0
        %v312 = vadd.f32 %v305, %v311
        %s313 = scalar_lea.vmem %s105, 8 [#allocation1]
        %314 = vst [vmem:[%s313] sm:$0xff] %v312
        %vm315 = vcmask 56368
        %s316 = scalar_lea.vmem %s105, 6 [#allocation1]
        %v317 = vld [vmem:[%s316] ss:$0 sm:$0xff]
        %s318 = scalar_lea.vmem %s97, 6 [#allocation0]
        %v319 = vld [vmem:[%s318] ss:$0 sm:$0xff]
        %v320 = vmul.f32 %v317, %v317
        %321 = vadd.xlane.f32.xlu0 %v320
        %v322 = vpop.xlane.xlu0 %321
        %v323 = vsub.f32 %v319, %v322
        %v324 = vrsqrt.pop %v323
        %v325 = vld [vmem:[%s97] sm:$0xff]
        %v326 = vld [vmem:[%s105] sm:$0xff]
        %v327 = vmul.f32 %v326, %v317
        %328 = vadd.xlane.f32.xlu0 %v327
        %v329 = vpop.xlane.xlu0 %328
        %v330 = vsub.f32 %v325, %v329
        %v331 = vmul.f32 %v330, %v324
        %vm332 = vcmask 1047558
        %vm333 = vmand %vm315, %vm332
        %v334 = vsel %vm333, %v331, 0.0
        %v335 = vadd.f32 %v326, %v334
        %336 = vst [vmem:[%s105] sm:$0xff] %v335
        %s337 = scalar_lea.vmem %s97, 8 [#allocation0]
        %v338 = vld [vmem:[%s337] sm:$0xff]
        %s339 = scalar_lea.vmem %s105, 8 [#allocation1]
        %v340 = vld [vmem:[%s339] sm:$0xff]
        %v341 = vmul.f32 %v340, %v317
        %342 = vadd.xlane.f32.xlu0 %v341
        %v343 = vpop.xlane.xlu0 %342
        %v344 = vsub.f32 %v338, %v343
        %v345 = vmul.f32 %v344, %v324
        %v346 = vsel %vm315, %v345, 0.0
        %v347 = vadd.f32 %v340, %v346
        %s348 = scalar_lea.vmem %s105, 8 [#allocation1]
        %349 = vst [vmem:[%s348] sm:$0xff] %v347
        %vm350 = vcmask 64568
        %s351 = scalar_lea.vmem %s105, 7 [#allocation1]
        %v352 = vld [vmem:[%s351] ss:$0 sm:$0xff]
        %s353 = scalar_lea.vmem %s97, 7 [#allocation0]
        %v354 = vld [vmem:[%s353] ss:$0 sm:$0xff]
        %v355 = vmul.f32 %v352, %v352
        %356 = vadd.xlane.f32.xlu0 %v355
        %v357 = vpop.xlane.xlu0 %356
        %v358 = vsub.f32 %v354, %v357
        %v359 = vrsqrt.pop %v358
        %v360 = vld [vmem:[%s97] sm:$0xff]
        %v361 = vld [vmem:[%s105] sm:$0xff]
        %v362 = vmul.f32 %v361, %v352
        %363 = vadd.xlane.f32.xlu0 %v362
        %v364 = vpop.xlane.xlu0 %363
        %v365 = vsub.f32 %v360, %v364
        %v366 = vmul.f32 %v365, %v359
        %vm367 = vcmask 1047559
        %vm368 = vmand %vm350, %vm367
        %v369 = vsel %vm368, %v366, 0.0
        %v370 = vadd.f32 %v361, %v369
        %371 = vst [vmem:[%s105] sm:$0xff] %v370
        %s372 = scalar_lea.vmem %s97, 8 [#allocation0]
        %v373 = vld [vmem:[%s372] sm:$0xff]
        %s374 = scalar_lea.vmem %s105, 8 [#allocation1]
        %v375 = vld [vmem:[%s374] sm:$0xff]
        %v376 = vmul.f32 %v375, %v352
        %377 = vadd.xlane.f32.xlu0 %v376
        %v378 = vpop.xlane.xlu0 %377
        %v379 = vsub.f32 %v373, %v378
        %v380 = vmul.f32 %v379, %v359
        %v381 = vsel %vm350, %v380, 0.0
        %v382 = vadd.f32 %v375, %v381
        %s383 = scalar_lea.vmem %s105, 8 [#allocation1]
        %384 = vst [vmem:[%s383] sm:$0xff] %v382
        %vm385 = vcmask 72768
        %s386 = scalar_lea.vmem %s105, 8 [#allocation1]
        %v387 = vld [vmem:[%s386] ss:$0 sm:$0xff]
        %s388 = scalar_lea.vmem %s97, 8 [#allocation0]
        %v389 = vld [vmem:[%s388] ss:$0 sm:$0xff]
        %v390 = vmul.f32 %v387, %v387
        %391 = vadd.xlane.f32.xlu0 %v390
        %v392 = vpop.xlane.xlu0 %391
        %v393 = vsub.f32 %v389, %v392
        %v394 = vrsqrt.pop %v393
        %s395 = scalar_lea.vmem %s97, 8 [#allocation0]
        %v396 = vld [vmem:[%s395] sm:$0xff]
        %s397 = scalar_lea.vmem %s105, 8 [#allocation1]
        %v398 = vld [vmem:[%s397] sm:$0xff]
        %v399 = vmul.f32 %v398, %v387
        %400 = vadd.xlane.f32.xlu0 %v399
        %v401 = vpop.xlane.xlu0 %400
        %v402 = vsub.f32 %v396, %v401
        %v403 = vmul.f32 %v402, %v394
        %v404 = vsel %vm385, %v403, 0.0
        %v405 = vadd.f32 %v398, %v404
        %s406 = scalar_lea.vmem %s105, 8 [#allocation1]
        %407 = vst [vmem:[%s406] sm:$0xff] %v405
        %vm408 = vcmask 80968
        %s409 = scalar_lea.vmem %s105, 9 [#allocation1]
        %v410 = vld [vmem:[%s409] ss:$0 sm:$0xff]
        %s411 = scalar_lea.vmem %s97, 9 [#allocation0]
        %v412 = vld [vmem:[%s411] ss:$0 sm:$0xff]
        %v413 = vmul.f32 %v410, %v410
        %414 = vadd.xlane.f32.xlu0 %v413
        %v415 = vpop.xlane.xlu0 %414
        %v416 = vsub.f32 %v412, %v415
        %v417 = vrsqrt.pop %v416
        %s418 = scalar_lea.vmem %s97, 8 [#allocation0]
        %v419 = vld [vmem:[%s418] sm:$0xff]
        %s420 = scalar_lea.vmem %s105, 8 [#allocation1]
        %v421 = vld [vmem:[%s420] sm:$0xff]
        %v422 = vmul.f32 %v421, %v410
        %423 = vadd.xlane.f32.xlu0 %v422
        %v424 = vpop.xlane.xlu0 %423
        %v425 = vsub.f32 %v419, %v424
        %v426 = vmul.f32 %v425, %v417
        %vm427 = vcmask 1047553
        %vm428 = vmand %vm408, %vm427
        %v429 = vsel %vm428, %v426, 0.0
        %v430 = vadd.f32 %v421, %v429
        %s431 = scalar_lea.vmem %s105, 8 [#allocation1]
        %432 = vst [vmem:[%s431] sm:$0xff] %v430
        %vm433 = vcmask 89168
        %s434 = scalar_lea.vmem %s105, 10 [#allocation1]
        %v435 = vld [vmem:[%s434] ss:$0 sm:$0xff]
        %s436 = scalar_lea.vmem %s97, 10 [#allocation0]
        %v437 = vld [vmem:[%s436] ss:$0 sm:$0xff]
        %v438 = vmul.f32 %v435, %v435
        %439 = vadd.xlane.f32.xlu0 %v438
        %v440 = vpop.xlane.xlu0 %439
        %v441 = vsub.f32 %v437, %v440
        %v442 = vrsqrt.pop %v441
        %s443 = scalar_lea.vmem %s97, 8 [#allocation0]
        %v444 = vld [vmem:[%s443] sm:$0xff]
        %s445 = scalar_lea.vmem %s105, 8 [#allocation1]
        %v446 = vld [vmem:[%s445] sm:$0xff]
        %v447 = vmul.f32 %v446, %v435
        %448 = vadd.xlane.f32.xlu0 %v447
        %v449 = vpop.xlane.xlu0 %448
        %v450 = vsub.f32 %v444, %v449
        %v451 = vmul.f32 %v450, %v442
        %vm452 = vcmask 1047554
        %vm453 = vmand %vm433, %vm452
        %v454 = vsel %vm453, %v451, 0.0
        %v455 = vadd.f32 %v446, %v454
        %s456 = scalar_lea.vmem %s105, 8 [#allocation1]
        %457 = vst [vmem:[%s456] sm:$0xff] %v455
        %vm458 = vcmask 97368
        %s459 = scalar_lea.vmem %s105, 11 [#allocation1]
        %v460 = vld [vmem:[%s459] ss:$0 sm:$0xff]
        %s461 = scalar_lea.vmem %s97, 11 [#allocation0]
        %v462 = vld [vmem:[%s461] ss:$0 sm:$0xff]
        %v463 = vmul.f32 %v460, %v460
        %464 = vadd.xlane.f32.xlu0 %v463
        %v465 = vpop.xlane.xlu0 %464
        %v466 = vsub.f32 %v462, %v465
        %v467 = vrsqrt.pop %v466
        %s468 = scalar_lea.vmem %s97, 8 [#allocation0]
        %v469 = vld [vmem:[%s468] sm:$0xff]
        %s470 = scalar_lea.vmem %s105, 8 [#allocation1]
        %v471 = vld [vmem:[%s470] sm:$0xff]
        %v472 = vmul.f32 %v471, %v460
        %473 = vadd.xlane.f32.xlu0 %v472
        %v474 = vpop.xlane.xlu0 %473
        %v475 = vsub.f32 %v469, %v474
        %v476 = vmul.f32 %v475, %v467
        %vm477 = vcmask 1047555
        %vm478 = vmand %vm458, %vm477
        %v479 = vsel %vm478, %v476, 0.0
        %v480 = vadd.f32 %v471, %v479
        %s481 = scalar_lea.vmem %s105, 8 [#allocation1]
        %482 = vst [vmem:[%s481] sm:$0xff] %v480
        %vm483 = vcmask 105568
        %s484 = scalar_lea.vmem %s105, 12 [#allocation1]
        %v485 = vld [vmem:[%s484] ss:$0 sm:$0xff]
        %s486 = scalar_lea.vmem %s97, 12 [#allocation0]
        %v487 = vld [vmem:[%s486] ss:$0 sm:$0xff]
        %v488 = vmul.f32 %v485, %v485
        %489 = vadd.xlane.f32.xlu0 %v488
        %v490 = vpop.xlane.xlu0 %489
        %v491 = vsub.f32 %v487, %v490
        %v492 = vrsqrt.pop %v491
        %s493 = scalar_lea.vmem %s97, 8 [#allocation0]
        %v494 = vld [vmem:[%s493] sm:$0xff]
        %s495 = scalar_lea.vmem %s105, 8 [#allocation1]
        %v496 = vld [vmem:[%s495] sm:$0xff]
        %v497 = vmul.f32 %v496, %v485
        %498 = vadd.xlane.f32.xlu0 %v497
        %v499 = vpop.xlane.xlu0 %498
        %v500 = vsub.f32 %v494, %v499
        %v501 = vmul.f32 %v500, %v492
        %vm502 = vcmask 1047556
        %vm503 = vmand %vm483, %vm502
        %v504 = vsel %vm503, %v501, 0.0
        %v505 = vadd.f32 %v496, %v504
        %s506 = scalar_lea.vmem %s105, 8 [#allocation1]
        %507 = vst [vmem:[%s506] sm:$0xff] %v505
        %vm508 = vcmask 113768
        %s509 = scalar_lea.vmem %s105, 13 [#allocation1]
        %v510 = vld [vmem:[%s509] ss:$0 sm:$0xff]
        %s511 = scalar_lea.vmem %s97, 13 [#allocation0]
        %v512 = vld [vmem:[%s511] ss:$0 sm:$0xff]
        %v513 = vmul.f32 %v510, %v510
        %514 = vadd.xlane.f32.xlu0 %v513
        %v515 = vpop.xlane.xlu0 %514
        %v516 = vsub.f32 %v512, %v515
        %v517 = vrsqrt.pop %v516
        %s518 = scalar_lea.vmem %s97, 8 [#allocation0]
        %v519 = vld [vmem:[%s518] sm:$0xff]
        %s520 = scalar_lea.vmem %s105, 8 [#allocation1]
        %v521 = vld [vmem:[%s520] sm:$0xff]
        %v522 = vmul.f32 %v521, %v510
        %523 = vadd.xlane.f32.xlu0 %v522
        %v524 = vpop.xlane.xlu0 %523
        %v525 = vsub.f32 %v519, %v524
        %v526 = vmul.f32 %v525, %v517
        %vm527 = vcmask 1047557
        %vm528 = vmand %vm508, %vm527
        %v529 = vsel %vm528, %v526, 0.0
        %v530 = vadd.f32 %v521, %v529
        %s531 = scalar_lea.vmem %s105, 8 [#allocation1]
        %532 = vst [vmem:[%s531] sm:$0xff] %v530
        %vm533 = vcmask 121968
        %s534 = scalar_lea.vmem %s105, 14 [#allocation1]
        %v535 = vld [vmem:[%s534] ss:$0 sm:$0xff]
        %s536 = scalar_lea.vmem %s97, 14 [#allocation0]
        %v537 = vld [vmem:[%s536] ss:$0 sm:$0xff]
        %v538 = vmul.f32 %v535, %v535
        %539 = vadd.xlane.f32.xlu0 %v538
        %v540 = vpop.xlane.xlu0 %539
        %v541 = vsub.f32 %v537, %v540
        %v542 = vrsqrt.pop %v541
        %s543 = scalar_lea.vmem %s97, 8 [#allocation0]
        %v544 = vld [vmem:[%s543] sm:$0xff]
        %s545 = scalar_lea.vmem %s105, 8 [#allocation1]
        %v546 = vld [vmem:[%s545] sm:$0xff]
        %v547 = vmul.f32 %v546, %v535
        %548 = vadd.xlane.f32.xlu0 %v547
        %v549 = vpop.xlane.xlu0 %548
        %v550 = vsub.f32 %v544, %v549
        %v551 = vmul.f32 %v550, %v542
        %vm552 = vcmask 1047558
        %vm553 = vmand %vm533, %vm552
        %v554 = vsel %vm553, %v551, 0.0
        %v555 = vadd.f32 %v546, %v554
        %s556 = scalar_lea.vmem %s105, 8 [#allocation1]
        %557 = vst [vmem:[%s556] sm:$0xff] %v555
        %vm558 = vcmask 130168
        %s559 = scalar_lea.vmem %s105, 15 [#allocation1]
        %v560 = vld [vmem:[%s559] ss:$0 sm:$0xff]
        %s561 = scalar_lea.vmem %s97, 15 [#allocation0]
        %v562 = vld [vmem:[%s561] ss:$0 sm:$0xff]
        %v563 = vmul.f32 %v560, %v560
        %564 = vadd.xlane.f32.xlu0 %v563
        %v565 = vpop.xlane.xlu0 %564
        %v566 = vsub.f32 %v562, %v565
        %v567 = vrsqrt.pop %v566
        %s568 = scalar_lea.vmem %s97, 8 [#allocation0]
        %v569 = vld [vmem:[%s568] sm:$0xff]
        %s570 = scalar_lea.vmem %s105, 8 [#allocation1]
        %v571 = vld [vmem:[%s570] sm:$0xff]
        %v572 = vmul.f32 %v571, %v560
        %573 = vadd.xlane.f32.xlu0 %v572
        %v574 = vpop.xlane.xlu0 %573
        %v575 = vsub.f32 %v569, %v574
        %v576 = vmul.f32 %v575, %v567
        %vm577 = vcmask 1047559
        %vm578 = vmand %vm558, %vm577
        %v579 = vsel %vm578, %v576, 0.0
        %v580 = vadd.f32 %v571, %v579
        %s581 = scalar_lea.vmem %s105, 8 [#allocation1]
        %582 = vst [vmem:[%s581] sm:$0xff] %v580
        %s583 = sand.u32 %s8, 1
        %s584 = sand.u32 %s8, 1
        %s585 = smul.addr %s584, 16
        %s586 = scalar_lea.vmem [#allocation1], %s585
        %s587 = sadd.s32 %s15, %s14
        %s588 = smul.addr %s13, 2
        %s589 = sadd.s32 %s587, %s588
        %s590 = smul.addr %s589, 8
        %s591 = scalar_lea.vmem %s1, %s590
        // Predicated region
        $region55: #{custom-call.7} parent=53 // pred_check
          _
        $region56: #{custom-call.7} parent=53 // pred_check_branch
          %593 = sbr.rel (0) target = $region58
        $region57: #{custom-call.7} parent=53 // pred_region
          // Predicated region
          $region59: #{custom-call.7} parent=57 // pred_check
            _
          $region60: #{custom-call.7} parent=57 // pred_check_branch
            %595 = sbr.rel (0) target = $region62
          $region61: #{custom-call.7} parent=57 // pred_region
            // Predicated region
            $region74: #{custom-call.7} parent=61 // pred_check
              _
            $region75: #{custom-call.7} parent=61 // pred_check_branch
              %613 = sbr.rel (0) target = $region77
            $region76: #{custom-call.7} parent=61 // pred_region
              loop: start=0, step=1, limit=1
              $region78: #{custom-call.7} parent=76 // loop_pre_header
                _
              $region79: #{custom-call.7} parent=76 // loop_header
                %s615 = sphi 0, %s619
                %p616 = scmp.ge.s32.totalorder %s615, 1
                %s620 = sphi %s586, %s586
                %s621 = sphi %s591, %s591
              $region80: #{custom-call.7} parent=76 // loop_header_branch
                %618 = sbr.rel (%p616) target = $region84
              $region81: #{custom-call.7} parent=76 // loop_body
                %v622 = vld [vmem:[%s620] sm:$0xff]
                %623 = vst [vmem:[%s621] sm:$0xff] %v622
                %v624 = vld [vmem:[%s620 + $0x8] sm:$0xff]
                %625 = vst [vmem:[%s621 + $0x8] sm:$0xff] %v624
              $region82: #{custom-call.7} parent=76 // loop_footer
                %s619 = sadd.s32 1, %s615
              $region83: #{custom-call.7} parent=76 // loop_footer_branch
                %614 = sbr.rel target = $region79
              $region84: #{custom-call.7} parent=76 // loop_exit
                _
            $region77: #{custom-call.7} parent=61 // pred_fallthru
              _
            // Predicated region
            $region85: #{custom-call.7} parent=61 // pred_check
              _
            $region86: #{custom-call.7} parent=61 // pred_check_branch
              %627 = sbr.rel target = $region88
            $region87: #{custom-call.7} parent=61 // pred_region
              _
            $region88: #{custom-call.7} parent=61 // pred_fallthru
              _
          $region62: #{custom-call.7} parent=57 // pred_fallthru
            _
          // Predicated region
          $region63: #{custom-call.7} parent=57 // pred_check
            _
          $region64: #{custom-call.7} parent=57 // pred_check_branch
            %597 = sbr.rel target = $region66
          $region65: #{custom-call.7} parent=57 // pred_region
            %s599 = ssub.s32 256, 1
            loop: start=0, step=1, limit=1
            $region67: #{custom-call.7} parent=65 // loop_pre_header
              _
            $region68: #{custom-call.7} parent=65 // loop_header
              %s601 = sphi 0, %s605
              %p602 = scmp.ge.s32.totalorder %s601, 1
              %s606 = sphi %s586, %s586
              %s607 = sphi %s591, %s591
            $region69: #{custom-call.7} parent=65 // loop_header_branch
              %604 = sbr.rel (%p602) target = $region73
            $region70: #{custom-call.7} parent=65 // loop_body
              %v608 = vld [vmem:[%s606] sm:%s599]
              %609 = vst [vmem:[%s607] sm:%s599] %v608
              %v610 = vld [vmem:[%s606 + $0x8] sm:%s599]
              %611 = vst [vmem:[%s607 + $0x8] sm:%s599] %v610
            $region71: #{custom-call.7} parent=65 // loop_footer
              %s605 = sadd.s32 1, %s601
            $region72: #{custom-call.7} parent=65 // loop_footer_branch
              %600 = sbr.rel target = $region68
            $region73: #{custom-call.7} parent=65 // loop_exit
              _
          $region66: #{custom-call.7} parent=57 // pred_fallthru
            _
        $region58: #{custom-call.7} parent=53 // pred_fallthru
          _
        %628 = vnop
      $region54: #{custom-call.7} parent=5 // pred_fallthru
        _
      %p629 = scmp.le.s32.totalorder 2, %s3
      // Predicated region
      $region89: #{custom-call.7} parent=5 // pred_check
        %p630 = pneg %p629
      $region90: #{custom-call.7} parent=5 // pred_check_branch
        %632 = sbr.rel (%p630) target = $region92
      $region91: #{custom-call.7} parent=5 // pred_region
        %s633 = ssub.s32 %s3, 2
        %s634 = sand.u32 %s9, 1
        %s635 = sand.u32 %s9, 1
        %s636 = smul.addr %s635, 16
        %s637 = scalar_lea.vmem [#allocation1], %s636
      $region92: #{custom-call.7} parent=5 // pred_fallthru
        _
    $region6: #{custom-call.7} parent=1 // loop_footer
      %s7 = sadd.s32 1, %s3
    $region7: #{custom-call.7} parent=1 // loop_footer_branch
      %2 = sbr.rel target = $region3
    $region8: #{custom-call.7} parent=1 // loop_exit
      _

// kernel: custom-call.8
$region0: #{custom-call.8}
  %s0 = inlined_call_operand.vmem [shape: f32[8,1,16,16], index: 0, kind: input, shape index: {}]
  %s1 = inlined_call_operand.vmem [shape: f32[8,1,16,16], index: 1, kind: output, shape index: {}]
  $region1: #{custom-call.8} parent=0
    #allocation0 [shape = 'u8[16384]{0}', space=vmem, size = 0x4000, scoped, tag = 'operand span for operand 0']
    #allocation1 [shape = 'u8[16384]{0}', space=vmem, size = 0x4000, scoped, tag = 'operand span for operand 1']
    loop: start=0, step=1, limit=10
    $region2: #{custom-call.8} parent=1 // loop_pre_header
      _
    $region3: #{custom-call.8} parent=1 // loop_header
      %s3 = sphi 0, %s7
      %p4 = scmp.ge.s32.totalorder %s3, 10
      %s10 = sphi 0, %s36
      %s11 = sphi 0, %s32
      %s12 = sphi 0, %s28
      %s13 = sphi 0, %s24
      %s14 = sphi 0, %s10
      %s15 = sphi 0, %s11
      %s16 = sphi 0, %s12
      %s17 = sphi 0, %s13
      %s18 = sphi 0, %s14
      %s19 = sphi 0, %s15
      %s20 = sphi 0, %s16
      %s21 = sphi 0, %s17
    $region4: #{custom-call.8} parent=1 // loop_header_branch
      %6 = sbr.rel (%p4) target = $region8
    $region5: #{custom-call.8} parent=1 // loop_body
      %s8 = ssub.s32 %s3, 1
      %s9 = ssub.s32 %s3, 2
      %s22 = sadd.s32 1, %s13
      %p23 = scmp.ge.s32.totalorder %s22, 1
      %s24 = scalar_select %p23, 0, %s22
      %s25 = sadd.s32 1, %s12
      %s26 = scalar_select %p23, %s25, %s12
      %p27 = scmp.ge.s32.totalorder %s26, 1
      %s28 = scalar_select %p27, 0, %s26
      %s29 = sadd.s32 1, %s11
      %s30 = scalar_select %p27, %s29, %s11
      %p31 = scmp.ge.s32.totalorder %s30, 1
      %s32 = scalar_select %p31, 0, %s30
      %s33 = sadd.s32 1, %s10
      %s34 = scalar_select %p31, %s33, %s10
      %p35 = scmp.ge.s32.totalorder %s34, 8
      %s36 = scalar_select %p35, 0, %s34
      %p37 = scmp.le.s32.totalorder 1, %s3
      %p38 = scmp.lt.s32.totalorder %s3, 9
      %p39 = pnand %p37, %p38
      %p40 = pneg %p39
      // Predicated region
      $region9: #{custom-call.8} parent=5 // pred_check
        _
      $region10: #{custom-call.8} parent=5 // pred_check_branch
        %42 = sbr.rel (%p39) target = $region12
      $region11: #{custom-call.8} parent=5 // pred_region
        %s43 = ssub.s32 %s3, 1
      $region12: #{custom-call.8} parent=5 // pred_fallthru
        _
      %p44 = scmp.lt.s32.totalorder %s3, 8
      // Predicated region
      $region13: #{custom-call.8} parent=5 // pred_check
        %p45 = pneg %p44
      $region14: #{custom-call.8} parent=5 // pred_check_branch
        %47 = sbr.rel (%p45) target = $region16
      $region15: #{custom-call.8} parent=5 // pred_region
        %s48 = sand.u32 %s3, 1
        %s49 = sand.u32 %s3, 1
        %s50 = smul.addr %s49, 16
        %s51 = scalar_lea.vmem [#allocation0], %s50
        %s52 = sadd.s32 %s13, %s12
        %s53 = smul.addr %s11, 2
        %s54 = sadd.s32 %s52, %s53
        %s55 = smul.addr %s10, 2
        %s56 = sadd.s32 %s54, %s55
        %s57 = smul.addr %s56, 8
        %s58 = scalar_lea.vmem %s0, %s57
        // Predicated region
        $region17: #{custom-call.8} parent=15 // pred_check
          _
        $region18: #{custom-call.8} parent=15 // pred_check_branch
          %60 = sbr.rel (0) target = $region20
        $region19: #{custom-call.8} parent=15 // pred_region
          // Predicated region
          $region21: #{custom-call.8} parent=19 // pred_check
            _
          $region22: #{custom-call.8} parent=19 // pred_check_branch
            %62 = sbr.rel (0) target = $region24
          $region23: #{custom-call.8} parent=19 // pred_region
            // Predicated region
            $region36: #{custom-call.8} parent=23 // pred_check
              _
            $region37: #{custom-call.8} parent=23 // pred_check_branch
              %80 = sbr.rel (0) target = $region39
            $region38: #{custom-call.8} parent=23 // pred_region
              loop: start=0, step=1, limit=1
              $region40: #{custom-call.8} parent=38 // loop_pre_header
                _
              $region41: #{custom-call.8} parent=38 // loop_header
                %s82 = sphi 0, %s86
                %p83 = scmp.ge.s32.totalorder %s82, 1
                %s87 = sphi %s58, %s58
                %s88 = sphi %s51, %s51
              $region42: #{custom-call.8} parent=38 // loop_header_branch
                %85 = sbr.rel (%p83) target = $region46
              $region43: #{custom-call.8} parent=38 // loop_body
                %v89 = vld [vmem:[%s87] sm:$0xff]
                %90 = vst [vmem:[%s88] sm:$0xff] %v89
                %v91 = vld [vmem:[%s87 + $0x8] sm:$0xff]
                %92 = vst [vmem:[%s88 + $0x8] sm:$0xff] %v91
              $region44: #{custom-call.8} parent=38 // loop_footer
                %s86 = sadd.s32 1, %s82
              $region45: #{custom-call.8} parent=38 // loop_footer_branch
                %81 = sbr.rel target = $region41
              $region46: #{custom-call.8} parent=38 // loop_exit
                _
            $region39: #{custom-call.8} parent=23 // pred_fallthru
              _
            // Predicated region
            $region47: #{custom-call.8} parent=23 // pred_check
              _
            $region48: #{custom-call.8} parent=23 // pred_check_branch
              %94 = sbr.rel target = $region50
            $region49: #{custom-call.8} parent=23 // pred_region
              _
            $region50: #{custom-call.8} parent=23 // pred_fallthru
              _
          $region24: #{custom-call.8} parent=19 // pred_fallthru
            _
          // Predicated region
          $region25: #{custom-call.8} parent=19 // pred_check
            _
          $region26: #{custom-call.8} parent=19 // pred_check_branch
            %64 = sbr.rel target = $region28
          $region27: #{custom-call.8} parent=19 // pred_region
            %s66 = ssub.s32 256, 1
            loop: start=0, step=1, limit=1
            $region29: #{custom-call.8} parent=27 // loop_pre_header
              _
            $region30: #{custom-call.8} parent=27 // loop_header
              %s68 = sphi 0, %s72
              %p69 = scmp.ge.s32.totalorder %s68, 1
              %s73 = sphi %s58, %s58
              %s74 = sphi %s51, %s51
            $region31: #{custom-call.8} parent=27 // loop_header_branch
              %71 = sbr.rel (%p69) target = $region35
            $region32: #{custom-call.8} parent=27 // loop_body
              %v75 = vld [vmem:[%s73] sm:%s66]
              %76 = vst [vmem:[%s74] sm:%s66] %v75
              %v77 = vld [vmem:[%s73 + $0x8] sm:%s66]
              %78 = vst [vmem:[%s74 + $0x8] sm:%s66] %v77
            $region33: #{custom-call.8} parent=27 // loop_footer
              %s72 = sadd.s32 1, %s68
            $region34: #{custom-call.8} parent=27 // loop_footer_branch
              %67 = sbr.rel target = $region30
            $region35: #{custom-call.8} parent=27 // loop_exit
              _
          $region28: #{custom-call.8} parent=19 // pred_fallthru
            _
        $region20: #{custom-call.8} parent=15 // pred_fallthru
          _
        %95 = vnop
      $region16: #{custom-call.8} parent=5 // pred_fallthru
        _
      %p96 = scmp.le.s32.totalorder 1, %s3
      %p97 = scmp.lt.s32.totalorder %s3, 9
      %p98 = pnand %p96, %p97
      %p99 = pneg %p98
      // Predicated region
      $region51: #{custom-call.8} parent=5 // pred_check
        _
      $region52: #{custom-call.8} parent=5 // pred_check_branch
        %101 = sbr.rel (%p98) target = $region54
      $region53: #{custom-call.8} parent=5 // pred_region
        #allocation2 [shape = 'f32[16,16]{1,0}', space=vmem, size = 0x2000, scoped, tag = 'rescaled input a']
        %s102 = ssub.s32 %s3, 1
        %s103 = sand.u32 %s8, 1
        %s104 = sand.u32 %s8, 1
        %s105 = smul.addr %s104, 16
        %s106 = scalar_lea.vmem [#allocation0], %s105
        %s107 = sand.u32 %s8, 1
        %s108 = sand.u32 %s8, 1
        %s109 = smul.addr %s108, 16
        %s110 = scalar_lea.vmem [#allocation0], %s109
        %s111 = sand.u32 %s8, 1
        %s112 = sand.u32 %s8, 1
        %s113 = smul.addr %s112, 16
        %s114 = scalar_lea.vmem [#allocation1], %s113
        %v115 = vlaneseq
        %v116 = vand.u32 %v115, 127
        %vm117 = vcmp.lt.s32.totalorder %v116, 16
        %v118 = vlaneseq
        %v119 = vshrl.u32 %v118, 7
        %vm121 = vcmp.eq.s32.totalorder %v119, %v116
        %v122 = vld [vmem:[%s106] sm:$0xff]
        %v123 = vsel %vm121, %v122, 0.0
        %124 = vadd.xlane.f32.xlu0 %v123
        %v125 = vpop.xlane.xlu0 %124
        %vm126 = vcmp.ge.s32.totalorder %v119, %v116
        %vm127 = vmand %vm126, %vm117
        %v128 = vsel %vm127, %v122, 0.0
        %v129 = vrcp.pop %v125
        %v130 = vmul.f32 %v128, %v129
        %131 = vst [vmem:[#allocation2] sm:$0xff] %v130
        %s132 = scalar_lea.vmem %s106, 8 [#allocation0]
        %s133 = scalar_lea.vmem [#allocation2], 8
        %v134 = vlaneseq
        %v135 = vshrl.u32 %v134, 7
        %v136 = vadd.s32 %v135, 8
        %vm137 = vcmp.eq.s32.totalorder %v136, %v116
        %v138 = vld [vmem:[%s132] sm:$0xff]
        %v139 = vsel %vm137, %v138, 0.0
        %140 = vadd.xlane.f32.xlu0 %v139
        %v141 = vpop.xlane.xlu0 %140
        %vm142 = vcmp.ge.s32.totalorder %v136, %v116
        %vm143 = vmand %vm142, %vm117
        %v144 = vsel %vm143, %v138, 0.0
        %v145 = vrcp.pop %v141
        %v146 = vmul.f32 %v144, %v145
        %147 = vst [vmem:[%s133] sm:$0xff] %v146
        %v148 = vlaneseq
        %v149 = vand.u32 %v148, 127
        %v150 = vlaneseq
        %v151 = vshrl.u32 %v150, 7
        %vm153 = vcmp.eq.s32.totalorder %v149, %v151
        %v154 = vlaneseq
        %v155 = vand.u32 %v154, 127
        %vm156 = vcmp.eq.s32.totalorder %v155, 0
        %v157 = vsel %vm156, 1.0, -1.0
        %v158 = vsel %vm153, %v157, 0.0
        %v159 = vlaneseq
        %v160 = vand.u32 %v159, 127
        %v161 = vlaneseq
        %v162 = vshrl.u32 %v161, 7
        %v163 = vadd.s32 %v162, 8
        %vm164 = vcmp.eq.s32.totalorder %v160, %v163
        %v165 = vsel %vm164, -1.0, 0.0
        %s166 = scalar_lea.vmem [#allocation2], 1
        %v167 = vld [vmem:[%s166] ss:$0 sm:$0xff]
        %v168 = vxor.u32 %v167, 2147483648
        %v169 = vlaneseq
        %v170 = vand.u32 %v169, 127
        %vm171 = vcmp.eq.s32.totalorder %v170, 1
        %v172 = vmul.f32 %v168, %v158
        %173 = vadd.xlane.f32.xlu0 %v172
        %v174 = vpop.xlane.xlu0 %173
        %v175 = vsel %vm171, %v174, %v158
        %s176 = scalar_lea.vmem [#allocation2], 2
        %v177 = vld [vmem:[%s176] ss:$0 sm:$0xff]
        %v178 = vxor.u32 %v177, 2147483648
        %v179 = vlaneseq
        %v180 = vand.u32 %v179, 127
        %vm181 = vcmp.eq.s32.totalorder %v180, 2
        %v182 = vmul.f32 %v178, %v175
        %183 = vadd.xlane.f32.xlu0 %v182
        %v184 = vpop.xlane.xlu0 %183
        %v185 = vsel %vm181, %v184, %v175
        %s186 = scalar_lea.vmem [#allocation2], 3
        %v187 = vld [vmem:[%s186] ss:$0 sm:$0xff]
        %v188 = vxor.u32 %v187, 2147483648
        %v189 = vlaneseq
        %v190 = vand.u32 %v189, 127
        %vm191 = vcmp.eq.s32.totalorder %v190, 3
        %v192 = vmul.f32 %v188, %v185
        %193 = vadd.xlane.f32.xlu0 %v192
        %v194 = vpop.xlane.xlu0 %193
        %v195 = vsel %vm191, %v194, %v185
        %s196 = scalar_lea.vmem [#allocation2], 4
        %v197 = vld [vmem:[%s196] ss:$0 sm:$0xff]
        %v198 = vxor.u32 %v197, 2147483648
        %v199 = vlaneseq
        %v200 = vand.u32 %v199, 127
        %vm201 = vcmp.eq.s32.totalorder %v200, 4
        %v202 = vmul.f32 %v198, %v195
        %203 = vadd.xlane.f32.xlu0 %v202
        %v204 = vpop.xlane.xlu0 %203
        %v205 = vsel %vm201, %v204, %v195
        %s206 = scalar_lea.vmem [#allocation2], 5
        %v207 = vld [vmem:[%s206] ss:$0 sm:$0xff]
        %v208 = vxor.u32 %v207, 2147483648
        %v209 = vlaneseq
        %v210 = vand.u32 %v209, 127
        %vm211 = vcmp.eq.s32.totalorder %v210, 5
        %v212 = vmul.f32 %v208, %v205
        %213 = vadd.xlane.f32.xlu0 %v212
        %v214 = vpop.xlane.xlu0 %213
        %v215 = vsel %vm211, %v214, %v205
        %s216 = scalar_lea.vmem [#allocation2], 6
        %v217 = vld [vmem:[%s216] ss:$0 sm:$0xff]
        %v218 = vxor.u32 %v217, 2147483648
        %v219 = vlaneseq
        %v220 = vand.u32 %v219, 127
        %vm221 = vcmp.eq.s32.totalorder %v220, 6
        %v222 = vmul.f32 %v218, %v215
        %223 = vadd.xlane.f32.xlu0 %v222
        %v224 = vpop.xlane.xlu0 %223
        %v225 = vsel %vm221, %v224, %v215
        %s226 = scalar_lea.vmem [#allocation2], 7
        %v227 = vld [vmem:[%s226] ss:$0 sm:$0xff]
        %v228 = vxor.u32 %v227, 2147483648
        %v229 = vlaneseq
        %v230 = vand.u32 %v229, 127
        %vm231 = vcmp.eq.s32.totalorder %v230, 7
        %v232 = vmul.f32 %v228, %v225
        %233 = vadd.xlane.f32.xlu0 %v232
        %v234 = vpop.xlane.xlu0 %233
        %v235 = vsel %vm231, %v234, %v225
        %s236 = scalar_lea.vmem [#allocation2], 8
        %v237 = vld [vmem:[%s236] ss:$0 sm:$0xff]
        %v238 = vxor.u32 %v237, 2147483648
        %v239 = vlaneseq
        %v240 = vand.u32 %v239, 127
        %vm241 = vcmp.eq.s32.totalorder %v240, 8
        %v242 = vmul.f32 %v238, %v235
        %243 = vadd.xlane.f32.xlu0 %v242
        %v244 = vpop.xlane.xlu0 %243
        %v245 = vsel %vm241, %v244, %v235
        %v246 = vmul.f32 %v238, %v165
        %247 = vadd.xlane.f32.xlu0 %v246
        %v248 = vpop.xlane.xlu0 %247
        %v249 = vsel %vm241, %v248, %v165
        %s250 = scalar_lea.vmem [#allocation2], 9
        %v251 = vld [vmem:[%s250] ss:$0 sm:$0xff]
        %v252 = vxor.u32 %v251, 2147483648
        %v253 = vlaneseq
        %v254 = vand.u32 %v253, 127
        %vm255 = vcmp.eq.s32.totalorder %v254, 9
        %v256 = vmul.f32 %v252, %v245
        %257 = vadd.xlane.f32.xlu0 %v256
        %v258 = vpop.xlane.xlu0 %257
        %v259 = vsel %vm255, %v258, %v245
        %v260 = vmul.f32 %v252, %v249
        %261 = vadd.xlane.f32.xlu0 %v260
        %v262 = vpop.xlane.xlu0 %261
        %v263 = vsel %vm255, %v262, %v249
        %s264 = scalar_lea.vmem [#allocation2], 10
        %v265 = vld [vmem:[%s264] ss:$0 sm:$0xff]
        %v266 = vxor.u32 %v265, 2147483648
        %v267 = vlaneseq
        %v268 = vand.u32 %v267, 127
        %vm269 = vcmp.eq.s32.totalorder %v268, 10
        %v270 = vmul.f32 %v266, %v259
        %271 = vadd.xlane.f32.xlu0 %v270
        %v272 = vpop.xlane.xlu0 %271
        %v273 = vsel %vm269, %v272, %v259
        %v274 = vmul.f32 %v266, %v263
        %275 = vadd.xlane.f32.xlu0 %v274
        %v276 = vpop.xlane.xlu0 %275
        %v277 = vsel %vm269, %v276, %v263
        %s278 = scalar_lea.vmem [#allocation2], 11
        %v279 = vld [vmem:[%s278] ss:$0 sm:$0xff]
        %v280 = vxor.u32 %v279, 2147483648
        %v281 = vlaneseq
        %v282 = vand.u32 %v281, 127
        %vm283 = vcmp.eq.s32.totalorder %v282, 11
        %v284 = vmul.f32 %v280, %v273
        %285 = vadd.xlane.f32.xlu0 %v284
        %v286 = vpop.xlane.xlu0 %285
        %v287 = vsel %vm283, %v286, %v273
        %v288 = vmul.f32 %v280, %v277
        %289 = vadd.xlane.f32.xlu0 %v288
        %v290 = vpop.xlane.xlu0 %289
        %v291 = vsel %vm283, %v290, %v277
        %s292 = scalar_lea.vmem [#allocation2], 12
        %v293 = vld [vmem:[%s292] ss:$0 sm:$0xff]
        %v294 = vxor.u32 %v293, 2147483648
        %v295 = vlaneseq
        %v296 = vand.u32 %v295, 127
        %vm297 = vcmp.eq.s32.totalorder %v296, 12
        %v298 = vmul.f32 %v294, %v287
        %299 = vadd.xlane.f32.xlu0 %v298
        %v300 = vpop.xlane.xlu0 %299
        %v301 = vsel %vm297, %v300, %v287
        %v302 = vmul.f32 %v294, %v291
        %303 = vadd.xlane.f32.xlu0 %v302
        %v304 = vpop.xlane.xlu0 %303
        %v305 = vsel %vm297, %v304, %v291
        %s306 = scalar_lea.vmem [#allocation2], 13
        %v307 = vld [vmem:[%s306] ss:$0 sm:$0xff]
        %v308 = vxor.u32 %v307, 2147483648
        %v309 = vlaneseq
        %v310 = vand.u32 %v309, 127
        %vm311 = vcmp.eq.s32.totalorder %v310, 13
        %v312 = vmul.f32 %v308, %v301
        %313 = vadd.xlane.f32.xlu0 %v312
        %v314 = vpop.xlane.xlu0 %313
        %v315 = vsel %vm311, %v314, %v301
        %v316 = vmul.f32 %v308, %v305
        %317 = vadd.xlane.f32.xlu0 %v316
        %v318 = vpop.xlane.xlu0 %317
        %v319 = vsel %vm311, %v318, %v305
        %s320 = scalar_lea.vmem [#allocation2], 14
        %v321 = vld [vmem:[%s320] ss:$0 sm:$0xff]
        %v322 = vxor.u32 %v321, 2147483648
        %v323 = vlaneseq
        %v324 = vand.u32 %v323, 127
        %vm325 = vcmp.eq.s32.totalorder %v324, 14
        %v326 = vmul.f32 %v322, %v315
        %327 = vadd.xlane.f32.xlu0 %v326
        %v328 = vpop.xlane.xlu0 %327
        %v329 = vsel %vm325, %v328, %v315
        %v330 = vmul.f32 %v322, %v319
        %331 = vadd.xlane.f32.xlu0 %v330
        %v332 = vpop.xlane.xlu0 %331
        %v333 = vsel %vm325, %v332, %v319
        %s334 = scalar_lea.vmem [#allocation2], 15
        %v335 = vld [vmem:[%s334] ss:$0 sm:$0xff]
        %v336 = vxor.u32 %v335, 2147483648
        %v337 = vlaneseq
        %v338 = vand.u32 %v337, 127
        %vm339 = vcmp.eq.s32.totalorder %v338, 15
        %v340 = vmul.f32 %v336, %v329
        %341 = vadd.xlane.f32.xlu0 %v340
        %v342 = vpop.xlane.xlu0 %341
        %v343 = vsel %vm339, %v342, %v329
        %v344 = vmul.f32 %v336, %v333
        %345 = vadd.xlane.f32.xlu0 %v344
        %v346 = vpop.xlane.xlu0 %345
        %v347 = vsel %vm339, %v346, %v333
        %v348 = vrcp.pop %v125
        %v349 = vmul.f32 %v343, %v348
        %vm350 = vweird.f32 %v125
        %v351 = vsel %vm350, %v343, %v349
        %352 = vst [vmem:[%s114] sm:$0xff] %v351
        %v353 = vrcp.pop %v141
        %v354 = vmul.f32 %v347, %v353
        %vm355 = vweird.f32 %v141
        %v356 = vsel %vm355, %v347, %v354
        %s357 = scalar_lea.vmem %s114, 8 [#allocation1]
        %358 = vst [vmem:[%s357] sm:$0xff] %v356
        %s359 = sand.u32 %s8, 1
        %s360 = sand.u32 %s8, 1
        %s361 = smul.addr %s360, 16
        %s362 = scalar_lea.vmem [#allocation1], %s361
        %s363 = sadd.s32 %s17, %s16
        %s364 = smul.addr %s15, 2
        %s365 = sadd.s32 %s363, %s364
        %s366 = smul.addr %s14, 2
        %s367 = sadd.s32 %s365, %s366
        %s368 = smul.addr %s367, 8
        %s369 = scalar_lea.vmem %s1, %s368
        // Predicated region
        $region55: #{custom-call.8} parent=53 // pred_check
          _
        $region56: #{custom-call.8} parent=53 // pred_check_branch
          %371 = sbr.rel (0) target = $region58
        $region57: #{custom-call.8} parent=53 // pred_region
          // Predicated region
          $region59: #{custom-call.8} parent=57 // pred_check
            _
          $region60: #{custom-call.8} parent=57 // pred_check_branch
            %373 = sbr.rel (0) target = $region62
          $region61: #{custom-call.8} parent=57 // pred_region
            // Predicated region
            $region74: #{custom-call.8} parent=61 // pred_check
              _
            $region75: #{custom-call.8} parent=61 // pred_check_branch
              %391 = sbr.rel (0) target = $region77
            $region76: #{custom-call.8} parent=61 // pred_region
              loop: start=0, step=1, limit=1
              $region78: #{custom-call.8} parent=76 // loop_pre_header
                _
              $region79: #{custom-call.8} parent=76 // loop_header
                %s393 = sphi 0, %s397
                %p394 = scmp.ge.s32.totalorder %s393, 1
                %s398 = sphi %s362, %s362
                %s399 = sphi %s369, %s369
              $region80: #{custom-call.8} parent=76 // loop_header_branch
                %396 = sbr.rel (%p394) target = $region84
              $region81: #{custom-call.8} parent=76 // loop_body
                %v400 = vld [vmem:[%s398] sm:$0xff]
                %401 = vst [vmem:[%s399] sm:$0xff] %v400
                %v402 = vld [vmem:[%s398 + $0x8] sm:$0xff]
                %403 = vst [vmem:[%s399 + $0x8] sm:$0xff] %v402
              $region82: #{custom-call.8} parent=76 // loop_footer
                %s397 = sadd.s32 1, %s393
              $region83: #{custom-call.8} parent=76 // loop_footer_branch
                %392 = sbr.rel target = $region79
              $region84: #{custom-call.8} parent=76 // loop_exit
                _
            $region77: #{custom-call.8} parent=61 // pred_fallthru
              _
            // Predicated region
            $region85: #{custom-call.8} parent=61 // pred_check
              _
            $region86: #{custom-call.8} parent=61 // pred_check_branch
              %405 = sbr.rel target = $region88
            $region87: #{custom-call.8} parent=61 // pred_region
              _
            $region88: #{custom-call.8} parent=61 // pred_fallthru
              _
          $region62: #{custom-call.8} parent=57 // pred_fallthru
            _
          // Predicated region
          $region63: #{custom-call.8} parent=57 // pred_check
            _
          $region64: #{custom-call.8} parent=57 // pred_check_branch
            %375 = sbr.rel target = $region66
          $region65: #{custom-call.8} parent=57 // pred_region
            %s377 = ssub.s32 256, 1
            loop: start=0, step=1, limit=1
            $region67: #{custom-call.8} parent=65 // loop_pre_header
              _
            $region68: #{custom-call.8} parent=65 // loop_header
              %s379 = sphi 0, %s383
              %p380 = scmp.ge.s32.totalorder %s379, 1
              %s384 = sphi %s362, %s362
              %s385 = sphi %s369, %s369
            $region69: #{custom-call.8} parent=65 // loop_header_branch
              %382 = sbr.rel (%p380) target = $region73
            $region70: #{custom-call.8} parent=65 // loop_body
              %v386 = vld [vmem:[%s384] sm:%s377]
              %387 = vst [vmem:[%s385] sm:%s377] %v386
              %v388 = vld [vmem:[%s384 + $0x8] sm:%s377]
              %389 = vst [vmem:[%s385 + $0x8] sm:%s377] %v388
            $region71: #{custom-call.8} parent=65 // loop_footer
              %s383 = sadd.s32 1, %s379
            $region72: #{custom-call.8} parent=65 // loop_footer_branch
              %378 = sbr.rel target = $region68
            $region73: #{custom-call.8} parent=65 // loop_exit
              _
          $region66: #{custom-call.8} parent=57 // pred_fallthru
            _
        $region58: #{custom-call.8} parent=53 // pred_fallthru
          _
        %406 = vnop
      $region54: #{custom-call.8} parent=5 // pred_fallthru
        _
      %p407 = scmp.le.s32.totalorder 2, %s3
      // Predicated region
      $region89: #{custom-call.8} parent=5 // pred_check
        %p408 = pneg %p407
      $region90: #{custom-call.8} parent=5 // pred_check_branch
        %410 = sbr.rel (%p408) target = $region92
      $region91: #{custom-call.8} parent=5 // pred_region
        %s411 = ssub.s32 %s3, 2
        %s412 = sand.u32 %s9, 1
        %s413 = sand.u32 %s9, 1
        %s414 = smul.addr %s413, 16
        %s415 = scalar_lea.vmem [#allocation1], %s414
      $region92: #{custom-call.8} parent=5 // pred_fallthru
        _
    $region6: #{custom-call.8} parent=1 // loop_footer
      %s7 = sadd.s32 1, %s3
    $region7: #{custom-call.8} parent=1 // loop_footer_branch
      %2 = sbr.rel target = $region3
    $region8: #{custom-call.8} parent=1 // loop_exit
      _

// kernel: custom-call.9
$region0: #{custom-call.9}
  %s0 = inlined_call_operand.vmem [shape: f32[8,8,8], index: 0, kind: input, shape index: {}]
  %s1 = inlined_call_operand.vmem [shape: f32[8,8,8], index: 1, kind: input, shape index: {}]
  %s2 = inlined_call_operand.vmem [shape: f32[8,8,8], index: 2, kind: input, shape index: {}]
  %s3 = inlined_call_operand.vmem [shape: f32[8,8,8], index: 3, kind: input, shape index: {}]
  %s4 = inlined_call_operand.vmem [shape: f32[8,8], index: 4, kind: output, shape index: {0}]
  %s5 = inlined_call_operand.vmem [shape: f32[8,8], index: 5, kind: output, shape index: {1}]
  %s6 = inlined_call_operand.hbm [shape: f32[8,8,8], index: 6, kind: output, shape index: {2}]
  %s7 = inlined_call_operand.hbm [shape: f32[8,8,8], index: 7, kind: output, shape index: {3}]
  %s8 = inlined_call_operand.hbm [shape: f32[8,8,8], index: 8, kind: output, shape index: {4}]
  %s9 = inlined_call_operand.hbm [shape: f32[8,8,8], index: 9, kind: output, shape index: {5}]
  %10 = xla_tuple %s4, %s5, %s6, %s7, %s8, %s9
  $region1: #{custom-call.9} parent=0
    #allocation0 [shape = 'u8[8192]{0}', space=vmem, size = 0x2000, scoped, tag = 'operand span for operand 0']
    #allocation1 [shape = 'u8[8192]{0}', space=vmem, size = 0x2000, scoped, tag = 'operand span for operand 1']
    #allocation2 [shape = 'u8[8192]{0}', space=vmem, size = 0x2000, scoped, tag = 'operand span for operand 2']
    #allocation3 [shape = 'u8[8192]{0}', space=vmem, size = 0x2000, scoped, tag = 'operand span for operand 3']
    #allocation4 [shape = 'u8[8192]{0}', space=vmem, size = 0x2000, scoped, tag = 'operand span for operand 4']
    #allocation5 [shape = 'u8[8192]{0}', space=vmem, size = 0x2000, scoped, tag = 'operand span for operand 5']
    #allocation6 [shape = 'u8[8192]{0}', space=vmem, size = 0x2000, scoped, tag = 'operand span for operand 6']
    #allocation7 [shape = 's32[2]{0}', space=sflag, size = 0x8, scoped, tag = 'scoped memory for custom-call.9']
    #allocation8 [shape = 'u8[8192]{0}', space=vmem, size = 0x2000, scoped, tag = 'operand span for operand 7']
    #allocation9 [shape = 's32[2]{0}', space=sflag, size = 0x8, scoped, tag = 'scoped memory for custom-call.9']
    #allocation10 [shape = 'u8[8192]{0}', space=vmem, size = 0x2000, scoped, tag = 'operand span for operand 8']
    #allocation11 [shape = 'u8[8192]{0}', space=vmem, size = 0x2000, scoped, tag = 'operand span for operand 9']
    #allocation12 [shape = 's32[2]{0}', space=sflag, size = 0x8, scoped, tag = 'scoped memory for custom-call.9']
    %11 = vsyncpa [#allocation7], 0
    %s12 = scalar_lea.sflag [#allocation7], 1
    %13 = vsyncpa %s12, 0
    %14 = vsyncpa [#allocation9], 0
    %s15 = scalar_lea.sflag [#allocation9], 1
    %16 = vsyncpa %s15, 0
    %17 = vsyncpa [#allocation12], 0
    %s18 = scalar_lea.sflag [#allocation12], 1
    %19 = vsyncpa %s18, 0
    loop: start=0, step=1, limit=10
    $region2: #{custom-call.9} parent=1 // loop_pre_header
      _
    $region3: #{custom-call.9} parent=1 // loop_header
      %s21 = sphi 0, %s25
      %p22 = scmp.ge.s32.totalorder %s21, 10
      %s33 = sphi 0, %s35
      %s36 = sphi 0, %s33
      %s37 = sphi 0, %s36
      %s53 = sphi 0, %s37
      %s61 = sphi 0, %s63
      %s64 = sphi 0, %s61
      %s65 = sphi 0, %s64
      %s81 = sphi 0, %s65
    $region4: #{custom-call.9} parent=1 // loop_header_branch
      %24 = sbr.rel (%p22) target = $region8
    $region5: #{custom-call.9} parent=1 // loop_body
      %s26 = ssub.s32 %s21, 1
      %s27 = ssub.s32 %s21, 2
      %s28 = sadd.s32 %s21, 1
      %s29 = sshrl.u32 %s21, 3
      %s30 = sshrl.u32 %s28, 3
      %s31 = ssub.s32 %s29, %s30
      %p32 = scmp.eq.s32.totalorder %s31, 0
      %s34 = sadd.s32 %s33, 1
      %s35 = scalar_select %p32, %s33, %s34
      %p38 = pneg %p32
      %p39 = scmp.eq.s32.totalorder %s21, 7
      %p40 = por %p38, %p39
      %p41 = scmp.ne.s32.totalorder %s33, %s36
      %p42 = scmp.eq.s32.totalorder %s21, 0
      %p43 = por %p41, %p42
      %p44 = scmp.ne.s32.totalorder %s33, %s36
      %p45 = scmp.eq.s32.totalorder %s26, 7
      %p46 = por %p44, %p45
      %p47 = scmp.ne.s32.totalorder %s36, %s37
      %p48 = scmp.eq.s32.totalorder %s26, 0
      %p49 = por %p47, %p48
      %p50 = scmp.ne.s32.totalorder %s36, %s37
      %p51 = scmp.eq.s32.totalorder %s27, 7
      %p52 = por %p50, %p51
      %p54 = scmp.ne.s32.totalorder %s37, %s53
      %p55 = scmp.eq.s32.totalorder %s27, 0
      %p56 = por %p54, %p55
      %s57 = sshrl.u32 %s21, 3
      %s58 = sshrl.u32 %s28, 3
      %s59 = ssub.s32 %s57, %s58
      %p60 = scmp.eq.s32.totalorder %s59, 0
      %s62 = sadd.s32 %s61, 1
      %s63 = scalar_select %p60, %s61, %s62
      %p66 = pneg %p60
      %p67 = scmp.eq.s32.totalorder %s21, 7
      %p68 = por %p66, %p67
      %p69 = scmp.ne.s32.totalorder %s61, %s64
      %p70 = scmp.eq.s32.totalorder %s21, 0
      %p71 = por %p69, %p70
      %p72 = scmp.ne.s32.totalorder %s61, %s64
      %p73 = scmp.eq.s32.totalorder %s26, 7
      %p74 = por %p72, %p73
      %p75 = scmp.ne.s32.totalorder %s64, %s65
      %p76 = scmp.eq.s32.totalorder %s26, 0
      %p77 = por %p75, %p76
      %p78 = scmp.ne.s32.totalorder %s64, %s65
      %p79 = scmp.eq.s32.totalorder %s27, 7
      %p80 = por %p78, %p79
      %p82 = scmp.ne.s32.totalorder %s65, %s81
      %p83 = scmp.eq.s32.totalorder %s27, 0
      %p84 = por %p82, %p83
      %p85 = scmp.le.s32.totalorder 1, %s21
      %p86 = scmp.lt.s32.totalorder %s21, 9
      %p87 = pnand %p85, %p86
      %p88 = pneg %p87
      // Predicated region
      $region9: #{custom-call.9} parent=5 // pred_check
        _
      $region10: #{custom-call.9} parent=5 // pred_check_branch
        %90 = sbr.rel (%p87) target = $region12
      $region11: #{custom-call.9} parent=5 // pred_region
        %s91 = ssub.s32 %s21, 1
      $region12: #{custom-call.9} parent=5 // pred_fallthru
        _
      %p92 = scmp.lt.s32.totalorder %s21, 8
      // Predicated region
      $region13: #{custom-call.9} parent=5 // pred_check
        %p93 = pneg %p92
      $region14: #{custom-call.9} parent=5 // pred_check_branch
        %95 = sbr.rel (%p93) target = $region16
      $region15: #{custom-call.9} parent=5 // pred_region
        %s96 = sand.u32 %s21, 1
        %s97 = sand.u32 %s21, 1
        %s98 = smul.addr %s97, 8
        %s99 = scalar_lea.vmem [#allocation0], %s98
        %s100 = smul.addr %s21, 8
        %s101 = scalar_lea.vmem %s0, %s100
        // Predicated region
        $region17: #{custom-call.9} parent=15 // pred_check
          _
        $region18: #{custom-call.9} parent=15 // pred_check_branch
          %103 = sbr.rel (0) target = $region20
        $region19: #{custom-call.9} parent=15 // pred_region
          // Predicated region
          $region21: #{custom-call.9} parent=19 // pred_check
            _
          $region22: #{custom-call.9} parent=19 // pred_check_branch
            %105 = sbr.rel (0) target = $region24
          $region23: #{custom-call.9} parent=19 // pred_region
            // Predicated region
            $region36: #{custom-call.9} parent=23 // pred_check
              _
            $region37: #{custom-call.9} parent=23 // pred_check_branch
              %121 = sbr.rel (0) target = $region39
            $region38: #{custom-call.9} parent=23 // pred_region
              loop: start=0, step=1, limit=1
              $region40: #{custom-call.9} parent=38 // loop_pre_header
                _
              $region41: #{custom-call.9} parent=38 // loop_header
                %s123 = sphi 0, %s127
                %p124 = scmp.ge.s32.totalorder %s123, 1
                %s128 = sphi %s101, %s101
                %s129 = sphi %s99, %s99
              $region42: #{custom-call.9} parent=38 // loop_header_branch
                %126 = sbr.rel (%p124) target = $region46
              $region43: #{custom-call.9} parent=38 // loop_body
                %v130 = vld [vmem:[%s128] sm:$0xff]
                %131 = vst [vmem:[%s129] sm:$0xff] %v130
              $region44: #{custom-call.9} parent=38 // loop_footer
                %s127 = sadd.s32 1, %s123
              $region45: #{custom-call.9} parent=38 // loop_footer_branch
                %122 = sbr.rel target = $region41
              $region46: #{custom-call.9} parent=38 // loop_exit
                _
            $region39: #{custom-call.9} parent=23 // pred_fallthru
              _
            // Predicated region
            $region47: #{custom-call.9} parent=23 // pred_check
              _
            $region48: #{custom-call.9} parent=23 // pred_check_branch
              %133 = sbr.rel target = $region50
            $region49: #{custom-call.9} parent=23 // pred_region
              _
            $region50: #{custom-call.9} parent=23 // pred_fallthru
              _
          $region24: #{custom-call.9} parent=19 // pred_fallthru
            _
          // Predicated region
          $region25: #{custom-call.9} parent=19 // pred_check
            _
          $region26: #{custom-call.9} parent=19 // pred_check_branch
            %107 = sbr.rel target = $region28
          $region27: #{custom-call.9} parent=19 // pred_region
            %s109 = ssub.s32 256, 1
            loop: start=0, step=1, limit=1
            $region29: #{custom-call.9} parent=27 // loop_pre_header
              _
            $region30: #{custom-call.9} parent=27 // loop_header
              %s111 = sphi 0, %s115
              %p112 = scmp.ge.s32.totalorder %s111, 1
              %s116 = sphi %s101, %s101
              %s117 = sphi %s99, %s99
            $region31: #{custom-call.9} parent=27 // loop_header_branch
              %114 = sbr.rel (%p112) target = $region35
            $region32: #{custom-call.9} parent=27 // loop_body
              %v118 = vld [vmem:[%s116] sm:%s109]
              %119 = vst [vmem:[%s117] sm:%s109] %v118
            $region33: #{custom-call.9} parent=27 // loop_footer
              %s115 = sadd.s32 1, %s111
            $region34: #{custom-call.9} parent=27 // loop_footer_branch
              %110 = sbr.rel target = $region30
            $region35: #{custom-call.9} parent=27 // loop_exit
              _
          $region28: #{custom-call.9} parent=19 // pred_fallthru
            _
        $region20: #{custom-call.9} parent=15 // pred_fallthru
          _
        %134 = vnop
        %s135 = sand.u32 %s21, 1
        %s136 = sand.u32 %s21, 1
        %s137 = smul.addr %s136, 8
        %s138 = scalar_lea.vmem [#allocation1], %s137
        %s139 = smul.addr %s21, 8
        %s140 = scalar_lea.vmem %s1, %s139
        // Predicated region
        $region51: #{custom-call.9} parent=15 // pred_check
          _
        $region52: #{custom-call.9} parent=15 // pred_check_branch
          %142 = sbr.rel (0) target = $region54
        $region53: #{custom-call.9} parent=15 // pred_region
          // Predicated region
          $region55: #{custom-call.9} parent=53 // pred_check
            _
          $region56: #{custom-call.9} parent=53 // pred_check_branch
            %144 = sbr.rel (0) target = $region58
          $region57: #{custom-call.9} parent=53 // pred_region
            // Predicated region
            $region70: #{custom-call.9} parent=57 // pred_check
              _
            $region71: #{custom-call.9} parent=57 // pred_check_branch
              %160 = sbr.rel (0) target = $region73
            $region72: #{custom-call.9} parent=57 // pred_region
              loop: start=0, step=1, limit=1
              $region74: #{custom-call.9} parent=72 // loop_pre_header
                _
              $region75: #{custom-call.9} parent=72 // loop_header
                %s162 = sphi 0, %s166
                %p163 = scmp.ge.s32.totalorder %s162, 1
                %s167 = sphi %s140, %s140
                %s168 = sphi %s138, %s138
              $region76: #{custom-call.9} parent=72 // loop_header_branch
                %165 = sbr.rel (%p163) target = $region80
              $region77: #{custom-call.9} parent=72 // loop_body
                %v169 = vld [vmem:[%s167] sm:$0xff]
                %170 = vst [vmem:[%s168] sm:$0xff] %v169
              $region78: #{custom-call.9} parent=72 // loop_footer
                %s166 = sadd.s32 1, %s162
              $region79: #{custom-call.9} parent=72 // loop_footer_branch
                %161 = sbr.rel target = $region75
              $region80: #{custom-call.9} parent=72 // loop_exit
                _
            $region73: #{custom-call.9} parent=57 // pred_fallthru
              _
            // Predicated region
            $region81: #{custom-call.9} parent=57 // pred_check
              _
            $region82: #{custom-call.9} parent=57 // pred_check_branch
              %172 = sbr.rel target = $region84
            $region83: #{custom-call.9} parent=57 // pred_region
              _
            $region84: #{custom-call.9} parent=57 // pred_fallthru
              _
          $region58: #{custom-call.9} parent=53 // pred_fallthru
            _
          // Predicated region
          $region59: #{custom-call.9} parent=53 // pred_check
            _
          $region60: #{custom-call.9} parent=53 // pred_check_branch
            %146 = sbr.rel target = $region62
          $region61: #{custom-call.9} parent=53 // pred_region
            %s148 = ssub.s32 256, 1
            loop: start=0, step=1, limit=1
            $region63: #{custom-call.9} parent=61 // loop_pre_header
              _
            $region64: #{custom-call.9} parent=61 // loop_header
              %s150 = sphi 0, %s154
              %p151 = scmp.ge.s32.totalorder %s150, 1
              %s155 = sphi %s140, %s140
              %s156 = sphi %s138, %s138
            $region65: #{custom-call.9} parent=61 // loop_header_branch
              %153 = sbr.rel (%p151) target = $region69
            $region66: #{custom-call.9} parent=61 // loop_body
              %v157 = vld [vmem:[%s155] sm:%s148]
              %158 = vst [vmem:[%s156] sm:%s148] %v157
            $region67: #{custom-call.9} parent=61 // loop_footer
              %s154 = sadd.s32 1, %s150
            $region68: #{custom-call.9} parent=61 // loop_footer_branch
              %149 = sbr.rel target = $region64
            $region69: #{custom-call.9} parent=61 // loop_exit
              _
          $region62: #{custom-call.9} parent=53 // pred_fallthru
            _
        $region54: #{custom-call.9} parent=15 // pred_fallthru
          _
        %173 = vnop
        %s174 = sand.u32 %s21, 1
        %s175 = sand.u32 %s21, 1
        %s176 = smul.addr %s175, 8
        %s177 = scalar_lea.vmem [#allocation2], %s176
        %s178 = smul.addr %s21, 8
        %s179 = scalar_lea.vmem %s2, %s178
        // Predicated region
        $region85: #{custom-call.9} parent=15 // pred_check
          _
        $region86: #{custom-call.9} parent=15 // pred_check_branch
          %181 = sbr.rel (0) target = $region88
        $region87: #{custom-call.9} parent=15 // pred_region
          // Predicated region
          $region89: #{custom-call.9} parent=87 // pred_check
            _
          $region90: #{custom-call.9} parent=87 // pred_check_branch
            %183 = sbr.rel (0) target = $region92
          $region91: #{custom-call.9} parent=87 // pred_region
            // Predicated region
            $region104: #{custom-call.9} parent=91 // pred_check
              _
            $region105: #{custom-call.9} parent=91 // pred_check_branch
              %199 = sbr.rel (0) target = $region107
            $region106: #{custom-call.9} parent=91 // pred_region
              loop: start=0, step=1, limit=1
              $region108: #{custom-call.9} parent=106 // loop_pre_header
                _
              $region109: #{custom-call.9} parent=106 // loop_header
                %s201 = sphi 0, %s205
                %p202 = scmp.ge.s32.totalorder %s201, 1
                %s206 = sphi %s179, %s179
                %s207 = sphi %s177, %s177
              $region110: #{custom-call.9} parent=106 // loop_header_branch
                %204 = sbr.rel (%p202) target = $region114
              $region111: #{custom-call.9} parent=106 // loop_body
                %v208 = vld [vmem:[%s206] sm:$0xff]
                %209 = vst [vmem:[%s207] sm:$0xff] %v208
              $region112: #{custom-call.9} parent=106 // loop_footer
                %s205 = sadd.s32 1, %s201
              $region113: #{custom-call.9} parent=106 // loop_footer_branch
                %200 = sbr.rel target = $region109
              $region114: #{custom-call.9} parent=106 // loop_exit
                _
            $region107: #{custom-call.9} parent=91 // pred_fallthru
              _
            // Predicated region
            $region115: #{custom-call.9} parent=91 // pred_check
              _
            $region116: #{custom-call.9} parent=91 // pred_check_branch
              %211 = sbr.rel target = $region118
            $region117: #{custom-call.9} parent=91 // pred_region
              _
            $region118: #{custom-call.9} parent=91 // pred_fallthru
              _
          $region92: #{custom-call.9} parent=87 // pred_fallthru
            _
          // Predicated region
          $region93: #{custom-call.9} parent=87 // pred_check
            _
          $region94: #{custom-call.9} parent=87 // pred_check_branch
            %185 = sbr.rel target = $region96
          $region95: #{custom-call.9} parent=87 // pred_region
            %s187 = ssub.s32 256, 1
            loop: start=0, step=1, limit=1
            $region97: #{custom-call.9} parent=95 // loop_pre_header
              _
            $region98: #{custom-call.9} parent=95 // loop_header
              %s189 = sphi 0, %s193
              %p190 = scmp.ge.s32.totalorder %s189, 1
              %s194 = sphi %s179, %s179
              %s195 = sphi %s177, %s177
            $region99: #{custom-call.9} parent=95 // loop_header_branch
              %192 = sbr.rel (%p190) target = $region103
            $region100: #{custom-call.9} parent=95 // loop_body
              %v196 = vld [vmem:[%s194] sm:%s187]
              %197 = vst [vmem:[%s195] sm:%s187] %v196
            $region101: #{custom-call.9} parent=95 // loop_footer
              %s193 = sadd.s32 1, %s189
            $region102: #{custom-call.9} parent=95 // loop_footer_branch
              %188 = sbr.rel target = $region98
            $region103: #{custom-call.9} parent=95 // loop_exit
              _
          $region96: #{custom-call.9} parent=87 // pred_fallthru
            _
        $region88: #{custom-call.9} parent=15 // pred_fallthru
          _
        %212 = vnop
        %s213 = sand.u32 %s21, 1
        %s214 = sand.u32 %s21, 1
        %s215 = smul.addr %s214, 8
        %s216 = scalar_lea.vmem [#allocation3], %s215
        %s217 = smul.addr %s21, 8
        %s218 = scalar_lea.vmem %s3, %s217
        // Predicated region
        $region119: #{custom-call.9} parent=15 // pred_check
          _
        $region120: #{custom-call.9} parent=15 // pred_check_branch
          %220 = sbr.rel (0) target = $region122
        $region121: #{custom-call.9} parent=15 // pred_region
          // Predicated region
          $region123: #{custom-call.9} parent=121 // pred_check
            _
          $region124: #{custom-call.9} parent=121 // pred_check_branch
            %222 = sbr.rel (0) target = $region126
          $region125: #{custom-call.9} parent=121 // pred_region
            // Predicated region
            $region138: #{custom-call.9} parent=125 // pred_check
              _
            $region139: #{custom-call.9} parent=125 // pred_check_branch
              %238 = sbr.rel (0) target = $region141
            $region140: #{custom-call.9} parent=125 // pred_region
              loop: start=0, step=1, limit=1
              $region142: #{custom-call.9} parent=140 // loop_pre_header
                _
              $region143: #{custom-call.9} parent=140 // loop_header
                %s240 = sphi 0, %s244
                %p241 = scmp.ge.s32.totalorder %s240, 1
                %s245 = sphi %s218, %s218
                %s246 = sphi %s216, %s216
              $region144: #{custom-call.9} parent=140 // loop_header_branch
                %243 = sbr.rel (%p241) target = $region148
              $region145: #{custom-call.9} parent=140 // loop_body
                %v247 = vld [vmem:[%s245] sm:$0xff]
                %248 = vst [vmem:[%s246] sm:$0xff] %v247
              $region146: #{custom-call.9} parent=140 // loop_footer
                %s244 = sadd.s32 1, %s240
              $region147: #{custom-call.9} parent=140 // loop_footer_branch
                %239 = sbr.rel target = $region143
              $region148: #{custom-call.9} parent=140 // loop_exit
                _
            $region141: #{custom-call.9} parent=125 // pred_fallthru
              _
            // Predicated region
            $region149: #{custom-call.9} parent=125 // pred_check
              _
            $region150: #{custom-call.9} parent=125 // pred_check_branch
              %250 = sbr.rel target = $region152
            $region151: #{custom-call.9} parent=125 // pred_region
              _
            $region152: #{custom-call.9} parent=125 // pred_fallthru
              _
          $region126: #{custom-call.9} parent=121 // pred_fallthru
            _
          // Predicated region
          $region127: #{custom-call.9} parent=121 // pred_check
            _
          $region128: #{custom-call.9} parent=121 // pred_check_branch
            %224 = sbr.rel target = $region130
          $region129: #{custom-call.9} parent=121 // pred_region
            %s226 = ssub.s32 256, 1
            loop: start=0, step=1, limit=1
            $region131: #{custom-call.9} parent=129 // loop_pre_header
              _
            $region132: #{custom-call.9} parent=129 // loop_header
              %s228 = sphi 0, %s232
              %p229 = scmp.ge.s32.totalorder %s228, 1
              %s233 = sphi %s218, %s218
              %s234 = sphi %s216, %s216
            $region133: #{custom-call.9} parent=129 // loop_header_branch
              %231 = sbr.rel (%p229) target = $region137
            $region134: #{custom-call.9} parent=129 // loop_body
              %v235 = vld [vmem:[%s233] sm:%s226]
              %236 = vst [vmem:[%s234] sm:%s226] %v235
            $region135: #{custom-call.9} parent=129 // loop_footer
              %s232 = sadd.s32 1, %s228
            $region136: #{custom-call.9} parent=129 // loop_footer_branch
              %227 = sbr.rel target = $region132
            $region137: #{custom-call.9} parent=129 // loop_exit
              _
          $region130: #{custom-call.9} parent=121 // pred_fallthru
            _
        $region122: #{custom-call.9} parent=15 // pred_fallthru
          _
        %251 = vnop
      $region16: #{custom-call.9} parent=5 // pred_fallthru
        _
      %p252 = scmp.le.s32.totalorder 1, %s21
      %p253 = scmp.lt.s32.totalorder %s21, 9
      %p254 = pnand %p252, %p253
      %p255 = pneg %p254
      // Predicated region
      $region153: #{custom-call.9} parent=5 // pred_check
        _
      $region154: #{custom-call.9} parent=5 // pred_check_branch
        %257 = sbr.rel (%p254) target = $region156
      $region155: #{custom-call.9} parent=5 // pred_region
        #allocation13 [shape = 'f32[8,8]{1,0}', space=vmem, size = 0x1000, scoped, tag = 'a top-left matrix']
        #allocation14 [shape = 'f32[8,8]{1,0}', space=vmem, size = 0x1000, scoped, tag = 'a top-right matrix']
        #allocation15 [shape = 'f32[8,8]{1,0}', space=vmem, size = 0x1000, scoped, tag = 'a bottom-left matrix']
        #allocation16 [shape = 'f32[8,8]{1,0}', space=vmem, size = 0x1000, scoped, tag = 'a bottom-right matrix']
        %s258 = ssub.s32 %s21, 1
        %s259 = sand.u32 %s26, 1
        %s260 = sand.u32 %s26, 1
        %s261 = smul.addr %s260, 8
        %s262 = scalar_lea.vmem [#allocation0], %s261
        %s263 = sand.u32 %s26, 1
        %s264 = sand.u32 %s26, 1
        %s265 = smul.addr %s264, 8
        %s266 = scalar_lea.vmem [#allocation1], %s265
        %s267 = sand.u32 %s26, 1
        %s268 = sand.u32 %s26, 1
        %s269 = smul.addr %s268, 8
        %s270 = scalar_lea.vmem [#allocation2], %s269
        %s271 = sand.u32 %s26, 1
        %s272 = sand.u32 %s26, 1
        %s273 = smul.addr %s272, 8
        %s274 = scalar_lea.vmem [#allocation3], %s273
        %s275 = sand.u32 %s26, 1
        %s276 = sand.u32 %s26, 1
        %s277 = smul.addr %s276, 8
        %s278 = scalar_lea.vmem [#allocation0], %s277
        %s279 = sand.u32 %s26, 1
        %s280 = sand.u32 %s26, 1
        %s281 = smul.addr %s280, 8
        %s282 = scalar_lea.vmem [#allocation1], %s281
        %s283 = sand.u32 %s26, 1
        %s284 = sand.u32 %s26, 1
        %s285 = smul.addr %s284, 8
        %s286 = scalar_lea.vmem [#allocation2], %s285
        %s287 = sand.u32 %s26, 1
        %s288 = sand.u32 %s26, 1
        %s289 = smul.addr %s288, 8
        %s290 = scalar_lea.vmem [#allocation3], %s289
        %p291 = pneg %p49
        %p292 = pneg %p46
        %s293 = sand.u32 %s36, 1
        %s294 = sand.u32 %s36, 1
        %s295 = smul.addr %s294, 8
        %s296 = scalar_lea.vmem [#allocation4], %s295
        %p297 = pneg %p77
        %p298 = pneg %p74
        %s299 = sand.u32 %s64, 1
        %s300 = sand.u32 %s64, 1
        %s301 = smul.addr %s300, 8
        %s302 = scalar_lea.vmem [#allocation5], %s301
        %s303 = sand.u32 %s26, 1
        %s304 = scalar_lea.sflag [#allocation7], %s303
        %s305 = sand.u32 %s26, 1
        %s306 = smul.addr %s305, 8
        %s307 = scalar_lea.vmem [#allocation6], %s306
        %s308 = sand.u32 %s26, 1
        %s309 = scalar_lea.sflag [#allocation9], %s308
        %s310 = sand.u32 %s26, 1
        %s311 = smul.addr %s310, 8
        %s312 = scalar_lea.vmem [#allocation8], %s311
        %s313 = sand.u32 %s26, 1
        %s314 = scalar_lea.sflag [#allocation9], %s313
        %s315 = sand.u32 %s26, 1
        %s316 = smul.addr %s315, 8
        %s317 = scalar_lea.vmem [#allocation10], %s316
        %s318 = sand.u32 %s26, 1
        %s319 = scalar_lea.sflag [#allocation12], %s318
        %s320 = sand.u32 %s26, 1
        %s321 = smul.addr %s320, 8
        %s322 = scalar_lea.vmem [#allocation11], %s321
        %s323 = sshrl.u32 %s26, 3
        %s324 = sshrl.u32 %s26, 3
        %s325 = smov [#allocation13]
        %v326 = vld [vmem:[%s262] sm:$0xff]
        %327 = vst [vmem:[%s325] sm:$0xff] %v326
        %s328 = smov [#allocation14]
        %v329 = vld [vmem:[%s266] sm:$0xff]
        %330 = vst [vmem:[%s328] sm:$0xff] %v329
        %s331 = smov [#allocation15]
        %v332 = vld [vmem:[%s270] sm:$0xff]
        %333 = vst [vmem:[%s331] sm:$0xff] %v332
        %s334 = smov [#allocation16]
        %v335 = vld [vmem:[%s274] sm:$0xff]
        %336 = vst [vmem:[%s334] sm:$0xff] %v335
        %337 = vst [vmem:[%s307] sm:$0xff] 0.0
        %338 = vst [vmem:[%s312] sm:$0xff] 0.0
        %339 = vst [vmem:[%s317] sm:$0xff] 0.0
        %340 = vst [vmem:[%s322] sm:$0xff] 0.0
        %s341 = smov %s307
        %v342 = vlaneseq
        %v343 = vand.u32 %v342, 127
        %v344 = vmov %v343
        %v345 = vlaneseq
        %v346 = vshrl.u32 %v345, 7
        %v347 = vmov %v346
        %v348 = vld [vmem:[%s341] sm:$0xff]
        %vm351 = vcmp.eq.s32.totalorder %v347, %v344
        %v352 = vsel %vm351, 1.0, %v348
        %353 = vst [vmem:[%s341] sm:$0xff] %v352
        %s354 = smov %s322
        %v355 = vlaneseq
        %v356 = vand.u32 %v355, 127
        %v357 = vmov %v356
        %v358 = vlaneseq
        %v359 = vshrl.u32 %v358, 7
        %v360 = vmov %v359
        %v361 = vld [vmem:[%s354] sm:$0xff]
        %vm364 = vcmp.eq.s32.totalorder %v360, %v357
        %v365 = vsel %vm364, 1.0, %v361
        %366 = vst [vmem:[%s354] sm:$0xff] %v365
        // While loop
        $region157: #{custom-call.9} parent=155 // loop_pre_header
          _
        $region158: #{custom-call.9} parent=155 // loop_header
          %s368 = sphi 0, %s910
          %v369 = vlaneseq
          %v370 = vand.u32 %v369, 127
          %v371 = vmov %v370
          %v372 = vlaneseq
          %v373 = vshrl.u32 %v372, 7
          %v374 = vmov %v373
          %s375 = smov [#allocation13]
          %v376 = vlaneseq
          %v377 = vand.u32 %v376, 127
          %vm378 = vcmp.ge.s32.totalorder %v377, 0
          %vm379 = vcmp.lt.s32.totalorder %v377, 8
          %vm380 = vmand %vm378, %vm379
          %v381 = vld [vmem:[%s375] sm:$0xff]
          %v382 = vsel %vm380, %v381, 0.0
          %v383 = vmul.f32 %v382, %v382
          %vm386 = vcmp.eq.s32.totalorder %v374, %v371
          %v387 = vsel %vm386, 0.0, %v383
          %v388 = vlaneseq
          %v389 = vand.u32 %v388, 127
          %v390 = vmov %v389
          %v391 = vlaneseq
          %v392 = vshrl.u32 %v391, 7
          %v393 = vmov %v392
          %s394 = smov [#allocation14]
          %v395 = vlaneseq
          %v396 = vand.u32 %v395, 127
          %vm397 = vcmp.ge.s32.totalorder %v396, 0
          %vm398 = vcmp.lt.s32.totalorder %v396, 8
          %vm399 = vmand %vm397, %vm398
          %v400 = vld [vmem:[%s394] sm:$0xff]
          %v401 = vsel %vm399, %v400, 0.0
          %v402 = vmul.f32 %v401, %v401
          %v403 = vadd.f32 %v387, %v402
          %v404 = vadd.f32 %v383, %v402
          %v405 = vlaneseq
          %v406 = vand.u32 %v405, 127
          %v407 = vmov %v406
          %v408 = vlaneseq
          %v409 = vshrl.u32 %v408, 7
          %v410 = vmov %v409
          %s411 = smov [#allocation15]
          %v412 = vlaneseq
          %v413 = vand.u32 %v412, 127
          %vm414 = vcmp.ge.s32.totalorder %v413, 0
          %vm415 = vcmp.lt.s32.totalorder %v413, 8
          %vm416 = vmand %vm414, %vm415
          %v417 = vld [vmem:[%s411] sm:$0xff]
          %v418 = vsel %vm416, %v417, 0.0
          %v419 = vmul.f32 %v418, %v418
          %v420 = vadd.f32 %v403, %v419
          %v421 = vadd.f32 %v404, %v419
          %v422 = vlaneseq
          %v423 = vand.u32 %v422, 127
          %v424 = vmov %v423
          %v425 = vlaneseq
          %v426 = vshrl.u32 %v425, 7
          %v427 = vmov %v426
          %s428 = smov [#allocation16]
          %v429 = vlaneseq
          %v430 = vand.u32 %v429, 127
          %vm431 = vcmp.ge.s32.totalorder %v430, 0
          %vm432 = vcmp.lt.s32.totalorder %v430, 8
          %vm433 = vmand %vm431, %vm432
          %v434 = vld [vmem:[%s428] sm:$0xff]
          %v435 = vsel %vm433, %v434, 0.0
          %v436 = vmul.f32 %v435, %v435
          %vm439 = vcmp.eq.s32.totalorder %v427, %v424
          %v440 = vsel %vm439, 0.0, %v436
          %v441 = vadd.f32 %v420, %v440
          %v442 = vadd.f32 %v421, %v436
          %443 = vadd.xlane.f32.xlu0 %v442
          %v444 = vpop.xlane.xlu0 %443
          %v445 = vrot.slane %v444, 4
          %v446 = vadd.f32 %v444, %v445
          %v447 = vrot.slane %v446, 2
          %v448 = vadd.f32 %v446, %v447
          %v449 = vrot.slane %v448, 1
          %v450 = vadd.f32 %v448, %v449
          %451 = vadd.xlane.f32.xlu0 %v441
          %v452 = vpop.xlane.xlu0 %451
          %v453 = vrot.slane %v452, 4
          %v454 = vadd.f32 %v452, %v453
          %v455 = vrot.slane %v454, 2
          %v456 = vadd.f32 %v454, %v455
          %v457 = vrot.slane %v456, 1
          %v458 = vadd.f32 %v456, %v457
          %s459 = vtos %v458
          %s460 = vtos %v450
          %s461 = smul.f32 1e-10, %s460
          %p462 = scmp.le.f32.partialorder %s459, %s461
          %p463 = scmp.ge.s32.totalorder %s368, 15
          %p464 = por %p462, %p463
        $region159: #{custom-call.9} parent=155 // loop_header_branch
          %912 = sbr.rel (%p464) target = $region163
        $region160: #{custom-call.9} parent=155 // loop_body
          loop: start=0, step=1, limit=15
          $region164: #{custom-call.9} parent=160 // loop_pre_header
            _
          $region165: #{custom-call.9} parent=160 // loop_header
            %s466 = sphi 0, %s470
            %p467 = scmp.ge.s32.totalorder %s466, 15
          $region166: #{custom-call.9} parent=160 // loop_header_branch
            %469 = sbr.rel (%p467) target = $region170
          $region167: #{custom-call.9} parent=160 // loop_body
            #allocation17 [shape = 'f32[1024]{0}', space=vmem, size = 0x1000, scoped, tag = 'a_tl_diag vmem']
            #allocation18 [shape = 'f32[1024]{0}', space=vmem, size = 0x1000, scoped, tag = 'a_tr_diag vmem']
            #allocation19 [shape = 'f32[1024]{0}', space=vmem, size = 0x1000, scoped, tag = 'a_br_diag vmem']
            #allocation20 [shape = 'f32[1024]{0}', space=vmem, size = 0x1000, scoped, tag = 'rt1 vmem']
            #allocation21 [shape = 'f32[1024]{0}', space=vmem, size = 0x1000, scoped, tag = 'rt2 vmem']
            #allocation22 [shape = 'f32[1024]{0}', space=vmem, size = 0x1000, scoped, tag = 'c vmem']
            #allocation23 [shape = 'f32[1024]{0}', space=vmem, size = 0x1000, scoped, tag = 's vmem']
            #allocation24 [shape = 'f32[4096]{0}', space=vmem, size = 0x4000, scoped, tag = 'c broadcast']
            #allocation25 [shape = 'f32[4096]{0}', space=vmem, size = 0x4000, scoped, tag = 's broadcast']
            %s471 = smov [#allocation13]
            %s472 = smov [#allocation17]
            %v473 = vlaneseq
            %v474 = vand.u32 %v473, 127
            %v475 = vmov %v474
            %v476 = vlaneseq
            %v477 = vshrl.u32 %v476, 7
            %v478 = vmov %v477
            %v479 = vld [vmem:[%s471] sm:$0xff]
            %vm482 = vcmp.eq.s32.totalorder %v478, %v475
            %v483 = vsel %vm482, %v479, 0.0
            %v484 = vrot.slane %v483, 4
            %v485 = vadd.f32 %v483, %v484
            %v486 = vrot.slane %v485, 2
            %v487 = vadd.f32 %v485, %v486
            %v488 = vrot.slane %v487, 1
            %v489 = vadd.f32 %v487, %v488
            %490 = vst [vmem:[%s472] sm:$0x1] %v489
            %s491 = smov [#allocation14]
            %s492 = smov [#allocation18]
            %v493 = vlaneseq
            %v494 = vand.u32 %v493, 127
            %v495 = vmov %v494
            %v496 = vlaneseq
            %v497 = vshrl.u32 %v496, 7
            %v498 = vmov %v497
            %v499 = vld [vmem:[%s491] sm:$0xff]
            %vm502 = vcmp.eq.s32.totalorder %v498, %v495
            %v503 = vsel %vm502, %v499, 0.0
            %v504 = vrot.slane %v503, 4
            %v505 = vadd.f32 %v503, %v504
            %v506 = vrot.slane %v505, 2
            %v507 = vadd.f32 %v505, %v506
            %v508 = vrot.slane %v507, 1
            %v509 = vadd.f32 %v507, %v508
            %510 = vst [vmem:[%s492] sm:$0x1] %v509
            %s511 = smov [#allocation16]
            %s512 = smov [#allocation19]
            %v513 = vlaneseq
            %v514 = vand.u32 %v513, 127
            %v515 = vmov %v514
            %v516 = vlaneseq
            %v517 = vshrl.u32 %v516, 7
            %v518 = vmov %v517
            %v519 = vld [vmem:[%s511] sm:$0xff]
            %vm522 = vcmp.eq.s32.totalorder %v518, %v515
            %v523 = vsel %vm522, %v519, 0.0
            %v524 = vrot.slane %v523, 4
            %v525 = vadd.f32 %v523, %v524
            %v526 = vrot.slane %v525, 2
            %v527 = vadd.f32 %v525, %v526
            %v528 = vrot.slane %v527, 1
            %v529 = vadd.f32 %v527, %v528
            %530 = vst [vmem:[%s512] sm:$0x1] %v529
            %s531 = smov [#allocation22]
            %s532 = smov [#allocation23]
            %s533 = smov [#allocation17]
            %v534 = vld [vmem:[%s533] sm:$0xff]
            %s535 = smov [#allocation18]
            %v536 = vld [vmem:[%s535] sm:$0xff]
            %s537 = smov [#allocation19]
            %v538 = vld [vmem:[%s537] sm:$0xff]
            %v539 = vsub.f32 %v538, %v534
            %v540 = vmul.f32 2.0, %v536
            %v541 = vrcp.pop %v540
            %v542 = vmul.f32 %v539, %v541
            %vm543 = vcmp.ge.f32.partialorder %v542, 0.0
            %v544 = vmul.f32 %v542, %v542
            %v545 = vadd.f32 1.0, %v544
            %v546 = vrsqrt.pop %v545
            %v547 = vmul.f32 %v545, %v546
            %vm548 = vcmp.eq.f32.partialorder %v545, inf
            %v549 = vsel %vm548, %v545, %v547
            %vm550 = vcmp.eq.f32.partialorder %v545, 0.0
            %v551 = vand.u32 %v545, 2147483648
            %v552 = vsel %vm550, %v551, %v549
            %v553 = vxor.u32 %v552, 2147483648
            %v554 = vsel %vm543, %v552, %v553
            %v555 = vadd.f32 %v542, %v554
            %v556 = vrcp.pop %v555
            %v557 = vand.u32 2147483647, %v534
            %v558 = vand.u32 2147483647, %v536
            %v559 = vand.u32 2147483647, %v538
            %v560 = vmin.f32 %v557, %v559
            %v561 = vmul.f32 1.1920929e-08, %v560
            %vm562 = vcmp.le.f32.partialorder %v558, %v561
            %v563 = vsel %vm562, 0.0, %v556
            %v564 = vmul.f32 %v563, %v563
            %v565 = vadd.f32 1.0, %v564
            %v566 = vrsqrt.pop %v565
            %v567 = vmul.f32 %v563, %v566
            %v568 = vmul.f32 %v563, %v536
            %v569 = vsub.f32 %v534, %v568
            %v570 = vmul.f32 %v563, %v536
            %v571 = vadd.f32 %v538, %v570
            %s572 = smov [#allocation20]
            %573 = vst [vmem:[%s572] sm:$0xff] %v569
            %s574 = smov [#allocation21]
            %575 = vst [vmem:[%s574] sm:$0xff] %v571
            %s576 = smov %s531
            %577 = vst [vmem:[%s576] sm:$0xff] %v566
            %s578 = smov %s532
            %579 = vst [vmem:[%s578] sm:$0xff] %v567
            %s580 = smov [#allocation22]
            %v581 = vld [vmem:[%s580] ss:$0 sm:$0xff]
            %v582 = vlaneseq
            %v583 = vand.u32 %v582, 127
            %v584 = vmov %v583
            %v585 = vlaneseq
            %v586 = vshrl.u32 %v585, 7
            %v587 = vmov %v586
            %vm589 = vcmp.eq.s32.totalorder %v587, %v584
            %v590 = vsel %vm589, %v581, 0.0
            %591 = vadd.xlane.f32.xlu0 %v590
            %v592 = vpop.xlane.xlu0 %591
            %s593 = smov [#allocation24]
            %594 = vst [vmem:[%s593] sm:$0xff] %v592
            %s595 = smov [#allocation23]
            %v596 = vld [vmem:[%s595] ss:$0 sm:$0xff]
            %v597 = vlaneseq
            %v598 = vand.u32 %v597, 127
            %v599 = vmov %v598
            %v600 = vlaneseq
            %v601 = vshrl.u32 %v600, 7
            %v602 = vmov %v601
            %vm604 = vcmp.eq.s32.totalorder %v602, %v599
            %v605 = vsel %vm604, %v596, 0.0
            %606 = vadd.xlane.f32.xlu0 %v605
            %v607 = vpop.xlane.xlu0 %606
            %s608 = smov [#allocation25]
            %609 = vst [vmem:[%s608] sm:$0xff] %v607
            %s610 = smov [#allocation24]
            %v611 = vld [vmem:[%s610] sm:$0xff]
            %s612 = smov [#allocation25]
            %v613 = vld [vmem:[%s612] sm:$0xff]
            %s614 = smov [#allocation13]
            %s615 = smov [#allocation14]
            %s616 = smov [#allocation15]
            %s617 = smov [#allocation16]
            %v618 = vld [vmem:[%s614] sm:$0xff]
            %v619 = vld [vmem:[%s615] sm:$0xff]
            %v620 = vld [vmem:[%s616] sm:$0xff]
            %v621 = vld [vmem:[%s617] sm:$0xff]
            %v622 = vmul.f32 %v611, %v618
            %v623 = vmul.f32 %v613, %v620
            %v624 = vsub.f32 %v622, %v623
            %v625 = vmul.f32 %v611, %v619
            %v626 = vmul.f32 %v613, %v621
            %v627 = vsub.f32 %v625, %v626
            %v628 = vmul.f32 %v613, %v618
            %v629 = vmul.f32 %v611, %v620
            %v630 = vadd.f32 %v628, %v629
            %v631 = vmul.f32 %v613, %v619
            %v632 = vmul.f32 %v611, %v621
            %v633 = vadd.f32 %v631, %v632
            %634 = vst [vmem:[%s614] sm:$0xff] %v624
            %635 = vst [vmem:[%s615] sm:$0xff] %v627
            %636 = vst [vmem:[%s616] sm:$0xff] %v630
            %637 = vst [vmem:[%s617] sm:$0xff] %v633
            %s638 = smov [#allocation22]
            %v639 = vld [vmem:[%s638] ss:$0 sm:$0xff]
            %s640 = smov [#allocation23]
            %v641 = vld [vmem:[%s640] ss:$0 sm:$0xff]
            %s642 = smov [#allocation13]
            %s643 = smov [#allocation14]
            %s644 = smov [#allocation15]
            %s645 = smov [#allocation16]
            %v646 = vld [vmem:[%s642] sm:$0xff]
            %v647 = vld [vmem:[%s643] sm:$0xff]
            %v648 = vld [vmem:[%s644] sm:$0xff]
            %v649 = vld [vmem:[%s645] sm:$0xff]
            %v650 = vmul.f32 %v639, %v646
            %v651 = vmul.f32 %v641, %v647
            %v652 = vsub.f32 %v650, %v651
            %v653 = vmul.f32 %v641, %v646
            %v654 = vmul.f32 %v639, %v647
            %v655 = vadd.f32 %v653, %v654
            %v656 = vmul.f32 %v639, %v648
            %v657 = vmul.f32 %v641, %v649
            %v658 = vsub.f32 %v656, %v657
            %v659 = vmul.f32 %v641, %v648
            %v660 = vmul.f32 %v639, %v649
            %v661 = vadd.f32 %v659, %v660
            %662 = vst [vmem:[%s642] sm:$0xff] %v652
            %663 = vst [vmem:[%s643] sm:$0xff] %v655
            %664 = vst [vmem:[%s644] sm:$0xff] %v658
            %665 = vst [vmem:[%s645] sm:$0xff] %v661
            %s666 = smov [#allocation13]
            %s667 = smov [#allocation20]
            %v668 = vlaneseq
            %v669 = vand.u32 %v668, 127
            %v670 = vmov %v669
            %v671 = vlaneseq
            %v672 = vshrl.u32 %v671, 7
            %v673 = vmov %v672
            %v674 = vld [vmem:[%s667] ss:$0 sm:$0xff]
            %v675 = vld [vmem:[%s666] sm:$0xff]
            %vm678 = vcmp.eq.s32.totalorder %v673, %v670
            %v679 = vsel %vm678, %v674, %v675
            %680 = vst [vmem:[%s666] sm:$0xff] %v679
            %s681 = smov [#allocation14]
            %v682 = vlaneseq
            %v683 = vand.u32 %v682, 127
            %v684 = vmov %v683
            %v685 = vlaneseq
            %v686 = vshrl.u32 %v685, 7
            %v687 = vmov %v686
            %v688 = vld [vmem:[%s681] sm:$0xff]
            %vm691 = vcmp.eq.s32.totalorder %v687, %v684
            %v692 = vsel %vm691, 0.0, %v688
            %693 = vst [vmem:[%s681] sm:$0xff] %v692
            %s694 = smov [#allocation15]
            %v695 = vlaneseq
            %v696 = vand.u32 %v695, 127
            %v697 = vmov %v696
            %v698 = vlaneseq
            %v699 = vshrl.u32 %v698, 7
            %v700 = vmov %v699
            %v701 = vld [vmem:[%s694] sm:$0xff]
            %vm704 = vcmp.eq.s32.totalorder %v700, %v697
            %v705 = vsel %vm704, 0.0, %v701
            %706 = vst [vmem:[%s694] sm:$0xff] %v705
            %s707 = smov [#allocation16]
            %s708 = smov [#allocation21]
            %v709 = vlaneseq
            %v710 = vand.u32 %v709, 127
            %v711 = vmov %v710
            %v712 = vlaneseq
            %v713 = vshrl.u32 %v712, 7
            %v714 = vmov %v713
            %v715 = vld [vmem:[%s708] ss:$0 sm:$0xff]
            %v716 = vld [vmem:[%s707] sm:$0xff]
            %vm719 = vcmp.eq.s32.totalorder %v714, %v711
            %v720 = vsel %vm719, %v715, %v716
            %721 = vst [vmem:[%s707] sm:$0xff] %v720
            %s722 = smov [#allocation13]
            %s723 = smov [#allocation14]
            %v724 = vld [vmem:[%s723] sm:$0xff]
            %725 = vrot.lane.b32.xlu0 %v724, 1
            %v726 = vpop.permute.xlu0 %725
            %v727 = vld [vmem:[%s722] sm:$0xff]
            %v728 = vld [vmem:[%s722] sm:$0xff]
            %729 = vrot.lane.b32.xlu0 %v728, 1
            %v730 = vpop.permute.xlu0 %729
            %v731 = vlaneseq
            %v732 = vand.u32 %v731, 127
            %vm733 = vcmp.eq.s32.totalorder %v732, 0
            %v734 = vsel %vm733, %v728, %v730
            %v735 = vlaneseq
            %v736 = vand.u32 %v735, 127
            %vm737 = vcmp.eq.s32.totalorder %v736, 1
            %v738 = vsel %vm737, %v726, %v734
            %v739 = vlaneseq
            %v740 = vand.u32 %v739, 127
            %vm741 = vcmp.ge.s32.totalorder %v740, 0
            %vm742 = vcmp.lt.s32.totalorder %v740, 8
            %vm743 = vmand %vm741, %vm742
            %v744 = vsel %vm743, %v738, 0.0
            %v745 = vld [vmem:[%s723] sm:$0xff]
            %746 = vrot.lane.b32.xlu0 %v745, 127
            %v747 = vpop.permute.xlu0 %746
            %v748 = vlaneseq
            %v749 = vand.u32 %v748, 127
            %vm750 = vcmp.eq.s32.totalorder %v749, 7
            %v751 = vsel %vm750, %v727, %v747
            %752 = vst [vmem:[%s722] sm:$0xff] %v744
            %753 = vst [vmem:[%s723] sm:$0xff] %v751
            %s754 = smov [#allocation15]
            %s755 = smov [#allocation16]
            %v756 = vld [vmem:[%s755] sm:$0xff]
            %757 = vrot.lane.b32.xlu0 %v756, 1
            %v758 = vpop.permute.xlu0 %757
            %v759 = vld [vmem:[%s754] sm:$0xff]
            %v760 = vld [vmem:[%s754] sm:$0xff]
            %761 = vrot.lane.b32.xlu0 %v760, 1
            %v762 = vpop.permute.xlu0 %761
            %v763 = vlaneseq
            %v764 = vand.u32 %v763, 127
            %vm765 = vcmp.eq.s32.totalorder %v764, 0
            %v766 = vsel %vm765, %v760, %v762
            %v767 = vlaneseq
            %v768 = vand.u32 %v767, 127
            %vm769 = vcmp.eq.s32.totalorder %v768, 1
            %v770 = vsel %vm769, %v758, %v766
            %v771 = vlaneseq
            %v772 = vand.u32 %v771, 127
            %vm773 = vcmp.ge.s32.totalorder %v772, 0
            %vm774 = vcmp.lt.s32.totalorder %v772, 8
            %vm775 = vmand %vm773, %vm774
            %v776 = vsel %vm775, %v770, 0.0
            %v777 = vld [vmem:[%s755] sm:$0xff]
            %778 = vrot.lane.b32.xlu0 %v777, 127
            %v779 = vpop.permute.xlu0 %778
            %v780 = vlaneseq
            %v781 = vand.u32 %v780, 127
            %vm782 = vcmp.eq.s32.totalorder %v781, 7
            %v783 = vsel %vm782, %v759, %v779
            %784 = vst [vmem:[%s754] sm:$0xff] %v776
            %785 = vst [vmem:[%s755] sm:$0xff] %v783
            %s786 = smov [#allocation13]
            %s787 = smov [#allocation15]
            %v788 = vld [vmem:[%s786] ss:$0 sm:$0xff]
            %s790 = scalar_lea.vmem %s786, 4294967295
            %v791 = vld [vmem:[%s790] sm:$0xfe]
            %v792 = vlaneseq
            %v793 = vshrl.u32 %v792, 7
            %vm794 = vcmp.eq.s32.totalorder %v793, 0
            %v795 = vsel %vm794, %v788, %v791
            %s796 = scalar_lea.vmem %s786, 7
            %v797 = vld [vmem:[%s796] ss:$0 sm:$0xff]
            %798 = vst [vmem:[%s786] sm:$0xff] %v795
            %v799 = vld [vmem:[%s787] ss:$0 sm:$0xff]
            %s800 = scalar_lea.vmem %s786, 1
            %801 = vst [vmem:[%s800] sm:$0x1] %v799
            %s802 = scalar_lea.vmem %s787, 1
            %v803 = vld [vmem:[%s802] sm:$0x7f]
            %v804 = vlaneseq
            %v805 = vshrl.u32 %v804, 7
            %vm806 = vcmp.eq.s32.totalorder %v805, 7
            %v807 = vsel %vm806, %v797, %v803
            %v808 = vld [vmem:[%s787] ss:$0 sm:$0xff]
            %809 = vst [vmem:[%s787] sm:$0xff] %v807
            %s810 = smov [#allocation14]
            %s811 = smov [#allocation16]
            %v812 = vld [vmem:[%s810] ss:$0 sm:$0xff]
            %s814 = scalar_lea.vmem %s810, 4294967295
            %v815 = vld [vmem:[%s814] sm:$0xfe]
            %v816 = vlaneseq
            %v817 = vshrl.u32 %v816, 7
            %vm818 = vcmp.eq.s32.totalorder %v817, 0
            %v819 = vsel %vm818, %v812, %v815
            %s820 = scalar_lea.vmem %s810, 7
            %v821 = vld [vmem:[%s820] ss:$0 sm:$0xff]
            %822 = vst [vmem:[%s810] sm:$0xff] %v819
            %v823 = vld [vmem:[%s811] ss:$0 sm:$0xff]
            %s824 = scalar_lea.vmem %s810, 1
            %825 = vst [vmem:[%s824] sm:$0x1] %v823
            %s826 = scalar_lea.vmem %s811, 1
            %v827 = vld [vmem:[%s826] sm:$0x7f]
            %v828 = vlaneseq
            %v829 = vshrl.u32 %v828, 7
            %vm830 = vcmp.eq.s32.totalorder %v829, 7
            %v831 = vsel %vm830, %v821, %v827
            %v832 = vld [vmem:[%s811] ss:$0 sm:$0xff]
            %833 = vst [vmem:[%s811] sm:$0xff] %v831
            %s834 = smov [#allocation24]
            %v835 = vld [vmem:[%s834] sm:$0xff]
            %s836 = smov [#allocation25]
            %v837 = vld [vmem:[%s836] sm:$0xff]
            %s838 = smov %s307
            %s839 = smov %s312
            %s840 = smov %s317
            %s841 = smov %s322
            %v842 = vld [vmem:[%s838] sm:$0xff]
            %v843 = vld [vmem:[%s839] sm:$0xff]
            %v844 = vld [vmem:[%s840] sm:$0xff]
            %v845 = vld [vmem:[%s841] sm:$0xff]
            %v846 = vmul.f32 %v835, %v842
            %v847 = vmul.f32 %v837, %v844
            %v848 = vsub.f32 %v846, %v847
            %v849 = vmul.f32 %v835, %v843
            %v850 = vmul.f32 %v837, %v845
            %v851 = vsub.f32 %v849, %v850
            %v852 = vmul.f32 %v837, %v842
            %v853 = vmul.f32 %v835, %v844
            %v854 = vadd.f32 %v852, %v853
            %v855 = vmul.f32 %v837, %v843
            %v856 = vmul.f32 %v835, %v845
            %v857 = vadd.f32 %v855, %v856
            %858 = vst [vmem:[%s838] sm:$0xff] %v848
            %859 = vst [vmem:[%s839] sm:$0xff] %v851
            %860 = vst [vmem:[%s840] sm:$0xff] %v854
            %861 = vst [vmem:[%s841] sm:$0xff] %v857
            %s862 = smov %s307
            %s863 = smov %s317
            %v864 = vld [vmem:[%s862] ss:$0 sm:$0xff]
            %s866 = scalar_lea.vmem %s862, 4294967295
            %v867 = vld [vmem:[%s866] sm:$0xfe]
            %v868 = vlaneseq
            %v869 = vshrl.u32 %v868, 7
            %vm870 = vcmp.eq.s32.totalorder %v869, 0
            %v871 = vsel %vm870, %v864, %v867
            %s872 = scalar_lea.vmem %s862, 7
            %v873 = vld [vmem:[%s872] ss:$0 sm:$0xff]
            %874 = vst [vmem:[%s862] sm:$0xff] %v871
            %v875 = vld [vmem:[%s863] ss:$0 sm:$0xff]
            %s876 = scalar_lea.vmem %s862, 1
            %877 = vst [vmem:[%s876] sm:$0x1] %v875
            %s878 = scalar_lea.vmem %s863, 1
            %v879 = vld [vmem:[%s878] sm:$0x7f]
            %v880 = vlaneseq
            %v881 = vshrl.u32 %v880, 7
            %vm882 = vcmp.eq.s32.totalorder %v881, 7
            %v883 = vsel %vm882, %v873, %v879
            %v884 = vld [vmem:[%s863] ss:$0 sm:$0xff]
            %885 = vst [vmem:[%s863] sm:$0xff] %v883
            %s886 = smov %s312
            %s887 = smov %s322
            %v888 = vld [vmem:[%s886] ss:$0 sm:$0xff]
            %s890 = scalar_lea.vmem %s886, 4294967295
            %v891 = vld [vmem:[%s890] sm:$0xfe]
            %v892 = vlaneseq
            %v893 = vshrl.u32 %v892, 7
            %vm894 = vcmp.eq.s32.totalorder %v893, 0
            %v895 = vsel %vm894, %v888, %v891
            %s896 = scalar_lea.vmem %s886, 7
            %v897 = vld [vmem:[%s896] ss:$0 sm:$0xff]
            %898 = vst [vmem:[%s886] sm:$0xff] %v895
            %v899 = vld [vmem:[%s887] ss:$0 sm:$0xff]
            %s900 = scalar_lea.vmem %s886, 1
            %901 = vst [vmem:[%s900] sm:$0x1] %v899
            %s902 = scalar_lea.vmem %s887, 1
            %v903 = vld [vmem:[%s902] sm:$0x7f]
            %v904 = vlaneseq
            %v905 = vshrl.u32 %v904, 7
            %vm906 = vcmp.eq.s32.totalorder %v905, 7
            %v907 = vsel %vm906, %v897, %v903
            %v908 = vld [vmem:[%s887] ss:$0 sm:$0xff]
            %909 = vst [vmem:[%s887] sm:$0xff] %v907
          $region168: #{custom-call.9} parent=160 // loop_footer
            %s470 = sadd.s32 1, %s466
          $region169: #{custom-call.9} parent=160 // loop_footer_branch
            %465 = sbr.rel target = $region165
          $region170: #{custom-call.9} parent=160 // loop_exit
            _
          %s910 = sadd.s32 %s368, 1
        $region161: #{custom-call.9} parent=155 // loop_footer
          _
        $region162: #{custom-call.9} parent=155 // loop_footer_branch
          %367 = sbr.rel target = $region158
        $region163: #{custom-call.9} parent=155 // loop_exit
          _
        %s913 = sand.u32 %s26, 7
        %s914 = scalar_lea.vmem %s296, %s913 [#allocation4]
        %s915 = sand.u32 %s26, 7
        %s916 = scalar_lea.vmem %s302, %s915 [#allocation5]
        %s917 = smov [#allocation13]
        %s918 = smov %s914
        %v919 = vlaneseq
        %v920 = vand.u32 %v919, 127
        %v921 = vmov %v920
        %v922 = vlaneseq
        %v923 = vshrl.u32 %v922, 7
        %v924 = vmov %v923
        %v925 = vld [vmem:[%s917] sm:$0xff]
        %vm928 = vcmp.eq.s32.totalorder %v924, %v921
        %v929 = vsel %vm928, %v925, 0.0
        %v930 = vrot.slane %v929, 4
        %v931 = vadd.f32 %v929, %v930
        %v932 = vrot.slane %v931, 2
        %v933 = vadd.f32 %v931, %v932
        %v934 = vrot.slane %v933, 1
        %v935 = vadd.f32 %v933, %v934
        %936 = vst [vmem:[%s918] sm:$0x1] %v935
        %s937 = smov [#allocation16]
        %s938 = smov %s916
        %v939 = vlaneseq
        %v940 = vand.u32 %v939, 127
        %v941 = vmov %v940
        %v942 = vlaneseq
        %v943 = vshrl.u32 %v942, 7
        %v944 = vmov %v943
        %v945 = vld [vmem:[%s937] sm:$0xff]
        %vm948 = vcmp.eq.s32.totalorder %v944, %v941
        %v949 = vsel %vm948, %v945, 0.0
        %v950 = vrot.slane %v949, 4
        %v951 = vadd.f32 %v949, %v950
        %v952 = vrot.slane %v951, 2
        %v953 = vadd.f32 %v951, %v952
        %v954 = vrot.slane %v953, 1
        %v955 = vadd.f32 %v953, %v954
        %956 = vst [vmem:[%s938] sm:$0x1] %v955
        %s957 = sand.u32 %s36, 1
        %s958 = sand.u32 %s36, 1
        %s959 = smul.addr %s958, 8
        %s960 = scalar_lea.vmem [#allocation4], %s959
        %s961 = sand.u32 %s64, 1
        %s962 = sand.u32 %s64, 1
        %s963 = smul.addr %s962, 8
        %s964 = scalar_lea.vmem [#allocation5], %s963
        %s965 = sand.u32 %s26, 1
        %s966 = scalar_lea.sflag [#allocation7], %s965
        %s967 = sand.u32 %s26, 1
        %s968 = smul.addr %s967, 8
        %s969 = scalar_lea.vmem [#allocation6], %s968
        %s970 = sand.u32 %s26, 1
        %s971 = scalar_lea.sflag [#allocation9], %s970
        %s972 = sand.u32 %s26, 1
        %s973 = smul.addr %s972, 8
        %s974 = scalar_lea.vmem [#allocation8], %s973
        %s975 = sand.u32 %s26, 1
        %s976 = scalar_lea.sflag [#allocation9], %s975
        %s977 = sand.u32 %s26, 1
        %s978 = smul.addr %s977, 8
        %s979 = scalar_lea.vmem [#allocation10], %s978
        %s980 = sand.u32 %s26, 1
        %s981 = scalar_lea.sflag [#allocation12], %s980
        %s982 = sand.u32 %s26, 1
        %s983 = smul.addr %s982, 8
        %s984 = scalar_lea.vmem [#allocation11], %s983
        // Predicated region
        $region171: #{custom-call.9} parent=155 // pred_check
          %p985 = pneg %p46
        $region172: #{custom-call.9} parent=155 // pred_check_branch
          %987 = sbr.rel (%p985) target = $region174
        $region173: #{custom-call.9} parent=155 // pred_region
          %s988 = sshrl.u32 %s26, 3
          %s989 = smul.addr %s988, 8
          %s990 = scalar_lea.vmem %s4, %s989
          // Predicated region
          $region175: #{custom-call.9} parent=173 // pred_check
            _
          $region176: #{custom-call.9} parent=173 // pred_check_branch
            %992 = sbr.rel (0) target = $region178
          $region177: #{custom-call.9} parent=173 // pred_region
            // Predicated region
            $region179: #{custom-call.9} parent=177 // pred_check
              _
            $region180: #{custom-call.9} parent=177 // pred_check_branch
              %994 = sbr.rel (0) target = $region182
            $region181: #{custom-call.9} parent=177 // pred_region
              // Predicated region
              $region194: #{custom-call.9} parent=181 // pred_check
                _
              $region195: #{custom-call.9} parent=181 // pred_check_branch
                %1010 = sbr.rel (0) target = $region197
              $region196: #{custom-call.9} parent=181 // pred_region
                loop: start=0, step=1, limit=1
                $region198: #{custom-call.9} parent=196 // loop_pre_header
                  _
                $region199: #{custom-call.9} parent=196 // loop_header
                  %s1012 = sphi 0, %s1016
                  %p1013 = scmp.ge.s32.totalorder %s1012, 1
                  %s1017 = sphi %s960, %s960
                  %s1018 = sphi %s990, %s990
                $region200: #{custom-call.9} parent=196 // loop_header_branch
                  %1015 = sbr.rel (%p1013) target = $region204
                $region201: #{custom-call.9} parent=196 // loop_body
                  %v1019 = vld [vmem:[%s1017] sm:$0xff]
                  %1020 = vst [vmem:[%s1018] sm:$0xff] %v1019
                $region202: #{custom-call.9} parent=196 // loop_footer
                  %s1016 = sadd.s32 1, %s1012
                $region203: #{custom-call.9} parent=196 // loop_footer_branch
                  %1011 = sbr.rel target = $region199
                $region204: #{custom-call.9} parent=196 // loop_exit
                  _
              $region197: #{custom-call.9} parent=181 // pred_fallthru
                _
              // Predicated region
              $region205: #{custom-call.9} parent=181 // pred_check
                _
              $region206: #{custom-call.9} parent=181 // pred_check_branch
                %1022 = sbr.rel target = $region208
              $region207: #{custom-call.9} parent=181 // pred_region
                _
              $region208: #{custom-call.9} parent=181 // pred_fallthru
                _
            $region182: #{custom-call.9} parent=177 // pred_fallthru
              _
            // Predicated region
            $region183: #{custom-call.9} parent=177 // pred_check
              _
            $region184: #{custom-call.9} parent=177 // pred_check_branch
              %996 = sbr.rel target = $region186
            $region185: #{custom-call.9} parent=177 // pred_region
              %s998 = ssub.s32 256, 1
              loop: start=0, step=1, limit=1
              $region187: #{custom-call.9} parent=185 // loop_pre_header
                _
              $region188: #{custom-call.9} parent=185 // loop_header
                %s1000 = sphi 0, %s1004
                %p1001 = scmp.ge.s32.totalorder %s1000, 1
                %s1005 = sphi %s960, %s960
                %s1006 = sphi %s990, %s990
              $region189: #{custom-call.9} parent=185 // loop_header_branch
                %1003 = sbr.rel (%p1001) target = $region193
              $region190: #{custom-call.9} parent=185 // loop_body
                %v1007 = vld [vmem:[%s1005] sm:%s998]
                %1008 = vst [vmem:[%s1006] sm:%s998] %v1007
              $region191: #{custom-call.9} parent=185 // loop_footer
                %s1004 = sadd.s32 1, %s1000
              $region192: #{custom-call.9} parent=185 // loop_footer_branch
                %999 = sbr.rel target = $region188
              $region193: #{custom-call.9} parent=185 // loop_exit
                _
            $region186: #{custom-call.9} parent=177 // pred_fallthru
              _
          $region178: #{custom-call.9} parent=173 // pred_fallthru
            _
          %1023 = vnop
        $region174: #{custom-call.9} parent=155 // pred_fallthru
          _
        // Predicated region
        $region209: #{custom-call.9} parent=155 // pred_check
          %p1024 = pneg %p74
        $region210: #{custom-call.9} parent=155 // pred_check_branch
          %1026 = sbr.rel (%p1024) target = $region212
        $region211: #{custom-call.9} parent=155 // pred_region
          %s1027 = sshrl.u32 %s26, 3
          %s1028 = smul.addr %s1027, 8
          %s1029 = scalar_lea.vmem %s5, %s1028
          // Predicated region
          $region213: #{custom-call.9} parent=211 // pred_check
            _
          $region214: #{custom-call.9} parent=211 // pred_check_branch
            %1031 = sbr.rel (0) target = $region216
          $region215: #{custom-call.9} parent=211 // pred_region
            // Predicated region
            $region217: #{custom-call.9} parent=215 // pred_check
              _
            $region218: #{custom-call.9} parent=215 // pred_check_branch
              %1033 = sbr.rel (0) target = $region220
            $region219: #{custom-call.9} parent=215 // pred_region
              // Predicated region
              $region232: #{custom-call.9} parent=219 // pred_check
                _
              $region233: #{custom-call.9} parent=219 // pred_check_branch
                %1049 = sbr.rel (0) target = $region235
              $region234: #{custom-call.9} parent=219 // pred_region
                loop: start=0, step=1, limit=1
                $region236: #{custom-call.9} parent=234 // loop_pre_header
                  _
                $region237: #{custom-call.9} parent=234 // loop_header
                  %s1051 = sphi 0, %s1055
                  %p1052 = scmp.ge.s32.totalorder %s1051, 1
                  %s1056 = sphi %s964, %s964
                  %s1057 = sphi %s1029, %s1029
                $region238: #{custom-call.9} parent=234 // loop_header_branch
                  %1054 = sbr.rel (%p1052) target = $region242
                $region239: #{custom-call.9} parent=234 // loop_body
                  %v1058 = vld [vmem:[%s1056] sm:$0xff]
                  %1059 = vst [vmem:[%s1057] sm:$0xff] %v1058
                $region240: #{custom-call.9} parent=234 // loop_footer
                  %s1055 = sadd.s32 1, %s1051
                $region241: #{custom-call.9} parent=234 // loop_footer_branch
                  %1050 = sbr.rel target = $region237
                $region242: #{custom-call.9} parent=234 // loop_exit
                  _
              $region235: #{custom-call.9} parent=219 // pred_fallthru
                _
              // Predicated region
              $region243: #{custom-call.9} parent=219 // pred_check
                _
              $region244: #{custom-call.9} parent=219 // pred_check_branch
                %1061 = sbr.rel target = $region246
              $region245: #{custom-call.9} parent=219 // pred_region
                _
              $region246: #{custom-call.9} parent=219 // pred_fallthru
                _
            $region220: #{custom-call.9} parent=215 // pred_fallthru
              _
            // Predicated region
            $region221: #{custom-call.9} parent=215 // pred_check
              _
            $region222: #{custom-call.9} parent=215 // pred_check_branch
              %1035 = sbr.rel target = $region224
            $region223: #{custom-call.9} parent=215 // pred_region
              %s1037 = ssub.s32 256, 1
              loop: start=0, step=1, limit=1
              $region225: #{custom-call.9} parent=223 // loop_pre_header
                _
              $region226: #{custom-call.9} parent=223 // loop_header
                %s1039 = sphi 0, %s1043
                %p1040 = scmp.ge.s32.totalorder %s1039, 1
                %s1044 = sphi %s964, %s964
                %s1045 = sphi %s1029, %s1029
              $region227: #{custom-call.9} parent=223 // loop_header_branch
                %1042 = sbr.rel (%p1040) target = $region231
              $region228: #{custom-call.9} parent=223 // loop_body
                %v1046 = vld [vmem:[%s1044] sm:%s1037]
                %1047 = vst [vmem:[%s1045] sm:%s1037] %v1046
              $region229: #{custom-call.9} parent=223 // loop_footer
                %s1043 = sadd.s32 1, %s1039
              $region230: #{custom-call.9} parent=223 // loop_footer_branch
                %1038 = sbr.rel target = $region226
              $region231: #{custom-call.9} parent=223 // loop_exit
                _
            $region224: #{custom-call.9} parent=215 // pred_fallthru
              _
          $region216: #{custom-call.9} parent=211 // pred_fallthru
            _
          %1062 = vnop
        $region212: #{custom-call.9} parent=155 // pred_fallthru
          _
        %s1064 = ssub.s32 128, 128
        %1065 = vsyncadd %s966, %s1064
        %s1066 = smul.addr %s26, 128
        %s1067 = scalar_lea.hbm %s6, %s1066
        %s1069 = sshll.u32 %s969, 4
        %s1070 = int_to_ptr.vmem [resolvable:$true] %s1069
        %1072 = dma.vmem_to_hbm [thread:$0]  %s1070, 128, %s1067, %s966
        %s1074 = ssub.s32 128, 128
        %1075 = vsyncadd %s971, %s1074
        %s1076 = smul.addr %s26, 128
        %s1077 = scalar_lea.hbm %s7, %s1076
        %s1079 = sshll.u32 %s974, 4
        %s1080 = int_to_ptr.vmem [resolvable:$true] %s1079
        %1082 = dma.vmem_to_hbm [thread:$0]  %s1080, 128, %s1077, %s971
        %s1084 = ssub.s32 128, 128
        %1085 = vsyncadd %s976, %s1084
        %s1086 = smul.addr %s26, 128
        %s1087 = scalar_lea.hbm %s8, %s1086
        %s1089 = sshll.u32 %s979, 4
        %s1090 = int_to_ptr.vmem [resolvable:$true] %s1089
        %1092 = dma.vmem_to_hbm [thread:$0]  %s1090, 128, %s1087, %s976
        %s1094 = ssub.s32 128, 128
        %1095 = vsyncadd %s981, %s1094
        %s1096 = smul.addr %s26, 128
        %s1097 = scalar_lea.hbm %s9, %s1096
        %s1099 = sshll.u32 %s984, 4
        %s1100 = int_to_ptr.vmem [resolvable:$true] %s1099
        %1102 = dma.vmem_to_hbm [thread:$0]  %s1100, 128, %s1097, %s981
      $region156: #{custom-call.9} parent=5 // pred_fallthru
        _
      %p1103 = scmp.le.s32.totalorder 2, %s21
      // Predicated region
      $region247: #{custom-call.9} parent=5 // pred_check
        %p1104 = pneg %p1103
      $region248: #{custom-call.9} parent=5 // pred_check_branch
        %1106 = sbr.rel (%p1104) target = $region250
      $region249: #{custom-call.9} parent=5 // pred_region
        %s1107 = ssub.s32 %s21, 2
        // Predicated region
        $region251: #{custom-call.9} parent=249 // pred_check
          %p1108 = pneg %p52
        $region252: #{custom-call.9} parent=249 // pred_check_branch
          %1110 = sbr.rel (%p1108) target = $region254
        $region253: #{custom-call.9} parent=249 // pred_region
          %s1111 = sand.u32 %s37, 1
          %s1112 = sand.u32 %s37, 1
          %s1113 = smul.addr %s1112, 8
          %s1114 = scalar_lea.vmem [#allocation4], %s1113
        $region254: #{custom-call.9} parent=249 // pred_fallthru
          _
        // Predicated region
        $region255: #{custom-call.9} parent=249 // pred_check
          %p1115 = pneg %p80
        $region256: #{custom-call.9} parent=249 // pred_check_branch
          %1117 = sbr.rel (%p1115) target = $region258
        $region257: #{custom-call.9} parent=249 // pred_region
          %s1118 = sand.u32 %s65, 1
          %s1119 = sand.u32 %s65, 1
          %s1120 = smul.addr %s1119, 8
          %s1121 = scalar_lea.vmem [#allocation5], %s1120
        $region258: #{custom-call.9} parent=249 // pred_fallthru
          _
        %s1122 = sand.u32 %s27, 1
        %s1123 = scalar_lea.sflag [#allocation7], %s1122
        %s1124 = sand.u32 %s27, 1
        %s1125 = smul.addr %s1124, 8
        %s1126 = scalar_lea.vmem [#allocation6], %s1125
        %1127 = dma.done %s1123, 128
        %s1128 = sand.u32 %s27, 1
        %s1129 = scalar_lea.sflag [#allocation9], %s1128
        %s1130 = sand.u32 %s27, 1
        %s1131 = smul.addr %s1130, 8
        %s1132 = scalar_lea.vmem [#allocation8], %s1131
        %1133 = dma.done %s1129, 128
        %s1134 = sand.u32 %s27, 1
        %s1135 = scalar_lea.sflag [#allocation9], %s1134
        %s1136 = sand.u32 %s27, 1
        %s1137 = smul.addr %s1136, 8
        %s1138 = scalar_lea.vmem [#allocation10], %s1137
        %1139 = dma.done %s1135, 128
        %s1140 = sand.u32 %s27, 1
        %s1141 = scalar_lea.sflag [#allocation12], %s1140
        %s1142 = sand.u32 %s27, 1
        %s1143 = smul.addr %s1142, 8
        %s1144 = scalar_lea.vmem [#allocation11], %s1143
        %1145 = dma.done %s1141, 128
      $region250: #{custom-call.9} parent=5 // pred_fallthru
        _
    $region6: #{custom-call.9} parent=1 // loop_footer
      %s25 = sadd.s32 1, %s21
    $region7: #{custom-call.9} parent=1 // loop_footer_branch
      %20 = sbr.rel target = $region3
    $region8: #{custom-call.9} parent=1 // loop_exit
      _
    %1146 = vsyncpa [#allocation7], 1
    %s1147 = scalar_lea.sflag [#allocation7], 1
    %1148 = vsyncpa %s1147, 1
    %1149 = vsyncpa [#allocation9], 1
    %s1150 = scalar_lea.sflag [#allocation9], 1
    %1151 = vsyncpa %s1150, 1
    %1152 = vsyncpa [#allocation12], 1
    %s1153 = scalar_lea.sflag [#allocation12], 1
    %1154 = vsyncpa %s1153, 1

// kernel: riemannian_distance_loss.1
$region0: #{riemannian_distance_loss.1}
  #allocation0 [shape = 'u32[]', space=smem, size = 0x4, offset = 0x4, fixed_abs, tag = 'smem constant byte address 0x4 - core index']
  #allocation1 [shape = 'u32[144,128]{1,0:T(1,128)}', space=vmem, size = 0x12000, scoped, tag = 'internal scratch']
  %s0 = inlined_call_operand.vmem [shape: f32[16,16,1,128], index: 0, kind: input, shape index: {}]
  %s1 = inlined_call_operand.vmem [shape: f32[16,16,128], index: 1, kind: input, shape index: {}]
  %s2 = inlined_call_operand.vmem [shape: f32[16,16,128], index: 2, kind: input, shape index: {}]
  %s3 = inlined_call_operand.vmem [shape: f32[16,16,1,128], index: 3, kind: output, shape index: {}]
  %s4 = sld [smem:[#allocation0]]
  $region22: #{riemannian_distance_loss.1} parent=0
    _
  %s6 = ssub.s32 1, %s4
  %s7 = scalar_select 0, %s6, %s4
  // Predicated region
  $region2: #{riemannian_distance_loss.1} parent=0 // pred_check
    _
  $region3: #{riemannian_distance_loss.1} parent=0 // pred_check_branch
    %9 = sbr.rel (0) target = $region5
  $region4: #{riemannian_distance_loss.1} parent=0 // pred_region
    _
  $region5: #{riemannian_distance_loss.1} parent=0 // pred_fallthru
    _
  // Predicated region
  $region6: #{riemannian_distance_loss.1} parent=0 // pred_check
    _
  $region7: #{riemannian_distance_loss.1} parent=0 // pred_check_branch
    %11 = sbr.rel (0) target = $region9
  $region8: #{riemannian_distance_loss.1} parent=0 // pred_region
    _
  $region9: #{riemannian_distance_loss.1} parent=0 // pred_fallthru
    _
  // Predicated region
  $region10: #{riemannian_distance_loss.1} parent=0 // pred_check
    _
  $region11: #{riemannian_distance_loss.1} parent=0 // pred_check_branch
    %13 = sbr.rel (0) target = $region13
  $region12: #{riemannian_distance_loss.1} parent=0 // pred_region
    _
  $region13: #{riemannian_distance_loss.1} parent=0 // pred_fallthru
    _
  %v14 = vld [vmem:[%s0] sm:$0x1]
  %v15 = vld [vmem:[%s0 + $0x10] sm:$0x1]
  %v16 = vld [vmem:[%s0 + $0x20] sm:$0x1]
  %v17 = vld [vmem:[%s0 + $0x30] sm:$0x1]
  %v18 = vld [vmem:[%s0 + $0x40] sm:$0x1]
  %v19 = vld [vmem:[%s0 + $0x50] sm:$0x1]
  %v20 = vld [vmem:[%s0 + $0x60] sm:$0x1]
  %v21 = vld [vmem:[%s0 + $0x70] sm:$0x1]
  %v22 = vld [vmem:[%s0 + $0x80] sm:$0x1]
  %v23 = vld [vmem:[%s0 + $0x90] sm:$0x1]
  %v24 = vld [vmem:[%s0 + $0xa0] sm:$0x1]
  %v25 = vld [vmem:[%s0 + $0xb0] sm:$0x1]
  %v26 = vld [vmem:[%s0 + $0xc0] sm:$0x1]
  %v27 = vld [vmem:[%s0 + $0xd0] sm:$0x1]
  %v28 = vld [vmem:[%s0 + $0xe0] sm:$0x1]
  %v29 = vld [vmem:[%s0 + $0xf0] sm:$0x1]
  %v30 = vld [vmem:[%s2] sm:$0xff]
  %v31 = vld [vmem:[%s2 + $0x8] sm:$0xff]
  %v48 = vlaneseq
  %v49 = vshrl.u32 %v48, 7
  %v50 = vsub.s32 0, %v49
  %v51 = vrot.slane %v14, %v50
  %v52 = vlaneseq
  %v53 = vshrl.u32 %v52, 7
  %v54 = vsub.s32 0, %v53
  %v55 = vrot.slane %v15, %v54
  %v56 = vlaneseq
  %v57 = vshrl.u32 %v56, 7
  %v58 = vsub.s32 0, %v57
  %v59 = vrot.slane %v16, %v58
  %v60 = vlaneseq
  %v61 = vshrl.u32 %v60, 7
  %v62 = vsub.s32 0, %v61
  %v63 = vrot.slane %v17, %v62
  %v64 = vlaneseq
  %v65 = vshrl.u32 %v64, 7
  %v66 = vsub.s32 0, %v65
  %v67 = vrot.slane %v18, %v66
  %v68 = vlaneseq
  %v69 = vshrl.u32 %v68, 7
  %v70 = vsub.s32 0, %v69
  %v71 = vrot.slane %v19, %v70
  %v72 = vlaneseq
  %v73 = vshrl.u32 %v72, 7
  %v74 = vsub.s32 0, %v73
  %v75 = vrot.slane %v20, %v74
  %v76 = vlaneseq
  %v77 = vshrl.u32 %v76, 7
  %v78 = vsub.s32 0, %v77
  %v79 = vrot.slane %v21, %v78
  %v80 = vlaneseq
  %v81 = vshrl.u32 %v80, 7
  %v82 = vsub.s32 0, %v81
  %v83 = vrot.slane %v22, %v82
  %v84 = vlaneseq
  %v85 = vshrl.u32 %v84, 7
  %v86 = vsub.s32 0, %v85
  %v87 = vrot.slane %v23, %v86
  %v88 = vlaneseq
  %v89 = vshrl.u32 %v88, 7
  %v90 = vsub.s32 0, %v89
  %v91 = vrot.slane %v24, %v90
  %v92 = vlaneseq
  %v93 = vshrl.u32 %v92, 7
  %v94 = vsub.s32 0, %v93
  %v95 = vrot.slane %v25, %v94
  %v96 = vlaneseq
  %v97 = vshrl.u32 %v96, 7
  %v98 = vsub.s32 0, %v97
  %v99 = vrot.slane %v26, %v98
  %v100 = vlaneseq
  %v101 = vshrl.u32 %v100, 7
  %v102 = vsub.s32 0, %v101
  %v103 = vrot.slane %v27, %v102
  %v104 = vlaneseq
  %v105 = vshrl.u32 %v104, 7
  %v106 = vsub.s32 0, %v105
  %v107 = vrot.slane %v28, %v106
  %v108 = vlaneseq
  %v109 = vshrl.u32 %v108, 7
  %v110 = vsub.s32 0, %v109
  %v111 = vrot.slane %v29, %v110
  %v128 = vmul.f32 %v51, %v30
  %v129 = vmul.f32 %v51, %v31
  %v130 = vmul.f32 %v55, %v30
  %v131 = vmul.f32 %v55, %v31
  %v132 = vmul.f32 %v59, %v30
  %v133 = vmul.f32 %v59, %v31
  %v134 = vmul.f32 %v63, %v30
  %v135 = vmul.f32 %v63, %v31
  %v136 = vmul.f32 %v67, %v30
  %v137 = vmul.f32 %v67, %v31
  %v138 = vmul.f32 %v71, %v30
  %v139 = vmul.f32 %v71, %v31
  %v140 = vmul.f32 %v75, %v30
  %v141 = vmul.f32 %v75, %v31
  %v142 = vmul.f32 %v79, %v30
  %v143 = vmul.f32 %v79, %v31
  %v144 = vmul.f32 %v83, %v30
  %v145 = vmul.f32 %v83, %v31
  %v146 = vmul.f32 %v87, %v30
  %v147 = vmul.f32 %v87, %v31
  %v148 = vmul.f32 %v91, %v30
  %v149 = vmul.f32 %v91, %v31
  %v150 = vmul.f32 %v95, %v30
  %v151 = vmul.f32 %v95, %v31
  %v152 = vmul.f32 %v99, %v30
  %v153 = vmul.f32 %v99, %v31
  %v154 = vmul.f32 %v103, %v30
  %v155 = vmul.f32 %v103, %v31
  %v156 = vmul.f32 %v107, %v30
  %v157 = vmul.f32 %v107, %v31
  %v158 = vmul.f32 %v111, %v30
  %v159 = vmul.f32 %v111, %v31
  %s160 = scalar_lea.vmem %s0, 1
  %v161 = vld [vmem:[%s160] sm:$0x1]
  %v162 = vld [vmem:[%s160 + $0x10] sm:$0x1]
  %v163 = vld [vmem:[%s160 + $0x20] sm:$0x1]
  %v164 = vld [vmem:[%s160 + $0x30] sm:$0x1]
  %v165 = vld [vmem:[%s160 + $0x40] sm:$0x1]
  %v166 = vld [vmem:[%s160 + $0x50] sm:$0x1]
  %v167 = vld [vmem:[%s160 + $0x60] sm:$0x1]
  %v168 = vld [vmem:[%s160 + $0x70] sm:$0x1]
  %v169 = vld [vmem:[%s160 + $0x80] sm:$0x1]
  %v170 = vld [vmem:[%s160 + $0x90] sm:$0x1]
  %v171 = vld [vmem:[%s160 + $0xa0] sm:$0x1]
  %v172 = vld [vmem:[%s160 + $0xb0] sm:$0x1]
  %v173 = vld [vmem:[%s160 + $0xc0] sm:$0x1]
  %v174 = vld [vmem:[%s160 + $0xd0] sm:$0x1]
  %v175 = vld [vmem:[%s160 + $0xe0] sm:$0x1]
  %v176 = vld [vmem:[%s160 + $0xf0] sm:$0x1]
  %s177 = scalar_lea.vmem %s2, 16
  %v178 = vld [vmem:[%s177] sm:$0xff]
  %v179 = vld [vmem:[%s177 + $0x8] sm:$0xff]
  %v196 = vlaneseq
  %v197 = vshrl.u32 %v196, 7
  %v198 = vsub.s32 0, %v197
  %v199 = vrot.slane %v161, %v198
  %v200 = vlaneseq
  %v201 = vshrl.u32 %v200, 7
  %v202 = vsub.s32 0, %v201
  %v203 = vrot.slane %v162, %v202
  %v204 = vlaneseq
  %v205 = vshrl.u32 %v204, 7
  %v206 = vsub.s32 0, %v205
  %v207 = vrot.slane %v163, %v206
  %v208 = vlaneseq
  %v209 = vshrl.u32 %v208, 7
  %v210 = vsub.s32 0, %v209
  %v211 = vrot.slane %v164, %v210
  %v212 = vlaneseq
  %v213 = vshrl.u32 %v212, 7
  %v214 = vsub.s32 0, %v213
  %v215 = vrot.slane %v165, %v214
  %v216 = vlaneseq
  %v217 = vshrl.u32 %v216, 7
  %v218 = vsub.s32 0, %v217
  %v219 = vrot.slane %v166, %v218
  %v220 = vlaneseq
  %v221 = vshrl.u32 %v220, 7
  %v222 = vsub.s32 0, %v221
  %v223 = vrot.slane %v167, %v222
  %v224 = vlaneseq
  %v225 = vshrl.u32 %v224, 7
  %v226 = vsub.s32 0, %v225
  %v227 = vrot.slane %v168, %v226
  %v228 = vlaneseq
  %v229 = vshrl.u32 %v228, 7
  %v230 = vsub.s32 0, %v229
  %v231 = vrot.slane %v169, %v230
  %v232 = vlaneseq
  %v233 = vshrl.u32 %v232, 7
  %v234 = vsub.s32 0, %v233
  %v235 = vrot.slane %v170, %v234
  %v236 = vlaneseq
  %v237 = vshrl.u32 %v236, 7
  %v238 = vsub.s32 0, %v237
  %v239 = vrot.slane %v171, %v238
  %v240 = vlaneseq
  %v241 = vshrl.u32 %v240, 7
  %v242 = vsub.s32 0, %v241
  %v243 = vrot.slane %v172, %v242
  %v244 = vlaneseq
  %v245 = vshrl.u32 %v244, 7
  %v246 = vsub.s32 0, %v245
  %v247 = vrot.slane %v173, %v246
  %v248 = vlaneseq
  %v249 = vshrl.u32 %v248, 7
  %v250 = vsub.s32 0, %v249
  %v251 = vrot.slane %v174, %v250
  %v252 = vlaneseq
  %v253 = vshrl.u32 %v252, 7
  %v254 = vsub.s32 0, %v253
  %v255 = vrot.slane %v175, %v254
  %v256 = vlaneseq
  %v257 = vshrl.u32 %v256, 7
  %v258 = vsub.s32 0, %v257
  %v259 = vrot.slane %v176, %v258
  %v276 = vmul.f32 %v199, %v178
  %v277 = vmul.f32 %v199, %v179
  %v278 = vmul.f32 %v203, %v178
  %v279 = vmul.f32 %v203, %v179
  %v280 = vmul.f32 %v207, %v178
  %v281 = vmul.f32 %v207, %v179
  %v282 = vmul.f32 %v211, %v178
  %v283 = vmul.f32 %v211, %v179
  %v284 = vmul.f32 %v215, %v178
  %v285 = vmul.f32 %v215, %v179
  %v286 = vmul.f32 %v219, %v178
  %v287 = vmul.f32 %v219, %v179
  %v288 = vmul.f32 %v223, %v178
  %v289 = vmul.f32 %v223, %v179
  %v290 = vmul.f32 %v227, %v178
  %v291 = vmul.f32 %v227, %v179
  %v292 = vmul.f32 %v231, %v178
  %v293 = vmul.f32 %v231, %v179
  %v294 = vmul.f32 %v235, %v178
  %v295 = vmul.f32 %v235, %v179
  %v296 = vmul.f32 %v239, %v178
  %v297 = vmul.f32 %v239, %v179
  %v298 = vmul.f32 %v243, %v178
  %v299 = vmul.f32 %v243, %v179
  %v300 = vmul.f32 %v247, %v178
  %v301 = vmul.f32 %v247, %v179
  %v302 = vmul.f32 %v251, %v178
  %v303 = vmul.f32 %v251, %v179
  %v304 = vmul.f32 %v255, %v178
  %v305 = vmul.f32 %v255, %v179
  %v306 = vmul.f32 %v259, %v178
  %v307 = vmul.f32 %v259, %v179
  %v308 = vadd.f32 %v128, %v276
  %v309 = vadd.f32 %v129, %v277
  %v310 = vadd.f32 %v130, %v278
  %v311 = vadd.f32 %v131, %v279
  %v312 = vadd.f32 %v132, %v280
  %v313 = vadd.f32 %v133, %v281
  %v314 = vadd.f32 %v134, %v282
  %v315 = vadd.f32 %v135, %v283
  %v316 = vadd.f32 %v136, %v284
  %v317 = vadd.f32 %v137, %v285
  %v318 = vadd.f32 %v138, %v286
  %v319 = vadd.f32 %v139, %v287
  %v320 = vadd.f32 %v140, %v288
  %v321 = vadd.f32 %v141, %v289
  %v322 = vadd.f32 %v142, %v290
  %v323 = vadd.f32 %v143, %v291
  %v324 = vadd.f32 %v144, %v292
  %v325 = vadd.f32 %v145, %v293
  %v326 = vadd.f32 %v146, %v294
  %v327 = vadd.f32 %v147, %v295
  %v328 = vadd.f32 %v148, %v296
  %v329 = vadd.f32 %v149, %v297
  %v330 = vadd.f32 %v150, %v298
  %v331 = vadd.f32 %v151, %v299
  %v332 = vadd.f32 %v152, %v300
  %v333 = vadd.f32 %v153, %v301
  %v334 = vadd.f32 %v154, %v302
  %v335 = vadd.f32 %v155, %v303
  %v336 = vadd.f32 %v156, %v304
  %v337 = vadd.f32 %v157, %v305
  %v338 = vadd.f32 %v158, %v306
  %v339 = vadd.f32 %v159, %v307
  %s340 = scalar_lea.vmem %s0, 2
  %v341 = vld [vmem:[%s340] sm:$0x1]
  %v342 = vld [vmem:[%s340 + $0x10] sm:$0x1]
  %v343 = vld [vmem:[%s340 + $0x20] sm:$0x1]
  %v344 = vld [vmem:[%s340 + $0x30] sm:$0x1]
  %v345 = vld [vmem:[%s340 + $0x40] sm:$0x1]
  %v346 = vld [vmem:[%s340 + $0x50] sm:$0x1]
  %v347 = vld [vmem:[%s340 + $0x60] sm:$0x1]
  %v348 = vld [vmem:[%s340 + $0x70] sm:$0x1]
  %v349 = vld [vmem:[%s340 + $0x80] sm:$0x1]
  %v350 = vld [vmem:[%s340 + $0x90] sm:$0x1]
  %v351 = vld [vmem:[%s340 + $0xa0] sm:$0x1]
  %v352 = vld [vmem:[%s340 + $0xb0] sm:$0x1]
  %v353 = vld [vmem:[%s340 + $0xc0] sm:$0x1]
  %v354 = vld [vmem:[%s340 + $0xd0] sm:$0x1]
  %v355 = vld [vmem:[%s340 + $0xe0] sm:$0x1]
  %v356 = vld [vmem:[%s340 + $0xf0] sm:$0x1]
  %s357 = scalar_lea.vmem %s2, 32
  %v358 = vld [vmem:[%s357] sm:$0xff]
  %v359 = vld [vmem:[%s357 + $0x8] sm:$0xff]
  %v376 = vlaneseq
  %v377 = vshrl.u32 %v376, 7
  %v378 = vsub.s32 0, %v377
  %v379 = vrot.slane %v341, %v378
  %v380 = vlaneseq
  %v381 = vshrl.u32 %v380, 7
  %v382 = vsub.s32 0, %v381
  %v383 = vrot.slane %v342, %v382
  %v384 = vlaneseq
  %v385 = vshrl.u32 %v384, 7
  %v386 = vsub.s32 0, %v385
  %v387 = vrot.slane %v343, %v386
  %v388 = vlaneseq
  %v389 = vshrl.u32 %v388, 7
  %v390 = vsub.s32 0, %v389
  %v391 = vrot.slane %v344, %v390
  %v392 = vlaneseq
  %v393 = vshrl.u32 %v392, 7
  %v394 = vsub.s32 0, %v393
  %v395 = vrot.slane %v345, %v394
  %v396 = vlaneseq
  %v397 = vshrl.u32 %v396, 7
  %v398 = vsub.s32 0, %v397
  %v399 = vrot.slane %v346, %v398
  %v400 = vlaneseq
  %v401 = vshrl.u32 %v400, 7
  %v402 = vsub.s32 0, %v401
  %v403 = vrot.slane %v347, %v402
  %v404 = vlaneseq
  %v405 = vshrl.u32 %v404, 7
  %v406 = vsub.s32 0, %v405
  %v407 = vrot.slane %v348, %v406
  %v408 = vlaneseq
  %v409 = vshrl.u32 %v408, 7
  %v410 = vsub.s32 0, %v409
  %v411 = vrot.slane %v349, %v410
  %v412 = vlaneseq
  %v413 = vshrl.u32 %v412, 7
  %v414 = vsub.s32 0, %v413
  %v415 = vrot.slane %v350, %v414
  %v416 = vlaneseq
  %v417 = vshrl.u32 %v416, 7
  %v418 = vsub.s32 0, %v417
  %v419 = vrot.slane %v351, %v418
  %v420 = vlaneseq
  %v421 = vshrl.u32 %v420, 7
  %v422 = vsub.s32 0, %v421
  %v423 = vrot.slane %v352, %v422
  %v424 = vlaneseq
  %v425 = vshrl.u32 %v424, 7
  %v426 = vsub.s32 0, %v425
  %v427 = vrot.slane %v353, %v426
  %v428 = vlaneseq
  %v429 = vshrl.u32 %v428, 7
  %v430 = vsub.s32 0, %v429
  %v431 = vrot.slane %v354, %v430
  %v432 = vlaneseq
  %v433 = vshrl.u32 %v432, 7
  %v434 = vsub.s32 0, %v433
  %v435 = vrot.slane %v355, %v434
  %v436 = vlaneseq
  %v437 = vshrl.u32 %v436, 7
  %v438 = vsub.s32 0, %v437
  %v439 = vrot.slane %v356, %v438
  %v456 = vmul.f32 %v379, %v358
  %v457 = vmul.f32 %v379, %v359
  %v458 = vmul.f32 %v383, %v358
  %v459 = vmul.f32 %v383, %v359
  %v460 = vmul.f32 %v387, %v358
  %v461 = vmul.f32 %v387, %v359
  %v462 = vmul.f32 %v391, %v358
  %v463 = vmul.f32 %v391, %v359
  %v464 = vmul.f32 %v395, %v358
  %v465 = vmul.f32 %v395, %v359
  %v466 = vmul.f32 %v399, %v358
  %v467 = vmul.f32 %v399, %v359
  %v468 = vmul.f32 %v403, %v358
  %v469 = vmul.f32 %v403, %v359
  %v470 = vmul.f32 %v407, %v358
  %v471 = vmul.f32 %v407, %v359
  %v472 = vmul.f32 %v411, %v358
  %v473 = vmul.f32 %v411, %v359
  %v474 = vmul.f32 %v415, %v358
  %v475 = vmul.f32 %v415, %v359
  %v476 = vmul.f32 %v419, %v358
  %v477 = vmul.f32 %v419, %v359
  %v478 = vmul.f32 %v423, %v358
  %v479 = vmul.f32 %v423, %v359
  %v480 = vmul.f32 %v427, %v358
  %v481 = vmul.f32 %v427, %v359
  %v482 = vmul.f32 %v431, %v358
  %v483 = vmul.f32 %v431, %v359
  %v484 = vmul.f32 %v435, %v358
  %v485 = vmul.f32 %v435, %v359
  %v486 = vmul.f32 %v439, %v358
  %v487 = vmul.f32 %v439, %v359
  %v488 = vadd.f32 %v308, %v456
  %v489 = vadd.f32 %v309, %v457
  %v490 = vadd.f32 %v310, %v458
  %v491 = vadd.f32 %v311, %v459
  %v492 = vadd.f32 %v312, %v460
  %v493 = vadd.f32 %v313, %v461
  %v494 = vadd.f32 %v314, %v462
  %v495 = vadd.f32 %v315, %v463
  %v496 = vadd.f32 %v316, %v464
  %v497 = vadd.f32 %v317, %v465
  %v498 = vadd.f32 %v318, %v466
  %v499 = vadd.f32 %v319, %v467
  %v500 = vadd.f32 %v320, %v468
  %v501 = vadd.f32 %v321, %v469
  %v502 = vadd.f32 %v322, %v470
  %v503 = vadd.f32 %v323, %v471
  %v504 = vadd.f32 %v324, %v472
  %v505 = vadd.f32 %v325, %v473
  %v506 = vadd.f32 %v326, %v474
  %v507 = vadd.f32 %v327, %v475
  %v508 = vadd.f32 %v328, %v476
  %v509 = vadd.f32 %v329, %v477
  %v510 = vadd.f32 %v330, %v478
  %v511 = vadd.f32 %v331, %v479
  %v512 = vadd.f32 %v332, %v480
  %v513 = vadd.f32 %v333, %v481
  %v514 = vadd.f32 %v334, %v482
  %v515 = vadd.f32 %v335, %v483
  %v516 = vadd.f32 %v336, %v484
  %v517 = vadd.f32 %v337, %v485
  %v518 = vadd.f32 %v338, %v486
  %v519 = vadd.f32 %v339, %v487
  %s520 = scalar_lea.vmem %s0, 3
  %v521 = vld [vmem:[%s520] sm:$0x1]
  %v522 = vld [vmem:[%s520 + $0x10] sm:$0x1]
  %v523 = vld [vmem:[%s520 + $0x20] sm:$0x1]
  %v524 = vld [vmem:[%s520 + $0x30] sm:$0x1]
  %v525 = vld [vmem:[%s520 + $0x40] sm:$0x1]
  %v526 = vld [vmem:[%s520 + $0x50] sm:$0x1]
  %v527 = vld [vmem:[%s520 + $0x60] sm:$0x1]
  %v528 = vld [vmem:[%s520 + $0x70] sm:$0x1]
  %v529 = vld [vmem:[%s520 + $0x80] sm:$0x1]
  %v530 = vld [vmem:[%s520 + $0x90] sm:$0x1]
  %v531 = vld [vmem:[%s520 + $0xa0] sm:$0x1]
  %v532 = vld [vmem:[%s520 + $0xb0] sm:$0x1]
  %v533 = vld [vmem:[%s520 + $0xc0] sm:$0x1]
  %v534 = vld [vmem:[%s520 + $0xd0] sm:$0x1]
  %v535 = vld [vmem:[%s520 + $0xe0] sm:$0x1]
  %v536 = vld [vmem:[%s520 + $0xf0] sm:$0x1]
  %s537 = scalar_lea.vmem %s2, 48
  %v538 = vld [vmem:[%s537] sm:$0xff]
  %v539 = vld [vmem:[%s537 + $0x8] sm:$0xff]
  %v556 = vlaneseq
  %v557 = vshrl.u32 %v556, 7
  %v558 = vsub.s32 0, %v557
  %v559 = vrot.slane %v521, %v558
  %v560 = vlaneseq
  %v561 = vshrl.u32 %v560, 7
  %v562 = vsub.s32 0, %v561
  %v563 = vrot.slane %v522, %v562
  %v564 = vlaneseq
  %v565 = vshrl.u32 %v564, 7
  %v566 = vsub.s32 0, %v565
  %v567 = vrot.slane %v523, %v566
  %v568 = vlaneseq
  %v569 = vshrl.u32 %v568, 7
  %v570 = vsub.s32 0, %v569
  %v571 = vrot.slane %v524, %v570
  %v572 = vlaneseq
  %v573 = vshrl.u32 %v572, 7
  %v574 = vsub.s32 0, %v573
  %v575 = vrot.slane %v525, %v574
  %v576 = vlaneseq
  %v577 = vshrl.u32 %v576, 7
  %v578 = vsub.s32 0, %v577
  %v579 = vrot.slane %v526, %v578
  %v580 = vlaneseq
  %v581 = vshrl.u32 %v580, 7
  %v582 = vsub.s32 0, %v581
  %v583 = vrot.slane %v527, %v582
  %v584 = vlaneseq
  %v585 = vshrl.u32 %v584, 7
  %v586 = vsub.s32 0, %v585
  %v587 = vrot.slane %v528, %v586
  %v588 = vlaneseq
  %v589 = vshrl.u32 %v588, 7
  %v590 = vsub.s32 0, %v589
  %v591 = vrot.slane %v529, %v590
  %v592 = vlaneseq
  %v593 = vshrl.u32 %v592, 7
  %v594 = vsub.s32 0, %v593
  %v595 = vrot.slane %v530, %v594
  %v596 = vlaneseq
  %v597 = vshrl.u32 %v596, 7
  %v598 = vsub.s32 0, %v597
  %v599 = vrot.slane %v531, %v598
  %v600 = vlaneseq
  %v601 = vshrl.u32 %v600, 7
  %v602 = vsub.s32 0, %v601
  %v603 = vrot.slane %v532, %v602
  %v604 = vlaneseq
  %v605 = vshrl.u32 %v604, 7
  %v606 = vsub.s32 0, %v605
  %v607 = vrot.slane %v533, %v606
  %v608 = vlaneseq
  %v609 = vshrl.u32 %v608, 7
  %v610 = vsub.s32 0, %v609
  %v611 = vrot.slane %v534, %v610
  %v612 = vlaneseq
  %v613 = vshrl.u32 %v612, 7
  %v614 = vsub.s32 0, %v613
  %v615 = vrot.slane %v535, %v614
  %v616 = vlaneseq
  %v617 = vshrl.u32 %v616, 7
  %v618 = vsub.s32 0, %v617
  %v619 = vrot.slane %v536, %v618
  %v636 = vmul.f32 %v559, %v538
  %v637 = vmul.f32 %v559, %v539
  %v638 = vmul.f32 %v563, %v538
  %v639 = vmul.f32 %v563, %v539
  %v640 = vmul.f32 %v567, %v538
  %v641 = vmul.f32 %v567, %v539
  %v642 = vmul.f32 %v571, %v538
  %v643 = vmul.f32 %v571, %v539
  %v644 = vmul.f32 %v575, %v538
  %v645 = vmul.f32 %v575, %v539
  %v646 = vmul.f32 %v579, %v538
  %v647 = vmul.f32 %v579, %v539
  %v648 = vmul.f32 %v583, %v538
  %v649 = vmul.f32 %v583, %v539
  %v650 = vmul.f32 %v587, %v538
  %v651 = vmul.f32 %v587, %v539
  %v652 = vmul.f32 %v591, %v538
  %v653 = vmul.f32 %v591, %v539
  %v654 = vmul.f32 %v595, %v538
  %v655 = vmul.f32 %v595, %v539
  %v656 = vmul.f32 %v599, %v538
  %v657 = vmul.f32 %v599, %v539
  %v658 = vmul.f32 %v603, %v538
  %v659 = vmul.f32 %v603, %v539
  %v660 = vmul.f32 %v607, %v538
  %v661 = vmul.f32 %v607, %v539
  %v662 = vmul.f32 %v611, %v538
  %v663 = vmul.f32 %v611, %v539
  %v664 = vmul.f32 %v615, %v538
  %v665 = vmul.f32 %v615, %v539
  %v666 = vmul.f32 %v619, %v538
  %v667 = vmul.f32 %v619, %v539
  %v668 = vadd.f32 %v488, %v636
  %v669 = vadd.f32 %v489, %v637
  %v670 = vadd.f32 %v490, %v638
  %v671 = vadd.f32 %v491, %v639
  %v672 = vadd.f32 %v492, %v640
  %v673 = vadd.f32 %v493, %v641
  %v674 = vadd.f32 %v494, %v642
  %v675 = vadd.f32 %v495, %v643
  %v676 = vadd.f32 %v496, %v644
  %v677 = vadd.f32 %v497, %v645
  %v678 = vadd.f32 %v498, %v646
  %v679 = vadd.f32 %v499, %v647
  %v680 = vadd.f32 %v500, %v648
  %v681 = vadd.f32 %v501, %v649
  %v682 = vadd.f32 %v502, %v650
  %v683 = vadd.f32 %v503, %v651
  %v684 = vadd.f32 %v504, %v652
  %v685 = vadd.f32 %v505, %v653
  %v686 = vadd.f32 %v506, %v654
  %v687 = vadd.f32 %v507, %v655
  %v688 = vadd.f32 %v508, %v656
  %v689 = vadd.f32 %v509, %v657
  %v690 = vadd.f32 %v510, %v658
  %v691 = vadd.f32 %v511, %v659
  %v692 = vadd.f32 %v512, %v660
  %v693 = vadd.f32 %v513, %v661
  %v694 = vadd.f32 %v514, %v662
  %v695 = vadd.f32 %v515, %v663
  %v696 = vadd.f32 %v516, %v664
  %v697 = vadd.f32 %v517, %v665
  %v698 = vadd.f32 %v518, %v666
  %v699 = vadd.f32 %v519, %v667
  %s700 = scalar_lea.vmem %s0, 4
  %v701 = vld [vmem:[%s700] sm:$0x1]
  %v702 = vld [vmem:[%s700 + $0x10] sm:$0x1]
  %v703 = vld [vmem:[%s700 + $0x20] sm:$0x1]
  %v704 = vld [vmem:[%s700 + $0x30] sm:$0x1]
  %v705 = vld [vmem:[%s700 + $0x40] sm:$0x1]
  %v706 = vld [vmem:[%s700 + $0x50] sm:$0x1]
  %v707 = vld [vmem:[%s700 + $0x60] sm:$0x1]
  %v708 = vld [vmem:[%s700 + $0x70] sm:$0x1]
  %v709 = vld [vmem:[%s700 + $0x80] sm:$0x1]
  %v710 = vld [vmem:[%s700 + $0x90] sm:$0x1]
  %v711 = vld [vmem:[%s700 + $0xa0] sm:$0x1]
  %v712 = vld [vmem:[%s700 + $0xb0] sm:$0x1]
  %v713 = vld [vmem:[%s700 + $0xc0] sm:$0x1]
  %v714 = vld [vmem:[%s700 + $0xd0] sm:$0x1]
  %v715 = vld [vmem:[%s700 + $0xe0] sm:$0x1]
  %v716 = vld [vmem:[%s700 + $0xf0] sm:$0x1]
  %s717 = scalar_lea.vmem %s2, 64
  %v718 = vld [vmem:[%s717] sm:$0xff]
  %v719 = vld [vmem:[%s717 + $0x8] sm:$0xff]
  %v736 = vlaneseq
  %v737 = vshrl.u32 %v736, 7
  %v738 = vsub.s32 0, %v737
  %v739 = vrot.slane %v701, %v738
  %v740 = vlaneseq
  %v741 = vshrl.u32 %v740, 7
  %v742 = vsub.s32 0, %v741
  %v743 = vrot.slane %v702, %v742
  %v744 = vlaneseq
  %v745 = vshrl.u32 %v744, 7
  %v746 = vsub.s32 0, %v745
  %v747 = vrot.slane %v703, %v746
  %v748 = vlaneseq
  %v749 = vshrl.u32 %v748, 7
  %v750 = vsub.s32 0, %v749
  %v751 = vrot.slane %v704, %v750
  %v752 = vlaneseq
  %v753 = vshrl.u32 %v752, 7
  %v754 = vsub.s32 0, %v753
  %v755 = vrot.slane %v705, %v754
  %v756 = vlaneseq
  %v757 = vshrl.u32 %v756, 7
  %v758 = vsub.s32 0, %v757
  %v759 = vrot.slane %v706, %v758
  %v760 = vlaneseq
  %v761 = vshrl.u32 %v760, 7
  %v762 = vsub.s32 0, %v761
  %v763 = vrot.slane %v707, %v762
  %v764 = vlaneseq
  %v765 = vshrl.u32 %v764, 7
  %v766 = vsub.s32 0, %v765
  %v767 = vrot.slane %v708, %v766
  %v768 = vlaneseq
  %v769 = vshrl.u32 %v768, 7
  %v770 = vsub.s32 0, %v769
  %v771 = vrot.slane %v709, %v770
  %v772 = vlaneseq
  %v773 = vshrl.u32 %v772, 7
  %v774 = vsub.s32 0, %v773
  %v775 = vrot.slane %v710, %v774
  %v776 = vlaneseq
  %v777 = vshrl.u32 %v776, 7
  %v778 = vsub.s32 0, %v777
  %v779 = vrot.slane %v711, %v778
  %v780 = vlaneseq
  %v781 = vshrl.u32 %v780, 7
  %v782 = vsub.s32 0, %v781
  %v783 = vrot.slane %v712, %v782
  %v784 = vlaneseq
  %v785 = vshrl.u32 %v784, 7
  %v786 = vsub.s32 0, %v785
  %v787 = vrot.slane %v713, %v786
  %v788 = vlaneseq
  %v789 = vshrl.u32 %v788, 7
  %v790 = vsub.s32 0, %v789
  %v791 = vrot.slane %v714, %v790
  %v792 = vlaneseq
  %v793 = vshrl.u32 %v792, 7
  %v794 = vsub.s32 0, %v793
  %v795 = vrot.slane %v715, %v794
  %v796 = vlaneseq
  %v797 = vshrl.u32 %v796, 7
  %v798 = vsub.s32 0, %v797
  %v799 = vrot.slane %v716, %v798
  %v816 = vmul.f32 %v739, %v718
  %v817 = vmul.f32 %v739, %v719
  %v818 = vmul.f32 %v743, %v718
  %v819 = vmul.f32 %v743, %v719
  %v820 = vmul.f32 %v747, %v718
  %v821 = vmul.f32 %v747, %v719
  %v822 = vmul.f32 %v751, %v718
  %v823 = vmul.f32 %v751, %v719
  %v824 = vmul.f32 %v755, %v718
  %v825 = vmul.f32 %v755, %v719
  %v826 = vmul.f32 %v759, %v718
  %v827 = vmul.f32 %v759, %v719
  %v828 = vmul.f32 %v763, %v718
  %v829 = vmul.f32 %v763, %v719
  %v830 = vmul.f32 %v767, %v718
  %v831 = vmul.f32 %v767, %v719
  %v832 = vmul.f32 %v771, %v718
  %v833 = vmul.f32 %v771, %v719
  %v834 = vmul.f32 %v775, %v718
  %v835 = vmul.f32 %v775, %v719
  %v836 = vmul.f32 %v779, %v718
  %v837 = vmul.f32 %v779, %v719
  %v838 = vmul.f32 %v783, %v718
  %v839 = vmul.f32 %v783, %v719
  %v840 = vmul.f32 %v787, %v718
  %v841 = vmul.f32 %v787, %v719
  %v842 = vmul.f32 %v791, %v718
  %v843 = vmul.f32 %v791, %v719
  %v844 = vmul.f32 %v795, %v718
  %v845 = vmul.f32 %v795, %v719
  %v846 = vmul.f32 %v799, %v718
  %v847 = vmul.f32 %v799, %v719
  %v848 = vadd.f32 %v668, %v816
  %v849 = vadd.f32 %v669, %v817
  %v850 = vadd.f32 %v670, %v818
  %v851 = vadd.f32 %v671, %v819
  %v852 = vadd.f32 %v672, %v820
  %v853 = vadd.f32 %v673, %v821
  %v854 = vadd.f32 %v674, %v822
  %v855 = vadd.f32 %v675, %v823
  %v856 = vadd.f32 %v676, %v824
  %v857 = vadd.f32 %v677, %v825
  %v858 = vadd.f32 %v678, %v826
  %v859 = vadd.f32 %v679, %v827
  %v860 = vadd.f32 %v680, %v828
  %v861 = vadd.f32 %v681, %v829
  %v862 = vadd.f32 %v682, %v830
  %v863 = vadd.f32 %v683, %v831
  %v864 = vadd.f32 %v684, %v832
  %v865 = vadd.f32 %v685, %v833
  %v866 = vadd.f32 %v686, %v834
  %v867 = vadd.f32 %v687, %v835
  %v868 = vadd.f32 %v688, %v836
  %v869 = vadd.f32 %v689, %v837
  %v870 = vadd.f32 %v690, %v838
  %v871 = vadd.f32 %v691, %v839
  %v872 = vadd.f32 %v692, %v840
  %v873 = vadd.f32 %v693, %v841
  %v874 = vadd.f32 %v694, %v842
  %v875 = vadd.f32 %v695, %v843
  %v876 = vadd.f32 %v696, %v844
  %v877 = vadd.f32 %v697, %v845
  %v878 = vadd.f32 %v698, %v846
  %v879 = vadd.f32 %v699, %v847
  %s880 = scalar_lea.vmem %s0, 5
  %v881 = vld [vmem:[%s880] sm:$0x1]
  %v882 = vld [vmem:[%s880 + $0x10] sm:$0x1]
  %v883 = vld [vmem:[%s880 + $0x20] sm:$0x1]
  %v884 = vld [vmem:[%s880 + $0x30] sm:$0x1]
  %v885 = vld [vmem:[%s880 + $0x40] sm:$0x1]
  %v886 = vld [vmem:[%s880 + $0x50] sm:$0x1]
  %v887 = vld [vmem:[%s880 + $0x60] sm:$0x1]
  %v888 = vld [vmem:[%s880 + $0x70] sm:$0x1]
  %v889 = vld [vmem:[%s880 + $0x80] sm:$0x1]
  %v890 = vld [vmem:[%s880 + $0x90] sm:$0x1]
  %v891 = vld [vmem:[%s880 + $0xa0] sm:$0x1]
  %v892 = vld [vmem:[%s880 + $0xb0] sm:$0x1]
  %v893 = vld [vmem:[%s880 + $0xc0] sm:$0x1]
  %v894 = vld [vmem:[%s880 + $0xd0] sm:$0x1]
  %v895 = vld [vmem:[%s880 + $0xe0] sm:$0x1]
  %v896 = vld [vmem:[%s880 + $0xf0] sm:$0x1]
  %s897 = scalar_lea.vmem %s2, 80
  %v898 = vld [vmem:[%s897] sm:$0xff]
  %v899 = vld [vmem:[%s897 + $0x8] sm:$0xff]
  %v916 = vlaneseq
  %v917 = vshrl.u32 %v916, 7
  %v918 = vsub.s32 0, %v917
  %v919 = vrot.slane %v881, %v918
  %v920 = vlaneseq
  %v921 = vshrl.u32 %v920, 7
  %v922 = vsub.s32 0, %v921
  %v923 = vrot.slane %v882, %v922
  %v924 = vlaneseq
  %v925 = vshrl.u32 %v924, 7
  %v926 = vsub.s32 0, %v925
  %v927 = vrot.slane %v883, %v926
  %v928 = vlaneseq
  %v929 = vshrl.u32 %v928, 7
  %v930 = vsub.s32 0, %v929
  %v931 = vrot.slane %v884, %v930
  %v932 = vlaneseq
  %v933 = vshrl.u32 %v932, 7
  %v934 = vsub.s32 0, %v933
  %v935 = vrot.slane %v885, %v934
  %v936 = vlaneseq
  %v937 = vshrl.u32 %v936, 7
  %v938 = vsub.s32 0, %v937
  %v939 = vrot.slane %v886, %v938
  %v940 = vlaneseq
  %v941 = vshrl.u32 %v940, 7
  %v942 = vsub.s32 0, %v941
  %v943 = vrot.slane %v887, %v942
  %v944 = vlaneseq
  %v945 = vshrl.u32 %v944, 7
  %v946 = vsub.s32 0, %v945
  %v947 = vrot.slane %v888, %v946
  %v948 = vlaneseq
  %v949 = vshrl.u32 %v948, 7
  %v950 = vsub.s32 0, %v949
  %v951 = vrot.slane %v889, %v950
  %v952 = vlaneseq
  %v953 = vshrl.u32 %v952, 7
  %v954 = vsub.s32 0, %v953
  %v955 = vrot.slane %v890, %v954
  %v956 = vlaneseq
  %v957 = vshrl.u32 %v956, 7
  %v958 = vsub.s32 0, %v957
  %v959 = vrot.slane %v891, %v958
  %v960 = vlaneseq
  %v961 = vshrl.u32 %v960, 7
  %v962 = vsub.s32 0, %v961
  %v963 = vrot.slane %v892, %v962
  %v964 = vlaneseq
  %v965 = vshrl.u32 %v964, 7
  %v966 = vsub.s32 0, %v965
  %v967 = vrot.slane %v893, %v966
  %v968 = vlaneseq
  %v969 = vshrl.u32 %v968, 7
  %v970 = vsub.s32 0, %v969
  %v971 = vrot.slane %v894, %v970
  %v972 = vlaneseq
  %v973 = vshrl.u32 %v972, 7
  %v974 = vsub.s32 0, %v973
  %v975 = vrot.slane %v895, %v974
  %v976 = vlaneseq
  %v977 = vshrl.u32 %v976, 7
  %v978 = vsub.s32 0, %v977
  %v979 = vrot.slane %v896, %v978
  %v996 = vmul.f32 %v919, %v898
  %v997 = vmul.f32 %v919, %v899
  %v998 = vmul.f32 %v923, %v898
  %v999 = vmul.f32 %v923, %v899
  %v1000 = vmul.f32 %v927, %v898
  %v1001 = vmul.f32 %v927, %v899
  %v1002 = vmul.f32 %v931, %v898
  %v1003 = vmul.f32 %v931, %v899
  %v1004 = vmul.f32 %v935, %v898
  %v1005 = vmul.f32 %v935, %v899
  %v1006 = vmul.f32 %v939, %v898
  %v1007 = vmul.f32 %v939, %v899
  %v1008 = vmul.f32 %v943, %v898
  %v1009 = vmul.f32 %v943, %v899
  %v1010 = vmul.f32 %v947, %v898
  %v1011 = vmul.f32 %v947, %v899
  %v1012 = vmul.f32 %v951, %v898
  %v1013 = vmul.f32 %v951, %v899
  %v1014 = vmul.f32 %v955, %v898
  %v1015 = vmul.f32 %v955, %v899
  %v1016 = vmul.f32 %v959, %v898
  %v1017 = vmul.f32 %v959, %v899
  %v1018 = vmul.f32 %v963, %v898
  %v1019 = vmul.f32 %v963, %v899
  %v1020 = vmul.f32 %v967, %v898
  %v1021 = vmul.f32 %v967, %v899
  %v1022 = vmul.f32 %v971, %v898
  %v1023 = vmul.f32 %v971, %v899
  %v1024 = vmul.f32 %v975, %v898
  %v1025 = vmul.f32 %v975, %v899
  %v1026 = vmul.f32 %v979, %v898
  %v1027 = vmul.f32 %v979, %v899
  %v1028 = vadd.f32 %v848, %v996
  %v1029 = vadd.f32 %v849, %v997
  %v1030 = vadd.f32 %v850, %v998
  %v1031 = vadd.f32 %v851, %v999
  %v1032 = vadd.f32 %v852, %v1000
  %v1033 = vadd.f32 %v853, %v1001
  %v1034 = vadd.f32 %v854, %v1002
  %v1035 = vadd.f32 %v855, %v1003
  %v1036 = vadd.f32 %v856, %v1004
  %v1037 = vadd.f32 %v857, %v1005
  %v1038 = vadd.f32 %v858, %v1006
  %v1039 = vadd.f32 %v859, %v1007
  %v1040 = vadd.f32 %v860, %v1008
  %v1041 = vadd.f32 %v861, %v1009
  %v1042 = vadd.f32 %v862, %v1010
  %v1043 = vadd.f32 %v863, %v1011
  %v1044 = vadd.f32 %v864, %v1012
  %v1045 = vadd.f32 %v865, %v1013
  %v1046 = vadd.f32 %v866, %v1014
  %v1047 = vadd.f32 %v867, %v1015
  %v1048 = vadd.f32 %v868, %v1016
  %v1049 = vadd.f32 %v869, %v1017
  %v1050 = vadd.f32 %v870, %v1018
  %v1051 = vadd.f32 %v871, %v1019
  %v1052 = vadd.f32 %v872, %v1020
  %v1053 = vadd.f32 %v873, %v1021
  %v1054 = vadd.f32 %v874, %v1022
  %v1055 = vadd.f32 %v875, %v1023
  %v1056 = vadd.f32 %v876, %v1024
  %v1057 = vadd.f32 %v877, %v1025
  %v1058 = vadd.f32 %v878, %v1026
  %v1059 = vadd.f32 %v879, %v1027
  %s1060 = scalar_lea.vmem %s0, 6
  %v1061 = vld [vmem:[%s1060] sm:$0x1]
  %v1062 = vld [vmem:[%s1060 + $0x10] sm:$0x1]
  %v1063 = vld [vmem:[%s1060 + $0x20] sm:$0x1]
  %v1064 = vld [vmem:[%s1060 + $0x30] sm:$0x1]
  %v1065 = vld [vmem:[%s1060 + $0x40] sm:$0x1]
  %v1066 = vld [vmem:[%s1060 + $0x50] sm:$0x1]
  %v1067 = vld [vmem:[%s1060 + $0x60] sm:$0x1]
  %v1068 = vld [vmem:[%s1060 + $0x70] sm:$0x1]
  %v1069 = vld [vmem:[%s1060 + $0x80] sm:$0x1]
  %v1070 = vld [vmem:[%s1060 + $0x90] sm:$0x1]
  %v1071 = vld [vmem:[%s1060 + $0xa0] sm:$0x1]
  %v1072 = vld [vmem:[%s1060 + $0xb0] sm:$0x1]
  %v1073 = vld [vmem:[%s1060 + $0xc0] sm:$0x1]
  %v1074 = vld [vmem:[%s1060 + $0xd0] sm:$0x1]
  %v1075 = vld [vmem:[%s1060 + $0xe0] sm:$0x1]
  %v1076 = vld [vmem:[%s1060 + $0xf0] sm:$0x1]
  %s1077 = scalar_lea.vmem %s2, 96
  %v1078 = vld [vmem:[%s1077] sm:$0xff]
  %v1079 = vld [vmem:[%s1077 + $0x8] sm:$0xff]
  %v1096 = vlaneseq
  %v1097 = vshrl.u32 %v1096, 7
  %v1098 = vsub.s32 0, %v1097
  %v1099 = vrot.slane %v1061, %v1098
  %v1100 = vlaneseq
  %v1101 = vshrl.u32 %v1100, 7
  %v1102 = vsub.s32 0, %v1101
  %v1103 = vrot.slane %v1062, %v1102
  %v1104 = vlaneseq
  %v1105 = vshrl.u32 %v1104, 7
  %v1106 = vsub.s32 0, %v1105
  %v1107 = vrot.slane %v1063, %v1106
  %v1108 = vlaneseq
  %v1109 = vshrl.u32 %v1108, 7
  %v1110 = vsub.s32 0, %v1109
  %v1111 = vrot.slane %v1064, %v1110
  %v1112 = vlaneseq
  %v1113 = vshrl.u32 %v1112, 7
  %v1114 = vsub.s32 0, %v1113
  %v1115 = vrot.slane %v1065, %v1114
  %v1116 = vlaneseq
  %v1117 = vshrl.u32 %v1116, 7
  %v1118 = vsub.s32 0, %v1117
  %v1119 = vrot.slane %v1066, %v1118
  %v1120 = vlaneseq
  %v1121 = vshrl.u32 %v1120, 7
  %v1122 = vsub.s32 0, %v1121
  %v1123 = vrot.slane %v1067, %v1122
  %v1124 = vlaneseq
  %v1125 = vshrl.u32 %v1124, 7
  %v1126 = vsub.s32 0, %v1125
  %v1127 = vrot.slane %v1068, %v1126
  %v1128 = vlaneseq
  %v1129 = vshrl.u32 %v1128, 7
  %v1130 = vsub.s32 0, %v1129
  %v1131 = vrot.slane %v1069, %v1130
  %v1132 = vlaneseq
  %v1133 = vshrl.u32 %v1132, 7
  %v1134 = vsub.s32 0, %v1133
  %v1135 = vrot.slane %v1070, %v1134
  %v1136 = vlaneseq
  %v1137 = vshrl.u32 %v1136, 7
  %v1138 = vsub.s32 0, %v1137
  %v1139 = vrot.slane %v1071, %v1138
  %v1140 = vlaneseq
  %v1141 = vshrl.u32 %v1140, 7
  %v1142 = vsub.s32 0, %v1141
  %v1143 = vrot.slane %v1072, %v1142
  %v1144 = vlaneseq
  %v1145 = vshrl.u32 %v1144, 7
  %v1146 = vsub.s32 0, %v1145
  %v1147 = vrot.slane %v1073, %v1146
  %v1148 = vlaneseq
  %v1149 = vshrl.u32 %v1148, 7
  %v1150 = vsub.s32 0, %v1149
  %v1151 = vrot.slane %v1074, %v1150
  %v1152 = vlaneseq
  %v1153 = vshrl.u32 %v1152, 7
  %v1154 = vsub.s32 0, %v1153
  %v1155 = vrot.slane %v1075, %v1154
  %v1156 = vlaneseq
  %v1157 = vshrl.u32 %v1156, 7
  %v1158 = vsub.s32 0, %v1157
  %v1159 = vrot.slane %v1076, %v1158
  %v1176 = vmul.f32 %v1099, %v1078
  %v1177 = vmul.f32 %v1099, %v1079
  %v1178 = vmul.f32 %v1103, %v1078
  %v1179 = vmul.f32 %v1103, %v1079
  %v1180 = vmul.f32 %v1107, %v1078
  %v1181 = vmul.f32 %v1107, %v1079
  %v1182 = vmul.f32 %v1111, %v1078
  %v1183 = vmul.f32 %v1111, %v1079
  %v1184 = vmul.f32 %v1115, %v1078
  %v1185 = vmul.f32 %v1115, %v1079
  %v1186 = vmul.f32 %v1119, %v1078
  %v1187 = vmul.f32 %v1119, %v1079
  %v1188 = vmul.f32 %v1123, %v1078
  %v1189 = vmul.f32 %v1123, %v1079
  %v1190 = vmul.f32 %v1127, %v1078
  %v1191 = vmul.f32 %v1127, %v1079
  %v1192 = vmul.f32 %v1131, %v1078
  %v1193 = vmul.f32 %v1131, %v1079
  %v1194 = vmul.f32 %v1135, %v1078
  %v1195 = vmul.f32 %v1135, %v1079
  %v1196 = vmul.f32 %v1139, %v1078
  %v1197 = vmul.f32 %v1139, %v1079
  %v1198 = vmul.f32 %v1143, %v1078
  %v1199 = vmul.f32 %v1143, %v1079
  %v1200 = vmul.f32 %v1147, %v1078
  %v1201 = vmul.f32 %v1147, %v1079
  %v1202 = vmul.f32 %v1151, %v1078
  %v1203 = vmul.f32 %v1151, %v1079
  %v1204 = vmul.f32 %v1155, %v1078
  %v1205 = vmul.f32 %v1155, %v1079
  %v1206 = vmul.f32 %v1159, %v1078
  %v1207 = vmul.f32 %v1159, %v1079
  %v1208 = vadd.f32 %v1028, %v1176
  %v1209 = vadd.f32 %v1029, %v1177
  %v1210 = vadd.f32 %v1030, %v1178
  %v1211 = vadd.f32 %v1031, %v1179
  %v1212 = vadd.f32 %v1032, %v1180
  %v1213 = vadd.f32 %v1033, %v1181
  %v1214 = vadd.f32 %v1034, %v1182
  %v1215 = vadd.f32 %v1035, %v1183
  %v1216 = vadd.f32 %v1036, %v1184
  %v1217 = vadd.f32 %v1037, %v1185
  %v1218 = vadd.f32 %v1038, %v1186
  %v1219 = vadd.f32 %v1039, %v1187
  %v1220 = vadd.f32 %v1040, %v1188
  %v1221 = vadd.f32 %v1041, %v1189
  %v1222 = vadd.f32 %v1042, %v1190
  %v1223 = vadd.f32 %v1043, %v1191
  %v1224 = vadd.f32 %v1044, %v1192
  %v1225 = vadd.f32 %v1045, %v1193
  %v1226 = vadd.f32 %v1046, %v1194
  %v1227 = vadd.f32 %v1047, %v1195
  %v1228 = vadd.f32 %v1048, %v1196
  %v1229 = vadd.f32 %v1049, %v1197
  %v1230 = vadd.f32 %v1050, %v1198
  %v1231 = vadd.f32 %v1051, %v1199
  %v1232 = vadd.f32 %v1052, %v1200
  %v1233 = vadd.f32 %v1053, %v1201
  %v1234 = vadd.f32 %v1054, %v1202
  %v1235 = vadd.f32 %v1055, %v1203
  %v1236 = vadd.f32 %v1056, %v1204
  %v1237 = vadd.f32 %v1057, %v1205
  %v1238 = vadd.f32 %v1058, %v1206
  %v1239 = vadd.f32 %v1059, %v1207
  %s1240 = scalar_lea.vmem %s0, 7
  %v1241 = vld [vmem:[%s1240] sm:$0x1]
  %v1242 = vld [vmem:[%s1240 + $0x10] sm:$0x1]
  %v1243 = vld [vmem:[%s1240 + $0x20] sm:$0x1]
  %v1244 = vld [vmem:[%s1240 + $0x30] sm:$0x1]
  %v1245 = vld [vmem:[%s1240 + $0x40] sm:$0x1]
  %v1246 = vld [vmem:[%s1240 + $0x50] sm:$0x1]
  %v1247 = vld [vmem:[%s1240 + $0x60] sm:$0x1]
  %v1248 = vld [vmem:[%s1240 + $0x70] sm:$0x1]
  %v1249 = vld [vmem:[%s1240 + $0x80] sm:$0x1]
  %v1250 = vld [vmem:[%s1240 + $0x90] sm:$0x1]
  %v1251 = vld [vmem:[%s1240 + $0xa0] sm:$0x1]
  %v1252 = vld [vmem:[%s1240 + $0xb0] sm:$0x1]
  %v1253 = vld [vmem:[%s1240 + $0xc0] sm:$0x1]
  %v1254 = vld [vmem:[%s1240 + $0xd0] sm:$0x1]
  %v1255 = vld [vmem:[%s1240 + $0xe0] sm:$0x1]
  %v1256 = vld [vmem:[%s1240 + $0xf0] sm:$0x1]
  %s1257 = scalar_lea.vmem %s2, 112
  %v1258 = vld [vmem:[%s1257] sm:$0xff]
  %v1259 = vld [vmem:[%s1257 + $0x8] sm:$0xff]
  %v1276 = vlaneseq
  %v1277 = vshrl.u32 %v1276, 7
  %v1278 = vsub.s32 0, %v1277
  %v1279 = vrot.slane %v1241, %v1278
  %v1280 = vlaneseq
  %v1281 = vshrl.u32 %v1280, 7
  %v1282 = vsub.s32 0, %v1281
  %v1283 = vrot.slane %v1242, %v1282
  %v1284 = vlaneseq
  %v1285 = vshrl.u32 %v1284, 7
  %v1286 = vsub.s32 0, %v1285
  %v1287 = vrot.slane %v1243, %v1286
  %v1288 = vlaneseq
  %v1289 = vshrl.u32 %v1288, 7
  %v1290 = vsub.s32 0, %v1289
  %v1291 = vrot.slane %v1244, %v1290
  %v1292 = vlaneseq
  %v1293 = vshrl.u32 %v1292, 7
  %v1294 = vsub.s32 0, %v1293
  %v1295 = vrot.slane %v1245, %v1294
  %v1296 = vlaneseq
  %v1297 = vshrl.u32 %v1296, 7
  %v1298 = vsub.s32 0, %v1297
  %v1299 = vrot.slane %v1246, %v1298
  %v1300 = vlaneseq
  %v1301 = vshrl.u32 %v1300, 7
  %v1302 = vsub.s32 0, %v1301
  %v1303 = vrot.slane %v1247, %v1302
  %v1304 = vlaneseq
  %v1305 = vshrl.u32 %v1304, 7
  %v1306 = vsub.s32 0, %v1305
  %v1307 = vrot.slane %v1248, %v1306
  %v1308 = vlaneseq
  %v1309 = vshrl.u32 %v1308, 7
  %v1310 = vsub.s32 0, %v1309
  %v1311 = vrot.slane %v1249, %v1310
  %v1312 = vlaneseq
  %v1313 = vshrl.u32 %v1312, 7
  %v1314 = vsub.s32 0, %v1313
  %v1315 = vrot.slane %v1250, %v1314
  %v1316 = vlaneseq
  %v1317 = vshrl.u32 %v1316, 7
  %v1318 = vsub.s32 0, %v1317
  %v1319 = vrot.slane %v1251, %v1318
  %v1320 = vlaneseq
  %v1321 = vshrl.u32 %v1320, 7
  %v1322 = vsub.s32 0, %v1321
  %v1323 = vrot.slane %v1252, %v1322
  %v1324 = vlaneseq
  %v1325 = vshrl.u32 %v1324, 7
  %v1326 = vsub.s32 0, %v1325
  %v1327 = vrot.slane %v1253, %v1326
  %v1328 = vlaneseq
  %v1329 = vshrl.u32 %v1328, 7
  %v1330 = vsub.s32 0, %v1329
  %v1331 = vrot.slane %v1254, %v1330
  %v1332 = vlaneseq
  %v1333 = vshrl.u32 %v1332, 7
  %v1334 = vsub.s32 0, %v1333
  %v1335 = vrot.slane %v1255, %v1334
  %v1336 = vlaneseq
  %v1337 = vshrl.u32 %v1336, 7
  %v1338 = vsub.s32 0, %v1337
  %v1339 = vrot.slane %v1256, %v1338
  %v1356 = vmul.f32 %v1279, %v1258
  %v1357 = vmul.f32 %v1279, %v1259
  %v1358 = vmul.f32 %v1283, %v1258
  %v1359 = vmul.f32 %v1283, %v1259
  %v1360 = vmul.f32 %v1287, %v1258
  %v1361 = vmul.f32 %v1287, %v1259
  %v1362 = vmul.f32 %v1291, %v1258
  %v1363 = vmul.f32 %v1291, %v1259
  %v1364 = vmul.f32 %v1295, %v1258
  %v1365 = vmul.f32 %v1295, %v1259
  %v1366 = vmul.f32 %v1299, %v1258
  %v1367 = vmul.f32 %v1299, %v1259
  %v1368 = vmul.f32 %v1303, %v1258
  %v1369 = vmul.f32 %v1303, %v1259
  %v1370 = vmul.f32 %v1307, %v1258
  %v1371 = vmul.f32 %v1307, %v1259
  %v1372 = vmul.f32 %v1311, %v1258
  %v1373 = vmul.f32 %v1311, %v1259
  %v1374 = vmul.f32 %v1315, %v1258
  %v1375 = vmul.f32 %v1315, %v1259
  %v1376 = vmul.f32 %v1319, %v1258
  %v1377 = vmul.f32 %v1319, %v1259
  %v1378 = vmul.f32 %v1323, %v1258
  %v1379 = vmul.f32 %v1323, %v1259
  %v1380 = vmul.f32 %v1327, %v1258
  %v1381 = vmul.f32 %v1327, %v1259
  %v1382 = vmul.f32 %v1331, %v1258
  %v1383 = vmul.f32 %v1331, %v1259
  %v1384 = vmul.f32 %v1335, %v1258
  %v1385 = vmul.f32 %v1335, %v1259
  %v1386 = vmul.f32 %v1339, %v1258
  %v1387 = vmul.f32 %v1339, %v1259
  %v1388 = vadd.f32 %v1208, %v1356
  %v1389 = vadd.f32 %v1209, %v1357
  %v1390 = vadd.f32 %v1210, %v1358
  %v1391 = vadd.f32 %v1211, %v1359
  %v1392 = vadd.f32 %v1212, %v1360
  %v1393 = vadd.f32 %v1213, %v1361
  %v1394 = vadd.f32 %v1214, %v1362
  %v1395 = vadd.f32 %v1215, %v1363
  %v1396 = vadd.f32 %v1216, %v1364
  %v1397 = vadd.f32 %v1217, %v1365
  %v1398 = vadd.f32 %v1218, %v1366
  %v1399 = vadd.f32 %v1219, %v1367
  %v1400 = vadd.f32 %v1220, %v1368
  %v1401 = vadd.f32 %v1221, %v1369
  %v1402 = vadd.f32 %v1222, %v1370
  %v1403 = vadd.f32 %v1223, %v1371
  %v1404 = vadd.f32 %v1224, %v1372
  %v1405 = vadd.f32 %v1225, %v1373
  %v1406 = vadd.f32 %v1226, %v1374
  %v1407 = vadd.f32 %v1227, %v1375
  %v1408 = vadd.f32 %v1228, %v1376
  %v1409 = vadd.f32 %v1229, %v1377
  %v1410 = vadd.f32 %v1230, %v1378
  %v1411 = vadd.f32 %v1231, %v1379
  %v1412 = vadd.f32 %v1232, %v1380
  %v1413 = vadd.f32 %v1233, %v1381
  %v1414 = vadd.f32 %v1234, %v1382
  %v1415 = vadd.f32 %v1235, %v1383
  %v1416 = vadd.f32 %v1236, %v1384
  %v1417 = vadd.f32 %v1237, %v1385
  %v1418 = vadd.f32 %v1238, %v1386
  %v1419 = vadd.f32 %v1239, %v1387
  %s1420 = scalar_lea.vmem %s0, 8
  %v1421 = vld [vmem:[%s1420] sm:$0x1]
  %v1422 = vld [vmem:[%s1420 + $0x10] sm:$0x1]
  %v1423 = vld [vmem:[%s1420 + $0x20] sm:$0x1]
  %v1424 = vld [vmem:[%s1420 + $0x30] sm:$0x1]
  %v1425 = vld [vmem:[%s1420 + $0x40] sm:$0x1]
  %v1426 = vld [vmem:[%s1420 + $0x50] sm:$0x1]
  %v1427 = vld [vmem:[%s1420 + $0x60] sm:$0x1]
  %v1428 = vld [vmem:[%s1420 + $0x70] sm:$0x1]
  %v1429 = vld [vmem:[%s1420 + $0x80] sm:$0x1]
  %v1430 = vld [vmem:[%s1420 + $0x90] sm:$0x1]
  %v1431 = vld [vmem:[%s1420 + $0xa0] sm:$0x1]
  %v1432 = vld [vmem:[%s1420 + $0xb0] sm:$0x1]
  %v1433 = vld [vmem:[%s1420 + $0xc0] sm:$0x1]
  %v1434 = vld [vmem:[%s1420 + $0xd0] sm:$0x1]
  %v1435 = vld [vmem:[%s1420 + $0xe0] sm:$0x1]
  %v1436 = vld [vmem:[%s1420 + $0xf0] sm:$0x1]
  %s1437 = scalar_lea.vmem %s2, 128
  %v1438 = vld [vmem:[%s1437] sm:$0xff]
  %v1439 = vld [vmem:[%s1437 + $0x8] sm:$0xff]
  %v1456 = vlaneseq
  %v1457 = vshrl.u32 %v1456, 7
  %v1458 = vsub.s32 0, %v1457
  %v1459 = vrot.slane %v1421, %v1458
  %v1460 = vlaneseq
  %v1461 = vshrl.u32 %v1460, 7
  %v1462 = vsub.s32 0, %v1461
  %v1463 = vrot.slane %v1422, %v1462
  %v1464 = vlaneseq
  %v1465 = vshrl.u32 %v1464, 7
  %v1466 = vsub.s32 0, %v1465
  %v1467 = vrot.slane %v1423, %v1466
  %v1468 = vlaneseq
  %v1469 = vshrl.u32 %v1468, 7
  %v1470 = vsub.s32 0, %v1469
  %v1471 = vrot.slane %v1424, %v1470
  %v1472 = vlaneseq
  %v1473 = vshrl.u32 %v1472, 7
  %v1474 = vsub.s32 0, %v1473
  %v1475 = vrot.slane %v1425, %v1474
  %v1476 = vlaneseq
  %v1477 = vshrl.u32 %v1476, 7
  %v1478 = vsub.s32 0, %v1477
  %v1479 = vrot.slane %v1426, %v1478
  %v1480 = vlaneseq
  %v1481 = vshrl.u32 %v1480, 7
  %v1482 = vsub.s32 0, %v1481
  %v1483 = vrot.slane %v1427, %v1482
  %v1484 = vlaneseq
  %v1485 = vshrl.u32 %v1484, 7
  %v1486 = vsub.s32 0, %v1485
  %v1487 = vrot.slane %v1428, %v1486
  %v1488 = vlaneseq
  %v1489 = vshrl.u32 %v1488, 7
  %v1490 = vsub.s32 0, %v1489
  %v1491 = vrot.slane %v1429, %v1490
  %v1492 = vlaneseq
  %v1493 = vshrl.u32 %v1492, 7
  %v1494 = vsub.s32 0, %v1493
  %v1495 = vrot.slane %v1430, %v1494
  %v1496 = vlaneseq
  %v1497 = vshrl.u32 %v1496, 7
  %v1498 = vsub.s32 0, %v1497
  %v1499 = vrot.slane %v1431, %v1498
  %v1500 = vlaneseq
  %v1501 = vshrl.u32 %v1500, 7
  %v1502 = vsub.s32 0, %v1501
  %v1503 = vrot.slane %v1432, %v1502
  %v1504 = vlaneseq
  %v1505 = vshrl.u32 %v1504, 7
  %v1506 = vsub.s32 0, %v1505
  %v1507 = vrot.slane %v1433, %v1506
  %v1508 = vlaneseq
  %v1509 = vshrl.u32 %v1508, 7
  %v1510 = vsub.s32 0, %v1509
  %v1511 = vrot.slane %v1434, %v1510
  %v1512 = vlaneseq
  %v1513 = vshrl.u32 %v1512, 7
  %v1514 = vsub.s32 0, %v1513
  %v1515 = vrot.slane %v1435, %v1514
  %v1516 = vlaneseq
  %v1517 = vshrl.u32 %v1516, 7
  %v1518 = vsub.s32 0, %v1517
  %v1519 = vrot.slane %v1436, %v1518
  %v1536 = vmul.f32 %v1459, %v1438
  %v1537 = vmul.f32 %v1459, %v1439
  %v1538 = vmul.f32 %v1463, %v1438
  %v1539 = vmul.f32 %v1463, %v1439
  %v1540 = vmul.f32 %v1467, %v1438
  %v1541 = vmul.f32 %v1467, %v1439
  %v1542 = vmul.f32 %v1471, %v1438
  %v1543 = vmul.f32 %v1471, %v1439
  %v1544 = vmul.f32 %v1475, %v1438
  %v1545 = vmul.f32 %v1475, %v1439
  %v1546 = vmul.f32 %v1479, %v1438
  %v1547 = vmul.f32 %v1479, %v1439
  %v1548 = vmul.f32 %v1483, %v1438
  %v1549 = vmul.f32 %v1483, %v1439
  %v1550 = vmul.f32 %v1487, %v1438
  %v1551 = vmul.f32 %v1487, %v1439
  %v1552 = vmul.f32 %v1491, %v1438
  %v1553 = vmul.f32 %v1491, %v1439
  %v1554 = vmul.f32 %v1495, %v1438
  %v1555 = vmul.f32 %v1495, %v1439
  %v1556 = vmul.f32 %v1499, %v1438
  %v1557 = vmul.f32 %v1499, %v1439
  %v1558 = vmul.f32 %v1503, %v1438
  %v1559 = vmul.f32 %v1503, %v1439
  %v1560 = vmul.f32 %v1507, %v1438
  %v1561 = vmul.f32 %v1507, %v1439
  %v1562 = vmul.f32 %v1511, %v1438
  %v1563 = vmul.f32 %v1511, %v1439
  %v1564 = vmul.f32 %v1515, %v1438
  %v1565 = vmul.f32 %v1515, %v1439
  %v1566 = vmul.f32 %v1519, %v1438
  %v1567 = vmul.f32 %v1519, %v1439
  %v1568 = vadd.f32 %v1388, %v1536
  %v1569 = vadd.f32 %v1389, %v1537
  %v1570 = vadd.f32 %v1390, %v1538
  %v1571 = vadd.f32 %v1391, %v1539
  %v1572 = vadd.f32 %v1392, %v1540
  %v1573 = vadd.f32 %v1393, %v1541
  %v1574 = vadd.f32 %v1394, %v1542
  %v1575 = vadd.f32 %v1395, %v1543
  %v1576 = vadd.f32 %v1396, %v1544
  %v1577 = vadd.f32 %v1397, %v1545
  %v1578 = vadd.f32 %v1398, %v1546
  %v1579 = vadd.f32 %v1399, %v1547
  %v1580 = vadd.f32 %v1400, %v1548
  %v1581 = vadd.f32 %v1401, %v1549
  %v1582 = vadd.f32 %v1402, %v1550
  %v1583 = vadd.f32 %v1403, %v1551
  %v1584 = vadd.f32 %v1404, %v1552
  %v1585 = vadd.f32 %v1405, %v1553
  %v1586 = vadd.f32 %v1406, %v1554
  %v1587 = vadd.f32 %v1407, %v1555
  %v1588 = vadd.f32 %v1408, %v1556
  %v1589 = vadd.f32 %v1409, %v1557
  %v1590 = vadd.f32 %v1410, %v1558
  %v1591 = vadd.f32 %v1411, %v1559
  %v1592 = vadd.f32 %v1412, %v1560
  %v1593 = vadd.f32 %v1413, %v1561
  %v1594 = vadd.f32 %v1414, %v1562
  %v1595 = vadd.f32 %v1415, %v1563
  %v1596 = vadd.f32 %v1416, %v1564
  %v1597 = vadd.f32 %v1417, %v1565
  %v1598 = vadd.f32 %v1418, %v1566
  %v1599 = vadd.f32 %v1419, %v1567
  %s1600 = scalar_lea.vmem %s0, 9
  %v1601 = vld [vmem:[%s1600] sm:$0x1]
  %v1602 = vld [vmem:[%s1600 + $0x10] sm:$0x1]
  %v1603 = vld [vmem:[%s1600 + $0x20] sm:$0x1]
  %v1604 = vld [vmem:[%s1600 + $0x30] sm:$0x1]
  %v1605 = vld [vmem:[%s1600 + $0x40] sm:$0x1]
  %v1606 = vld [vmem:[%s1600 + $0x50] sm:$0x1]
  %v1607 = vld [vmem:[%s1600 + $0x60] sm:$0x1]
  %v1608 = vld [vmem:[%s1600 + $0x70] sm:$0x1]
  %v1609 = vld [vmem:[%s1600 + $0x80] sm:$0x1]
  %v1610 = vld [vmem:[%s1600 + $0x90] sm:$0x1]
  %v1611 = vld [vmem:[%s1600 + $0xa0] sm:$0x1]
  %v1612 = vld [vmem:[%s1600 + $0xb0] sm:$0x1]
  %v1613 = vld [vmem:[%s1600 + $0xc0] sm:$0x1]
  %v1614 = vld [vmem:[%s1600 + $0xd0] sm:$0x1]
  %v1615 = vld [vmem:[%s1600 + $0xe0] sm:$0x1]
  %v1616 = vld [vmem:[%s1600 + $0xf0] sm:$0x1]
  %s1617 = scalar_lea.vmem %s2, 144
  %v1618 = vld [vmem:[%s1617] sm:$0xff]
  %v1619 = vld [vmem:[%s1617 + $0x8] sm:$0xff]
  %v1636 = vlaneseq
  %v1637 = vshrl.u32 %v1636, 7
  %v1638 = vsub.s32 0, %v1637
  %v1639 = vrot.slane %v1601, %v1638
  %v1640 = vlaneseq
  %v1641 = vshrl.u32 %v1640, 7
  %v1642 = vsub.s32 0, %v1641
  %v1643 = vrot.slane %v1602, %v1642
  %v1644 = vlaneseq
  %v1645 = vshrl.u32 %v1644, 7
  %v1646 = vsub.s32 0, %v1645
  %v1647 = vrot.slane %v1603, %v1646
  %v1648 = vlaneseq
  %v1649 = vshrl.u32 %v1648, 7
  %v1650 = vsub.s32 0, %v1649
  %v1651 = vrot.slane %v1604, %v1650
  %v1652 = vlaneseq
  %v1653 = vshrl.u32 %v1652, 7
  %v1654 = vsub.s32 0, %v1653
  %v1655 = vrot.slane %v1605, %v1654
  %v1656 = vlaneseq
  %v1657 = vshrl.u32 %v1656, 7
  %v1658 = vsub.s32 0, %v1657
  %v1659 = vrot.slane %v1606, %v1658
  %v1660 = vlaneseq
  %v1661 = vshrl.u32 %v1660, 7
  %v1662 = vsub.s32 0, %v1661
  %v1663 = vrot.slane %v1607, %v1662
  %v1664 = vlaneseq
  %v1665 = vshrl.u32 %v1664, 7
  %v1666 = vsub.s32 0, %v1665
  %v1667 = vrot.slane %v1608, %v1666
  %v1668 = vlaneseq
  %v1669 = vshrl.u32 %v1668, 7
  %v1670 = vsub.s32 0, %v1669
  %v1671 = vrot.slane %v1609, %v1670
  %v1672 = vlaneseq
  %v1673 = vshrl.u32 %v1672, 7
  %v1674 = vsub.s32 0, %v1673
  %v1675 = vrot.slane %v1610, %v1674
  %v1676 = vlaneseq
  %v1677 = vshrl.u32 %v1676, 7
  %v1678 = vsub.s32 0, %v1677
  %v1679 = vrot.slane %v1611, %v1678
  %v1680 = vlaneseq
  %v1681 = vshrl.u32 %v1680, 7
  %v1682 = vsub.s32 0, %v1681
  %v1683 = vrot.slane %v1612, %v1682
  %v1684 = vlaneseq
  %v1685 = vshrl.u32 %v1684, 7
  %v1686 = vsub.s32 0, %v1685
  %v1687 = vrot.slane %v1613, %v1686
  %v1688 = vlaneseq
  %v1689 = vshrl.u32 %v1688, 7
  %v1690 = vsub.s32 0, %v1689
  %v1691 = vrot.slane %v1614, %v1690
  %v1692 = vlaneseq
  %v1693 = vshrl.u32 %v1692, 7
  %v1694 = vsub.s32 0, %v1693
  %v1695 = vrot.slane %v1615, %v1694
  %v1696 = vlaneseq
  %v1697 = vshrl.u32 %v1696, 7
  %v1698 = vsub.s32 0, %v1697
  %v1699 = vrot.slane %v1616, %v1698
  %v1716 = vmul.f32 %v1639, %v1618
  %v1717 = vmul.f32 %v1639, %v1619
  %v1718 = vmul.f32 %v1643, %v1618
  %v1719 = vmul.f32 %v1643, %v1619
  %v1720 = vmul.f32 %v1647, %v1618
  %v1721 = vmul.f32 %v1647, %v1619
  %v1722 = vmul.f32 %v1651, %v1618
  %v1723 = vmul.f32 %v1651, %v1619
  %v1724 = vmul.f32 %v1655, %v1618
  %v1725 = vmul.f32 %v1655, %v1619
  %v1726 = vmul.f32 %v1659, %v1618
  %v1727 = vmul.f32 %v1659, %v1619
  %v1728 = vmul.f32 %v1663, %v1618
  %v1729 = vmul.f32 %v1663, %v1619
  %v1730 = vmul.f32 %v1667, %v1618
  %v1731 = vmul.f32 %v1667, %v1619
  %v1732 = vmul.f32 %v1671, %v1618
  %v1733 = vmul.f32 %v1671, %v1619
  %v1734 = vmul.f32 %v1675, %v1618
  %v1735 = vmul.f32 %v1675, %v1619
  %v1736 = vmul.f32 %v1679, %v1618
  %v1737 = vmul.f32 %v1679, %v1619
  %v1738 = vmul.f32 %v1683, %v1618
  %v1739 = vmul.f32 %v1683, %v1619
  %v1740 = vmul.f32 %v1687, %v1618
  %v1741 = vmul.f32 %v1687, %v1619
  %v1742 = vmul.f32 %v1691, %v1618
  %v1743 = vmul.f32 %v1691, %v1619
  %v1744 = vmul.f32 %v1695, %v1618
  %v1745 = vmul.f32 %v1695, %v1619
  %v1746 = vmul.f32 %v1699, %v1618
  %v1747 = vmul.f32 %v1699, %v1619
  %v1748 = vadd.f32 %v1568, %v1716
  %v1749 = vadd.f32 %v1569, %v1717
  %v1750 = vadd.f32 %v1570, %v1718
  %v1751 = vadd.f32 %v1571, %v1719
  %v1752 = vadd.f32 %v1572, %v1720
  %v1753 = vadd.f32 %v1573, %v1721
  %v1754 = vadd.f32 %v1574, %v1722
  %v1755 = vadd.f32 %v1575, %v1723
  %v1756 = vadd.f32 %v1576, %v1724
  %v1757 = vadd.f32 %v1577, %v1725
  %v1758 = vadd.f32 %v1578, %v1726
  %v1759 = vadd.f32 %v1579, %v1727
  %v1760 = vadd.f32 %v1580, %v1728
  %v1761 = vadd.f32 %v1581, %v1729
  %v1762 = vadd.f32 %v1582, %v1730
  %v1763 = vadd.f32 %v1583, %v1731
  %v1764 = vadd.f32 %v1584, %v1732
  %v1765 = vadd.f32 %v1585, %v1733
  %v1766 = vadd.f32 %v1586, %v1734
  %v1767 = vadd.f32 %v1587, %v1735
  %v1768 = vadd.f32 %v1588, %v1736
  %v1769 = vadd.f32 %v1589, %v1737
  %v1770 = vadd.f32 %v1590, %v1738
  %v1771 = vadd.f32 %v1591, %v1739
  %v1772 = vadd.f32 %v1592, %v1740
  %v1773 = vadd.f32 %v1593, %v1741
  %v1774 = vadd.f32 %v1594, %v1742
  %v1775 = vadd.f32 %v1595, %v1743
  %v1776 = vadd.f32 %v1596, %v1744
  %v1777 = vadd.f32 %v1597, %v1745
  %v1778 = vadd.f32 %v1598, %v1746
  %v1779 = vadd.f32 %v1599, %v1747
  %s1780 = scalar_lea.vmem %s0, 10
  %v1781 = vld [vmem:[%s1780] sm:$0x1]
  %v1782 = vld [vmem:[%s1780 + $0x10] sm:$0x1]
  %v1783 = vld [vmem:[%s1780 + $0x20] sm:$0x1]
  %v1784 = vld [vmem:[%s1780 + $0x30] sm:$0x1]
  %v1785 = vld [vmem:[%s1780 + $0x40] sm:$0x1]
  %v1786 = vld [vmem:[%s1780 + $0x50] sm:$0x1]
  %v1787 = vld [vmem:[%s1780 + $0x60] sm:$0x1]
  %v1788 = vld [vmem:[%s1780 + $0x70] sm:$0x1]
  %v1789 = vld [vmem:[%s1780 + $0x80] sm:$0x1]
  %v1790 = vld [vmem:[%s1780 + $0x90] sm:$0x1]
  %v1791 = vld [vmem:[%s1780 + $0xa0] sm:$0x1]
  %v1792 = vld [vmem:[%s1780 + $0xb0] sm:$0x1]
  %v1793 = vld [vmem:[%s1780 + $0xc0] sm:$0x1]
  %v1794 = vld [vmem:[%s1780 + $0xd0] sm:$0x1]
  %v1795 = vld [vmem:[%s1780 + $0xe0] sm:$0x1]
  %v1796 = vld [vmem:[%s1780 + $0xf0] sm:$0x1]
  %s1797 = scalar_lea.vmem %s2, 160
  %v1798 = vld [vmem:[%s1797] sm:$0xff]
  %v1799 = vld [vmem:[%s1797 + $0x8] sm:$0xff]
  %v1816 = vlaneseq
  %v1817 = vshrl.u32 %v1816, 7
  %v1818 = vsub.s32 0, %v1817
  %v1819 = vrot.slane %v1781, %v1818
  %v1820 = vlaneseq
  %v1821 = vshrl.u32 %v1820, 7
  %v1822 = vsub.s32 0, %v1821
  %v1823 = vrot.slane %v1782, %v1822
  %v1824 = vlaneseq
  %v1825 = vshrl.u32 %v1824, 7
  %v1826 = vsub.s32 0, %v1825
  %v1827 = vrot.slane %v1783, %v1826
  %v1828 = vlaneseq
  %v1829 = vshrl.u32 %v1828, 7
  %v1830 = vsub.s32 0, %v1829
  %v1831 = vrot.slane %v1784, %v1830
  %v1832 = vlaneseq
  %v1833 = vshrl.u32 %v1832, 7
  %v1834 = vsub.s32 0, %v1833
  %v1835 = vrot.slane %v1785, %v1834
  %v1836 = vlaneseq
  %v1837 = vshrl.u32 %v1836, 7
  %v1838 = vsub.s32 0, %v1837
  %v1839 = vrot.slane %v1786, %v1838
  %v1840 = vlaneseq
  %v1841 = vshrl.u32 %v1840, 7
  %v1842 = vsub.s32 0, %v1841
  %v1843 = vrot.slane %v1787, %v1842
  %v1844 = vlaneseq
  %v1845 = vshrl.u32 %v1844, 7
  %v1846 = vsub.s32 0, %v1845
  %v1847 = vrot.slane %v1788, %v1846
  %v1848 = vlaneseq
  %v1849 = vshrl.u32 %v1848, 7
  %v1850 = vsub.s32 0, %v1849
  %v1851 = vrot.slane %v1789, %v1850
  %v1852 = vlaneseq
  %v1853 = vshrl.u32 %v1852, 7
  %v1854 = vsub.s32 0, %v1853
  %v1855 = vrot.slane %v1790, %v1854
  %v1856 = vlaneseq
  %v1857 = vshrl.u32 %v1856, 7
  %v1858 = vsub.s32 0, %v1857
  %v1859 = vrot.slane %v1791, %v1858
  %v1860 = vlaneseq
  %v1861 = vshrl.u32 %v1860, 7
  %v1862 = vsub.s32 0, %v1861
  %v1863 = vrot.slane %v1792, %v1862
  %v1864 = vlaneseq
  %v1865 = vshrl.u32 %v1864, 7
  %v1866 = vsub.s32 0, %v1865
  %v1867 = vrot.slane %v1793, %v1866
  %v1868 = vlaneseq
  %v1869 = vshrl.u32 %v1868, 7
  %v1870 = vsub.s32 0, %v1869
  %v1871 = vrot.slane %v1794, %v1870
  %v1872 = vlaneseq
  %v1873 = vshrl.u32 %v1872, 7
  %v1874 = vsub.s32 0, %v1873
  %v1875 = vrot.slane %v1795, %v1874
  %v1876 = vlaneseq
  %v1877 = vshrl.u32 %v1876, 7
  %v1878 = vsub.s32 0, %v1877
  %v1879 = vrot.slane %v1796, %v1878
  %v1896 = vmul.f32 %v1819, %v1798
  %v1897 = vmul.f32 %v1819, %v1799
  %v1898 = vmul.f32 %v1823, %v1798
  %v1899 = vmul.f32 %v1823, %v1799
  %v1900 = vmul.f32 %v1827, %v1798
  %v1901 = vmul.f32 %v1827, %v1799
  %v1902 = vmul.f32 %v1831, %v1798
  %v1903 = vmul.f32 %v1831, %v1799
  %v1904 = vmul.f32 %v1835, %v1798
  %v1905 = vmul.f32 %v1835, %v1799
  %v1906 = vmul.f32 %v1839, %v1798
  %v1907 = vmul.f32 %v1839, %v1799
  %v1908 = vmul.f32 %v1843, %v1798
  %v1909 = vmul.f32 %v1843, %v1799
  %v1910 = vmul.f32 %v1847, %v1798
  %v1911 = vmul.f32 %v1847, %v1799
  %v1912 = vmul.f32 %v1851, %v1798
  %v1913 = vmul.f32 %v1851, %v1799
  %v1914 = vmul.f32 %v1855, %v1798
  %v1915 = vmul.f32 %v1855, %v1799
  %v1916 = vmul.f32 %v1859, %v1798
  %v1917 = vmul.f32 %v1859, %v1799
  %v1918 = vmul.f32 %v1863, %v1798
  %v1919 = vmul.f32 %v1863, %v1799
  %v1920 = vmul.f32 %v1867, %v1798
  %v1921 = vmul.f32 %v1867, %v1799
  %v1922 = vmul.f32 %v1871, %v1798
  %v1923 = vmul.f32 %v1871, %v1799
  %v1924 = vmul.f32 %v1875, %v1798
  %v1925 = vmul.f32 %v1875, %v1799
  %v1926 = vmul.f32 %v1879, %v1798
  %v1927 = vmul.f32 %v1879, %v1799
  %v1928 = vadd.f32 %v1748, %v1896
  %v1929 = vadd.f32 %v1749, %v1897
  %v1930 = vadd.f32 %v1750, %v1898
  %v1931 = vadd.f32 %v1751, %v1899
  %v1932 = vadd.f32 %v1752, %v1900
  %v1933 = vadd.f32 %v1753, %v1901
  %v1934 = vadd.f32 %v1754, %v1902
  %v1935 = vadd.f32 %v1755, %v1903
  %v1936 = vadd.f32 %v1756, %v1904
  %v1937 = vadd.f32 %v1757, %v1905
  %v1938 = vadd.f32 %v1758, %v1906
  %v1939 = vadd.f32 %v1759, %v1907
  %v1940 = vadd.f32 %v1760, %v1908
  %v1941 = vadd.f32 %v1761, %v1909
  %v1942 = vadd.f32 %v1762, %v1910
  %v1943 = vadd.f32 %v1763, %v1911
  %v1944 = vadd.f32 %v1764, %v1912
  %v1945 = vadd.f32 %v1765, %v1913
  %v1946 = vadd.f32 %v1766, %v1914
  %v1947 = vadd.f32 %v1767, %v1915
  %v1948 = vadd.f32 %v1768, %v1916
  %v1949 = vadd.f32 %v1769, %v1917
  %v1950 = vadd.f32 %v1770, %v1918
  %v1951 = vadd.f32 %v1771, %v1919
  %v1952 = vadd.f32 %v1772, %v1920
  %v1953 = vadd.f32 %v1773, %v1921
  %v1954 = vadd.f32 %v1774, %v1922
  %v1955 = vadd.f32 %v1775, %v1923
  %v1956 = vadd.f32 %v1776, %v1924
  %v1957 = vadd.f32 %v1777, %v1925
  %v1958 = vadd.f32 %v1778, %v1926
  %v1959 = vadd.f32 %v1779, %v1927
  %s1960 = scalar_lea.vmem %s0, 11
  %v1961 = vld [vmem:[%s1960] sm:$0x1]
  %v1962 = vld [vmem:[%s1960 + $0x10] sm:$0x1]
  %v1963 = vld [vmem:[%s1960 + $0x20] sm:$0x1]
  %v1964 = vld [vmem:[%s1960 + $0x30] sm:$0x1]
  %v1965 = vld [vmem:[%s1960 + $0x40] sm:$0x1]
  %v1966 = vld [vmem:[%s1960 + $0x50] sm:$0x1]
  %v1967 = vld [vmem:[%s1960 + $0x60] sm:$0x1]
  %v1968 = vld [vmem:[%s1960 + $0x70] sm:$0x1]
  %v1969 = vld [vmem:[%s1960 + $0x80] sm:$0x1]
  %v1970 = vld [vmem:[%s1960 + $0x90] sm:$0x1]
  %v1971 = vld [vmem:[%s1960 + $0xa0] sm:$0x1]
  %v1972 = vld [vmem:[%s1960 + $0xb0] sm:$0x1]
  %v1973 = vld [vmem:[%s1960 + $0xc0] sm:$0x1]
  %v1974 = vld [vmem:[%s1960 + $0xd0] sm:$0x1]
  %v1975 = vld [vmem:[%s1960 + $0xe0] sm:$0x1]
  %v1976 = vld [vmem:[%s1960 + $0xf0] sm:$0x1]
  %s1977 = scalar_lea.vmem %s2, 176
  %v1978 = vld [vmem:[%s1977] sm:$0xff]
  %v1979 = vld [vmem:[%s1977 + $0x8] sm:$0xff]
  %v1996 = vlaneseq
  %v1997 = vshrl.u32 %v1996, 7
  %v1998 = vsub.s32 0, %v1997
  %v1999 = vrot.slane %v1961, %v1998
  %v2000 = vlaneseq
  %v2001 = vshrl.u32 %v2000, 7
  %v2002 = vsub.s32 0, %v2001
  %v2003 = vrot.slane %v1962, %v2002
  %v2004 = vlaneseq
  %v2005 = vshrl.u32 %v2004, 7
  %v2006 = vsub.s32 0, %v2005
  %v2007 = vrot.slane %v1963, %v2006
  %v2008 = vlaneseq
  %v2009 = vshrl.u32 %v2008, 7
  %v2010 = vsub.s32 0, %v2009
  %v2011 = vrot.slane %v1964, %v2010
  %v2012 = vlaneseq
  %v2013 = vshrl.u32 %v2012, 7
  %v2014 = vsub.s32 0, %v2013
  %v2015 = vrot.slane %v1965, %v2014
  %v2016 = vlaneseq
  %v2017 = vshrl.u32 %v2016, 7
  %v2018 = vsub.s32 0, %v2017
  %v2019 = vrot.slane %v1966, %v2018
  %v2020 = vlaneseq
  %v2021 = vshrl.u32 %v2020, 7
  %v2022 = vsub.s32 0, %v2021
  %v2023 = vrot.slane %v1967, %v2022
  %v2024 = vlaneseq
  %v2025 = vshrl.u32 %v2024, 7
  %v2026 = vsub.s32 0, %v2025
  %v2027 = vrot.slane %v1968, %v2026
  %v2028 = vlaneseq
  %v2029 = vshrl.u32 %v2028, 7
  %v2030 = vsub.s32 0, %v2029
  %v2031 = vrot.slane %v1969, %v2030
  %v2032 = vlaneseq
  %v2033 = vshrl.u32 %v2032, 7
  %v2034 = vsub.s32 0, %v2033
  %v2035 = vrot.slane %v1970, %v2034
  %v2036 = vlaneseq
  %v2037 = vshrl.u32 %v2036, 7
  %v2038 = vsub.s32 0, %v2037
  %v2039 = vrot.slane %v1971, %v2038
  %v2040 = vlaneseq
  %v2041 = vshrl.u32 %v2040, 7
  %v2042 = vsub.s32 0, %v2041
  %v2043 = vrot.slane %v1972, %v2042
  %v2044 = vlaneseq
  %v2045 = vshrl.u32 %v2044, 7
  %v2046 = vsub.s32 0, %v2045
  %v2047 = vrot.slane %v1973, %v2046
  %v2048 = vlaneseq
  %v2049 = vshrl.u32 %v2048, 7
  %v2050 = vsub.s32 0, %v2049
  %v2051 = vrot.slane %v1974, %v2050
  %v2052 = vlaneseq
  %v2053 = vshrl.u32 %v2052, 7
  %v2054 = vsub.s32 0, %v2053
  %v2055 = vrot.slane %v1975, %v2054
  %v2056 = vlaneseq
  %v2057 = vshrl.u32 %v2056, 7
  %v2058 = vsub.s32 0, %v2057
  %v2059 = vrot.slane %v1976, %v2058
  %v2076 = vmul.f32 %v1999, %v1978
  %v2077 = vmul.f32 %v1999, %v1979
  %v2078 = vmul.f32 %v2003, %v1978
  %v2079 = vmul.f32 %v2003, %v1979
  %v2080 = vmul.f32 %v2007, %v1978
  %v2081 = vmul.f32 %v2007, %v1979
  %v2082 = vmul.f32 %v2011, %v1978
  %v2083 = vmul.f32 %v2011, %v1979
  %v2084 = vmul.f32 %v2015, %v1978
  %v2085 = vmul.f32 %v2015, %v1979
  %v2086 = vmul.f32 %v2019, %v1978
  %v2087 = vmul.f32 %v2019, %v1979
  %v2088 = vmul.f32 %v2023, %v1978
  %v2089 = vmul.f32 %v2023, %v1979
  %v2090 = vmul.f32 %v2027, %v1978
  %v2091 = vmul.f32 %v2027, %v1979
  %v2092 = vmul.f32 %v2031, %v1978
  %v2093 = vmul.f32 %v2031, %v1979
  %v2094 = vmul.f32 %v2035, %v1978
  %v2095 = vmul.f32 %v2035, %v1979
  %v2096 = vmul.f32 %v2039, %v1978
  %v2097 = vmul.f32 %v2039, %v1979
  %v2098 = vmul.f32 %v2043, %v1978
  %v2099 = vmul.f32 %v2043, %v1979
  %v2100 = vmul.f32 %v2047, %v1978
  %v2101 = vmul.f32 %v2047, %v1979
  %v2102 = vmul.f32 %v2051, %v1978
  %v2103 = vmul.f32 %v2051, %v1979
  %v2104 = vmul.f32 %v2055, %v1978
  %v2105 = vmul.f32 %v2055, %v1979
  %v2106 = vmul.f32 %v2059, %v1978
  %v2107 = vmul.f32 %v2059, %v1979
  %v2108 = vadd.f32 %v1928, %v2076
  %v2109 = vadd.f32 %v1929, %v2077
  %v2110 = vadd.f32 %v1930, %v2078
  %v2111 = vadd.f32 %v1931, %v2079
  %v2112 = vadd.f32 %v1932, %v2080
  %v2113 = vadd.f32 %v1933, %v2081
  %v2114 = vadd.f32 %v1934, %v2082
  %v2115 = vadd.f32 %v1935, %v2083
  %v2116 = vadd.f32 %v1936, %v2084
  %v2117 = vadd.f32 %v1937, %v2085
  %v2118 = vadd.f32 %v1938, %v2086
  %v2119 = vadd.f32 %v1939, %v2087
  %v2120 = vadd.f32 %v1940, %v2088
  %v2121 = vadd.f32 %v1941, %v2089
  %v2122 = vadd.f32 %v1942, %v2090
  %v2123 = vadd.f32 %v1943, %v2091
  %v2124 = vadd.f32 %v1944, %v2092
  %v2125 = vadd.f32 %v1945, %v2093
  %v2126 = vadd.f32 %v1946, %v2094
  %v2127 = vadd.f32 %v1947, %v2095
  %v2128 = vadd.f32 %v1948, %v2096
  %v2129 = vadd.f32 %v1949, %v2097
  %v2130 = vadd.f32 %v1950, %v2098
  %v2131 = vadd.f32 %v1951, %v2099
  %v2132 = vadd.f32 %v1952, %v2100
  %v2133 = vadd.f32 %v1953, %v2101
  %v2134 = vadd.f32 %v1954, %v2102
  %v2135 = vadd.f32 %v1955, %v2103
  %v2136 = vadd.f32 %v1956, %v2104
  %v2137 = vadd.f32 %v1957, %v2105
  %v2138 = vadd.f32 %v1958, %v2106
  %v2139 = vadd.f32 %v1959, %v2107
  %s2140 = scalar_lea.vmem %s0, 12
  %v2141 = vld [vmem:[%s2140] sm:$0x1]
  %v2142 = vld [vmem:[%s2140 + $0x10] sm:$0x1]
  %v2143 = vld [vmem:[%s2140 + $0x20] sm:$0x1]
  %v2144 = vld [vmem:[%s2140 + $0x30] sm:$0x1]
  %v2145 = vld [vmem:[%s2140 + $0x40] sm:$0x1]
  %v2146 = vld [vmem:[%s2140 + $0x50] sm:$0x1]
  %v2147 = vld [vmem:[%s2140 + $0x60] sm:$0x1]
  %v2148 = vld [vmem:[%s2140 + $0x70] sm:$0x1]
  %v2149 = vld [vmem:[%s2140 + $0x80] sm:$0x1]
  %v2150 = vld [vmem:[%s2140 + $0x90] sm:$0x1]
  %v2151 = vld [vmem:[%s2140 + $0xa0] sm:$0x1]
  %v2152 = vld [vmem:[%s2140 + $0xb0] sm:$0x1]
  %v2153 = vld [vmem:[%s2140 + $0xc0] sm:$0x1]
  %v2154 = vld [vmem:[%s2140 + $0xd0] sm:$0x1]
  %v2155 = vld [vmem:[%s2140 + $0xe0] sm:$0x1]
  %v2156 = vld [vmem:[%s2140 + $0xf0] sm:$0x1]
  %s2157 = scalar_lea.vmem %s2, 192
  %v2158 = vld [vmem:[%s2157] sm:$0xff]
  %v2159 = vld [vmem:[%s2157 + $0x8] sm:$0xff]
  %v2176 = vlaneseq
  %v2177 = vshrl.u32 %v2176, 7
  %v2178 = vsub.s32 0, %v2177
  %v2179 = vrot.slane %v2141, %v2178
  %v2180 = vlaneseq
  %v2181 = vshrl.u32 %v2180, 7
  %v2182 = vsub.s32 0, %v2181
  %v2183 = vrot.slane %v2142, %v2182
  %v2184 = vlaneseq
  %v2185 = vshrl.u32 %v2184, 7
  %v2186 = vsub.s32 0, %v2185
  %v2187 = vrot.slane %v2143, %v2186
  %v2188 = vlaneseq
  %v2189 = vshrl.u32 %v2188, 7
  %v2190 = vsub.s32 0, %v2189
  %v2191 = vrot.slane %v2144, %v2190
  %v2192 = vlaneseq
  %v2193 = vshrl.u32 %v2192, 7
  %v2194 = vsub.s32 0, %v2193
  %v2195 = vrot.slane %v2145, %v2194
  %v2196 = vlaneseq
  %v2197 = vshrl.u32 %v2196, 7
  %v2198 = vsub.s32 0, %v2197
  %v2199 = vrot.slane %v2146, %v2198
  %v2200 = vlaneseq
  %v2201 = vshrl.u32 %v2200, 7
  %v2202 = vsub.s32 0, %v2201
  %v2203 = vrot.slane %v2147, %v2202
  %v2204 = vlaneseq
  %v2205 = vshrl.u32 %v2204, 7
  %v2206 = vsub.s32 0, %v2205
  %v2207 = vrot.slane %v2148, %v2206
  %v2208 = vlaneseq
  %v2209 = vshrl.u32 %v2208, 7
  %v2210 = vsub.s32 0, %v2209
  %v2211 = vrot.slane %v2149, %v2210
  %v2212 = vlaneseq
  %v2213 = vshrl.u32 %v2212, 7
  %v2214 = vsub.s32 0, %v2213
  %v2215 = vrot.slane %v2150, %v2214
  %v2216 = vlaneseq
  %v2217 = vshrl.u32 %v2216, 7
  %v2218 = vsub.s32 0, %v2217
  %v2219 = vrot.slane %v2151, %v2218
  %v2220 = vlaneseq
  %v2221 = vshrl.u32 %v2220, 7
  %v2222 = vsub.s32 0, %v2221
  %v2223 = vrot.slane %v2152, %v2222
  %v2224 = vlaneseq
  %v2225 = vshrl.u32 %v2224, 7
  %v2226 = vsub.s32 0, %v2225
  %v2227 = vrot.slane %v2153, %v2226
  %v2228 = vlaneseq
  %v2229 = vshrl.u32 %v2228, 7
  %v2230 = vsub.s32 0, %v2229
  %v2231 = vrot.slane %v2154, %v2230
  %v2232 = vlaneseq
  %v2233 = vshrl.u32 %v2232, 7
  %v2234 = vsub.s32 0, %v2233
  %v2235 = vrot.slane %v2155, %v2234
  %v2236 = vlaneseq
  %v2237 = vshrl.u32 %v2236, 7
  %v2238 = vsub.s32 0, %v2237
  %v2239 = vrot.slane %v2156, %v2238
  %v2256 = vmul.f32 %v2179, %v2158
  %v2257 = vmul.f32 %v2179, %v2159
  %v2258 = vmul.f32 %v2183, %v2158
  %v2259 = vmul.f32 %v2183, %v2159
  %v2260 = vmul.f32 %v2187, %v2158
  %v2261 = vmul.f32 %v2187, %v2159
  %v2262 = vmul.f32 %v2191, %v2158
  %v2263 = vmul.f32 %v2191, %v2159
  %v2264 = vmul.f32 %v2195, %v2158
  %v2265 = vmul.f32 %v2195, %v2159
  %v2266 = vmul.f32 %v2199, %v2158
  %v2267 = vmul.f32 %v2199, %v2159
  %v2268 = vmul.f32 %v2203, %v2158
  %v2269 = vmul.f32 %v2203, %v2159
  %v2270 = vmul.f32 %v2207, %v2158
  %v2271 = vmul.f32 %v2207, %v2159
  %v2272 = vmul.f32 %v2211, %v2158
  %v2273 = vmul.f32 %v2211, %v2159
  %v2274 = vmul.f32 %v2215, %v2158
  %v2275 = vmul.f32 %v2215, %v2159
  %v2276 = vmul.f32 %v2219, %v2158
  %v2277 = vmul.f32 %v2219, %v2159
  %v2278 = vmul.f32 %v2223, %v2158
  %v2279 = vmul.f32 %v2223, %v2159
  %v2280 = vmul.f32 %v2227, %v2158
  %v2281 = vmul.f32 %v2227, %v2159
  %v2282 = vmul.f32 %v2231, %v2158
  %v2283 = vmul.f32 %v2231, %v2159
  %v2284 = vmul.f32 %v2235, %v2158
  %v2285 = vmul.f32 %v2235, %v2159
  %v2286 = vmul.f32 %v2239, %v2158
  %v2287 = vmul.f32 %v2239, %v2159
  %v2288 = vadd.f32 %v2108, %v2256
  %v2289 = vadd.f32 %v2109, %v2257
  %v2290 = vadd.f32 %v2110, %v2258
  %v2291 = vadd.f32 %v2111, %v2259
  %v2292 = vadd.f32 %v2112, %v2260
  %v2293 = vadd.f32 %v2113, %v2261
  %v2294 = vadd.f32 %v2114, %v2262
  %v2295 = vadd.f32 %v2115, %v2263
  %v2296 = vadd.f32 %v2116, %v2264
  %v2297 = vadd.f32 %v2117, %v2265
  %v2298 = vadd.f32 %v2118, %v2266
  %v2299 = vadd.f32 %v2119, %v2267
  %v2300 = vadd.f32 %v2120, %v2268
  %v2301 = vadd.f32 %v2121, %v2269
  %v2302 = vadd.f32 %v2122, %v2270
  %v2303 = vadd.f32 %v2123, %v2271
  %v2304 = vadd.f32 %v2124, %v2272
  %v2305 = vadd.f32 %v2125, %v2273
  %v2306 = vadd.f32 %v2126, %v2274
  %v2307 = vadd.f32 %v2127, %v2275
  %v2308 = vadd.f32 %v2128, %v2276
  %v2309 = vadd.f32 %v2129, %v2277
  %v2310 = vadd.f32 %v2130, %v2278
  %v2311 = vadd.f32 %v2131, %v2279
  %v2312 = vadd.f32 %v2132, %v2280
  %v2313 = vadd.f32 %v2133, %v2281
  %v2314 = vadd.f32 %v2134, %v2282
  %v2315 = vadd.f32 %v2135, %v2283
  %v2316 = vadd.f32 %v2136, %v2284
  %v2317 = vadd.f32 %v2137, %v2285
  %v2318 = vadd.f32 %v2138, %v2286
  %v2319 = vadd.f32 %v2139, %v2287
  %s2320 = scalar_lea.vmem %s0, 13
  %v2321 = vld [vmem:[%s2320] sm:$0x1]
  %v2322 = vld [vmem:[%s2320 + $0x10] sm:$0x1]
  %v2323 = vld [vmem:[%s2320 + $0x20] sm:$0x1]
  %v2324 = vld [vmem:[%s2320 + $0x30] sm:$0x1]
  %v2325 = vld [vmem:[%s2320 + $0x40] sm:$0x1]
  %v2326 = vld [vmem:[%s2320 + $0x50] sm:$0x1]
  %v2327 = vld [vmem:[%s2320 + $0x60] sm:$0x1]
  %v2328 = vld [vmem:[%s2320 + $0x70] sm:$0x1]
  %v2329 = vld [vmem:[%s2320 + $0x80] sm:$0x1]
  %v2330 = vld [vmem:[%s2320 + $0x90] sm:$0x1]
  %v2331 = vld [vmem:[%s2320 + $0xa0] sm:$0x1]
  %v2332 = vld [vmem:[%s2320 + $0xb0] sm:$0x1]
  %v2333 = vld [vmem:[%s2320 + $0xc0] sm:$0x1]
  %v2334 = vld [vmem:[%s2320 + $0xd0] sm:$0x1]
  %v2335 = vld [vmem:[%s2320 + $0xe0] sm:$0x1]
  %v2336 = vld [vmem:[%s2320 + $0xf0] sm:$0x1]
  %s2337 = scalar_lea.vmem %s2, 208
  %v2338 = vld [vmem:[%s2337] sm:$0xff]
  %v2339 = vld [vmem:[%s2337 + $0x8] sm:$0xff]
  %v2356 = vlaneseq
  %v2357 = vshrl.u32 %v2356, 7
  %v2358 = vsub.s32 0, %v2357
  %v2359 = vrot.slane %v2321, %v2358
  %v2360 = vlaneseq
  %v2361 = vshrl.u32 %v2360, 7
  %v2362 = vsub.s32 0, %v2361
  %v2363 = vrot.slane %v2322, %v2362
  %v2364 = vlaneseq
  %v2365 = vshrl.u32 %v2364, 7
  %v2366 = vsub.s32 0, %v2365
  %v2367 = vrot.slane %v2323, %v2366
  %v2368 = vlaneseq
  %v2369 = vshrl.u32 %v2368, 7
  %v2370 = vsub.s32 0, %v2369
  %v2371 = vrot.slane %v2324, %v2370
  %v2372 = vlaneseq
  %v2373 = vshrl.u32 %v2372, 7
  %v2374 = vsub.s32 0, %v2373
  %v2375 = vrot.slane %v2325, %v2374
  %v2376 = vlaneseq
  %v2377 = vshrl.u32 %v2376, 7
  %v2378 = vsub.s32 0, %v2377
  %v2379 = vrot.slane %v2326, %v2378
  %v2380 = vlaneseq
  %v2381 = vshrl.u32 %v2380, 7
  %v2382 = vsub.s32 0, %v2381
  %v2383 = vrot.slane %v2327, %v2382
  %v2384 = vlaneseq
  %v2385 = vshrl.u32 %v2384, 7
  %v2386 = vsub.s32 0, %v2385
  %v2387 = vrot.slane %v2328, %v2386
  %v2388 = vlaneseq
  %v2389 = vshrl.u32 %v2388, 7
  %v2390 = vsub.s32 0, %v2389
  %v2391 = vrot.slane %v2329, %v2390
  %v2392 = vlaneseq
  %v2393 = vshrl.u32 %v2392, 7
  %v2394 = vsub.s32 0, %v2393
  %v2395 = vrot.slane %v2330, %v2394
  %v2396 = vlaneseq
  %v2397 = vshrl.u32 %v2396, 7
  %v2398 = vsub.s32 0, %v2397
  %v2399 = vrot.slane %v2331, %v2398
  %v2400 = vlaneseq
  %v2401 = vshrl.u32 %v2400, 7
  %v2402 = vsub.s32 0, %v2401
  %v2403 = vrot.slane %v2332, %v2402
  %v2404 = vlaneseq
  %v2405 = vshrl.u32 %v2404, 7
  %v2406 = vsub.s32 0, %v2405
  %v2407 = vrot.slane %v2333, %v2406
  %v2408 = vlaneseq
  %v2409 = vshrl.u32 %v2408, 7
  %v2410 = vsub.s32 0, %v2409
  %v2411 = vrot.slane %v2334, %v2410
  %v2412 = vlaneseq
  %v2413 = vshrl.u32 %v2412, 7
  %v2414 = vsub.s32 0, %v2413
  %v2415 = vrot.slane %v2335, %v2414
  %v2416 = vlaneseq
  %v2417 = vshrl.u32 %v2416, 7
  %v2418 = vsub.s32 0, %v2417
  %v2419 = vrot.slane %v2336, %v2418
  %v2436 = vmul.f32 %v2359, %v2338
  %v2437 = vmul.f32 %v2359, %v2339
  %v2438 = vmul.f32 %v2363, %v2338
  %v2439 = vmul.f32 %v2363, %v2339
  %v2440 = vmul.f32 %v2367, %v2338
  %v2441 = vmul.f32 %v2367, %v2339
  %v2442 = vmul.f32 %v2371, %v2338
  %v2443 = vmul.f32 %v2371, %v2339
  %v2444 = vmul.f32 %v2375, %v2338
  %v2445 = vmul.f32 %v2375, %v2339
  %v2446 = vmul.f32 %v2379, %v2338
  %v2447 = vmul.f32 %v2379, %v2339
  %v2448 = vmul.f32 %v2383, %v2338
  %v2449 = vmul.f32 %v2383, %v2339
  %v2450 = vmul.f32 %v2387, %v2338
  %v2451 = vmul.f32 %v2387, %v2339
  %v2452 = vmul.f32 %v2391, %v2338
  %v2453 = vmul.f32 %v2391, %v2339
  %v2454 = vmul.f32 %v2395, %v2338
  %v2455 = vmul.f32 %v2395, %v2339
  %v2456 = vmul.f32 %v2399, %v2338
  %v2457 = vmul.f32 %v2399, %v2339
  %v2458 = vmul.f32 %v2403, %v2338
  %v2459 = vmul.f32 %v2403, %v2339
  %v2460 = vmul.f32 %v2407, %v2338
  %v2461 = vmul.f32 %v2407, %v2339
  %v2462 = vmul.f32 %v2411, %v2338
  %v2463 = vmul.f32 %v2411, %v2339
  %v2464 = vmul.f32 %v2415, %v2338
  %v2465 = vmul.f32 %v2415, %v2339
  %v2466 = vmul.f32 %v2419, %v2338
  %v2467 = vmul.f32 %v2419, %v2339
  %v2468 = vadd.f32 %v2288, %v2436
  %v2469 = vadd.f32 %v2289, %v2437
  %v2470 = vadd.f32 %v2290, %v2438
  %v2471 = vadd.f32 %v2291, %v2439
  %v2472 = vadd.f32 %v2292, %v2440
  %v2473 = vadd.f32 %v2293, %v2441
  %v2474 = vadd.f32 %v2294, %v2442
  %v2475 = vadd.f32 %v2295, %v2443
  %v2476 = vadd.f32 %v2296, %v2444
  %v2477 = vadd.f32 %v2297, %v2445
  %v2478 = vadd.f32 %v2298, %v2446
  %v2479 = vadd.f32 %v2299, %v2447
  %v2480 = vadd.f32 %v2300, %v2448
  %v2481 = vadd.f32 %v2301, %v2449
  %v2482 = vadd.f32 %v2302, %v2450
  %v2483 = vadd.f32 %v2303, %v2451
  %v2484 = vadd.f32 %v2304, %v2452
  %v2485 = vadd.f32 %v2305, %v2453
  %v2486 = vadd.f32 %v2306, %v2454
  %v2487 = vadd.f32 %v2307, %v2455
  %v2488 = vadd.f32 %v2308, %v2456
  %v2489 = vadd.f32 %v2309, %v2457
  %v2490 = vadd.f32 %v2310, %v2458
  %v2491 = vadd.f32 %v2311, %v2459
  %v2492 = vadd.f32 %v2312, %v2460
  %v2493 = vadd.f32 %v2313, %v2461
  %v2494 = vadd.f32 %v2314, %v2462
  %v2495 = vadd.f32 %v2315, %v2463
  %v2496 = vadd.f32 %v2316, %v2464
  %v2497 = vadd.f32 %v2317, %v2465
  %v2498 = vadd.f32 %v2318, %v2466
  %v2499 = vadd.f32 %v2319, %v2467
  %s2500 = scalar_lea.vmem %s0, 14
  %v2501 = vld [vmem:[%s2500] sm:$0x1]
  %v2502 = vld [vmem:[%s2500 + $0x10] sm:$0x1]
  %v2503 = vld [vmem:[%s2500 + $0x20] sm:$0x1]
  %v2504 = vld [vmem:[%s2500 + $0x30] sm:$0x1]
  %v2505 = vld [vmem:[%s2500 + $0x40] sm:$0x1]
  %v2506 = vld [vmem:[%s2500 + $0x50] sm:$0x1]
  %v2507 = vld [vmem:[%s2500 + $0x60] sm:$0x1]
  %v2508 = vld [vmem:[%s2500 + $0x70] sm:$0x1]
  %v2509 = vld [vmem:[%s2500 + $0x80] sm:$0x1]
  %v2510 = vld [vmem:[%s2500 + $0x90] sm:$0x1]
  %v2511 = vld [vmem:[%s2500 + $0xa0] sm:$0x1]
  %v2512 = vld [vmem:[%s2500 + $0xb0] sm:$0x1]
  %v2513 = vld [vmem:[%s2500 + $0xc0] sm:$0x1]
  %v2514 = vld [vmem:[%s2500 + $0xd0] sm:$0x1]
  %v2515 = vld [vmem:[%s2500 + $0xe0] sm:$0x1]
  %v2516 = vld [vmem:[%s2500 + $0xf0] sm:$0x1]
  %s2517 = scalar_lea.vmem %s2, 224
  %v2518 = vld [vmem:[%s2517] sm:$0xff]
  %v2519 = vld [vmem:[%s2517 + $0x8] sm:$0xff]
  %v2536 = vlaneseq
  %v2537 = vshrl.u32 %v2536, 7
  %v2538 = vsub.s32 0, %v2537
  %v2539 = vrot.slane %v2501, %v2538
  %v2540 = vlaneseq
  %v2541 = vshrl.u32 %v2540, 7
  %v2542 = vsub.s32 0, %v2541
  %v2543 = vrot.slane %v2502, %v2542
  %v2544 = vlaneseq
  %v2545 = vshrl.u32 %v2544, 7
  %v2546 = vsub.s32 0, %v2545
  %v2547 = vrot.slane %v2503, %v2546
  %v2548 = vlaneseq
  %v2549 = vshrl.u32 %v2548, 7
  %v2550 = vsub.s32 0, %v2549
  %v2551 = vrot.slane %v2504, %v2550
  %v2552 = vlaneseq
  %v2553 = vshrl.u32 %v2552, 7
  %v2554 = vsub.s32 0, %v2553
  %v2555 = vrot.slane %v2505, %v2554
  %v2556 = vlaneseq
  %v2557 = vshrl.u32 %v2556, 7
  %v2558 = vsub.s32 0, %v2557
  %v2559 = vrot.slane %v2506, %v2558
  %v2560 = vlaneseq
  %v2561 = vshrl.u32 %v2560, 7
  %v2562 = vsub.s32 0, %v2561
  %v2563 = vrot.slane %v2507, %v2562
  %v2564 = vlaneseq
  %v2565 = vshrl.u32 %v2564, 7
  %v2566 = vsub.s32 0, %v2565
  %v2567 = vrot.slane %v2508, %v2566
  %v2568 = vlaneseq
  %v2569 = vshrl.u32 %v2568, 7
  %v2570 = vsub.s32 0, %v2569
  %v2571 = vrot.slane %v2509, %v2570
  %v2572 = vlaneseq
  %v2573 = vshrl.u32 %v2572, 7
  %v2574 = vsub.s32 0, %v2573
  %v2575 = vrot.slane %v2510, %v2574
  %v2576 = vlaneseq
  %v2577 = vshrl.u32 %v2576, 7
  %v2578 = vsub.s32 0, %v2577
  %v2579 = vrot.slane %v2511, %v2578
  %v2580 = vlaneseq
  %v2581 = vshrl.u32 %v2580, 7
  %v2582 = vsub.s32 0, %v2581
  %v2583 = vrot.slane %v2512, %v2582
  %v2584 = vlaneseq
  %v2585 = vshrl.u32 %v2584, 7
  %v2586 = vsub.s32 0, %v2585
  %v2587 = vrot.slane %v2513, %v2586
  %v2588 = vlaneseq
  %v2589 = vshrl.u32 %v2588, 7
  %v2590 = vsub.s32 0, %v2589
  %v2591 = vrot.slane %v2514, %v2590
  %v2592 = vlaneseq
  %v2593 = vshrl.u32 %v2592, 7
  %v2594 = vsub.s32 0, %v2593
  %v2595 = vrot.slane %v2515, %v2594
  %v2596 = vlaneseq
  %v2597 = vshrl.u32 %v2596, 7
  %v2598 = vsub.s32 0, %v2597
  %v2599 = vrot.slane %v2516, %v2598
  %v2616 = vmul.f32 %v2539, %v2518
  %v2617 = vmul.f32 %v2539, %v2519
  %v2618 = vmul.f32 %v2543, %v2518
  %v2619 = vmul.f32 %v2543, %v2519
  %v2620 = vmul.f32 %v2547, %v2518
  %v2621 = vmul.f32 %v2547, %v2519
  %v2622 = vmul.f32 %v2551, %v2518
  %v2623 = vmul.f32 %v2551, %v2519
  %v2624 = vmul.f32 %v2555, %v2518
  %v2625 = vmul.f32 %v2555, %v2519
  %v2626 = vmul.f32 %v2559, %v2518
  %v2627 = vmul.f32 %v2559, %v2519
  %v2628 = vmul.f32 %v2563, %v2518
  %v2629 = vmul.f32 %v2563, %v2519
  %v2630 = vmul.f32 %v2567, %v2518
  %v2631 = vmul.f32 %v2567, %v2519
  %v2632 = vmul.f32 %v2571, %v2518
  %v2633 = vmul.f32 %v2571, %v2519
  %v2634 = vmul.f32 %v2575, %v2518
  %v2635 = vmul.f32 %v2575, %v2519
  %v2636 = vmul.f32 %v2579, %v2518
  %v2637 = vmul.f32 %v2579, %v2519
  %v2638 = vmul.f32 %v2583, %v2518
  %v2639 = vmul.f32 %v2583, %v2519
  %v2640 = vmul.f32 %v2587, %v2518
  %v2641 = vmul.f32 %v2587, %v2519
  %v2642 = vmul.f32 %v2591, %v2518
  %v2643 = vmul.f32 %v2591, %v2519
  %v2644 = vmul.f32 %v2595, %v2518
  %v2645 = vmul.f32 %v2595, %v2519
  %v2646 = vmul.f32 %v2599, %v2518
  %v2647 = vmul.f32 %v2599, %v2519
  %v2648 = vadd.f32 %v2468, %v2616
  %v2649 = vadd.f32 %v2469, %v2617
  %v2650 = vadd.f32 %v2470, %v2618
  %v2651 = vadd.f32 %v2471, %v2619
  %v2652 = vadd.f32 %v2472, %v2620
  %v2653 = vadd.f32 %v2473, %v2621
  %v2654 = vadd.f32 %v2474, %v2622
  %v2655 = vadd.f32 %v2475, %v2623
  %v2656 = vadd.f32 %v2476, %v2624
  %v2657 = vadd.f32 %v2477, %v2625
  %v2658 = vadd.f32 %v2478, %v2626
  %v2659 = vadd.f32 %v2479, %v2627
  %v2660 = vadd.f32 %v2480, %v2628
  %v2661 = vadd.f32 %v2481, %v2629
  %v2662 = vadd.f32 %v2482, %v2630
  %v2663 = vadd.f32 %v2483, %v2631
  %v2664 = vadd.f32 %v2484, %v2632
  %v2665 = vadd.f32 %v2485, %v2633
  %v2666 = vadd.f32 %v2486, %v2634
  %v2667 = vadd.f32 %v2487, %v2635
  %v2668 = vadd.f32 %v2488, %v2636
  %v2669 = vadd.f32 %v2489, %v2637
  %v2670 = vadd.f32 %v2490, %v2638
  %v2671 = vadd.f32 %v2491, %v2639
  %v2672 = vadd.f32 %v2492, %v2640
  %v2673 = vadd.f32 %v2493, %v2641
  %v2674 = vadd.f32 %v2494, %v2642
  %v2675 = vadd.f32 %v2495, %v2643
  %v2676 = vadd.f32 %v2496, %v2644
  %v2677 = vadd.f32 %v2497, %v2645
  %v2678 = vadd.f32 %v2498, %v2646
  %v2679 = vadd.f32 %v2499, %v2647
  %s2680 = scalar_lea.vmem %s0, 15
  %v2681 = vld [vmem:[%s2680] sm:$0x1]
  %v2682 = vld [vmem:[%s2680 + $0x10] sm:$0x1]
  %v2683 = vld [vmem:[%s2680 + $0x20] sm:$0x1]
  %v2684 = vld [vmem:[%s2680 + $0x30] sm:$0x1]
  %v2685 = vld [vmem:[%s2680 + $0x40] sm:$0x1]
  %v2686 = vld [vmem:[%s2680 + $0x50] sm:$0x1]
  %v2687 = vld [vmem:[%s2680 + $0x60] sm:$0x1]
  %v2688 = vld [vmem:[%s2680 + $0x70] sm:$0x1]
  %v2689 = vld [vmem:[%s2680 + $0x80] sm:$0x1]
  %v2690 = vld [vmem:[%s2680 + $0x90] sm:$0x1]
  %v2691 = vld [vmem:[%s2680 + $0xa0] sm:$0x1]
  %v2692 = vld [vmem:[%s2680 + $0xb0] sm:$0x1]
  %v2693 = vld [vmem:[%s2680 + $0xc0] sm:$0x1]
  %v2694 = vld [vmem:[%s2680 + $0xd0] sm:$0x1]
  %v2695 = vld [vmem:[%s2680 + $0xe0] sm:$0x1]
  %v2696 = vld [vmem:[%s2680 + $0xf0] sm:$0x1]
  %s2697 = scalar_lea.vmem %s2, 240
  %v2698 = vld [vmem:[%s2697] sm:$0xff]
  %v2699 = vld [vmem:[%s2697 + $0x8] sm:$0xff]
  %v2716 = vlaneseq
  %v2717 = vshrl.u32 %v2716, 7
  %v2718 = vsub.s32 0, %v2717
  %v2719 = vrot.slane %v2681, %v2718
  %v2720 = vlaneseq
  %v2721 = vshrl.u32 %v2720, 7
  %v2722 = vsub.s32 0, %v2721
  %v2723 = vrot.slane %v2682, %v2722
  %v2724 = vlaneseq
  %v2725 = vshrl.u32 %v2724, 7
  %v2726 = vsub.s32 0, %v2725
  %v2727 = vrot.slane %v2683, %v2726
  %v2728 = vlaneseq
  %v2729 = vshrl.u32 %v2728, 7
  %v2730 = vsub.s32 0, %v2729
  %v2731 = vrot.slane %v2684, %v2730
  %v2732 = vlaneseq
  %v2733 = vshrl.u32 %v2732, 7
  %v2734 = vsub.s32 0, %v2733
  %v2735 = vrot.slane %v2685, %v2734
  %v2736 = vlaneseq
  %v2737 = vshrl.u32 %v2736, 7
  %v2738 = vsub.s32 0, %v2737
  %v2739 = vrot.slane %v2686, %v2738
  %v2740 = vlaneseq
  %v2741 = vshrl.u32 %v2740, 7
  %v2742 = vsub.s32 0, %v2741
  %v2743 = vrot.slane %v2687, %v2742
  %v2744 = vlaneseq
  %v2745 = vshrl.u32 %v2744, 7
  %v2746 = vsub.s32 0, %v2745
  %v2747 = vrot.slane %v2688, %v2746
  %v2748 = vlaneseq
  %v2749 = vshrl.u32 %v2748, 7
  %v2750 = vsub.s32 0, %v2749
  %v2751 = vrot.slane %v2689, %v2750
  %v2752 = vlaneseq
  %v2753 = vshrl.u32 %v2752, 7
  %v2754 = vsub.s32 0, %v2753
  %v2755 = vrot.slane %v2690, %v2754
  %v2756 = vlaneseq
  %v2757 = vshrl.u32 %v2756, 7
  %v2758 = vsub.s32 0, %v2757
  %v2759 = vrot.slane %v2691, %v2758
  %v2760 = vlaneseq
  %v2761 = vshrl.u32 %v2760, 7
  %v2762 = vsub.s32 0, %v2761
  %v2763 = vrot.slane %v2692, %v2762
  %v2764 = vlaneseq
  %v2765 = vshrl.u32 %v2764, 7
  %v2766 = vsub.s32 0, %v2765
  %v2767 = vrot.slane %v2693, %v2766
  %v2768 = vlaneseq
  %v2769 = vshrl.u32 %v2768, 7
  %v2770 = vsub.s32 0, %v2769
  %v2771 = vrot.slane %v2694, %v2770
  %v2772 = vlaneseq
  %v2773 = vshrl.u32 %v2772, 7
  %v2774 = vsub.s32 0, %v2773
  %v2775 = vrot.slane %v2695, %v2774
  %v2776 = vlaneseq
  %v2777 = vshrl.u32 %v2776, 7
  %v2778 = vsub.s32 0, %v2777
  %v2779 = vrot.slane %v2696, %v2778
  %v2796 = vmul.f32 %v2719, %v2698
  %v2797 = vmul.f32 %v2719, %v2699
  %v2798 = vmul.f32 %v2723, %v2698
  %v2799 = vmul.f32 %v2723, %v2699
  %v2800 = vmul.f32 %v2727, %v2698
  %v2801 = vmul.f32 %v2727, %v2699
  %v2802 = vmul.f32 %v2731, %v2698
  %v2803 = vmul.f32 %v2731, %v2699
  %v2804 = vmul.f32 %v2735, %v2698
  %v2805 = vmul.f32 %v2735, %v2699
  %v2806 = vmul.f32 %v2739, %v2698
  %v2807 = vmul.f32 %v2739, %v2699
  %v2808 = vmul.f32 %v2743, %v2698
  %v2809 = vmul.f32 %v2743, %v2699
  %v2810 = vmul.f32 %v2747, %v2698
  %v2811 = vmul.f32 %v2747, %v2699
  %v2812 = vmul.f32 %v2751, %v2698
  %v2813 = vmul.f32 %v2751, %v2699
  %v2814 = vmul.f32 %v2755, %v2698
  %v2815 = vmul.f32 %v2755, %v2699
  %v2816 = vmul.f32 %v2759, %v2698
  %v2817 = vmul.f32 %v2759, %v2699
  %v2818 = vmul.f32 %v2763, %v2698
  %v2819 = vmul.f32 %v2763, %v2699
  %v2820 = vmul.f32 %v2767, %v2698
  %v2821 = vmul.f32 %v2767, %v2699
  %v2822 = vmul.f32 %v2771, %v2698
  %v2823 = vmul.f32 %v2771, %v2699
  %v2824 = vmul.f32 %v2775, %v2698
  %v2825 = vmul.f32 %v2775, %v2699
  %v2826 = vmul.f32 %v2779, %v2698
  %v2827 = vmul.f32 %v2779, %v2699
  %v2828 = vadd.f32 %v2648, %v2796
  %v2829 = vadd.f32 %v2649, %v2797
  %v2830 = vadd.f32 %v2650, %v2798
  %v2831 = vadd.f32 %v2651, %v2799
  %v2832 = vadd.f32 %v2652, %v2800
  %v2833 = vadd.f32 %v2653, %v2801
  %v2834 = vadd.f32 %v2654, %v2802
  %v2835 = vadd.f32 %v2655, %v2803
  %v2836 = vadd.f32 %v2656, %v2804
  %v2837 = vadd.f32 %v2657, %v2805
  %v2838 = vadd.f32 %v2658, %v2806
  %v2839 = vadd.f32 %v2659, %v2807
  %v2840 = vadd.f32 %v2660, %v2808
  %v2841 = vadd.f32 %v2661, %v2809
  %v2842 = vadd.f32 %v2662, %v2810
  %v2843 = vadd.f32 %v2663, %v2811
  %v2844 = vadd.f32 %v2664, %v2812
  %v2845 = vadd.f32 %v2665, %v2813
  %v2846 = vadd.f32 %v2666, %v2814
  %v2847 = vadd.f32 %v2667, %v2815
  %v2848 = vadd.f32 %v2668, %v2816
  %v2849 = vadd.f32 %v2669, %v2817
  %v2850 = vadd.f32 %v2670, %v2818
  %v2851 = vadd.f32 %v2671, %v2819
  %v2852 = vadd.f32 %v2672, %v2820
  %v2853 = vadd.f32 %v2673, %v2821
  %v2854 = vadd.f32 %v2674, %v2822
  %v2855 = vadd.f32 %v2675, %v2823
  %v2856 = vadd.f32 %v2676, %v2824
  %v2857 = vadd.f32 %v2677, %v2825
  %v2858 = vadd.f32 %v2678, %v2826
  %v2859 = vadd.f32 %v2679, %v2827
  %v2860 = vld [vmem:[%s1] sm:$0xff]
  %v2861 = vld [vmem:[%s1 + $0x8] sm:$0xff]
  %v2862 = vld [vmem:[%s1 + $0x10] sm:$0xff]
  %v2863 = vld [vmem:[%s1 + $0x18] sm:$0xff]
  %v2864 = vld [vmem:[%s1 + $0x20] sm:$0xff]
  %v2865 = vld [vmem:[%s1 + $0x28] sm:$0xff]
  %v2866 = vld [vmem:[%s1 + $0x30] sm:$0xff]
  %v2867 = vld [vmem:[%s1 + $0x38] sm:$0xff]
  %v2868 = vld [vmem:[%s1 + $0x40] sm:$0xff]
  %v2869 = vld [vmem:[%s1 + $0x48] sm:$0xff]
  %v2870 = vld [vmem:[%s1 + $0x50] sm:$0xff]
  %v2871 = vld [vmem:[%s1 + $0x58] sm:$0xff]
  %v2872 = vld [vmem:[%s1 + $0x60] sm:$0xff]
  %v2873 = vld [vmem:[%s1 + $0x68] sm:$0xff]
  %v2874 = vld [vmem:[%s1 + $0x70] sm:$0xff]
  %v2875 = vld [vmem:[%s1 + $0x78] sm:$0xff]
  %v2876 = vld [vmem:[%s1 + $0x80] sm:$0xff]
  %v2877 = vld [vmem:[%s1 + $0x88] sm:$0xff]
  %v2878 = vld [vmem:[%s1 + $0x90] sm:$0xff]
  %v2879 = vld [vmem:[%s1 + $0x98] sm:$0xff]
  %v2880 = vld [vmem:[%s1 + $0xa0] sm:$0xff]
  %v2881 = vld [vmem:[%s1 + $0xa8] sm:$0xff]
  %v2882 = vld [vmem:[%s1 + $0xb0] sm:$0xff]
  %v2883 = vld [vmem:[%s1 + $0xb8] sm:$0xff]
  %v2884 = vld [vmem:[%s1 + $0xc0] sm:$0xff]
  %v2885 = vld [vmem:[%s1 + $0xc8] sm:$0xff]
  %v2886 = vld [vmem:[%s1 + $0xd0] sm:$0xff]
  %v2887 = vld [vmem:[%s1 + $0xd8] sm:$0xff]
  %v2888 = vld [vmem:[%s1 + $0xe0] sm:$0xff]
  %v2889 = vld [vmem:[%s1 + $0xe8] sm:$0xff]
  %v2890 = vld [vmem:[%s1 + $0xf0] sm:$0xff]
  %v2891 = vld [vmem:[%s1 + $0xf8] sm:$0xff]
  %v2892 = vmul.f32 %v2860, %v2828
  %v2893 = vmul.f32 %v2861, %v2829
  %v2894 = vmul.f32 %v2862, %v2828
  %v2895 = vmul.f32 %v2863, %v2829
  %v2896 = vmul.f32 %v2864, %v2828
  %v2897 = vmul.f32 %v2865, %v2829
  %v2898 = vmul.f32 %v2866, %v2828
  %v2899 = vmul.f32 %v2867, %v2829
  %v2900 = vmul.f32 %v2868, %v2828
  %v2901 = vmul.f32 %v2869, %v2829
  %v2902 = vmul.f32 %v2870, %v2828
  %v2903 = vmul.f32 %v2871, %v2829
  %v2904 = vmul.f32 %v2872, %v2828
  %v2905 = vmul.f32 %v2873, %v2829
  %v2906 = vmul.f32 %v2874, %v2828
  %v2907 = vmul.f32 %v2875, %v2829
  %v2908 = vmul.f32 %v2876, %v2828
  %v2909 = vmul.f32 %v2877, %v2829
  %v2910 = vmul.f32 %v2878, %v2828
  %v2911 = vmul.f32 %v2879, %v2829
  %v2912 = vmul.f32 %v2880, %v2828
  %v2913 = vmul.f32 %v2881, %v2829
  %v2914 = vmul.f32 %v2882, %v2828
  %v2915 = vmul.f32 %v2883, %v2829
  %v2916 = vmul.f32 %v2884, %v2828
  %v2917 = vmul.f32 %v2885, %v2829
  %v2918 = vmul.f32 %v2886, %v2828
  %v2919 = vmul.f32 %v2887, %v2829
  %v2920 = vmul.f32 %v2888, %v2828
  %v2921 = vmul.f32 %v2889, %v2829
  %v2922 = vmul.f32 %v2890, %v2828
  %v2923 = vmul.f32 %v2891, %v2829
  %v2924 = vadd.f32 %v2892, %v2893
  %v2925 = vrot.slane %v2924, 4
  %v2926 = vadd.f32 %v2924, %v2925
  %v2927 = vrot.slane %v2926, 2
  %v2928 = vadd.f32 %v2926, %v2927
  %v2929 = vrot.slane %v2928, 1
  %v2930 = vadd.f32 %v2928, %v2929
  %v2931 = vadd.f32 %v2894, %v2895
  %v2932 = vrot.slane %v2931, 4
  %v2933 = vadd.f32 %v2931, %v2932
  %v2934 = vrot.slane %v2933, 2
  %v2935 = vadd.f32 %v2933, %v2934
  %v2936 = vrot.slane %v2935, 1
  %v2937 = vadd.f32 %v2935, %v2936
  %v2938 = vadd.f32 %v2896, %v2897
  %v2939 = vrot.slane %v2938, 4
  %v2940 = vadd.f32 %v2938, %v2939
  %v2941 = vrot.slane %v2940, 2
  %v2942 = vadd.f32 %v2940, %v2941
  %v2943 = vrot.slane %v2942, 1
  %v2944 = vadd.f32 %v2942, %v2943
  %v2945 = vadd.f32 %v2898, %v2899
  %v2946 = vrot.slane %v2945, 4
  %v2947 = vadd.f32 %v2945, %v2946
  %v2948 = vrot.slane %v2947, 2
  %v2949 = vadd.f32 %v2947, %v2948
  %v2950 = vrot.slane %v2949, 1
  %v2951 = vadd.f32 %v2949, %v2950
  %v2952 = vadd.f32 %v2900, %v2901
  %v2953 = vrot.slane %v2952, 4
  %v2954 = vadd.f32 %v2952, %v2953
  %v2955 = vrot.slane %v2954, 2
  %v2956 = vadd.f32 %v2954, %v2955
  %v2957 = vrot.slane %v2956, 1
  %v2958 = vadd.f32 %v2956, %v2957
  %v2959 = vadd.f32 %v2902, %v2903
  %v2960 = vrot.slane %v2959, 4
  %v2961 = vadd.f32 %v2959, %v2960
  %v2962 = vrot.slane %v2961, 2
  %v2963 = vadd.f32 %v2961, %v2962
  %v2964 = vrot.slane %v2963, 1
  %v2965 = vadd.f32 %v2963, %v2964
  %v2966 = vadd.f32 %v2904, %v2905
  %v2967 = vrot.slane %v2966, 4
  %v2968 = vadd.f32 %v2966, %v2967
  %v2969 = vrot.slane %v2968, 2
  %v2970 = vadd.f32 %v2968, %v2969
  %v2971 = vrot.slane %v2970, 1
  %v2972 = vadd.f32 %v2970, %v2971
  %v2973 = vadd.f32 %v2906, %v2907
  %v2974 = vrot.slane %v2973, 4
  %v2975 = vadd.f32 %v2973, %v2974
  %v2976 = vrot.slane %v2975, 2
  %v2977 = vadd.f32 %v2975, %v2976
  %v2978 = vrot.slane %v2977, 1
  %v2979 = vadd.f32 %v2977, %v2978
  %v2980 = vadd.f32 %v2908, %v2909
  %v2981 = vrot.slane %v2980, 4
  %v2982 = vadd.f32 %v2980, %v2981
  %v2983 = vrot.slane %v2982, 2
  %v2984 = vadd.f32 %v2982, %v2983
  %v2985 = vrot.slane %v2984, 1
  %v2986 = vadd.f32 %v2984, %v2985
  %v2987 = vadd.f32 %v2910, %v2911
  %v2988 = vrot.slane %v2987, 4
  %v2989 = vadd.f32 %v2987, %v2988
  %v2990 = vrot.slane %v2989, 2
  %v2991 = vadd.f32 %v2989, %v2990
  %v2992 = vrot.slane %v2991, 1
  %v2993 = vadd.f32 %v2991, %v2992
  %v2994 = vadd.f32 %v2912, %v2913
  %v2995 = vrot.slane %v2994, 4
  %v2996 = vadd.f32 %v2994, %v2995
  %v2997 = vrot.slane %v2996, 2
  %v2998 = vadd.f32 %v2996, %v2997
  %v2999 = vrot.slane %v2998, 1
  %v3000 = vadd.f32 %v2998, %v2999
  %v3001 = vadd.f32 %v2914, %v2915
  %v3002 = vrot.slane %v3001, 4
  %v3003 = vadd.f32 %v3001, %v3002
  %v3004 = vrot.slane %v3003, 2
  %v3005 = vadd.f32 %v3003, %v3004
  %v3006 = vrot.slane %v3005, 1
  %v3007 = vadd.f32 %v3005, %v3006
  %v3008 = vadd.f32 %v2916, %v2917
  %v3009 = vrot.slane %v3008, 4
  %v3010 = vadd.f32 %v3008, %v3009
  %v3011 = vrot.slane %v3010, 2
  %v3012 = vadd.f32 %v3010, %v3011
  %v3013 = vrot.slane %v3012, 1
  %v3014 = vadd.f32 %v3012, %v3013
  %v3015 = vadd.f32 %v2918, %v2919
  %v3016 = vrot.slane %v3015, 4
  %v3017 = vadd.f32 %v3015, %v3016
  %v3018 = vrot.slane %v3017, 2
  %v3019 = vadd.f32 %v3017, %v3018
  %v3020 = vrot.slane %v3019, 1
  %v3021 = vadd.f32 %v3019, %v3020
  %v3022 = vadd.f32 %v2920, %v2921
  %v3023 = vrot.slane %v3022, 4
  %v3024 = vadd.f32 %v3022, %v3023
  %v3025 = vrot.slane %v3024, 2
  %v3026 = vadd.f32 %v3024, %v3025
  %v3027 = vrot.slane %v3026, 1
  %v3028 = vadd.f32 %v3026, %v3027
  %v3029 = vadd.f32 %v2922, %v2923
  %v3030 = vrot.slane %v3029, 4
  %v3031 = vadd.f32 %v3029, %v3030
  %v3032 = vrot.slane %v3031, 2
  %v3033 = vadd.f32 %v3031, %v3032
  %v3034 = vrot.slane %v3033, 1
  %v3035 = vadd.f32 %v3033, %v3034
  %3036 = vst [vmem:[%s3] sm:$0x1] %v2930
  %3037 = vst [vmem:[%s3 + $0x1] sm:$0x1] %v2937
  %3038 = vst [vmem:[%s3 + $0x2] sm:$0x1] %v2944
  %3039 = vst [vmem:[%s3 + $0x3] sm:$0x1] %v2951
  %3040 = vst [vmem:[%s3 + $0x4] sm:$0x1] %v2958
  %3041 = vst [vmem:[%s3 + $0x5] sm:$0x1] %v2965
  %3042 = vst [vmem:[%s3 + $0x6] sm:$0x1] %v2972
  %3043 = vst [vmem:[%s3 + $0x7] sm:$0x1] %v2979
  %3044 = vst [vmem:[%s3 + $0x8] sm:$0x1] %v2986
  %3045 = vst [vmem:[%s3 + $0x9] sm:$0x1] %v2993
  %3046 = vst [vmem:[%s3 + $0xa] sm:$0x1] %v3000
  %3047 = vst [vmem:[%s3 + $0xb] sm:$0x1] %v3007
  %3048 = vst [vmem:[%s3 + $0xc] sm:$0x1] %v3014
  %3049 = vst [vmem:[%s3 + $0xd] sm:$0x1] %v3021
  %3050 = vst [vmem:[%s3 + $0xe] sm:$0x1] %v3028
  %3051 = vst [vmem:[%s3 + $0xf] sm:$0x1] %v3035
  %v3052 = vmul.f32 %v2860, %v2830
  %v3053 = vmul.f32 %v2861, %v2831
  %v3054 = vmul.f32 %v2862, %v2830
  %v3055 = vmul.f32 %v2863, %v2831
  %v3056 = vmul.f32 %v2864, %v2830
  %v3057 = vmul.f32 %v2865, %v2831
  %v3058 = vmul.f32 %v2866, %v2830
  %v3059 = vmul.f32 %v2867, %v2831
  %v3060 = vmul.f32 %v2868, %v2830
  %v3061 = vmul.f32 %v2869, %v2831
  %v3062 = vmul.f32 %v2870, %v2830
  %v3063 = vmul.f32 %v2871, %v2831
  %v3064 = vmul.f32 %v2872, %v2830
  %v3065 = vmul.f32 %v2873, %v2831
  %v3066 = vmul.f32 %v2874, %v2830
  %v3067 = vmul.f32 %v2875, %v2831
  %v3068 = vmul.f32 %v2876, %v2830
  %v3069 = vmul.f32 %v2877, %v2831
  %v3070 = vmul.f32 %v2878, %v2830
  %v3071 = vmul.f32 %v2879, %v2831
  %v3072 = vmul.f32 %v2880, %v2830
  %v3073 = vmul.f32 %v2881, %v2831
  %v3074 = vmul.f32 %v2882, %v2830
  %v3075 = vmul.f32 %v2883, %v2831
  %v3076 = vmul.f32 %v2884, %v2830
  %v3077 = vmul.f32 %v2885, %v2831
  %v3078 = vmul.f32 %v2886, %v2830
  %v3079 = vmul.f32 %v2887, %v2831
  %v3080 = vmul.f32 %v2888, %v2830
  %v3081 = vmul.f32 %v2889, %v2831
  %v3082 = vmul.f32 %v2890, %v2830
  %v3083 = vmul.f32 %v2891, %v2831
  %v3084 = vadd.f32 %v3052, %v3053
  %v3085 = vrot.slane %v3084, 4
  %v3086 = vadd.f32 %v3084, %v3085
  %v3087 = vrot.slane %v3086, 2
  %v3088 = vadd.f32 %v3086, %v3087
  %v3089 = vrot.slane %v3088, 1
  %v3090 = vadd.f32 %v3088, %v3089
  %v3091 = vadd.f32 %v3054, %v3055
  %v3092 = vrot.slane %v3091, 4
  %v3093 = vadd.f32 %v3091, %v3092
  %v3094 = vrot.slane %v3093, 2
  %v3095 = vadd.f32 %v3093, %v3094
  %v3096 = vrot.slane %v3095, 1
  %v3097 = vadd.f32 %v3095, %v3096
  %v3098 = vadd.f32 %v3056, %v3057
  %v3099 = vrot.slane %v3098, 4
  %v3100 = vadd.f32 %v3098, %v3099
  %v3101 = vrot.slane %v3100, 2
  %v3102 = vadd.f32 %v3100, %v3101
  %v3103 = vrot.slane %v3102, 1
  %v3104 = vadd.f32 %v3102, %v3103
  %v3105 = vadd.f32 %v3058, %v3059
  %v3106 = vrot.slane %v3105, 4
  %v3107 = vadd.f32 %v3105, %v3106
  %v3108 = vrot.slane %v3107, 2
  %v3109 = vadd.f32 %v3107, %v3108
  %v3110 = vrot.slane %v3109, 1
  %v3111 = vadd.f32 %v3109, %v3110
  %v3112 = vadd.f32 %v3060, %v3061
  %v3113 = vrot.slane %v3112, 4
  %v3114 = vadd.f32 %v3112, %v3113
  %v3115 = vrot.slane %v3114, 2
  %v3116 = vadd.f32 %v3114, %v3115
  %v3117 = vrot.slane %v3116, 1
  %v3118 = vadd.f32 %v3116, %v3117
  %v3119 = vadd.f32 %v3062, %v3063
  %v3120 = vrot.slane %v3119, 4
  %v3121 = vadd.f32 %v3119, %v3120
  %v3122 = vrot.slane %v3121, 2
  %v3123 = vadd.f32 %v3121, %v3122
  %v3124 = vrot.slane %v3123, 1
  %v3125 = vadd.f32 %v3123, %v3124
  %v3126 = vadd.f32 %v3064, %v3065
  %v3127 = vrot.slane %v3126, 4
  %v3128 = vadd.f32 %v3126, %v3127
  %v3129 = vrot.slane %v3128, 2
  %v3130 = vadd.f32 %v3128, %v3129
  %v3131 = vrot.slane %v3130, 1
  %v3132 = vadd.f32 %v3130, %v3131
  %v3133 = vadd.f32 %v3066, %v3067
  %v3134 = vrot.slane %v3133, 4
  %v3135 = vadd.f32 %v3133, %v3134
  %v3136 = vrot.slane %v3135, 2
  %v3137 = vadd.f32 %v3135, %v3136
  %v3138 = vrot.slane %v3137, 1
  %v3139 = vadd.f32 %v3137, %v3138
  %v3140 = vadd.f32 %v3068, %v3069
  %v3141 = vrot.slane %v3140, 4
  %v3142 = vadd.f32 %v3140, %v3141
  %v3143 = vrot.slane %v3142, 2
  %v3144 = vadd.f32 %v3142, %v3143
  %v3145 = vrot.slane %v3144, 1
  %v3146 = vadd.f32 %v3144, %v3145
  %v3147 = vadd.f32 %v3070, %v3071
  %v3148 = vrot.slane %v3147, 4
  %v3149 = vadd.f32 %v3147, %v3148
  %v3150 = vrot.slane %v3149, 2
  %v3151 = vadd.f32 %v3149, %v3150
  %v3152 = vrot.slane %v3151, 1
  %v3153 = vadd.f32 %v3151, %v3152
  %v3154 = vadd.f32 %v3072, %v3073
  %v3155 = vrot.slane %v3154, 4
  %v3156 = vadd.f32 %v3154, %v3155
  %v3157 = vrot.slane %v3156, 2
  %v3158 = vadd.f32 %v3156, %v3157
  %v3159 = vrot.slane %v3158, 1
  %v3160 = vadd.f32 %v3158, %v3159
  %v3161 = vadd.f32 %v3074, %v3075
  %v3162 = vrot.slane %v3161, 4
  %v3163 = vadd.f32 %v3161, %v3162
  %v3164 = vrot.slane %v3163, 2
  %v3165 = vadd.f32 %v3163, %v3164
  %v3166 = vrot.slane %v3165, 1
  %v3167 = vadd.f32 %v3165, %v3166
  %v3168 = vadd.f32 %v3076, %v3077
  %v3169 = vrot.slane %v3168, 4
  %v3170 = vadd.f32 %v3168, %v3169
  %v3171 = vrot.slane %v3170, 2
  %v3172 = vadd.f32 %v3170, %v3171
  %v3173 = vrot.slane %v3172, 1
  %v3174 = vadd.f32 %v3172, %v3173
  %v3175 = vadd.f32 %v3078, %v3079
  %v3176 = vrot.slane %v3175, 4
  %v3177 = vadd.f32 %v3175, %v3176
  %v3178 = vrot.slane %v3177, 2
  %v3179 = vadd.f32 %v3177, %v3178
  %v3180 = vrot.slane %v3179, 1
  %v3181 = vadd.f32 %v3179, %v3180
  %v3182 = vadd.f32 %v3080, %v3081
  %v3183 = vrot.slane %v3182, 4
  %v3184 = vadd.f32 %v3182, %v3183
  %v3185 = vrot.slane %v3184, 2
  %v3186 = vadd.f32 %v3184, %v3185
  %v3187 = vrot.slane %v3186, 1
  %v3188 = vadd.f32 %v3186, %v3187
  %v3189 = vadd.f32 %v3082, %v3083
  %v3190 = vrot.slane %v3189, 4
  %v3191 = vadd.f32 %v3189, %v3190
  %v3192 = vrot.slane %v3191, 2
  %v3193 = vadd.f32 %v3191, %v3192
  %v3194 = vrot.slane %v3193, 1
  %v3195 = vadd.f32 %v3193, %v3194
  %s3196 = scalar_lea.vmem %s3, 16
  %3197 = vst [vmem:[%s3196] sm:$0x1] %v3090
  %3198 = vst [vmem:[%s3196 + $0x1] sm:$0x1] %v3097
  %3199 = vst [vmem:[%s3196 + $0x2] sm:$0x1] %v3104
  %3200 = vst [vmem:[%s3196 + $0x3] sm:$0x1] %v3111
  %3201 = vst [vmem:[%s3196 + $0x4] sm:$0x1] %v3118
  %3202 = vst [vmem:[%s3196 + $0x5] sm:$0x1] %v3125
  %3203 = vst [vmem:[%s3196 + $0x6] sm:$0x1] %v3132
  %3204 = vst [vmem:[%s3196 + $0x7] sm:$0x1] %v3139
  %3205 = vst [vmem:[%s3196 + $0x8] sm:$0x1] %v3146
  %3206 = vst [vmem:[%s3196 + $0x9] sm:$0x1] %v3153
  %3207 = vst [vmem:[%s3196 + $0xa] sm:$0x1] %v3160
  %3208 = vst [vmem:[%s3196 + $0xb] sm:$0x1] %v3167
  %3209 = vst [vmem:[%s3196 + $0xc] sm:$0x1] %v3174
  %3210 = vst [vmem:[%s3196 + $0xd] sm:$0x1] %v3181
  %3211 = vst [vmem:[%s3196 + $0xe] sm:$0x1] %v3188
  %3212 = vst [vmem:[%s3196 + $0xf] sm:$0x1] %v3195
  %v3213 = vmul.f32 %v2860, %v2832
  %v3214 = vmul.f32 %v2861, %v2833
  %v3215 = vmul.f32 %v2862, %v2832
  %v3216 = vmul.f32 %v2863, %v2833
  %v3217 = vmul.f32 %v2864, %v2832
  %v3218 = vmul.f32 %v2865, %v2833
  %v3219 = vmul.f32 %v2866, %v2832
  %v3220 = vmul.f32 %v2867, %v2833
  %v3221 = vmul.f32 %v2868, %v2832
  %v3222 = vmul.f32 %v2869, %v2833
  %v3223 = vmul.f32 %v2870, %v2832
  %v3224 = vmul.f32 %v2871, %v2833
  %v3225 = vmul.f32 %v2872, %v2832
  %v3226 = vmul.f32 %v2873, %v2833
  %v3227 = vmul.f32 %v2874, %v2832
  %v3228 = vmul.f32 %v2875, %v2833
  %v3229 = vmul.f32 %v2876, %v2832
  %v3230 = vmul.f32 %v2877, %v2833
  %v3231 = vmul.f32 %v2878, %v2832
  %v3232 = vmul.f32 %v2879, %v2833
  %v3233 = vmul.f32 %v2880, %v2832
  %v3234 = vmul.f32 %v2881, %v2833
  %v3235 = vmul.f32 %v2882, %v2832
  %v3236 = vmul.f32 %v2883, %v2833
  %v3237 = vmul.f32 %v2884, %v2832
  %v3238 = vmul.f32 %v2885, %v2833
  %v3239 = vmul.f32 %v2886, %v2832
  %v3240 = vmul.f32 %v2887, %v2833
  %v3241 = vmul.f32 %v2888, %v2832
  %v3242 = vmul.f32 %v2889, %v2833
  %v3243 = vmul.f32 %v2890, %v2832
  %v3244 = vmul.f32 %v2891, %v2833
  %v3245 = vadd.f32 %v3213, %v3214
  %v3246 = vrot.slane %v3245, 4
  %v3247 = vadd.f32 %v3245, %v3246
  %v3248 = vrot.slane %v3247, 2
  %v3249 = vadd.f32 %v3247, %v3248
  %v3250 = vrot.slane %v3249, 1
  %v3251 = vadd.f32 %v3249, %v3250
  %v3252 = vadd.f32 %v3215, %v3216
  %v3253 = vrot.slane %v3252, 4
  %v3254 = vadd.f32 %v3252, %v3253
  %v3255 = vrot.slane %v3254, 2
  %v3256 = vadd.f32 %v3254, %v3255
  %v3257 = vrot.slane %v3256, 1
  %v3258 = vadd.f32 %v3256, %v3257
  %v3259 = vadd.f32 %v3217, %v3218
  %v3260 = vrot.slane %v3259, 4
  %v3261 = vadd.f32 %v3259, %v3260
  %v3262 = vrot.slane %v3261, 2
  %v3263 = vadd.f32 %v3261, %v3262
  %v3264 = vrot.slane %v3263, 1
  %v3265 = vadd.f32 %v3263, %v3264
  %v3266 = vadd.f32 %v3219, %v3220
  %v3267 = vrot.slane %v3266, 4
  %v3268 = vadd.f32 %v3266, %v3267
  %v3269 = vrot.slane %v3268, 2
  %v3270 = vadd.f32 %v3268, %v3269
  %v3271 = vrot.slane %v3270, 1
  %v3272 = vadd.f32 %v3270, %v3271
  %v3273 = vadd.f32 %v3221, %v3222
  %v3274 = vrot.slane %v3273, 4
  %v3275 = vadd.f32 %v3273, %v3274
  %v3276 = vrot.slane %v3275, 2
  %v3277 = vadd.f32 %v3275, %v3276
  %v3278 = vrot.slane %v3277, 1
  %v3279 = vadd.f32 %v3277, %v3278
  %v3280 = vadd.f32 %v3223, %v3224
  %v3281 = vrot.slane %v3280, 4
  %v3282 = vadd.f32 %v3280, %v3281
  %v3283 = vrot.slane %v3282, 2
  %v3284 = vadd.f32 %v3282, %v3283
  %v3285 = vrot.slane %v3284, 1
  %v3286 = vadd.f32 %v3284, %v3285
  %v3287 = vadd.f32 %v3225, %v3226
  %v3288 = vrot.slane %v3287, 4
  %v3289 = vadd.f32 %v3287, %v3288
  %v3290 = vrot.slane %v3289, 2
  %v3291 = vadd.f32 %v3289, %v3290
  %v3292 = vrot.slane %v3291, 1
  %v3293 = vadd.f32 %v3291, %v3292
  %v3294 = vadd.f32 %v3227, %v3228
  %v3295 = vrot.slane %v3294, 4
  %v3296 = vadd.f32 %v3294, %v3295
  %v3297 = vrot.slane %v3296, 2
  %v3298 = vadd.f32 %v3296, %v3297
  %v3299 = vrot.slane %v3298, 1
  %v3300 = vadd.f32 %v3298, %v3299
  %v3301 = vadd.f32 %v3229, %v3230
  %v3302 = vrot.slane %v3301, 4
  %v3303 = vadd.f32 %v3301, %v3302
  %v3304 = vrot.slane %v3303, 2
  %v3305 = vadd.f32 %v3303, %v3304
  %v3306 = vrot.slane %v3305, 1
  %v3307 = vadd.f32 %v3305, %v3306
  %v3308 = vadd.f32 %v3231, %v3232
  %v3309 = vrot.slane %v3308, 4
  %v3310 = vadd.f32 %v3308, %v3309
  %v3311 = vrot.slane %v3310, 2
  %v3312 = vadd.f32 %v3310, %v3311
  %v3313 = vrot.slane %v3312, 1
  %v3314 = vadd.f32 %v3312, %v3313
  %v3315 = vadd.f32 %v3233, %v3234
  %v3316 = vrot.slane %v3315, 4
  %v3317 = vadd.f32 %v3315, %v3316
  %v3318 = vrot.slane %v3317, 2
  %v3319 = vadd.f32 %v3317, %v3318
  %v3320 = vrot.slane %v3319, 1
  %v3321 = vadd.f32 %v3319, %v3320
  %v3322 = vadd.f32 %v3235, %v3236
  %v3323 = vrot.slane %v3322, 4
  %v3324 = vadd.f32 %v3322, %v3323
  %v3325 = vrot.slane %v3324, 2
  %v3326 = vadd.f32 %v3324, %v3325
  %v3327 = vrot.slane %v3326, 1
  %v3328 = vadd.f32 %v3326, %v3327
  %v3329 = vadd.f32 %v3237, %v3238
  %v3330 = vrot.slane %v3329, 4
  %v3331 = vadd.f32 %v3329, %v3330
  %v3332 = vrot.slane %v3331, 2
  %v3333 = vadd.f32 %v3331, %v3332
  %v3334 = vrot.slane %v3333, 1
  %v3335 = vadd.f32 %v3333, %v3334
  %v3336 = vadd.f32 %v3239, %v3240
  %v3337 = vrot.slane %v3336, 4
  %v3338 = vadd.f32 %v3336, %v3337
  %v3339 = vrot.slane %v3338, 2
  %v3340 = vadd.f32 %v3338, %v3339
  %v3341 = vrot.slane %v3340, 1
  %v3342 = vadd.f32 %v3340, %v3341
  %v3343 = vadd.f32 %v3241, %v3242
  %v3344 = vrot.slane %v3343, 4
  %v3345 = vadd.f32 %v3343, %v3344
  %v3346 = vrot.slane %v3345, 2
  %v3347 = vadd.f32 %v3345, %v3346
  %v3348 = vrot.slane %v3347, 1
  %v3349 = vadd.f32 %v3347, %v3348
  %v3350 = vadd.f32 %v3243, %v3244
  %v3351 = vrot.slane %v3350, 4
  %v3352 = vadd.f32 %v3350, %v3351
  %v3353 = vrot.slane %v3352, 2
  %v3354 = vadd.f32 %v3352, %v3353
  %v3355 = vrot.slane %v3354, 1
  %v3356 = vadd.f32 %v3354, %v3355
  %s3357 = scalar_lea.vmem %s3, 32
  %3358 = vst [vmem:[%s3357] sm:$0x1] %v3251
  %3359 = vst [vmem:[%s3357 + $0x1] sm:$0x1] %v3258
  %3360 = vst [vmem:[%s3357 + $0x2] sm:$0x1] %v3265
  %3361 = vst [vmem:[%s3357 + $0x3] sm:$0x1] %v3272
  %3362 = vst [vmem:[%s3357 + $0x4] sm:$0x1] %v3279
  %3363 = vst [vmem:[%s3357 + $0x5] sm:$0x1] %v3286
  %3364 = vst [vmem:[%s3357 + $0x6] sm:$0x1] %v3293
  %3365 = vst [vmem:[%s3357 + $0x7] sm:$0x1] %v3300
  %3366 = vst [vmem:[%s3357 + $0x8] sm:$0x1] %v3307
  %3367 = vst [vmem:[%s3357 + $0x9] sm:$0x1] %v3314
  %3368 = vst [vmem:[%s3357 + $0xa] sm:$0x1] %v3321
  %3369 = vst [vmem:[%s3357 + $0xb] sm:$0x1] %v3328
  %3370 = vst [vmem:[%s3357 + $0xc] sm:$0x1] %v3335
  %3371 = vst [vmem:[%s3357 + $0xd] sm:$0x1] %v3342
  %3372 = vst [vmem:[%s3357 + $0xe] sm:$0x1] %v3349
  %3373 = vst [vmem:[%s3357 + $0xf] sm:$0x1] %v3356
  %v3374 = vmul.f32 %v2860, %v2834
  %v3375 = vmul.f32 %v2861, %v2835
  %v3376 = vmul.f32 %v2862, %v2834
  %v3377 = vmul.f32 %v2863, %v2835
  %v3378 = vmul.f32 %v2864, %v2834
  %v3379 = vmul.f32 %v2865, %v2835
  %v3380 = vmul.f32 %v2866, %v2834
  %v3381 = vmul.f32 %v2867, %v2835
  %v3382 = vmul.f32 %v2868, %v2834
  %v3383 = vmul.f32 %v2869, %v2835
  %v3384 = vmul.f32 %v2870, %v2834
  %v3385 = vmul.f32 %v2871, %v2835
  %v3386 = vmul.f32 %v2872, %v2834
  %v3387 = vmul.f32 %v2873, %v2835
  %v3388 = vmul.f32 %v2874, %v2834
  %v3389 = vmul.f32 %v2875, %v2835
  %v3390 = vmul.f32 %v2876, %v2834
  %v3391 = vmul.f32 %v2877, %v2835
  %v3392 = vmul.f32 %v2878, %v2834
  %v3393 = vmul.f32 %v2879, %v2835
  %v3394 = vmul.f32 %v2880, %v2834
  %v3395 = vmul.f32 %v2881, %v2835
  %v3396 = vmul.f32 %v2882, %v2834
  %v3397 = vmul.f32 %v2883, %v2835
  %v3398 = vmul.f32 %v2884, %v2834
  %v3399 = vmul.f32 %v2885, %v2835
  %v3400 = vmul.f32 %v2886, %v2834
  %v3401 = vmul.f32 %v2887, %v2835
  %v3402 = vmul.f32 %v2888, %v2834
  %v3403 = vmul.f32 %v2889, %v2835
  %v3404 = vmul.f32 %v2890, %v2834
  %v3405 = vmul.f32 %v2891, %v2835
  %v3406 = vadd.f32 %v3374, %v3375
  %v3407 = vrot.slane %v3406, 4
  %v3408 = vadd.f32 %v3406, %v3407
  %v3409 = vrot.slane %v3408, 2
  %v3410 = vadd.f32 %v3408, %v3409
  %v3411 = vrot.slane %v3410, 1
  %v3412 = vadd.f32 %v3410, %v3411
  %v3413 = vadd.f32 %v3376, %v3377
  %v3414 = vrot.slane %v3413, 4
  %v3415 = vadd.f32 %v3413, %v3414
  %v3416 = vrot.slane %v3415, 2
  %v3417 = vadd.f32 %v3415, %v3416
  %v3418 = vrot.slane %v3417, 1
  %v3419 = vadd.f32 %v3417, %v3418
  %v3420 = vadd.f32 %v3378, %v3379
  %v3421 = vrot.slane %v3420, 4
  %v3422 = vadd.f32 %v3420, %v3421
  %v3423 = vrot.slane %v3422, 2
  %v3424 = vadd.f32 %v3422, %v3423
  %v3425 = vrot.slane %v3424, 1
  %v3426 = vadd.f32 %v3424, %v3425
  %v3427 = vadd.f32 %v3380, %v3381
  %v3428 = vrot.slane %v3427, 4
  %v3429 = vadd.f32 %v3427, %v3428
  %v3430 = vrot.slane %v3429, 2
  %v3431 = vadd.f32 %v3429, %v3430
  %v3432 = vrot.slane %v3431, 1
  %v3433 = vadd.f32 %v3431, %v3432
  %v3434 = vadd.f32 %v3382, %v3383
  %v3435 = vrot.slane %v3434, 4
  %v3436 = vadd.f32 %v3434, %v3435
  %v3437 = vrot.slane %v3436, 2
  %v3438 = vadd.f32 %v3436, %v3437
  %v3439 = vrot.slane %v3438, 1
  %v3440 = vadd.f32 %v3438, %v3439
  %v3441 = vadd.f32 %v3384, %v3385
  %v3442 = vrot.slane %v3441, 4
  %v3443 = vadd.f32 %v3441, %v3442
  %v3444 = vrot.slane %v3443, 2
  %v3445 = vadd.f32 %v3443, %v3444
  %v3446 = vrot.slane %v3445, 1
  %v3447 = vadd.f32 %v3445, %v3446
  %v3448 = vadd.f32 %v3386, %v3387
  %v3449 = vrot.slane %v3448, 4
  %v3450 = vadd.f32 %v3448, %v3449
  %v3451 = vrot.slane %v3450, 2
  %v3452 = vadd.f32 %v3450, %v3451
  %v3453 = vrot.slane %v3452, 1
  %v3454 = vadd.f32 %v3452, %v3453
  %v3455 = vadd.f32 %v3388, %v3389
  %v3456 = vrot.slane %v3455, 4
  %v3457 = vadd.f32 %v3455, %v3456
  %v3458 = vrot.slane %v3457, 2
  %v3459 = vadd.f32 %v3457, %v3458
  %v3460 = vrot.slane %v3459, 1
  %v3461 = vadd.f32 %v3459, %v3460
  %v3462 = vadd.f32 %v3390, %v3391
  %v3463 = vrot.slane %v3462, 4
  %v3464 = vadd.f32 %v3462, %v3463
  %v3465 = vrot.slane %v3464, 2
  %v3466 = vadd.f32 %v3464, %v3465
  %v3467 = vrot.slane %v3466, 1
  %v3468 = vadd.f32 %v3466, %v3467
  %v3469 = vadd.f32 %v3392, %v3393
  %v3470 = vrot.slane %v3469, 4
  %v3471 = vadd.f32 %v3469, %v3470
  %v3472 = vrot.slane %v3471, 2
  %v3473 = vadd.f32 %v3471, %v3472
  %v3474 = vrot.slane %v3473, 1
  %v3475 = vadd.f32 %v3473, %v3474
  %v3476 = vadd.f32 %v3394, %v3395
  %v3477 = vrot.slane %v3476, 4
  %v3478 = vadd.f32 %v3476, %v3477
  %v3479 = vrot.slane %v3478, 2
  %v3480 = vadd.f32 %v3478, %v3479
  %v3481 = vrot.slane %v3480, 1
  %v3482 = vadd.f32 %v3480, %v3481
  %v3483 = vadd.f32 %v3396, %v3397
  %v3484 = vrot.slane %v3483, 4
  %v3485 = vadd.f32 %v3483, %v3484
  %v3486 = vrot.slane %v3485, 2
  %v3487 = vadd.f32 %v3485, %v3486
  %v3488 = vrot.slane %v3487, 1
  %v3489 = vadd.f32 %v3487, %v3488
  %v3490 = vadd.f32 %v3398, %v3399
  %v3491 = vrot.slane %v3490, 4
  %v3492 = vadd.f32 %v3490, %v3491
  %v3493 = vrot.slane %v3492, 2
  %v3494 = vadd.f32 %v3492, %v3493
  %v3495 = vrot.slane %v3494, 1
  %v3496 = vadd.f32 %v3494, %v3495
  %v3497 = vadd.f32 %v3400, %v3401
  %v3498 = vrot.slane %v3497, 4
  %v3499 = vadd.f32 %v3497, %v3498
  %v3500 = vrot.slane %v3499, 2
  %v3501 = vadd.f32 %v3499, %v3500
  %v3502 = vrot.slane %v3501, 1
  %v3503 = vadd.f32 %v3501, %v3502
  %v3504 = vadd.f32 %v3402, %v3403
  %v3505 = vrot.slane %v3504, 4
  %v3506 = vadd.f32 %v3504, %v3505
  %v3507 = vrot.slane %v3506, 2
  %v3508 = vadd.f32 %v3506, %v3507
  %v3509 = vrot.slane %v3508, 1
  %v3510 = vadd.f32 %v3508, %v3509
  %v3511 = vadd.f32 %v3404, %v3405
  %v3512 = vrot.slane %v3511, 4
  %v3513 = vadd.f32 %v3511, %v3512
  %v3514 = vrot.slane %v3513, 2
  %v3515 = vadd.f32 %v3513, %v3514
  %v3516 = vrot.slane %v3515, 1
  %v3517 = vadd.f32 %v3515, %v3516
  %s3518 = scalar_lea.vmem %s3, 48
  %3519 = vst [vmem:[%s3518] sm:$0x1] %v3412
  %3520 = vst [vmem:[%s3518 + $0x1] sm:$0x1] %v3419
  %3521 = vst [vmem:[%s3518 + $0x2] sm:$0x1] %v3426
  %3522 = vst [vmem:[%s3518 + $0x3] sm:$0x1] %v3433
  %3523 = vst [vmem:[%s3518 + $0x4] sm:$0x1] %v3440
  %3524 = vst [vmem:[%s3518 + $0x5] sm:$0x1] %v3447
  %3525 = vst [vmem:[%s3518 + $0x6] sm:$0x1] %v3454
  %3526 = vst [vmem:[%s3518 + $0x7] sm:$0x1] %v3461
  %3527 = vst [vmem:[%s3518 + $0x8] sm:$0x1] %v3468
  %3528 = vst [vmem:[%s3518 + $0x9] sm:$0x1] %v3475
  %3529 = vst [vmem:[%s3518 + $0xa] sm:$0x1] %v3482
  %3530 = vst [vmem:[%s3518 + $0xb] sm:$0x1] %v3489
  %3531 = vst [vmem:[%s3518 + $0xc] sm:$0x1] %v3496
  %3532 = vst [vmem:[%s3518 + $0xd] sm:$0x1] %v3503
  %3533 = vst [vmem:[%s3518 + $0xe] sm:$0x1] %v3510
  %3534 = vst [vmem:[%s3518 + $0xf] sm:$0x1] %v3517
  %v3535 = vmul.f32 %v2860, %v2836
  %v3536 = vmul.f32 %v2861, %v2837
  %v3537 = vmul.f32 %v2862, %v2836
  %v3538 = vmul.f32 %v2863, %v2837
  %v3539 = vmul.f32 %v2864, %v2836
  %v3540 = vmul.f32 %v2865, %v2837
  %v3541 = vmul.f32 %v2866, %v2836
  %v3542 = vmul.f32 %v2867, %v2837
  %v3543 = vmul.f32 %v2868, %v2836
  %v3544 = vmul.f32 %v2869, %v2837
  %v3545 = vmul.f32 %v2870, %v2836
  %v3546 = vmul.f32 %v2871, %v2837
  %v3547 = vmul.f32 %v2872, %v2836
  %v3548 = vmul.f32 %v2873, %v2837
  %v3549 = vmul.f32 %v2874, %v2836
  %v3550 = vmul.f32 %v2875, %v2837
  %v3551 = vmul.f32 %v2876, %v2836
  %v3552 = vmul.f32 %v2877, %v2837
  %v3553 = vmul.f32 %v2878, %v2836
  %v3554 = vmul.f32 %v2879, %v2837
  %v3555 = vmul.f32 %v2880, %v2836
  %v3556 = vmul.f32 %v2881, %v2837
  %v3557 = vmul.f32 %v2882, %v2836
  %v3558 = vmul.f32 %v2883, %v2837
  %v3559 = vmul.f32 %v2884, %v2836
  %v3560 = vmul.f32 %v2885, %v2837
  %v3561 = vmul.f32 %v2886, %v2836
  %v3562 = vmul.f32 %v2887, %v2837
  %v3563 = vmul.f32 %v2888, %v2836
  %v3564 = vmul.f32 %v2889, %v2837
  %v3565 = vmul.f32 %v2890, %v2836
  %v3566 = vmul.f32 %v2891, %v2837
  %v3567 = vadd.f32 %v3535, %v3536
  %v3568 = vrot.slane %v3567, 4
  %v3569 = vadd.f32 %v3567, %v3568
  %v3570 = vrot.slane %v3569, 2
  %v3571 = vadd.f32 %v3569, %v3570
  %v3572 = vrot.slane %v3571, 1
  %v3573 = vadd.f32 %v3571, %v3572
  %v3574 = vadd.f32 %v3537, %v3538
  %v3575 = vrot.slane %v3574, 4
  %v3576 = vadd.f32 %v3574, %v3575
  %v3577 = vrot.slane %v3576, 2
  %v3578 = vadd.f32 %v3576, %v3577
  %v3579 = vrot.slane %v3578, 1
  %v3580 = vadd.f32 %v3578, %v3579
  %v3581 = vadd.f32 %v3539, %v3540
  %v3582 = vrot.slane %v3581, 4
  %v3583 = vadd.f32 %v3581, %v3582
  %v3584 = vrot.slane %v3583, 2
  %v3585 = vadd.f32 %v3583, %v3584
  %v3586 = vrot.slane %v3585, 1
  %v3587 = vadd.f32 %v3585, %v3586
  %v3588 = vadd.f32 %v3541, %v3542
  %v3589 = vrot.slane %v3588, 4
  %v3590 = vadd.f32 %v3588, %v3589
  %v3591 = vrot.slane %v3590, 2
  %v3592 = vadd.f32 %v3590, %v3591
  %v3593 = vrot.slane %v3592, 1
  %v3594 = vadd.f32 %v3592, %v3593
  %v3595 = vadd.f32 %v3543, %v3544
  %v3596 = vrot.slane %v3595, 4
  %v3597 = vadd.f32 %v3595, %v3596
  %v3598 = vrot.slane %v3597, 2
  %v3599 = vadd.f32 %v3597, %v3598
  %v3600 = vrot.slane %v3599, 1
  %v3601 = vadd.f32 %v3599, %v3600
  %v3602 = vadd.f32 %v3545, %v3546
  %v3603 = vrot.slane %v3602, 4
  %v3604 = vadd.f32 %v3602, %v3603
  %v3605 = vrot.slane %v3604, 2
  %v3606 = vadd.f32 %v3604, %v3605
  %v3607 = vrot.slane %v3606, 1
  %v3608 = vadd.f32 %v3606, %v3607
  %v3609 = vadd.f32 %v3547, %v3548
  %v3610 = vrot.slane %v3609, 4
  %v3611 = vadd.f32 %v3609, %v3610
  %v3612 = vrot.slane %v3611, 2
  %v3613 = vadd.f32 %v3611, %v3612
  %v3614 = vrot.slane %v3613, 1
  %v3615 = vadd.f32 %v3613, %v3614
  %v3616 = vadd.f32 %v3549, %v3550
  %v3617 = vrot.slane %v3616, 4
  %v3618 = vadd.f32 %v3616, %v3617
  %v3619 = vrot.slane %v3618, 2
  %v3620 = vadd.f32 %v3618, %v3619
  %v3621 = vrot.slane %v3620, 1
  %v3622 = vadd.f32 %v3620, %v3621
  %v3623 = vadd.f32 %v3551, %v3552
  %v3624 = vrot.slane %v3623, 4
  %v3625 = vadd.f32 %v3623, %v3624
  %v3626 = vrot.slane %v3625, 2
  %v3627 = vadd.f32 %v3625, %v3626
  %v3628 = vrot.slane %v3627, 1
  %v3629 = vadd.f32 %v3627, %v3628
  %v3630 = vadd.f32 %v3553, %v3554
  %v3631 = vrot.slane %v3630, 4
  %v3632 = vadd.f32 %v3630, %v3631
  %v3633 = vrot.slane %v3632, 2
  %v3634 = vadd.f32 %v3632, %v3633
  %v3635 = vrot.slane %v3634, 1
  %v3636 = vadd.f32 %v3634, %v3635
  %v3637 = vadd.f32 %v3555, %v3556
  %v3638 = vrot.slane %v3637, 4
  %v3639 = vadd.f32 %v3637, %v3638
  %v3640 = vrot.slane %v3639, 2
  %v3641 = vadd.f32 %v3639, %v3640
  %v3642 = vrot.slane %v3641, 1
  %v3643 = vadd.f32 %v3641, %v3642
  %v3644 = vadd.f32 %v3557, %v3558
  %v3645 = vrot.slane %v3644, 4
  %v3646 = vadd.f32 %v3644, %v3645
  %v3647 = vrot.slane %v3646, 2
  %v3648 = vadd.f32 %v3646, %v3647
  %v3649 = vrot.slane %v3648, 1
  %v3650 = vadd.f32 %v3648, %v3649
  %v3651 = vadd.f32 %v3559, %v3560
  %v3652 = vrot.slane %v3651, 4
  %v3653 = vadd.f32 %v3651, %v3652
  %v3654 = vrot.slane %v3653, 2
  %v3655 = vadd.f32 %v3653, %v3654
  %v3656 = vrot.slane %v3655, 1
  %v3657 = vadd.f32 %v3655, %v3656
  %v3658 = vadd.f32 %v3561, %v3562
  %v3659 = vrot.slane %v3658, 4
  %v3660 = vadd.f32 %v3658, %v3659
  %v3661 = vrot.slane %v3660, 2
  %v3662 = vadd.f32 %v3660, %v3661
  %v3663 = vrot.slane %v3662, 1
  %v3664 = vadd.f32 %v3662, %v3663
  %v3665 = vadd.f32 %v3563, %v3564
  %v3666 = vrot.slane %v3665, 4
  %v3667 = vadd.f32 %v3665, %v3666
  %v3668 = vrot.slane %v3667, 2
  %v3669 = vadd.f32 %v3667, %v3668
  %v3670 = vrot.slane %v3669, 1
  %v3671 = vadd.f32 %v3669, %v3670
  %v3672 = vadd.f32 %v3565, %v3566
  %v3673 = vrot.slane %v3672, 4
  %v3674 = vadd.f32 %v3672, %v3673
  %v3675 = vrot.slane %v3674, 2
  %v3676 = vadd.f32 %v3674, %v3675
  %v3677 = vrot.slane %v3676, 1
  %v3678 = vadd.f32 %v3676, %v3677
  %s3679 = scalar_lea.vmem %s3, 64
  %3680 = vst [vmem:[%s3679] sm:$0x1] %v3573
  %3681 = vst [vmem:[%s3679 + $0x1] sm:$0x1] %v3580
  %3682 = vst [vmem:[%s3679 + $0x2] sm:$0x1] %v3587
  %3683 = vst [vmem:[%s3679 + $0x3] sm:$0x1] %v3594
  %3684 = vst [vmem:[%s3679 + $0x4] sm:$0x1] %v3601
  %3685 = vst [vmem:[%s3679 + $0x5] sm:$0x1] %v3608
  %3686 = vst [vmem:[%s3679 + $0x6] sm:$0x1] %v3615
  %3687 = vst [vmem:[%s3679 + $0x7] sm:$0x1] %v3622
  %3688 = vst [vmem:[%s3679 + $0x8] sm:$0x1] %v3629
  %3689 = vst [vmem:[%s3679 + $0x9] sm:$0x1] %v3636
  %3690 = vst [vmem:[%s3679 + $0xa] sm:$0x1] %v3643
  %3691 = vst [vmem:[%s3679 + $0xb] sm:$0x1] %v3650
  %3692 = vst [vmem:[%s3679 + $0xc] sm:$0x1] %v3657
  %3693 = vst [vmem:[%s3679 + $0xd] sm:$0x1] %v3664
  %3694 = vst [vmem:[%s3679 + $0xe] sm:$0x1] %v3671
  %3695 = vst [vmem:[%s3679 + $0xf] sm:$0x1] %v3678
  %v3696 = vmul.f32 %v2860, %v2838
  %v3697 = vmul.f32 %v2861, %v2839
  %v3698 = vmul.f32 %v2862, %v2838
  %v3699 = vmul.f32 %v2863, %v2839
  %v3700 = vmul.f32 %v2864, %v2838
  %v3701 = vmul.f32 %v2865, %v2839
  %v3702 = vmul.f32 %v2866, %v2838
  %v3703 = vmul.f32 %v2867, %v2839
  %v3704 = vmul.f32 %v2868, %v2838
  %v3705 = vmul.f32 %v2869, %v2839
  %v3706 = vmul.f32 %v2870, %v2838
  %v3707 = vmul.f32 %v2871, %v2839
  %v3708 = vmul.f32 %v2872, %v2838
  %v3709 = vmul.f32 %v2873, %v2839
  %v3710 = vmul.f32 %v2874, %v2838
  %v3711 = vmul.f32 %v2875, %v2839
  %v3712 = vmul.f32 %v2876, %v2838
  %v3713 = vmul.f32 %v2877, %v2839
  %v3714 = vmul.f32 %v2878, %v2838
  %v3715 = vmul.f32 %v2879, %v2839
  %v3716 = vmul.f32 %v2880, %v2838
  %v3717 = vmul.f32 %v2881, %v2839
  %v3718 = vmul.f32 %v2882, %v2838
  %v3719 = vmul.f32 %v2883, %v2839
  %v3720 = vmul.f32 %v2884, %v2838
  %v3721 = vmul.f32 %v2885, %v2839
  %v3722 = vmul.f32 %v2886, %v2838
  %v3723 = vmul.f32 %v2887, %v2839
  %v3724 = vmul.f32 %v2888, %v2838
  %v3725 = vmul.f32 %v2889, %v2839
  %v3726 = vmul.f32 %v2890, %v2838
  %v3727 = vmul.f32 %v2891, %v2839
  %v3728 = vadd.f32 %v3696, %v3697
  %v3729 = vrot.slane %v3728, 4
  %v3730 = vadd.f32 %v3728, %v3729
  %v3731 = vrot.slane %v3730, 2
  %v3732 = vadd.f32 %v3730, %v3731
  %v3733 = vrot.slane %v3732, 1
  %v3734 = vadd.f32 %v3732, %v3733
  %v3735 = vadd.f32 %v3698, %v3699
  %v3736 = vrot.slane %v3735, 4
  %v3737 = vadd.f32 %v3735, %v3736
  %v3738 = vrot.slane %v3737, 2
  %v3739 = vadd.f32 %v3737, %v3738
  %v3740 = vrot.slane %v3739, 1
  %v3741 = vadd.f32 %v3739, %v3740
  %v3742 = vadd.f32 %v3700, %v3701
  %v3743 = vrot.slane %v3742, 4
  %v3744 = vadd.f32 %v3742, %v3743
  %v3745 = vrot.slane %v3744, 2
  %v3746 = vadd.f32 %v3744, %v3745
  %v3747 = vrot.slane %v3746, 1
  %v3748 = vadd.f32 %v3746, %v3747
  %v3749 = vadd.f32 %v3702, %v3703
  %v3750 = vrot.slane %v3749, 4
  %v3751 = vadd.f32 %v3749, %v3750
  %v3752 = vrot.slane %v3751, 2
  %v3753 = vadd.f32 %v3751, %v3752
  %v3754 = vrot.slane %v3753, 1
  %v3755 = vadd.f32 %v3753, %v3754
  %v3756 = vadd.f32 %v3704, %v3705
  %v3757 = vrot.slane %v3756, 4
  %v3758 = vadd.f32 %v3756, %v3757
  %v3759 = vrot.slane %v3758, 2
  %v3760 = vadd.f32 %v3758, %v3759
  %v3761 = vrot.slane %v3760, 1
  %v3762 = vadd.f32 %v3760, %v3761
  %v3763 = vadd.f32 %v3706, %v3707
  %v3764 = vrot.slane %v3763, 4
  %v3765 = vadd.f32 %v3763, %v3764
  %v3766 = vrot.slane %v3765, 2
  %v3767 = vadd.f32 %v3765, %v3766
  %v3768 = vrot.slane %v3767, 1
  %v3769 = vadd.f32 %v3767, %v3768
  %v3770 = vadd.f32 %v3708, %v3709
  %v3771 = vrot.slane %v3770, 4
  %v3772 = vadd.f32 %v3770, %v3771
  %v3773 = vrot.slane %v3772, 2
  %v3774 = vadd.f32 %v3772, %v3773
  %v3775 = vrot.slane %v3774, 1
  %v3776 = vadd.f32 %v3774, %v3775
  %v3777 = vadd.f32 %v3710, %v3711
  %v3778 = vrot.slane %v3777, 4
  %v3779 = vadd.f32 %v3777, %v3778
  %v3780 = vrot.slane %v3779, 2
  %v3781 = vadd.f32 %v3779, %v3780
  %v3782 = vrot.slane %v3781, 1
  %v3783 = vadd.f32 %v3781, %v3782
  %v3784 = vadd.f32 %v3712, %v3713
  %v3785 = vrot.slane %v3784, 4
  %v3786 = vadd.f32 %v3784, %v3785
  %v3787 = vrot.slane %v3786, 2
  %v3788 = vadd.f32 %v3786, %v3787
  %v3789 = vrot.slane %v3788, 1
  %v3790 = vadd.f32 %v3788, %v3789
  %v3791 = vadd.f32 %v3714, %v3715
  %v3792 = vrot.slane %v3791, 4
  %v3793 = vadd.f32 %v3791, %v3792
  %v3794 = vrot.slane %v3793, 2
  %v3795 = vadd.f32 %v3793, %v3794
  %v3796 = vrot.slane %v3795, 1
  %v3797 = vadd.f32 %v3795, %v3796
  %v3798 = vadd.f32 %v3716, %v3717
  %v3799 = vrot.slane %v3798, 4
  %v3800 = vadd.f32 %v3798, %v3799
  %v3801 = vrot.slane %v3800, 2
  %v3802 = vadd.f32 %v3800, %v3801
  %v3803 = vrot.slane %v3802, 1
  %v3804 = vadd.f32 %v3802, %v3803
  %v3805 = vadd.f32 %v3718, %v3719
  %v3806 = vrot.slane %v3805, 4
  %v3807 = vadd.f32 %v3805, %v3806
  %v3808 = vrot.slane %v3807, 2
  %v3809 = vadd.f32 %v3807, %v3808
  %v3810 = vrot.slane %v3809, 1
  %v3811 = vadd.f32 %v3809, %v3810
  %v3812 = vadd.f32 %v3720, %v3721
  %v3813 = vrot.slane %v3812, 4
  %v3814 = vadd.f32 %v3812, %v3813
  %v3815 = vrot.slane %v3814, 2
  %v3816 = vadd.f32 %v3814, %v3815
  %v3817 = vrot.slane %v3816, 1
  %v3818 = vadd.f32 %v3816, %v3817
  %v3819 = vadd.f32 %v3722, %v3723
  %v3820 = vrot.slane %v3819, 4
  %v3821 = vadd.f32 %v3819, %v3820
  %v3822 = vrot.slane %v3821, 2
  %v3823 = vadd.f32 %v3821, %v3822
  %v3824 = vrot.slane %v3823, 1
  %v3825 = vadd.f32 %v3823, %v3824
  %v3826 = vadd.f32 %v3724, %v3725
  %v3827 = vrot.slane %v3826, 4
  %v3828 = vadd.f32 %v3826, %v3827
  %v3829 = vrot.slane %v3828, 2
  %v3830 = vadd.f32 %v3828, %v3829
  %v3831 = vrot.slane %v3830, 1
  %v3832 = vadd.f32 %v3830, %v3831
  %v3833 = vadd.f32 %v3726, %v3727
  %v3834 = vrot.slane %v3833, 4
  %v3835 = vadd.f32 %v3833, %v3834
  %v3836 = vrot.slane %v3835, 2
  %v3837 = vadd.f32 %v3835, %v3836
  %v3838 = vrot.slane %v3837, 1
  %v3839 = vadd.f32 %v3837, %v3838
  %s3840 = scalar_lea.vmem %s3, 80
  %3841 = vst [vmem:[%s3840] sm:$0x1] %v3734
  %3842 = vst [vmem:[%s3840 + $0x1] sm:$0x1] %v3741
  %3843 = vst [vmem:[%s3840 + $0x2] sm:$0x1] %v3748
  %3844 = vst [vmem:[%s3840 + $0x3] sm:$0x1] %v3755
  %3845 = vst [vmem:[%s3840 + $0x4] sm:$0x1] %v3762
  %3846 = vst [vmem:[%s3840 + $0x5] sm:$0x1] %v3769
  %3847 = vst [vmem:[%s3840 + $0x6] sm:$0x1] %v3776
  %3848 = vst [vmem:[%s3840 + $0x7] sm:$0x1] %v3783
  %3849 = vst [vmem:[%s3840 + $0x8] sm:$0x1] %v3790
  %3850 = vst [vmem:[%s3840 + $0x9] sm:$0x1] %v3797
  %3851 = vst [vmem:[%s3840 + $0xa] sm:$0x1] %v3804
  %3852 = vst [vmem:[%s3840 + $0xb] sm:$0x1] %v3811
  %3853 = vst [vmem:[%s3840 + $0xc] sm:$0x1] %v3818
  %3854 = vst [vmem:[%s3840 + $0xd] sm:$0x1] %v3825
  %3855 = vst [vmem:[%s3840 + $0xe] sm:$0x1] %v3832
  %3856 = vst [vmem:[%s3840 + $0xf] sm:$0x1] %v3839
  %v3857 = vmul.f32 %v2860, %v2840
  %v3858 = vmul.f32 %v2861, %v2841
  %v3859 = vmul.f32 %v2862, %v2840
  %v3860 = vmul.f32 %v2863, %v2841
  %v3861 = vmul.f32 %v2864, %v2840
  %v3862 = vmul.f32 %v2865, %v2841
  %v3863 = vmul.f32 %v2866, %v2840
  %v3864 = vmul.f32 %v2867, %v2841
  %v3865 = vmul.f32 %v2868, %v2840
  %v3866 = vmul.f32 %v2869, %v2841
  %v3867 = vmul.f32 %v2870, %v2840
  %v3868 = vmul.f32 %v2871, %v2841
  %v3869 = vmul.f32 %v2872, %v2840
  %v3870 = vmul.f32 %v2873, %v2841
  %v3871 = vmul.f32 %v2874, %v2840
  %v3872 = vmul.f32 %v2875, %v2841
  %v3873 = vmul.f32 %v2876, %v2840
  %v3874 = vmul.f32 %v2877, %v2841
  %v3875 = vmul.f32 %v2878, %v2840
  %v3876 = vmul.f32 %v2879, %v2841
  %v3877 = vmul.f32 %v2880, %v2840
  %v3878 = vmul.f32 %v2881, %v2841
  %v3879 = vmul.f32 %v2882, %v2840
  %v3880 = vmul.f32 %v2883, %v2841
  %v3881 = vmul.f32 %v2884, %v2840
  %v3882 = vmul.f32 %v2885, %v2841
  %v3883 = vmul.f32 %v2886, %v2840
  %v3884 = vmul.f32 %v2887, %v2841
  %v3885 = vmul.f32 %v2888, %v2840
  %v3886 = vmul.f32 %v2889, %v2841
  %v3887 = vmul.f32 %v2890, %v2840
  %v3888 = vmul.f32 %v2891, %v2841
  %v3889 = vadd.f32 %v3857, %v3858
  %v3890 = vrot.slane %v3889, 4
  %v3891 = vadd.f32 %v3889, %v3890
  %v3892 = vrot.slane %v3891, 2
  %v3893 = vadd.f32 %v3891, %v3892
  %v3894 = vrot.slane %v3893, 1
  %v3895 = vadd.f32 %v3893, %v3894
  %v3896 = vadd.f32 %v3859, %v3860
  %v3897 = vrot.slane %v3896, 4
  %v3898 = vadd.f32 %v3896, %v3897
  %v3899 = vrot.slane %v3898, 2
  %v3900 = vadd.f32 %v3898, %v3899
  %v3901 = vrot.slane %v3900, 1
  %v3902 = vadd.f32 %v3900, %v3901
  %v3903 = vadd.f32 %v3861, %v3862
  %v3904 = vrot.slane %v3903, 4
  %v3905 = vadd.f32 %v3903, %v3904
  %v3906 = vrot.slane %v3905, 2
  %v3907 = vadd.f32 %v3905, %v3906
  %v3908 = vrot.slane %v3907, 1
  %v3909 = vadd.f32 %v3907, %v3908
  %v3910 = vadd.f32 %v3863, %v3864
  %v3911 = vrot.slane %v3910, 4
  %v3912 = vadd.f32 %v3910, %v3911
  %v3913 = vrot.slane %v3912, 2
  %v3914 = vadd.f32 %v3912, %v3913
  %v3915 = vrot.slane %v3914, 1
  %v3916 = vadd.f32 %v3914, %v3915
  %v3917 = vadd.f32 %v3865, %v3866
  %v3918 = vrot.slane %v3917, 4
  %v3919 = vadd.f32 %v3917, %v3918
  %v3920 = vrot.slane %v3919, 2
  %v3921 = vadd.f32 %v3919, %v3920
  %v3922 = vrot.slane %v3921, 1
  %v3923 = vadd.f32 %v3921, %v3922
  %v3924 = vadd.f32 %v3867, %v3868
  %v3925 = vrot.slane %v3924, 4
  %v3926 = vadd.f32 %v3924, %v3925
  %v3927 = vrot.slane %v3926, 2
  %v3928 = vadd.f32 %v3926, %v3927
  %v3929 = vrot.slane %v3928, 1
  %v3930 = vadd.f32 %v3928, %v3929
  %v3931 = vadd.f32 %v3869, %v3870
  %v3932 = vrot.slane %v3931, 4
  %v3933 = vadd.f32 %v3931, %v3932
  %v3934 = vrot.slane %v3933, 2
  %v3935 = vadd.f32 %v3933, %v3934
  %v3936 = vrot.slane %v3935, 1
  %v3937 = vadd.f32 %v3935, %v3936
  %v3938 = vadd.f32 %v3871, %v3872
  %v3939 = vrot.slane %v3938, 4
  %v3940 = vadd.f32 %v3938, %v3939
  %v3941 = vrot.slane %v3940, 2
  %v3942 = vadd.f32 %v3940, %v3941
  %v3943 = vrot.slane %v3942, 1
  %v3944 = vadd.f32 %v3942, %v3943
  %v3945 = vadd.f32 %v3873, %v3874
  %v3946 = vrot.slane %v3945, 4
  %v3947 = vadd.f32 %v3945, %v3946
  %v3948 = vrot.slane %v3947, 2
  %v3949 = vadd.f32 %v3947, %v3948
  %v3950 = vrot.slane %v3949, 1
  %v3951 = vadd.f32 %v3949, %v3950
  %v3952 = vadd.f32 %v3875, %v3876
  %v3953 = vrot.slane %v3952, 4
  %v3954 = vadd.f32 %v3952, %v3953
  %v3955 = vrot.slane %v3954, 2
  %v3956 = vadd.f32 %v3954, %v3955
  %v3957 = vrot.slane %v3956, 1
  %v3958 = vadd.f32 %v3956, %v3957
  %v3959 = vadd.f32 %v3877, %v3878
  %v3960 = vrot.slane %v3959, 4
  %v3961 = vadd.f32 %v3959, %v3960
  %v3962 = vrot.slane %v3961, 2
  %v3963 = vadd.f32 %v3961, %v3962
  %v3964 = vrot.slane %v3963, 1
  %v3965 = vadd.f32 %v3963, %v3964
  %v3966 = vadd.f32 %v3879, %v3880
  %v3967 = vrot.slane %v3966, 4
  %v3968 = vadd.f32 %v3966, %v3967
  %v3969 = vrot.slane %v3968, 2
  %v3970 = vadd.f32 %v3968, %v3969
  %v3971 = vrot.slane %v3970, 1
  %v3972 = vadd.f32 %v3970, %v3971
  %v3973 = vadd.f32 %v3881, %v3882
  %v3974 = vrot.slane %v3973, 4
  %v3975 = vadd.f32 %v3973, %v3974
  %v3976 = vrot.slane %v3975, 2
  %v3977 = vadd.f32 %v3975, %v3976
  %v3978 = vrot.slane %v3977, 1
  %v3979 = vadd.f32 %v3977, %v3978
  %v3980 = vadd.f32 %v3883, %v3884
  %v3981 = vrot.slane %v3980, 4
  %v3982 = vadd.f32 %v3980, %v3981
  %v3983 = vrot.slane %v3982, 2
  %v3984 = vadd.f32 %v3982, %v3983
  %v3985 = vrot.slane %v3984, 1
  %v3986 = vadd.f32 %v3984, %v3985
  %v3987 = vadd.f32 %v3885, %v3886
  %v3988 = vrot.slane %v3987, 4
  %v3989 = vadd.f32 %v3987, %v3988
  %v3990 = vrot.slane %v3989, 2
  %v3991 = vadd.f32 %v3989, %v3990
  %v3992 = vrot.slane %v3991, 1
  %v3993 = vadd.f32 %v3991, %v3992
  %v3994 = vadd.f32 %v3887, %v3888
  %v3995 = vrot.slane %v3994, 4
  %v3996 = vadd.f32 %v3994, %v3995
  %v3997 = vrot.slane %v3996, 2
  %v3998 = vadd.f32 %v3996, %v3997
  %v3999 = vrot.slane %v3998, 1
  %v4000 = vadd.f32 %v3998, %v3999
  %s4001 = scalar_lea.vmem %s3, 96
  %4002 = vst [vmem:[%s4001] sm:$0x1] %v3895
  %4003 = vst [vmem:[%s4001 + $0x1] sm:$0x1] %v3902
  %4004 = vst [vmem:[%s4001 + $0x2] sm:$0x1] %v3909
  %4005 = vst [vmem:[%s4001 + $0x3] sm:$0x1] %v3916
  %4006 = vst [vmem:[%s4001 + $0x4] sm:$0x1] %v3923
  %4007 = vst [vmem:[%s4001 + $0x5] sm:$0x1] %v3930
  %4008 = vst [vmem:[%s4001 + $0x6] sm:$0x1] %v3937
  %4009 = vst [vmem:[%s4001 + $0x7] sm:$0x1] %v3944
  %4010 = vst [vmem:[%s4001 + $0x8] sm:$0x1] %v3951
  %4011 = vst [vmem:[%s4001 + $0x9] sm:$0x1] %v3958
  %4012 = vst [vmem:[%s4001 + $0xa] sm:$0x1] %v3965
  %4013 = vst [vmem:[%s4001 + $0xb] sm:$0x1] %v3972
  %4014 = vst [vmem:[%s4001 + $0xc] sm:$0x1] %v3979
  %4015 = vst [vmem:[%s4001 + $0xd] sm:$0x1] %v3986
  %4016 = vst [vmem:[%s4001 + $0xe] sm:$0x1] %v3993
  %4017 = vst [vmem:[%s4001 + $0xf] sm:$0x1] %v4000
  %v4018 = vmul.f32 %v2860, %v2842
  %v4019 = vmul.f32 %v2861, %v2843
  %v4020 = vmul.f32 %v2862, %v2842
  %v4021 = vmul.f32 %v2863, %v2843
  %v4022 = vmul.f32 %v2864, %v2842
  %v4023 = vmul.f32 %v2865, %v2843
  %v4024 = vmul.f32 %v2866, %v2842
  %v4025 = vmul.f32 %v2867, %v2843
  %v4026 = vmul.f32 %v2868, %v2842
  %v4027 = vmul.f32 %v2869, %v2843
  %v4028 = vmul.f32 %v2870, %v2842
  %v4029 = vmul.f32 %v2871, %v2843
  %v4030 = vmul.f32 %v2872, %v2842
  %v4031 = vmul.f32 %v2873, %v2843
  %v4032 = vmul.f32 %v2874, %v2842
  %v4033 = vmul.f32 %v2875, %v2843
  %v4034 = vmul.f32 %v2876, %v2842
  %v4035 = vmul.f32 %v2877, %v2843
  %v4036 = vmul.f32 %v2878, %v2842
  %v4037 = vmul.f32 %v2879, %v2843
  %v4038 = vmul.f32 %v2880, %v2842
  %v4039 = vmul.f32 %v2881, %v2843
  %v4040 = vmul.f32 %v2882, %v2842
  %v4041 = vmul.f32 %v2883, %v2843
  %v4042 = vmul.f32 %v2884, %v2842
  %v4043 = vmul.f32 %v2885, %v2843
  %v4044 = vmul.f32 %v2886, %v2842
  %v4045 = vmul.f32 %v2887, %v2843
  %v4046 = vmul.f32 %v2888, %v2842
  %v4047 = vmul.f32 %v2889, %v2843
  %v4048 = vmul.f32 %v2890, %v2842
  %v4049 = vmul.f32 %v2891, %v2843
  %v4050 = vadd.f32 %v4018, %v4019
  %v4051 = vrot.slane %v4050, 4
  %v4052 = vadd.f32 %v4050, %v4051
  %v4053 = vrot.slane %v4052, 2
  %v4054 = vadd.f32 %v4052, %v4053
  %v4055 = vrot.slane %v4054, 1
  %v4056 = vadd.f32 %v4054, %v4055
  %v4057 = vadd.f32 %v4020, %v4021
  %v4058 = vrot.slane %v4057, 4
  %v4059 = vadd.f32 %v4057, %v4058
  %v4060 = vrot.slane %v4059, 2
  %v4061 = vadd.f32 %v4059, %v4060
  %v4062 = vrot.slane %v4061, 1
  %v4063 = vadd.f32 %v4061, %v4062
  %v4064 = vadd.f32 %v4022, %v4023
  %v4065 = vrot.slane %v4064, 4
  %v4066 = vadd.f32 %v4064, %v4065
  %v4067 = vrot.slane %v4066, 2
  %v4068 = vadd.f32 %v4066, %v4067
  %v4069 = vrot.slane %v4068, 1
  %v4070 = vadd.f32 %v4068, %v4069
  %v4071 = vadd.f32 %v4024, %v4025
  %v4072 = vrot.slane %v4071, 4
  %v4073 = vadd.f32 %v4071, %v4072
  %v4074 = vrot.slane %v4073, 2
  %v4075 = vadd.f32 %v4073, %v4074
  %v4076 = vrot.slane %v4075, 1
  %v4077 = vadd.f32 %v4075, %v4076
  %v4078 = vadd.f32 %v4026, %v4027
  %v4079 = vrot.slane %v4078, 4
  %v4080 = vadd.f32 %v4078, %v4079
  %v4081 = vrot.slane %v4080, 2
  %v4082 = vadd.f32 %v4080, %v4081
  %v4083 = vrot.slane %v4082, 1
  %v4084 = vadd.f32 %v4082, %v4083
  %v4085 = vadd.f32 %v4028, %v4029
  %v4086 = vrot.slane %v4085, 4
  %v4087 = vadd.f32 %v4085, %v4086
  %v4088 = vrot.slane %v4087, 2
  %v4089 = vadd.f32 %v4087, %v4088
  %v4090 = vrot.slane %v4089, 1
  %v4091 = vadd.f32 %v4089, %v4090
  %v4092 = vadd.f32 %v4030, %v4031
  %v4093 = vrot.slane %v4092, 4
  %v4094 = vadd.f32 %v4092, %v4093
  %v4095 = vrot.slane %v4094, 2
  %v4096 = vadd.f32 %v4094, %v4095
  %v4097 = vrot.slane %v4096, 1
  %v4098 = vadd.f32 %v4096, %v4097
  %v4099 = vadd.f32 %v4032, %v4033
  %v4100 = vrot.slane %v4099, 4
  %v4101 = vadd.f32 %v4099, %v4100
  %v4102 = vrot.slane %v4101, 2
  %v4103 = vadd.f32 %v4101, %v4102
  %v4104 = vrot.slane %v4103, 1
  %v4105 = vadd.f32 %v4103, %v4104
  %v4106 = vadd.f32 %v4034, %v4035
  %v4107 = vrot.slane %v4106, 4
  %v4108 = vadd.f32 %v4106, %v4107
  %v4109 = vrot.slane %v4108, 2
  %v4110 = vadd.f32 %v4108, %v4109
  %v4111 = vrot.slane %v4110, 1
  %v4112 = vadd.f32 %v4110, %v4111
  %v4113 = vadd.f32 %v4036, %v4037
  %v4114 = vrot.slane %v4113, 4
  %v4115 = vadd.f32 %v4113, %v4114
  %v4116 = vrot.slane %v4115, 2
  %v4117 = vadd.f32 %v4115, %v4116
  %v4118 = vrot.slane %v4117, 1
  %v4119 = vadd.f32 %v4117, %v4118
  %v4120 = vadd.f32 %v4038, %v4039
  %v4121 = vrot.slane %v4120, 4
  %v4122 = vadd.f32 %v4120, %v4121
  %v4123 = vrot.slane %v4122, 2
  %v4124 = vadd.f32 %v4122, %v4123
  %v4125 = vrot.slane %v4124, 1
  %v4126 = vadd.f32 %v4124, %v4125
  %v4127 = vadd.f32 %v4040, %v4041
  %v4128 = vrot.slane %v4127, 4
  %v4129 = vadd.f32 %v4127, %v4128
  %v4130 = vrot.slane %v4129, 2
  %v4131 = vadd.f32 %v4129, %v4130
  %v4132 = vrot.slane %v4131, 1
  %v4133 = vadd.f32 %v4131, %v4132
  %v4134 = vadd.f32 %v4042, %v4043
  %v4135 = vrot.slane %v4134, 4
  %v4136 = vadd.f32 %v4134, %v4135
  %v4137 = vrot.slane %v4136, 2
  %v4138 = vadd.f32 %v4136, %v4137
  %v4139 = vrot.slane %v4138, 1
  %v4140 = vadd.f32 %v4138, %v4139
  %v4141 = vadd.f32 %v4044, %v4045
  %v4142 = vrot.slane %v4141, 4
  %v4143 = vadd.f32 %v4141, %v4142
  %v4144 = vrot.slane %v4143, 2
  %v4145 = vadd.f32 %v4143, %v4144
  %v4146 = vrot.slane %v4145, 1
  %v4147 = vadd.f32 %v4145, %v4146
  %v4148 = vadd.f32 %v4046, %v4047
  %v4149 = vrot.slane %v4148, 4
  %v4150 = vadd.f32 %v4148, %v4149
  %v4151 = vrot.slane %v4150, 2
  %v4152 = vadd.f32 %v4150, %v4151
  %v4153 = vrot.slane %v4152, 1
  %v4154 = vadd.f32 %v4152, %v4153
  %v4155 = vadd.f32 %v4048, %v4049
  %v4156 = vrot.slane %v4155, 4
  %v4157 = vadd.f32 %v4155, %v4156
  %v4158 = vrot.slane %v4157, 2
  %v4159 = vadd.f32 %v4157, %v4158
  %v4160 = vrot.slane %v4159, 1
  %v4161 = vadd.f32 %v4159, %v4160
  %s4162 = scalar_lea.vmem %s3, 112
  %4163 = vst [vmem:[%s4162] sm:$0x1] %v4056
  %4164 = vst [vmem:[%s4162 + $0x1] sm:$0x1] %v4063
  %4165 = vst [vmem:[%s4162 + $0x2] sm:$0x1] %v4070
  %4166 = vst [vmem:[%s4162 + $0x3] sm:$0x1] %v4077
  %4167 = vst [vmem:[%s4162 + $0x4] sm:$0x1] %v4084
  %4168 = vst [vmem:[%s4162 + $0x5] sm:$0x1] %v4091
  %4169 = vst [vmem:[%s4162 + $0x6] sm:$0x1] %v4098
  %4170 = vst [vmem:[%s4162 + $0x7] sm:$0x1] %v4105
  %4171 = vst [vmem:[%s4162 + $0x8] sm:$0x1] %v4112
  %4172 = vst [vmem:[%s4162 + $0x9] sm:$0x1] %v4119
  %4173 = vst [vmem:[%s4162 + $0xa] sm:$0x1] %v4126
  %4174 = vst [vmem:[%s4162 + $0xb] sm:$0x1] %v4133
  %4175 = vst [vmem:[%s4162 + $0xc] sm:$0x1] %v4140
  %4176 = vst [vmem:[%s4162 + $0xd] sm:$0x1] %v4147
  %4177 = vst [vmem:[%s4162 + $0xe] sm:$0x1] %v4154
  %4178 = vst [vmem:[%s4162 + $0xf] sm:$0x1] %v4161
  %v4179 = vmul.f32 %v2860, %v2844
  %v4180 = vmul.f32 %v2861, %v2845
  %v4181 = vmul.f32 %v2862, %v2844
  %v4182 = vmul.f32 %v2863, %v2845
  %v4183 = vmul.f32 %v2864, %v2844
  %v4184 = vmul.f32 %v2865, %v2845
  %v4185 = vmul.f32 %v2866, %v2844
  %v4186 = vmul.f32 %v2867, %v2845
  %v4187 = vmul.f32 %v2868, %v2844
  %v4188 = vmul.f32 %v2869, %v2845
  %v4189 = vmul.f32 %v2870, %v2844
  %v4190 = vmul.f32 %v2871, %v2845
  %v4191 = vmul.f32 %v2872, %v2844
  %v4192 = vmul.f32 %v2873, %v2845
  %v4193 = vmul.f32 %v2874, %v2844
  %v4194 = vmul.f32 %v2875, %v2845
  %v4195 = vmul.f32 %v2876, %v2844
  %v4196 = vmul.f32 %v2877, %v2845
  %v4197 = vmul.f32 %v2878, %v2844
  %v4198 = vmul.f32 %v2879, %v2845
  %v4199 = vmul.f32 %v2880, %v2844
  %v4200 = vmul.f32 %v2881, %v2845
  %v4201 = vmul.f32 %v2882, %v2844
  %v4202 = vmul.f32 %v2883, %v2845
  %v4203 = vmul.f32 %v2884, %v2844
  %v4204 = vmul.f32 %v2885, %v2845
  %v4205 = vmul.f32 %v2886, %v2844
  %v4206 = vmul.f32 %v2887, %v2845
  %v4207 = vmul.f32 %v2888, %v2844
  %v4208 = vmul.f32 %v2889, %v2845
  %v4209 = vmul.f32 %v2890, %v2844
  %v4210 = vmul.f32 %v2891, %v2845
  %v4211 = vadd.f32 %v4179, %v4180
  %v4212 = vrot.slane %v4211, 4
  %v4213 = vadd.f32 %v4211, %v4212
  %v4214 = vrot.slane %v4213, 2
  %v4215 = vadd.f32 %v4213, %v4214
  %v4216 = vrot.slane %v4215, 1
  %v4217 = vadd.f32 %v4215, %v4216
  %v4218 = vadd.f32 %v4181, %v4182
  %v4219 = vrot.slane %v4218, 4
  %v4220 = vadd.f32 %v4218, %v4219
  %v4221 = vrot.slane %v4220, 2
  %v4222 = vadd.f32 %v4220, %v4221
  %v4223 = vrot.slane %v4222, 1
  %v4224 = vadd.f32 %v4222, %v4223
  %v4225 = vadd.f32 %v4183, %v4184
  %v4226 = vrot.slane %v4225, 4
  %v4227 = vadd.f32 %v4225, %v4226
  %v4228 = vrot.slane %v4227, 2
  %v4229 = vadd.f32 %v4227, %v4228
  %v4230 = vrot.slane %v4229, 1
  %v4231 = vadd.f32 %v4229, %v4230
  %v4232 = vadd.f32 %v4185, %v4186
  %v4233 = vrot.slane %v4232, 4
  %v4234 = vadd.f32 %v4232, %v4233
  %v4235 = vrot.slane %v4234, 2
  %v4236 = vadd.f32 %v4234, %v4235
  %v4237 = vrot.slane %v4236, 1
  %v4238 = vadd.f32 %v4236, %v4237
  %v4239 = vadd.f32 %v4187, %v4188
  %v4240 = vrot.slane %v4239, 4
  %v4241 = vadd.f32 %v4239, %v4240
  %v4242 = vrot.slane %v4241, 2
  %v4243 = vadd.f32 %v4241, %v4242
  %v4244 = vrot.slane %v4243, 1
  %v4245 = vadd.f32 %v4243, %v4244
  %v4246 = vadd.f32 %v4189, %v4190
  %v4247 = vrot.slane %v4246, 4
  %v4248 = vadd.f32 %v4246, %v4247
  %v4249 = vrot.slane %v4248, 2
  %v4250 = vadd.f32 %v4248, %v4249
  %v4251 = vrot.slane %v4250, 1
  %v4252 = vadd.f32 %v4250, %v4251
  %v4253 = vadd.f32 %v4191, %v4192
  %v4254 = vrot.slane %v4253, 4
  %v4255 = vadd.f32 %v4253, %v4254
  %v4256 = vrot.slane %v4255, 2
  %v4257 = vadd.f32 %v4255, %v4256
  %v4258 = vrot.slane %v4257, 1
  %v4259 = vadd.f32 %v4257, %v4258
  %v4260 = vadd.f32 %v4193, %v4194
  %v4261 = vrot.slane %v4260, 4
  %v4262 = vadd.f32 %v4260, %v4261
  %v4263 = vrot.slane %v4262, 2
  %v4264 = vadd.f32 %v4262, %v4263
  %v4265 = vrot.slane %v4264, 1
  %v4266 = vadd.f32 %v4264, %v4265
  %v4267 = vadd.f32 %v4195, %v4196
  %v4268 = vrot.slane %v4267, 4
  %v4269 = vadd.f32 %v4267, %v4268
  %v4270 = vrot.slane %v4269, 2
  %v4271 = vadd.f32 %v4269, %v4270
  %v4272 = vrot.slane %v4271, 1
  %v4273 = vadd.f32 %v4271, %v4272
  %v4274 = vadd.f32 %v4197, %v4198
  %v4275 = vrot.slane %v4274, 4
  %v4276 = vadd.f32 %v4274, %v4275
  %v4277 = vrot.slane %v4276, 2
  %v4278 = vadd.f32 %v4276, %v4277
  %v4279 = vrot.slane %v4278, 1
  %v4280 = vadd.f32 %v4278, %v4279
  %v4281 = vadd.f32 %v4199, %v4200
  %v4282 = vrot.slane %v4281, 4
  %v4283 = vadd.f32 %v4281, %v4282
  %v4284 = vrot.slane %v4283, 2
  %v4285 = vadd.f32 %v4283, %v4284
  %v4286 = vrot.slane %v4285, 1
  %v4287 = vadd.f32 %v4285, %v4286
  %v4288 = vadd.f32 %v4201, %v4202
  %v4289 = vrot.slane %v4288, 4
  %v4290 = vadd.f32 %v4288, %v4289
  %v4291 = vrot.slane %v4290, 2
  %v4292 = vadd.f32 %v4290, %v4291
  %v4293 = vrot.slane %v4292, 1
  %v4294 = vadd.f32 %v4292, %v4293
  %v4295 = vadd.f32 %v4203, %v4204
  %v4296 = vrot.slane %v4295, 4
  %v4297 = vadd.f32 %v4295, %v4296
  %v4298 = vrot.slane %v4297, 2
  %v4299 = vadd.f32 %v4297, %v4298
  %v4300 = vrot.slane %v4299, 1
  %v4301 = vadd.f32 %v4299, %v4300
  %v4302 = vadd.f32 %v4205, %v4206
  %v4303 = vrot.slane %v4302, 4
  %v4304 = vadd.f32 %v4302, %v4303
  %v4305 = vrot.slane %v4304, 2
  %v4306 = vadd.f32 %v4304, %v4305
  %v4307 = vrot.slane %v4306, 1
  %v4308 = vadd.f32 %v4306, %v4307
  %v4309 = vadd.f32 %v4207, %v4208
  %v4310 = vrot.slane %v4309, 4
  %v4311 = vadd.f32 %v4309, %v4310
  %v4312 = vrot.slane %v4311, 2
  %v4313 = vadd.f32 %v4311, %v4312
  %v4314 = vrot.slane %v4313, 1
  %v4315 = vadd.f32 %v4313, %v4314
  %v4316 = vadd.f32 %v4209, %v4210
  %v4317 = vrot.slane %v4316, 4
  %v4318 = vadd.f32 %v4316, %v4317
  %v4319 = vrot.slane %v4318, 2
  %v4320 = vadd.f32 %v4318, %v4319
  %v4321 = vrot.slane %v4320, 1
  %v4322 = vadd.f32 %v4320, %v4321
  %s4323 = scalar_lea.vmem %s3, 128
  %4324 = vst [vmem:[%s4323] sm:$0x1] %v4217
  %4325 = vst [vmem:[%s4323 + $0x1] sm:$0x1] %v4224
  %4326 = vst [vmem:[%s4323 + $0x2] sm:$0x1] %v4231
  %4327 = vst [vmem:[%s4323 + $0x3] sm:$0x1] %v4238
  %4328 = vst [vmem:[%s4323 + $0x4] sm:$0x1] %v4245
  %4329 = vst [vmem:[%s4323 + $0x5] sm:$0x1] %v4252
  %4330 = vst [vmem:[%s4323 + $0x6] sm:$0x1] %v4259
  %4331 = vst [vmem:[%s4323 + $0x7] sm:$0x1] %v4266
  %4332 = vst [vmem:[%s4323 + $0x8] sm:$0x1] %v4273
  %4333 = vst [vmem:[%s4323 + $0x9] sm:$0x1] %v4280
  %4334 = vst [vmem:[%s4323 + $0xa] sm:$0x1] %v4287
  %4335 = vst [vmem:[%s4323 + $0xb] sm:$0x1] %v4294
  %4336 = vst [vmem:[%s4323 + $0xc] sm:$0x1] %v4301
  %4337 = vst [vmem:[%s4323 + $0xd] sm:$0x1] %v4308
  %4338 = vst [vmem:[%s4323 + $0xe] sm:$0x1] %v4315
  %4339 = vst [vmem:[%s4323 + $0xf] sm:$0x1] %v4322
  %v4340 = vmul.f32 %v2860, %v2846
  %v4341 = vmul.f32 %v2861, %v2847
  %v4342 = vmul.f32 %v2862, %v2846
  %v4343 = vmul.f32 %v2863, %v2847
  %v4344 = vmul.f32 %v2864, %v2846
  %v4345 = vmul.f32 %v2865, %v2847
  %v4346 = vmul.f32 %v2866, %v2846
  %v4347 = vmul.f32 %v2867, %v2847
  %v4348 = vmul.f32 %v2868, %v2846
  %v4349 = vmul.f32 %v2869, %v2847
  %v4350 = vmul.f32 %v2870, %v2846
  %v4351 = vmul.f32 %v2871, %v2847
  %v4352 = vmul.f32 %v2872, %v2846
  %v4353 = vmul.f32 %v2873, %v2847
  %v4354 = vmul.f32 %v2874, %v2846
  %v4355 = vmul.f32 %v2875, %v2847
  %v4356 = vmul.f32 %v2876, %v2846
  %v4357 = vmul.f32 %v2877, %v2847
  %v4358 = vmul.f32 %v2878, %v2846
  %v4359 = vmul.f32 %v2879, %v2847
  %v4360 = vmul.f32 %v2880, %v2846
  %v4361 = vmul.f32 %v2881, %v2847
  %v4362 = vmul.f32 %v2882, %v2846
  %v4363 = vmul.f32 %v2883, %v2847
  %v4364 = vmul.f32 %v2884, %v2846
  %v4365 = vmul.f32 %v2885, %v2847
  %v4366 = vmul.f32 %v2886, %v2846
  %v4367 = vmul.f32 %v2887, %v2847
  %v4368 = vmul.f32 %v2888, %v2846
  %v4369 = vmul.f32 %v2889, %v2847
  %v4370 = vmul.f32 %v2890, %v2846
  %v4371 = vmul.f32 %v2891, %v2847
  %v4372 = vadd.f32 %v4340, %v4341
  %v4373 = vrot.slane %v4372, 4
  %v4374 = vadd.f32 %v4372, %v4373
  %v4375 = vrot.slane %v4374, 2
  %v4376 = vadd.f32 %v4374, %v4375
  %v4377 = vrot.slane %v4376, 1
  %v4378 = vadd.f32 %v4376, %v4377
  %v4379 = vadd.f32 %v4342, %v4343
  %v4380 = vrot.slane %v4379, 4
  %v4381 = vadd.f32 %v4379, %v4380
  %v4382 = vrot.slane %v4381, 2
  %v4383 = vadd.f32 %v4381, %v4382
  %v4384 = vrot.slane %v4383, 1
  %v4385 = vadd.f32 %v4383, %v4384
  %v4386 = vadd.f32 %v4344, %v4345
  %v4387 = vrot.slane %v4386, 4
  %v4388 = vadd.f32 %v4386, %v4387
  %v4389 = vrot.slane %v4388, 2
  %v4390 = vadd.f32 %v4388, %v4389
  %v4391 = vrot.slane %v4390, 1
  %v4392 = vadd.f32 %v4390, %v4391
  %v4393 = vadd.f32 %v4346, %v4347
  %v4394 = vrot.slane %v4393, 4
  %v4395 = vadd.f32 %v4393, %v4394
  %v4396 = vrot.slane %v4395, 2
  %v4397 = vadd.f32 %v4395, %v4396
  %v4398 = vrot.slane %v4397, 1
  %v4399 = vadd.f32 %v4397, %v4398
  %v4400 = vadd.f32 %v4348, %v4349
  %v4401 = vrot.slane %v4400, 4
  %v4402 = vadd.f32 %v4400, %v4401
  %v4403 = vrot.slane %v4402, 2
  %v4404 = vadd.f32 %v4402, %v4403
  %v4405 = vrot.slane %v4404, 1
  %v4406 = vadd.f32 %v4404, %v4405
  %v4407 = vadd.f32 %v4350, %v4351
  %v4408 = vrot.slane %v4407, 4
  %v4409 = vadd.f32 %v4407, %v4408
  %v4410 = vrot.slane %v4409, 2
  %v4411 = vadd.f32 %v4409, %v4410
  %v4412 = vrot.slane %v4411, 1
  %v4413 = vadd.f32 %v4411, %v4412
  %v4414 = vadd.f32 %v4352, %v4353
  %v4415 = vrot.slane %v4414, 4
  %v4416 = vadd.f32 %v4414, %v4415
  %v4417 = vrot.slane %v4416, 2
  %v4418 = vadd.f32 %v4416, %v4417
  %v4419 = vrot.slane %v4418, 1
  %v4420 = vadd.f32 %v4418, %v4419
  %v4421 = vadd.f32 %v4354, %v4355
  %v4422 = vrot.slane %v4421, 4
  %v4423 = vadd.f32 %v4421, %v4422
  %v4424 = vrot.slane %v4423, 2
  %v4425 = vadd.f32 %v4423, %v4424
  %v4426 = vrot.slane %v4425, 1
  %v4427 = vadd.f32 %v4425, %v4426
  %v4428 = vadd.f32 %v4356, %v4357
  %v4429 = vrot.slane %v4428, 4
  %v4430 = vadd.f32 %v4428, %v4429
  %v4431 = vrot.slane %v4430, 2
  %v4432 = vadd.f32 %v4430, %v4431
  %v4433 = vrot.slane %v4432, 1
  %v4434 = vadd.f32 %v4432, %v4433
  %v4435 = vadd.f32 %v4358, %v4359
  %v4436 = vrot.slane %v4435, 4
  %v4437 = vadd.f32 %v4435, %v4436
  %v4438 = vrot.slane %v4437, 2
  %v4439 = vadd.f32 %v4437, %v4438
  %v4440 = vrot.slane %v4439, 1
  %v4441 = vadd.f32 %v4439, %v4440
  %v4442 = vadd.f32 %v4360, %v4361
  %v4443 = vrot.slane %v4442, 4
  %v4444 = vadd.f32 %v4442, %v4443
  %v4445 = vrot.slane %v4444, 2
  %v4446 = vadd.f32 %v4444, %v4445
  %v4447 = vrot.slane %v4446, 1
  %v4448 = vadd.f32 %v4446, %v4447
  %v4449 = vadd.f32 %v4362, %v4363
  %v4450 = vrot.slane %v4449, 4
  %v4451 = vadd.f32 %v4449, %v4450
  %v4452 = vrot.slane %v4451, 2
  %v4453 = vadd.f32 %v4451, %v4452
  %v4454 = vrot.slane %v4453, 1
  %v4455 = vadd.f32 %v4453, %v4454
  %v4456 = vadd.f32 %v4364, %v4365
  %v4457 = vrot.slane %v4456, 4
  %v4458 = vadd.f32 %v4456, %v4457
  %v4459 = vrot.slane %v4458, 2
  %v4460 = vadd.f32 %v4458, %v4459
  %v4461 = vrot.slane %v4460, 1
  %v4462 = vadd.f32 %v4460, %v4461
  %v4463 = vadd.f32 %v4366, %v4367
  %v4464 = vrot.slane %v4463, 4
  %v4465 = vadd.f32 %v4463, %v4464
  %v4466 = vrot.slane %v4465, 2
  %v4467 = vadd.f32 %v4465, %v4466
  %v4468 = vrot.slane %v4467, 1
  %v4469 = vadd.f32 %v4467, %v4468
  %v4470 = vadd.f32 %v4368, %v4369
  %v4471 = vrot.slane %v4470, 4
  %v4472 = vadd.f32 %v4470, %v4471
  %v4473 = vrot.slane %v4472, 2
  %v4474 = vadd.f32 %v4472, %v4473
  %v4475 = vrot.slane %v4474, 1
  %v4476 = vadd.f32 %v4474, %v4475
  %v4477 = vadd.f32 %v4370, %v4371
  %v4478 = vrot.slane %v4477, 4
  %v4479 = vadd.f32 %v4477, %v4478
  %v4480 = vrot.slane %v4479, 2
  %v4481 = vadd.f32 %v4479, %v4480
  %v4482 = vrot.slane %v4481, 1
  %v4483 = vadd.f32 %v4481, %v4482
  %s4484 = scalar_lea.vmem %s3, 144
  %4485 = vst [vmem:[%s4484] sm:$0x1] %v4378
  %4486 = vst [vmem:[%s4484 + $0x1] sm:$0x1] %v4385
  %4487 = vst [vmem:[%s4484 + $0x2] sm:$0x1] %v4392
  %4488 = vst [vmem:[%s4484 + $0x3] sm:$0x1] %v4399
  %4489 = vst [vmem:[%s4484 + $0x4] sm:$0x1] %v4406
  %4490 = vst [vmem:[%s4484 + $0x5] sm:$0x1] %v4413
  %4491 = vst [vmem:[%s4484 + $0x6] sm:$0x1] %v4420
  %4492 = vst [vmem:[%s4484 + $0x7] sm:$0x1] %v4427
  %4493 = vst [vmem:[%s4484 + $0x8] sm:$0x1] %v4434
  %4494 = vst [vmem:[%s4484 + $0x9] sm:$0x1] %v4441
  %4495 = vst [vmem:[%s4484 + $0xa] sm:$0x1] %v4448
  %4496 = vst [vmem:[%s4484 + $0xb] sm:$0x1] %v4455
  %4497 = vst [vmem:[%s4484 + $0xc] sm:$0x1] %v4462
  %4498 = vst [vmem:[%s4484 + $0xd] sm:$0x1] %v4469
  %4499 = vst [vmem:[%s4484 + $0xe] sm:$0x1] %v4476
  %4500 = vst [vmem:[%s4484 + $0xf] sm:$0x1] %v4483
  %v4501 = vmul.f32 %v2860, %v2848
  %v4502 = vmul.f32 %v2861, %v2849
  %v4503 = vmul.f32 %v2862, %v2848
  %v4504 = vmul.f32 %v2863, %v2849
  %v4505 = vmul.f32 %v2864, %v2848
  %v4506 = vmul.f32 %v2865, %v2849
  %v4507 = vmul.f32 %v2866, %v2848
  %v4508 = vmul.f32 %v2867, %v2849
  %v4509 = vmul.f32 %v2868, %v2848
  %v4510 = vmul.f32 %v2869, %v2849
  %v4511 = vmul.f32 %v2870, %v2848
  %v4512 = vmul.f32 %v2871, %v2849
  %v4513 = vmul.f32 %v2872, %v2848
  %v4514 = vmul.f32 %v2873, %v2849
  %v4515 = vmul.f32 %v2874, %v2848
  %v4516 = vmul.f32 %v2875, %v2849
  %v4517 = vmul.f32 %v2876, %v2848
  %v4518 = vmul.f32 %v2877, %v2849
  %v4519 = vmul.f32 %v2878, %v2848
  %v4520 = vmul.f32 %v2879, %v2849
  %v4521 = vmul.f32 %v2880, %v2848
  %v4522 = vmul.f32 %v2881, %v2849
  %v4523 = vmul.f32 %v2882, %v2848
  %v4524 = vmul.f32 %v2883, %v2849
  %v4525 = vmul.f32 %v2884, %v2848
  %v4526 = vmul.f32 %v2885, %v2849
  %v4527 = vmul.f32 %v2886, %v2848
  %v4528 = vmul.f32 %v2887, %v2849
  %v4529 = vmul.f32 %v2888, %v2848
  %v4530 = vmul.f32 %v2889, %v2849
  %v4531 = vmul.f32 %v2890, %v2848
  %v4532 = vmul.f32 %v2891, %v2849
  %v4533 = vadd.f32 %v4501, %v4502
  %v4534 = vrot.slane %v4533, 4
  %v4535 = vadd.f32 %v4533, %v4534
  %v4536 = vrot.slane %v4535, 2
  %v4537 = vadd.f32 %v4535, %v4536
  %v4538 = vrot.slane %v4537, 1
  %v4539 = vadd.f32 %v4537, %v4538
  %v4540 = vadd.f32 %v4503, %v4504
  %v4541 = vrot.slane %v4540, 4
  %v4542 = vadd.f32 %v4540, %v4541
  %v4543 = vrot.slane %v4542, 2
  %v4544 = vadd.f32 %v4542, %v4543
  %v4545 = vrot.slane %v4544, 1
  %v4546 = vadd.f32 %v4544, %v4545
  %v4547 = vadd.f32 %v4505, %v4506
  %v4548 = vrot.slane %v4547, 4
  %v4549 = vadd.f32 %v4547, %v4548
  %v4550 = vrot.slane %v4549, 2
  %v4551 = vadd.f32 %v4549, %v4550
  %v4552 = vrot.slane %v4551, 1
  %v4553 = vadd.f32 %v4551, %v4552
  %v4554 = vadd.f32 %v4507, %v4508
  %v4555 = vrot.slane %v4554, 4
  %v4556 = vadd.f32 %v4554, %v4555
  %v4557 = vrot.slane %v4556, 2
  %v4558 = vadd.f32 %v4556, %v4557
  %v4559 = vrot.slane %v4558, 1
  %v4560 = vadd.f32 %v4558, %v4559
  %v4561 = vadd.f32 %v4509, %v4510
  %v4562 = vrot.slane %v4561, 4
  %v4563 = vadd.f32 %v4561, %v4562
  %v4564 = vrot.slane %v4563, 2
  %v4565 = vadd.f32 %v4563, %v4564
  %v4566 = vrot.slane %v4565, 1
  %v4567 = vadd.f32 %v4565, %v4566
  %v4568 = vadd.f32 %v4511, %v4512
  %v4569 = vrot.slane %v4568, 4
  %v4570 = vadd.f32 %v4568, %v4569
  %v4571 = vrot.slane %v4570, 2
  %v4572 = vadd.f32 %v4570, %v4571
  %v4573 = vrot.slane %v4572, 1
  %v4574 = vadd.f32 %v4572, %v4573
  %v4575 = vadd.f32 %v4513, %v4514
  %v4576 = vrot.slane %v4575, 4
  %v4577 = vadd.f32 %v4575, %v4576
  %v4578 = vrot.slane %v4577, 2
  %v4579 = vadd.f32 %v4577, %v4578
  %v4580 = vrot.slane %v4579, 1
  %v4581 = vadd.f32 %v4579, %v4580
  %v4582 = vadd.f32 %v4515, %v4516
  %v4583 = vrot.slane %v4582, 4
  %v4584 = vadd.f32 %v4582, %v4583
  %v4585 = vrot.slane %v4584, 2
  %v4586 = vadd.f32 %v4584, %v4585
  %v4587 = vrot.slane %v4586, 1
  %v4588 = vadd.f32 %v4586, %v4587
  %v4589 = vadd.f32 %v4517, %v4518
  %v4590 = vrot.slane %v4589, 4
  %v4591 = vadd.f32 %v4589, %v4590
  %v4592 = vrot.slane %v4591, 2
  %v4593 = vadd.f32 %v4591, %v4592
  %v4594 = vrot.slane %v4593, 1
  %v4595 = vadd.f32 %v4593, %v4594
  %v4596 = vadd.f32 %v4519, %v4520
  %v4597 = vrot.slane %v4596, 4
  %v4598 = vadd.f32 %v4596, %v4597
  %v4599 = vrot.slane %v4598, 2
  %v4600 = vadd.f32 %v4598, %v4599
  %v4601 = vrot.slane %v4600, 1
  %v4602 = vadd.f32 %v4600, %v4601
  %v4603 = vadd.f32 %v4521, %v4522
  %v4604 = vrot.slane %v4603, 4
  %v4605 = vadd.f32 %v4603, %v4604
  %v4606 = vrot.slane %v4605, 2
  %v4607 = vadd.f32 %v4605, %v4606
  %v4608 = vrot.slane %v4607, 1
  %v4609 = vadd.f32 %v4607, %v4608
  %v4610 = vadd.f32 %v4523, %v4524
  %v4611 = vrot.slane %v4610, 4
  %v4612 = vadd.f32 %v4610, %v4611
  %v4613 = vrot.slane %v4612, 2
  %v4614 = vadd.f32 %v4612, %v4613
  %v4615 = vrot.slane %v4614, 1
  %v4616 = vadd.f32 %v4614, %v4615
  %v4617 = vadd.f32 %v4525, %v4526
  %v4618 = vrot.slane %v4617, 4
  %v4619 = vadd.f32 %v4617, %v4618
  %v4620 = vrot.slane %v4619, 2
  %v4621 = vadd.f32 %v4619, %v4620
  %v4622 = vrot.slane %v4621, 1
  %v4623 = vadd.f32 %v4621, %v4622
  %v4624 = vadd.f32 %v4527, %v4528
  %v4625 = vrot.slane %v4624, 4
  %v4626 = vadd.f32 %v4624, %v4625
  %v4627 = vrot.slane %v4626, 2
  %v4628 = vadd.f32 %v4626, %v4627
  %v4629 = vrot.slane %v4628, 1
  %v4630 = vadd.f32 %v4628, %v4629
  %v4631 = vadd.f32 %v4529, %v4530
  %v4632 = vrot.slane %v4631, 4
  %v4633 = vadd.f32 %v4631, %v4632
  %v4634 = vrot.slane %v4633, 2
  %v4635 = vadd.f32 %v4633, %v4634
  %v4636 = vrot.slane %v4635, 1
  %v4637 = vadd.f32 %v4635, %v4636
  %v4638 = vadd.f32 %v4531, %v4532
  %v4639 = vrot.slane %v4638, 4
  %v4640 = vadd.f32 %v4638, %v4639
  %v4641 = vrot.slane %v4640, 2
  %v4642 = vadd.f32 %v4640, %v4641
  %v4643 = vrot.slane %v4642, 1
  %v4644 = vadd.f32 %v4642, %v4643
  %s4645 = scalar_lea.vmem %s3, 160
  %4646 = vst [vmem:[%s4645] sm:$0x1] %v4539
  %4647 = vst [vmem:[%s4645 + $0x1] sm:$0x1] %v4546
  %4648 = vst [vmem:[%s4645 + $0x2] sm:$0x1] %v4553
  %4649 = vst [vmem:[%s4645 + $0x3] sm:$0x1] %v4560
  %4650 = vst [vmem:[%s4645 + $0x4] sm:$0x1] %v4567
  %4651 = vst [vmem:[%s4645 + $0x5] sm:$0x1] %v4574
  %4652 = vst [vmem:[%s4645 + $0x6] sm:$0x1] %v4581
  %4653 = vst [vmem:[%s4645 + $0x7] sm:$0x1] %v4588
  %4654 = vst [vmem:[%s4645 + $0x8] sm:$0x1] %v4595
  %4655 = vst [vmem:[%s4645 + $0x9] sm:$0x1] %v4602
  %4656 = vst [vmem:[%s4645 + $0xa] sm:$0x1] %v4609
  %4657 = vst [vmem:[%s4645 + $0xb] sm:$0x1] %v4616
  %4658 = vst [vmem:[%s4645 + $0xc] sm:$0x1] %v4623
  %4659 = vst [vmem:[%s4645 + $0xd] sm:$0x1] %v4630
  %4660 = vst [vmem:[%s4645 + $0xe] sm:$0x1] %v4637
  %4661 = vst [vmem:[%s4645 + $0xf] sm:$0x1] %v4644
  %v4662 = vmul.f32 %v2860, %v2850
  %v4663 = vmul.f32 %v2861, %v2851
  %v4664 = vmul.f32 %v2862, %v2850
  %v4665 = vmul.f32 %v2863, %v2851
  %v4666 = vmul.f32 %v2864, %v2850
  %v4667 = vmul.f32 %v2865, %v2851
  %v4668 = vmul.f32 %v2866, %v2850
  %v4669 = vmul.f32 %v2867, %v2851
  %v4670 = vmul.f32 %v2868, %v2850
  %v4671 = vmul.f32 %v2869, %v2851
  %v4672 = vmul.f32 %v2870, %v2850
  %v4673 = vmul.f32 %v2871, %v2851
  %v4674 = vmul.f32 %v2872, %v2850
  %v4675 = vmul.f32 %v2873, %v2851
  %v4676 = vmul.f32 %v2874, %v2850
  %v4677 = vmul.f32 %v2875, %v2851
  %v4678 = vmul.f32 %v2876, %v2850
  %v4679 = vmul.f32 %v2877, %v2851
  %v4680 = vmul.f32 %v2878, %v2850
  %v4681 = vmul.f32 %v2879, %v2851
  %v4682 = vmul.f32 %v2880, %v2850
  %v4683 = vmul.f32 %v2881, %v2851
  %v4684 = vmul.f32 %v2882, %v2850
  %v4685 = vmul.f32 %v2883, %v2851
  %v4686 = vmul.f32 %v2884, %v2850
  %v4687 = vmul.f32 %v2885, %v2851
  %v4688 = vmul.f32 %v2886, %v2850
  %v4689 = vmul.f32 %v2887, %v2851
  %v4690 = vmul.f32 %v2888, %v2850
  %v4691 = vmul.f32 %v2889, %v2851
  %v4692 = vmul.f32 %v2890, %v2850
  %v4693 = vmul.f32 %v2891, %v2851
  %v4694 = vadd.f32 %v4662, %v4663
  %v4695 = vrot.slane %v4694, 4
  %v4696 = vadd.f32 %v4694, %v4695
  %v4697 = vrot.slane %v4696, 2
  %v4698 = vadd.f32 %v4696, %v4697
  %v4699 = vrot.slane %v4698, 1
  %v4700 = vadd.f32 %v4698, %v4699
  %v4701 = vadd.f32 %v4664, %v4665
  %v4702 = vrot.slane %v4701, 4
  %v4703 = vadd.f32 %v4701, %v4702
  %v4704 = vrot.slane %v4703, 2
  %v4705 = vadd.f32 %v4703, %v4704
  %v4706 = vrot.slane %v4705, 1
  %v4707 = vadd.f32 %v4705, %v4706
  %v4708 = vadd.f32 %v4666, %v4667
  %v4709 = vrot.slane %v4708, 4
  %v4710 = vadd.f32 %v4708, %v4709
  %v4711 = vrot.slane %v4710, 2
  %v4712 = vadd.f32 %v4710, %v4711
  %v4713 = vrot.slane %v4712, 1
  %v4714 = vadd.f32 %v4712, %v4713
  %v4715 = vadd.f32 %v4668, %v4669
  %v4716 = vrot.slane %v4715, 4
  %v4717 = vadd.f32 %v4715, %v4716
  %v4718 = vrot.slane %v4717, 2
  %v4719 = vadd.f32 %v4717, %v4718
  %v4720 = vrot.slane %v4719, 1
  %v4721 = vadd.f32 %v4719, %v4720
  %v4722 = vadd.f32 %v4670, %v4671
  %v4723 = vrot.slane %v4722, 4
  %v4724 = vadd.f32 %v4722, %v4723
  %v4725 = vrot.slane %v4724, 2
  %v4726 = vadd.f32 %v4724, %v4725
  %v4727 = vrot.slane %v4726, 1
  %v4728 = vadd.f32 %v4726, %v4727
  %v4729 = vadd.f32 %v4672, %v4673
  %v4730 = vrot.slane %v4729, 4
  %v4731 = vadd.f32 %v4729, %v4730
  %v4732 = vrot.slane %v4731, 2
  %v4733 = vadd.f32 %v4731, %v4732
  %v4734 = vrot.slane %v4733, 1
  %v4735 = vadd.f32 %v4733, %v4734
  %v4736 = vadd.f32 %v4674, %v4675
  %v4737 = vrot.slane %v4736, 4
  %v4738 = vadd.f32 %v4736, %v4737
  %v4739 = vrot.slane %v4738, 2
  %v4740 = vadd.f32 %v4738, %v4739
  %v4741 = vrot.slane %v4740, 1
  %v4742 = vadd.f32 %v4740, %v4741
  %v4743 = vadd.f32 %v4676, %v4677
  %v4744 = vrot.slane %v4743, 4
  %v4745 = vadd.f32 %v4743, %v4744
  %v4746 = vrot.slane %v4745, 2
  %v4747 = vadd.f32 %v4745, %v4746
  %v4748 = vrot.slane %v4747, 1
  %v4749 = vadd.f32 %v4747, %v4748
  %v4750 = vadd.f32 %v4678, %v4679
  %v4751 = vrot.slane %v4750, 4
  %v4752 = vadd.f32 %v4750, %v4751
  %v4753 = vrot.slane %v4752, 2
  %v4754 = vadd.f32 %v4752, %v4753
  %v4755 = vrot.slane %v4754, 1
  %v4756 = vadd.f32 %v4754, %v4755
  %v4757 = vadd.f32 %v4680, %v4681
  %v4758 = vrot.slane %v4757, 4
  %v4759 = vadd.f32 %v4757, %v4758
  %v4760 = vrot.slane %v4759, 2
  %v4761 = vadd.f32 %v4759, %v4760
  %v4762 = vrot.slane %v4761, 1
  %v4763 = vadd.f32 %v4761, %v4762
  %v4764 = vadd.f32 %v4682, %v4683
  %v4765 = vrot.slane %v4764, 4
  %v4766 = vadd.f32 %v4764, %v4765
  %v4767 = vrot.slane %v4766, 2
  %v4768 = vadd.f32 %v4766, %v4767
  %v4769 = vrot.slane %v4768, 1
  %v4770 = vadd.f32 %v4768, %v4769
  %v4771 = vadd.f32 %v4684, %v4685
  %v4772 = vrot.slane %v4771, 4
  %v4773 = vadd.f32 %v4771, %v4772
  %v4774 = vrot.slane %v4773, 2
  %v4775 = vadd.f32 %v4773, %v4774
  %v4776 = vrot.slane %v4775, 1
  %v4777 = vadd.f32 %v4775, %v4776
  %v4778 = vadd.f32 %v4686, %v4687
  %v4779 = vrot.slane %v4778, 4
  %v4780 = vadd.f32 %v4778, %v4779
  %v4781 = vrot.slane %v4780, 2
  %v4782 = vadd.f32 %v4780, %v4781
  %v4783 = vrot.slane %v4782, 1
  %v4784 = vadd.f32 %v4782, %v4783
  %v4785 = vadd.f32 %v4688, %v4689
  %v4786 = vrot.slane %v4785, 4
  %v4787 = vadd.f32 %v4785, %v4786
  %v4788 = vrot.slane %v4787, 2
  %v4789 = vadd.f32 %v4787, %v4788
  %v4790 = vrot.slane %v4789, 1
  %v4791 = vadd.f32 %v4789, %v4790
  %v4792 = vadd.f32 %v4690, %v4691
  %v4793 = vrot.slane %v4792, 4
  %v4794 = vadd.f32 %v4792, %v4793
  %v4795 = vrot.slane %v4794, 2
  %v4796 = vadd.f32 %v4794, %v4795
  %v4797 = vrot.slane %v4796, 1
  %v4798 = vadd.f32 %v4796, %v4797
  %v4799 = vadd.f32 %v4692, %v4693
  %v4800 = vrot.slane %v4799, 4
  %v4801 = vadd.f32 %v4799, %v4800
  %v4802 = vrot.slane %v4801, 2
  %v4803 = vadd.f32 %v4801, %v4802
  %v4804 = vrot.slane %v4803, 1
  %v4805 = vadd.f32 %v4803, %v4804
  %s4806 = scalar_lea.vmem %s3, 176
  %4807 = vst [vmem:[%s4806] sm:$0x1] %v4700
  %4808 = vst [vmem:[%s4806 + $0x1] sm:$0x1] %v4707
  %4809 = vst [vmem:[%s4806 + $0x2] sm:$0x1] %v4714
  %4810 = vst [vmem:[%s4806 + $0x3] sm:$0x1] %v4721
  %4811 = vst [vmem:[%s4806 + $0x4] sm:$0x1] %v4728
  %4812 = vst [vmem:[%s4806 + $0x5] sm:$0x1] %v4735
  %4813 = vst [vmem:[%s4806 + $0x6] sm:$0x1] %v4742
  %4814 = vst [vmem:[%s4806 + $0x7] sm:$0x1] %v4749
  %4815 = vst [vmem:[%s4806 + $0x8] sm:$0x1] %v4756
  %4816 = vst [vmem:[%s4806 + $0x9] sm:$0x1] %v4763
  %4817 = vst [vmem:[%s4806 + $0xa] sm:$0x1] %v4770
  %4818 = vst [vmem:[%s4806 + $0xb] sm:$0x1] %v4777
  %4819 = vst [vmem:[%s4806 + $0xc] sm:$0x1] %v4784
  %4820 = vst [vmem:[%s4806 + $0xd] sm:$0x1] %v4791
  %4821 = vst [vmem:[%s4806 + $0xe] sm:$0x1] %v4798
  %4822 = vst [vmem:[%s4806 + $0xf] sm:$0x1] %v4805
  %v4823 = vmul.f32 %v2860, %v2852
  %v4824 = vmul.f32 %v2861, %v2853
  %v4825 = vmul.f32 %v2862, %v2852
  %v4826 = vmul.f32 %v2863, %v2853
  %v4827 = vmul.f32 %v2864, %v2852
  %v4828 = vmul.f32 %v2865, %v2853
  %v4829 = vmul.f32 %v2866, %v2852
  %v4830 = vmul.f32 %v2867, %v2853
  %v4831 = vmul.f32 %v2868, %v2852
  %v4832 = vmul.f32 %v2869, %v2853
  %v4833 = vmul.f32 %v2870, %v2852
  %v4834 = vmul.f32 %v2871, %v2853
  %v4835 = vmul.f32 %v2872, %v2852
  %v4836 = vmul.f32 %v2873, %v2853
  %v4837 = vmul.f32 %v2874, %v2852
  %v4838 = vmul.f32 %v2875, %v2853
  %v4839 = vmul.f32 %v2876, %v2852
  %v4840 = vmul.f32 %v2877, %v2853
  %v4841 = vmul.f32 %v2878, %v2852
  %v4842 = vmul.f32 %v2879, %v2853
  %v4843 = vmul.f32 %v2880, %v2852
  %v4844 = vmul.f32 %v2881, %v2853
  %v4845 = vmul.f32 %v2882, %v2852
  %v4846 = vmul.f32 %v2883, %v2853
  %v4847 = vmul.f32 %v2884, %v2852
  %v4848 = vmul.f32 %v2885, %v2853
  %v4849 = vmul.f32 %v2886, %v2852
  %v4850 = vmul.f32 %v2887, %v2853
  %v4851 = vmul.f32 %v2888, %v2852
  %v4852 = vmul.f32 %v2889, %v2853
  %v4853 = vmul.f32 %v2890, %v2852
  %v4854 = vmul.f32 %v2891, %v2853
  %v4855 = vadd.f32 %v4823, %v4824
  %v4856 = vrot.slane %v4855, 4
  %v4857 = vadd.f32 %v4855, %v4856
  %v4858 = vrot.slane %v4857, 2
  %v4859 = vadd.f32 %v4857, %v4858
  %v4860 = vrot.slane %v4859, 1
  %v4861 = vadd.f32 %v4859, %v4860
  %v4862 = vadd.f32 %v4825, %v4826
  %v4863 = vrot.slane %v4862, 4
  %v4864 = vadd.f32 %v4862, %v4863
  %v4865 = vrot.slane %v4864, 2
  %v4866 = vadd.f32 %v4864, %v4865
  %v4867 = vrot.slane %v4866, 1
  %v4868 = vadd.f32 %v4866, %v4867
  %v4869 = vadd.f32 %v4827, %v4828
  %v4870 = vrot.slane %v4869, 4
  %v4871 = vadd.f32 %v4869, %v4870
  %v4872 = vrot.slane %v4871, 2
  %v4873 = vadd.f32 %v4871, %v4872
  %v4874 = vrot.slane %v4873, 1
  %v4875 = vadd.f32 %v4873, %v4874
  %v4876 = vadd.f32 %v4829, %v4830
  %v4877 = vrot.slane %v4876, 4
  %v4878 = vadd.f32 %v4876, %v4877
  %v4879 = vrot.slane %v4878, 2
  %v4880 = vadd.f32 %v4878, %v4879
  %v4881 = vrot.slane %v4880, 1
  %v4882 = vadd.f32 %v4880, %v4881
  %v4883 = vadd.f32 %v4831, %v4832
  %v4884 = vrot.slane %v4883, 4
  %v4885 = vadd.f32 %v4883, %v4884
  %v4886 = vrot.slane %v4885, 2
  %v4887 = vadd.f32 %v4885, %v4886
  %v4888 = vrot.slane %v4887, 1
  %v4889 = vadd.f32 %v4887, %v4888
  %v4890 = vadd.f32 %v4833, %v4834
  %v4891 = vrot.slane %v4890, 4
  %v4892 = vadd.f32 %v4890, %v4891
  %v4893 = vrot.slane %v4892, 2
  %v4894 = vadd.f32 %v4892, %v4893
  %v4895 = vrot.slane %v4894, 1
  %v4896 = vadd.f32 %v4894, %v4895
  %v4897 = vadd.f32 %v4835, %v4836
  %v4898 = vrot.slane %v4897, 4
  %v4899 = vadd.f32 %v4897, %v4898
  %v4900 = vrot.slane %v4899, 2
  %v4901 = vadd.f32 %v4899, %v4900
  %v4902 = vrot.slane %v4901, 1
  %v4903 = vadd.f32 %v4901, %v4902
  %v4904 = vadd.f32 %v4837, %v4838
  %v4905 = vrot.slane %v4904, 4
  %v4906 = vadd.f32 %v4904, %v4905
  %v4907 = vrot.slane %v4906, 2
  %v4908 = vadd.f32 %v4906, %v4907
  %v4909 = vrot.slane %v4908, 1
  %v4910 = vadd.f32 %v4908, %v4909
  %v4911 = vadd.f32 %v4839, %v4840
  %v4912 = vrot.slane %v4911, 4
  %v4913 = vadd.f32 %v4911, %v4912
  %v4914 = vrot.slane %v4913, 2
  %v4915 = vadd.f32 %v4913, %v4914
  %v4916 = vrot.slane %v4915, 1
  %v4917 = vadd.f32 %v4915, %v4916
  %v4918 = vadd.f32 %v4841, %v4842
  %v4919 = vrot.slane %v4918, 4
  %v4920 = vadd.f32 %v4918, %v4919
  %v4921 = vrot.slane %v4920, 2
  %v4922 = vadd.f32 %v4920, %v4921
  %v4923 = vrot.slane %v4922, 1
  %v4924 = vadd.f32 %v4922, %v4923
  %v4925 = vadd.f32 %v4843, %v4844
  %v4926 = vrot.slane %v4925, 4
  %v4927 = vadd.f32 %v4925, %v4926
  %v4928 = vrot.slane %v4927, 2
  %v4929 = vadd.f32 %v4927, %v4928
  %v4930 = vrot.slane %v4929, 1
  %v4931 = vadd.f32 %v4929, %v4930
  %v4932 = vadd.f32 %v4845, %v4846
  %v4933 = vrot.slane %v4932, 4
  %v4934 = vadd.f32 %v4932, %v4933
  %v4935 = vrot.slane %v4934, 2
  %v4936 = vadd.f32 %v4934, %v4935
  %v4937 = vrot.slane %v4936, 1
  %v4938 = vadd.f32 %v4936, %v4937
  %v4939 = vadd.f32 %v4847, %v4848
  %v4940 = vrot.slane %v4939, 4
  %v4941 = vadd.f32 %v4939, %v4940
  %v4942 = vrot.slane %v4941, 2
  %v4943 = vadd.f32 %v4941, %v4942
  %v4944 = vrot.slane %v4943, 1
  %v4945 = vadd.f32 %v4943, %v4944
  %v4946 = vadd.f32 %v4849, %v4850
  %v4947 = vrot.slane %v4946, 4
  %v4948 = vadd.f32 %v4946, %v4947
  %v4949 = vrot.slane %v4948, 2
  %v4950 = vadd.f32 %v4948, %v4949
  %v4951 = vrot.slane %v4950, 1
  %v4952 = vadd.f32 %v4950, %v4951
  %v4953 = vadd.f32 %v4851, %v4852
  %v4954 = vrot.slane %v4953, 4
  %v4955 = vadd.f32 %v4953, %v4954
  %v4956 = vrot.slane %v4955, 2
  %v4957 = vadd.f32 %v4955, %v4956
  %v4958 = vrot.slane %v4957, 1
  %v4959 = vadd.f32 %v4957, %v4958
  %v4960 = vadd.f32 %v4853, %v4854
  %v4961 = vrot.slane %v4960, 4
  %v4962 = vadd.f32 %v4960, %v4961
  %v4963 = vrot.slane %v4962, 2
  %v4964 = vadd.f32 %v4962, %v4963
  %v4965 = vrot.slane %v4964, 1
  %v4966 = vadd.f32 %v4964, %v4965
  %s4967 = scalar_lea.vmem %s3, 192
  %4968 = vst [vmem:[%s4967] sm:$0x1] %v4861
  %4969 = vst [vmem:[%s4967 + $0x1] sm:$0x1] %v4868
  %4970 = vst [vmem:[%s4967 + $0x2] sm:$0x1] %v4875
  %4971 = vst [vmem:[%s4967 + $0x3] sm:$0x1] %v4882
  %4972 = vst [vmem:[%s4967 + $0x4] sm:$0x1] %v4889
  %4973 = vst [vmem:[%s4967 + $0x5] sm:$0x1] %v4896
  %4974 = vst [vmem:[%s4967 + $0x6] sm:$0x1] %v4903
  %4975 = vst [vmem:[%s4967 + $0x7] sm:$0x1] %v4910
  %4976 = vst [vmem:[%s4967 + $0x8] sm:$0x1] %v4917
  %4977 = vst [vmem:[%s4967 + $0x9] sm:$0x1] %v4924
  %4978 = vst [vmem:[%s4967 + $0xa] sm:$0x1] %v4931
  %4979 = vst [vmem:[%s4967 + $0xb] sm:$0x1] %v4938
  %4980 = vst [vmem:[%s4967 + $0xc] sm:$0x1] %v4945
  %4981 = vst [vmem:[%s4967 + $0xd] sm:$0x1] %v4952
  %4982 = vst [vmem:[%s4967 + $0xe] sm:$0x1] %v4959
  %4983 = vst [vmem:[%s4967 + $0xf] sm:$0x1] %v4966
  %v4984 = vmul.f32 %v2860, %v2854
  %v4985 = vmul.f32 %v2861, %v2855
  %v4986 = vmul.f32 %v2862, %v2854
  %v4987 = vmul.f32 %v2863, %v2855
  %v4988 = vmul.f32 %v2864, %v2854
  %v4989 = vmul.f32 %v2865, %v2855
  %v4990 = vmul.f32 %v2866, %v2854
  %v4991 = vmul.f32 %v2867, %v2855
  %v4992 = vmul.f32 %v2868, %v2854
  %v4993 = vmul.f32 %v2869, %v2855
  %v4994 = vmul.f32 %v2870, %v2854
  %v4995 = vmul.f32 %v2871, %v2855
  %v4996 = vmul.f32 %v2872, %v2854
  %v4997 = vmul.f32 %v2873, %v2855
  %v4998 = vmul.f32 %v2874, %v2854
  %v4999 = vmul.f32 %v2875, %v2855
  %v5000 = vmul.f32 %v2876, %v2854
  %v5001 = vmul.f32 %v2877, %v2855
  %v5002 = vmul.f32 %v2878, %v2854
  %v5003 = vmul.f32 %v2879, %v2855
  %v5004 = vmul.f32 %v2880, %v2854
  %v5005 = vmul.f32 %v2881, %v2855
  %v5006 = vmul.f32 %v2882, %v2854
  %v5007 = vmul.f32 %v2883, %v2855
  %v5008 = vmul.f32 %v2884, %v2854
  %v5009 = vmul.f32 %v2885, %v2855
  %v5010 = vmul.f32 %v2886, %v2854
  %v5011 = vmul.f32 %v2887, %v2855
  %v5012 = vmul.f32 %v2888, %v2854
  %v5013 = vmul.f32 %v2889, %v2855
  %v5014 = vmul.f32 %v2890, %v2854
  %v5015 = vmul.f32 %v2891, %v2855
  %v5016 = vadd.f32 %v4984, %v4985
  %v5017 = vrot.slane %v5016, 4
  %v5018 = vadd.f32 %v5016, %v5017
  %v5019 = vrot.slane %v5018, 2
  %v5020 = vadd.f32 %v5018, %v5019
  %v5021 = vrot.slane %v5020, 1
  %v5022 = vadd.f32 %v5020, %v5021
  %v5023 = vadd.f32 %v4986, %v4987
  %v5024 = vrot.slane %v5023, 4
  %v5025 = vadd.f32 %v5023, %v5024
  %v5026 = vrot.slane %v5025, 2
  %v5027 = vadd.f32 %v5025, %v5026
  %v5028 = vrot.slane %v5027, 1
  %v5029 = vadd.f32 %v5027, %v5028
  %v5030 = vadd.f32 %v4988, %v4989
  %v5031 = vrot.slane %v5030, 4
  %v5032 = vadd.f32 %v5030, %v5031
  %v5033 = vrot.slane %v5032, 2
  %v5034 = vadd.f32 %v5032, %v5033
  %v5035 = vrot.slane %v5034, 1
  %v5036 = vadd.f32 %v5034, %v5035
  %v5037 = vadd.f32 %v4990, %v4991
  %v5038 = vrot.slane %v5037, 4
  %v5039 = vadd.f32 %v5037, %v5038
  %v5040 = vrot.slane %v5039, 2
  %v5041 = vadd.f32 %v5039, %v5040
  %v5042 = vrot.slane %v5041, 1
  %v5043 = vadd.f32 %v5041, %v5042
  %v5044 = vadd.f32 %v4992, %v4993
  %v5045 = vrot.slane %v5044, 4
  %v5046 = vadd.f32 %v5044, %v5045
  %v5047 = vrot.slane %v5046, 2
  %v5048 = vadd.f32 %v5046, %v5047
  %v5049 = vrot.slane %v5048, 1
  %v5050 = vadd.f32 %v5048, %v5049
  %v5051 = vadd.f32 %v4994, %v4995
  %v5052 = vrot.slane %v5051, 4
  %v5053 = vadd.f32 %v5051, %v5052
  %v5054 = vrot.slane %v5053, 2
  %v5055 = vadd.f32 %v5053, %v5054
  %v5056 = vrot.slane %v5055, 1
  %v5057 = vadd.f32 %v5055, %v5056
  %v5058 = vadd.f32 %v4996, %v4997
  %v5059 = vrot.slane %v5058, 4
  %v5060 = vadd.f32 %v5058, %v5059
  %v5061 = vrot.slane %v5060, 2
  %v5062 = vadd.f32 %v5060, %v5061
  %v5063 = vrot.slane %v5062, 1
  %v5064 = vadd.f32 %v5062, %v5063
  %v5065 = vadd.f32 %v4998, %v4999
  %v5066 = vrot.slane %v5065, 4
  %v5067 = vadd.f32 %v5065, %v5066
  %v5068 = vrot.slane %v5067, 2
  %v5069 = vadd.f32 %v5067, %v5068
  %v5070 = vrot.slane %v5069, 1
  %v5071 = vadd.f32 %v5069, %v5070
  %v5072 = vadd.f32 %v5000, %v5001
  %v5073 = vrot.slane %v5072, 4
  %v5074 = vadd.f32 %v5072, %v5073
  %v5075 = vrot.slane %v5074, 2
  %v5076 = vadd.f32 %v5074, %v5075
  %v5077 = vrot.slane %v5076, 1
  %v5078 = vadd.f32 %v5076, %v5077
  %v5079 = vadd.f32 %v5002, %v5003
  %v5080 = vrot.slane %v5079, 4
  %v5081 = vadd.f32 %v5079, %v5080
  %v5082 = vrot.slane %v5081, 2
  %v5083 = vadd.f32 %v5081, %v5082
  %v5084 = vrot.slane %v5083, 1
  %v5085 = vadd.f32 %v5083, %v5084
  %v5086 = vadd.f32 %v5004, %v5005
  %v5087 = vrot.slane %v5086, 4
  %v5088 = vadd.f32 %v5086, %v5087
  %v5089 = vrot.slane %v5088, 2
  %v5090 = vadd.f32 %v5088, %v5089
  %v5091 = vrot.slane %v5090, 1
  %v5092 = vadd.f32 %v5090, %v5091
  %v5093 = vadd.f32 %v5006, %v5007
  %v5094 = vrot.slane %v5093, 4
  %v5095 = vadd.f32 %v5093, %v5094
  %v5096 = vrot.slane %v5095, 2
  %v5097 = vadd.f32 %v5095, %v5096
  %v5098 = vrot.slane %v5097, 1
  %v5099 = vadd.f32 %v5097, %v5098
  %v5100 = vadd.f32 %v5008, %v5009
  %v5101 = vrot.slane %v5100, 4
  %v5102 = vadd.f32 %v5100, %v5101
  %v5103 = vrot.slane %v5102, 2
  %v5104 = vadd.f32 %v5102, %v5103
  %v5105 = vrot.slane %v5104, 1
  %v5106 = vadd.f32 %v5104, %v5105
  %v5107 = vadd.f32 %v5010, %v5011
  %v5108 = vrot.slane %v5107, 4
  %v5109 = vadd.f32 %v5107, %v5108
  %v5110 = vrot.slane %v5109, 2
  %v5111 = vadd.f32 %v5109, %v5110
  %v5112 = vrot.slane %v5111, 1
  %v5113 = vadd.f32 %v5111, %v5112
  %v5114 = vadd.f32 %v5012, %v5013
  %v5115 = vrot.slane %v5114, 4
  %v5116 = vadd.f32 %v5114, %v5115
  %v5117 = vrot.slane %v5116, 2
  %v5118 = vadd.f32 %v5116, %v5117
  %v5119 = vrot.slane %v5118, 1
  %v5120 = vadd.f32 %v5118, %v5119
  %v5121 = vadd.f32 %v5014, %v5015
  %v5122 = vrot.slane %v5121, 4
  %v5123 = vadd.f32 %v5121, %v5122
  %v5124 = vrot.slane %v5123, 2
  %v5125 = vadd.f32 %v5123, %v5124
  %v5126 = vrot.slane %v5125, 1
  %v5127 = vadd.f32 %v5125, %v5126
  %s5128 = scalar_lea.vmem %s3, 208
  %5129 = vst [vmem:[%s5128] sm:$0x1] %v5022
  %5130 = vst [vmem:[%s5128 + $0x1] sm:$0x1] %v5029
  %5131 = vst [vmem:[%s5128 + $0x2] sm:$0x1] %v5036
  %5132 = vst [vmem:[%s5128 + $0x3] sm:$0x1] %v5043
  %5133 = vst [vmem:[%s5128 + $0x4] sm:$0x1] %v5050
  %5134 = vst [vmem:[%s5128 + $0x5] sm:$0x1] %v5057
  %5135 = vst [vmem:[%s5128 + $0x6] sm:$0x1] %v5064
  %5136 = vst [vmem:[%s5128 + $0x7] sm:$0x1] %v5071
  %5137 = vst [vmem:[%s5128 + $0x8] sm:$0x1] %v5078
  %5138 = vst [vmem:[%s5128 + $0x9] sm:$0x1] %v5085
  %5139 = vst [vmem:[%s5128 + $0xa] sm:$0x1] %v5092
  %5140 = vst [vmem:[%s5128 + $0xb] sm:$0x1] %v5099
  %5141 = vst [vmem:[%s5128 + $0xc] sm:$0x1] %v5106
  %5142 = vst [vmem:[%s5128 + $0xd] sm:$0x1] %v5113
  %5143 = vst [vmem:[%s5128 + $0xe] sm:$0x1] %v5120
  %5144 = vst [vmem:[%s5128 + $0xf] sm:$0x1] %v5127
  %v5145 = vmul.f32 %v2860, %v2856
  %v5146 = vmul.f32 %v2861, %v2857
  %v5147 = vmul.f32 %v2862, %v2856
  %v5148 = vmul.f32 %v2863, %v2857
  %v5149 = vmul.f32 %v2864, %v2856
  %v5150 = vmul.f32 %v2865, %v2857
  %v5151 = vmul.f32 %v2866, %v2856
  %v5152 = vmul.f32 %v2867, %v2857
  %v5153 = vmul.f32 %v2868, %v2856
  %v5154 = vmul.f32 %v2869, %v2857
  %v5155 = vmul.f32 %v2870, %v2856
  %v5156 = vmul.f32 %v2871, %v2857
  %v5157 = vmul.f32 %v2872, %v2856
  %v5158 = vmul.f32 %v2873, %v2857
  %v5159 = vmul.f32 %v2874, %v2856
  %v5160 = vmul.f32 %v2875, %v2857
  %v5161 = vmul.f32 %v2876, %v2856
  %v5162 = vmul.f32 %v2877, %v2857
  %v5163 = vmul.f32 %v2878, %v2856
  %v5164 = vmul.f32 %v2879, %v2857
  %v5165 = vmul.f32 %v2880, %v2856
  %v5166 = vmul.f32 %v2881, %v2857
  %v5167 = vmul.f32 %v2882, %v2856
  %v5168 = vmul.f32 %v2883, %v2857
  %v5169 = vmul.f32 %v2884, %v2856
  %v5170 = vmul.f32 %v2885, %v2857
  %v5171 = vmul.f32 %v2886, %v2856
  %v5172 = vmul.f32 %v2887, %v2857
  %v5173 = vmul.f32 %v2888, %v2856
  %v5174 = vmul.f32 %v2889, %v2857
  %v5175 = vmul.f32 %v2890, %v2856
  %v5176 = vmul.f32 %v2891, %v2857
  %v5177 = vadd.f32 %v5145, %v5146
  %v5178 = vrot.slane %v5177, 4
  %v5179 = vadd.f32 %v5177, %v5178
  %v5180 = vrot.slane %v5179, 2
  %v5181 = vadd.f32 %v5179, %v5180
  %v5182 = vrot.slane %v5181, 1
  %v5183 = vadd.f32 %v5181, %v5182
  %v5184 = vadd.f32 %v5147, %v5148
  %v5185 = vrot.slane %v5184, 4
  %v5186 = vadd.f32 %v5184, %v5185
  %v5187 = vrot.slane %v5186, 2
  %v5188 = vadd.f32 %v5186, %v5187
  %v5189 = vrot.slane %v5188, 1
  %v5190 = vadd.f32 %v5188, %v5189
  %v5191 = vadd.f32 %v5149, %v5150
  %v5192 = vrot.slane %v5191, 4
  %v5193 = vadd.f32 %v5191, %v5192
  %v5194 = vrot.slane %v5193, 2
  %v5195 = vadd.f32 %v5193, %v5194
  %v5196 = vrot.slane %v5195, 1
  %v5197 = vadd.f32 %v5195, %v5196
  %v5198 = vadd.f32 %v5151, %v5152
  %v5199 = vrot.slane %v5198, 4
  %v5200 = vadd.f32 %v5198, %v5199
  %v5201 = vrot.slane %v5200, 2
  %v5202 = vadd.f32 %v5200, %v5201
  %v5203 = vrot.slane %v5202, 1
  %v5204 = vadd.f32 %v5202, %v5203
  %v5205 = vadd.f32 %v5153, %v5154
  %v5206 = vrot.slane %v5205, 4
  %v5207 = vadd.f32 %v5205, %v5206
  %v5208 = vrot.slane %v5207, 2
  %v5209 = vadd.f32 %v5207, %v5208
  %v5210 = vrot.slane %v5209, 1
  %v5211 = vadd.f32 %v5209, %v5210
  %v5212 = vadd.f32 %v5155, %v5156
  %v5213 = vrot.slane %v5212, 4
  %v5214 = vadd.f32 %v5212, %v5213
  %v5215 = vrot.slane %v5214, 2
  %v5216 = vadd.f32 %v5214, %v5215
  %v5217 = vrot.slane %v5216, 1
  %v5218 = vadd.f32 %v5216, %v5217
  %v5219 = vadd.f32 %v5157, %v5158
  %v5220 = vrot.slane %v5219, 4
  %v5221 = vadd.f32 %v5219, %v5220
  %v5222 = vrot.slane %v5221, 2
  %v5223 = vadd.f32 %v5221, %v5222
  %v5224 = vrot.slane %v5223, 1
  %v5225 = vadd.f32 %v5223, %v5224
  %v5226 = vadd.f32 %v5159, %v5160
  %v5227 = vrot.slane %v5226, 4
  %v5228 = vadd.f32 %v5226, %v5227
  %v5229 = vrot.slane %v5228, 2
  %v5230 = vadd.f32 %v5228, %v5229
  %v5231 = vrot.slane %v5230, 1
  %v5232 = vadd.f32 %v5230, %v5231
  %v5233 = vadd.f32 %v5161, %v5162
  %v5234 = vrot.slane %v5233, 4
  %v5235 = vadd.f32 %v5233, %v5234
  %v5236 = vrot.slane %v5235, 2
  %v5237 = vadd.f32 %v5235, %v5236
  %v5238 = vrot.slane %v5237, 1
  %v5239 = vadd.f32 %v5237, %v5238
  %v5240 = vadd.f32 %v5163, %v5164
  %v5241 = vrot.slane %v5240, 4
  %v5242 = vadd.f32 %v5240, %v5241
  %v5243 = vrot.slane %v5242, 2
  %v5244 = vadd.f32 %v5242, %v5243
  %v5245 = vrot.slane %v5244, 1
  %v5246 = vadd.f32 %v5244, %v5245
  %v5247 = vadd.f32 %v5165, %v5166
  %v5248 = vrot.slane %v5247, 4
  %v5249 = vadd.f32 %v5247, %v5248
  %v5250 = vrot.slane %v5249, 2
  %v5251 = vadd.f32 %v5249, %v5250
  %v5252 = vrot.slane %v5251, 1
  %v5253 = vadd.f32 %v5251, %v5252
  %v5254 = vadd.f32 %v5167, %v5168
  %v5255 = vrot.slane %v5254, 4
  %v5256 = vadd.f32 %v5254, %v5255
  %v5257 = vrot.slane %v5256, 2
  %v5258 = vadd.f32 %v5256, %v5257
  %v5259 = vrot.slane %v5258, 1
  %v5260 = vadd.f32 %v5258, %v5259
  %v5261 = vadd.f32 %v5169, %v5170
  %v5262 = vrot.slane %v5261, 4
  %v5263 = vadd.f32 %v5261, %v5262
  %v5264 = vrot.slane %v5263, 2
  %v5265 = vadd.f32 %v5263, %v5264
  %v5266 = vrot.slane %v5265, 1
  %v5267 = vadd.f32 %v5265, %v5266
  %v5268 = vadd.f32 %v5171, %v5172
  %v5269 = vrot.slane %v5268, 4
  %v5270 = vadd.f32 %v5268, %v5269
  %v5271 = vrot.slane %v5270, 2
  %v5272 = vadd.f32 %v5270, %v5271
  %v5273 = vrot.slane %v5272, 1
  %v5274 = vadd.f32 %v5272, %v5273
  %v5275 = vadd.f32 %v5173, %v5174
  %v5276 = vrot.slane %v5275, 4
  %v5277 = vadd.f32 %v5275, %v5276
  %v5278 = vrot.slane %v5277, 2
  %v5279 = vadd.f32 %v5277, %v5278
  %v5280 = vrot.slane %v5279, 1
  %v5281 = vadd.f32 %v5279, %v5280
  %v5282 = vadd.f32 %v5175, %v5176
  %v5283 = vrot.slane %v5282, 4
  %v5284 = vadd.f32 %v5282, %v5283
  %v5285 = vrot.slane %v5284, 2
  %v5286 = vadd.f32 %v5284, %v5285
  %v5287 = vrot.slane %v5286, 1
  %v5288 = vadd.f32 %v5286, %v5287
  %s5289 = scalar_lea.vmem %s3, 224
  %5290 = vst [vmem:[%s5289] sm:$0x1] %v5183
  %5291 = vst [vmem:[%s5289 + $0x1] sm:$0x1] %v5190
  %5292 = vst [vmem:[%s5289 + $0x2] sm:$0x1] %v5197
  %5293 = vst [vmem:[%s5289 + $0x3] sm:$0x1] %v5204
  %5294 = vst [vmem:[%s5289 + $0x4] sm:$0x1] %v5211
  %5295 = vst [vmem:[%s5289 + $0x5] sm:$0x1] %v5218
  %5296 = vst [vmem:[%s5289 + $0x6] sm:$0x1] %v5225
  %5297 = vst [vmem:[%s5289 + $0x7] sm:$0x1] %v5232
  %5298 = vst [vmem:[%s5289 + $0x8] sm:$0x1] %v5239
  %5299 = vst [vmem:[%s5289 + $0x9] sm:$0x1] %v5246
  %5300 = vst [vmem:[%s5289 + $0xa] sm:$0x1] %v5253
  %5301 = vst [vmem:[%s5289 + $0xb] sm:$0x1] %v5260
  %5302 = vst [vmem:[%s5289 + $0xc] sm:$0x1] %v5267
  %5303 = vst [vmem:[%s5289 + $0xd] sm:$0x1] %v5274
  %5304 = vst [vmem:[%s5289 + $0xe] sm:$0x1] %v5281
  %5305 = vst [vmem:[%s5289 + $0xf] sm:$0x1] %v5288
  %v5306 = vmul.f32 %v2860, %v2858
  %v5307 = vmul.f32 %v2861, %v2859
  %v5308 = vmul.f32 %v2862, %v2858
  %v5309 = vmul.f32 %v2863, %v2859
  %v5310 = vmul.f32 %v2864, %v2858
  %v5311 = vmul.f32 %v2865, %v2859
  %v5312 = vmul.f32 %v2866, %v2858
  %v5313 = vmul.f32 %v2867, %v2859
  %v5314 = vmul.f32 %v2868, %v2858
  %v5315 = vmul.f32 %v2869, %v2859
  %v5316 = vmul.f32 %v2870, %v2858
  %v5317 = vmul.f32 %v2871, %v2859
  %v5318 = vmul.f32 %v2872, %v2858
  %v5319 = vmul.f32 %v2873, %v2859
  %v5320 = vmul.f32 %v2874, %v2858
  %v5321 = vmul.f32 %v2875, %v2859
  %v5322 = vmul.f32 %v2876, %v2858
  %v5323 = vmul.f32 %v2877, %v2859
  %v5324 = vmul.f32 %v2878, %v2858
  %v5325 = vmul.f32 %v2879, %v2859
  %v5326 = vmul.f32 %v2880, %v2858
  %v5327 = vmul.f32 %v2881, %v2859
  %v5328 = vmul.f32 %v2882, %v2858
  %v5329 = vmul.f32 %v2883, %v2859
  %v5330 = vmul.f32 %v2884, %v2858
  %v5331 = vmul.f32 %v2885, %v2859
  %v5332 = vmul.f32 %v2886, %v2858
  %v5333 = vmul.f32 %v2887, %v2859
  %v5334 = vmul.f32 %v2888, %v2858
  %v5335 = vmul.f32 %v2889, %v2859
  %v5336 = vmul.f32 %v2890, %v2858
  %v5337 = vmul.f32 %v2891, %v2859
  %v5338 = vadd.f32 %v5306, %v5307
  %v5339 = vrot.slane %v5338, 4
  %v5340 = vadd.f32 %v5338, %v5339
  %v5341 = vrot.slane %v5340, 2
  %v5342 = vadd.f32 %v5340, %v5341
  %v5343 = vrot.slane %v5342, 1
  %v5344 = vadd.f32 %v5342, %v5343
  %v5345 = vadd.f32 %v5308, %v5309
  %v5346 = vrot.slane %v5345, 4
  %v5347 = vadd.f32 %v5345, %v5346
  %v5348 = vrot.slane %v5347, 2
  %v5349 = vadd.f32 %v5347, %v5348
  %v5350 = vrot.slane %v5349, 1
  %v5351 = vadd.f32 %v5349, %v5350
  %v5352 = vadd.f32 %v5310, %v5311
  %v5353 = vrot.slane %v5352, 4
  %v5354 = vadd.f32 %v5352, %v5353
  %v5355 = vrot.slane %v5354, 2
  %v5356 = vadd.f32 %v5354, %v5355
  %v5357 = vrot.slane %v5356, 1
  %v5358 = vadd.f32 %v5356, %v5357
  %v5359 = vadd.f32 %v5312, %v5313
  %v5360 = vrot.slane %v5359, 4
  %v5361 = vadd.f32 %v5359, %v5360
  %v5362 = vrot.slane %v5361, 2
  %v5363 = vadd.f32 %v5361, %v5362
  %v5364 = vrot.slane %v5363, 1
  %v5365 = vadd.f32 %v5363, %v5364
  %v5366 = vadd.f32 %v5314, %v5315
  %v5367 = vrot.slane %v5366, 4
  %v5368 = vadd.f32 %v5366, %v5367
  %v5369 = vrot.slane %v5368, 2
  %v5370 = vadd.f32 %v5368, %v5369
  %v5371 = vrot.slane %v5370, 1
  %v5372 = vadd.f32 %v5370, %v5371
  %v5373 = vadd.f32 %v5316, %v5317
  %v5374 = vrot.slane %v5373, 4
  %v5375 = vadd.f32 %v5373, %v5374
  %v5376 = vrot.slane %v5375, 2
  %v5377 = vadd.f32 %v5375, %v5376
  %v5378 = vrot.slane %v5377, 1
  %v5379 = vadd.f32 %v5377, %v5378
  %v5380 = vadd.f32 %v5318, %v5319
  %v5381 = vrot.slane %v5380, 4
  %v5382 = vadd.f32 %v5380, %v5381
  %v5383 = vrot.slane %v5382, 2
  %v5384 = vadd.f32 %v5382, %v5383
  %v5385 = vrot.slane %v5384, 1
  %v5386 = vadd.f32 %v5384, %v5385
  %v5387 = vadd.f32 %v5320, %v5321
  %v5388 = vrot.slane %v5387, 4
  %v5389 = vadd.f32 %v5387, %v5388
  %v5390 = vrot.slane %v5389, 2
  %v5391 = vadd.f32 %v5389, %v5390
  %v5392 = vrot.slane %v5391, 1
  %v5393 = vadd.f32 %v5391, %v5392
  %v5394 = vadd.f32 %v5322, %v5323
  %v5395 = vrot.slane %v5394, 4
  %v5396 = vadd.f32 %v5394, %v5395
  %v5397 = vrot.slane %v5396, 2
  %v5398 = vadd.f32 %v5396, %v5397
  %v5399 = vrot.slane %v5398, 1
  %v5400 = vadd.f32 %v5398, %v5399
  %v5401 = vadd.f32 %v5324, %v5325
  %v5402 = vrot.slane %v5401, 4
  %v5403 = vadd.f32 %v5401, %v5402
  %v5404 = vrot.slane %v5403, 2
  %v5405 = vadd.f32 %v5403, %v5404
  %v5406 = vrot.slane %v5405, 1
  %v5407 = vadd.f32 %v5405, %v5406
  %v5408 = vadd.f32 %v5326, %v5327
  %v5409 = vrot.slane %v5408, 4
  %v5410 = vadd.f32 %v5408, %v5409
  %v5411 = vrot.slane %v5410, 2
  %v5412 = vadd.f32 %v5410, %v5411
  %v5413 = vrot.slane %v5412, 1
  %v5414 = vadd.f32 %v5412, %v5413
  %v5415 = vadd.f32 %v5328, %v5329
  %v5416 = vrot.slane %v5415, 4
  %v5417 = vadd.f32 %v5415, %v5416
  %v5418 = vrot.slane %v5417, 2
  %v5419 = vadd.f32 %v5417, %v5418
  %v5420 = vrot.slane %v5419, 1
  %v5421 = vadd.f32 %v5419, %v5420
  %v5422 = vadd.f32 %v5330, %v5331
  %v5423 = vrot.slane %v5422, 4
  %v5424 = vadd.f32 %v5422, %v5423
  %v5425 = vrot.slane %v5424, 2
  %v5426 = vadd.f32 %v5424, %v5425
  %v5427 = vrot.slane %v5426, 1
  %v5428 = vadd.f32 %v5426, %v5427
  %v5429 = vadd.f32 %v5332, %v5333
  %v5430 = vrot.slane %v5429, 4
  %v5431 = vadd.f32 %v5429, %v5430
  %v5432 = vrot.slane %v5431, 2
  %v5433 = vadd.f32 %v5431, %v5432
  %v5434 = vrot.slane %v5433, 1
  %v5435 = vadd.f32 %v5433, %v5434
  %v5436 = vadd.f32 %v5334, %v5335
  %v5437 = vrot.slane %v5436, 4
  %v5438 = vadd.f32 %v5436, %v5437
  %v5439 = vrot.slane %v5438, 2
  %v5440 = vadd.f32 %v5438, %v5439
  %v5441 = vrot.slane %v5440, 1
  %v5442 = vadd.f32 %v5440, %v5441
  %v5443 = vadd.f32 %v5336, %v5337
  %v5444 = vrot.slane %v5443, 4
  %v5445 = vadd.f32 %v5443, %v5444
  %v5446 = vrot.slane %v5445, 2
  %v5447 = vadd.f32 %v5445, %v5446
  %v5448 = vrot.slane %v5447, 1
  %v5449 = vadd.f32 %v5447, %v5448
  %s5450 = scalar_lea.vmem %s3, 240
  %5451 = vst [vmem:[%s5450] sm:$0x1] %v5344
  %5452 = vst [vmem:[%s5450 + $0x1] sm:$0x1] %v5351
  %5453 = vst [vmem:[%s5450 + $0x2] sm:$0x1] %v5358
  %5454 = vst [vmem:[%s5450 + $0x3] sm:$0x1] %v5365
  %5455 = vst [vmem:[%s5450 + $0x4] sm:$0x1] %v5372
  %5456 = vst [vmem:[%s5450 + $0x5] sm:$0x1] %v5379
  %5457 = vst [vmem:[%s5450 + $0x6] sm:$0x1] %v5386
  %5458 = vst [vmem:[%s5450 + $0x7] sm:$0x1] %v5393
  %5459 = vst [vmem:[%s5450 + $0x8] sm:$0x1] %v5400
  %5460 = vst [vmem:[%s5450 + $0x9] sm:$0x1] %v5407
  %5461 = vst [vmem:[%s5450 + $0xa] sm:$0x1] %v5414
  %5462 = vst [vmem:[%s5450 + $0xb] sm:$0x1] %v5421
  %5463 = vst [vmem:[%s5450 + $0xc] sm:$0x1] %v5428
  %5464 = vst [vmem:[%s5450 + $0xd] sm:$0x1] %v5435
  %5465 = vst [vmem:[%s5450 + $0xe] sm:$0x1] %v5442
  %5466 = vst [vmem:[%s5450 + $0xf] sm:$0x1] %v5449
  // Predicated region
  $region14: #{riemannian_distance_loss.1} parent=0 // pred_check
    _
  $region15: #{riemannian_distance_loss.1} parent=0 // pred_check_branch
    %5468 = sbr.rel (0) target = $region17
  $region16: #{riemannian_distance_loss.1} parent=0 // pred_region
    _
  $region17: #{riemannian_distance_loss.1} parent=0 // pred_fallthru
    _
  // Predicated region
  $region18: #{riemannian_distance_loss.1} parent=0 // pred_check
    _
  $region19: #{riemannian_distance_loss.1} parent=0 // pred_check_branch
    %5470 = sbr.rel (0) target = $region21
  $region20: #{riemannian_distance_loss.1} parent=0 // pred_region
    _
  $region21: #{riemannian_distance_loss.1} parent=0 // pred_fallthru
    _

</llo_original>
